<compile_context>
chip_gen: v5e
topology: v5e:2x2
jax: 0.10.0
libtpu: 0.0.40
codegen_flags: <defaults>
</compile_context>

<pallas_src>
import functools
import math

import jax
import jax.numpy as jnp
from jax.experimental import pallas as pl
from jax.experimental.pallas import tpu as pltpu


_G = 128  # lane-padded gate width: each GRU gate gets its own 128-lane block


def _prep_gru_layer(w_ih, w_hh, b_ih, b_hh):
    """Host-side weight prep for one GRU layer.

    PyTorch layout in:  w_ih (3H, In), w_hh (3H, H), gate order (r, z, n).
    Fused layout out (all pre-transposed, gates padded to 128 lanes):
      wx (In, 4*_G) : column blocks [ W_ir^T | W_iz^T | W_in^T |   0    ]
      wh (H,  4*_G) : column blocks [ W_hr^T | W_hz^T |   0    | W_hn^T ]
      b  (1,  4*_G) : [ b_ir+b_hr | b_iz+b_hz | b_in | b_hn ]
    so that g = x @ wx + h @ wh + b gives per 128-lane block:
      block0[:, :H] = r_pre, block1 = z_pre, block2 = i_n, block3 = h_n.
    """
    H = w_hh.shape[1]
    In = w_ih.shape[1]

    def split3(a):
        return a[0:H], a[H:2 * H], a[2 * H:3 * H]

    w_ir, w_iz, w_in = split3(w_ih)
    w_hr, w_hz, w_hn = split3(w_hh)
    b_ir, b_iz, b_in = split3(b_ih)
    b_hr, b_hz, b_hn = split3(b_hh)

    def pad_cols(w):            # (rows, H) -> (rows, _G)
        return jnp.pad(w, ((0, 0), (0, _G - H)))

    def pad_bias(b):            # (H,) -> (_G,)
        return jnp.pad(b, (0, _G - H))

    zx = jnp.zeros((In, _G), jnp.float32)
    zh = jnp.zeros((H, _G), jnp.float32)
    wx = jnp.concatenate(
        [pad_cols(w_ir.T), pad_cols(w_iz.T), pad_cols(w_in.T), zx], axis=1)
    wh = jnp.concatenate(
        [pad_cols(w_hr.T), pad_cols(w_hz.T), zh, pad_cols(w_hn.T)], axis=1)
    b = jnp.concatenate(
        [pad_bias(b_ir + b_hr), pad_bias(b_iz + b_hz),
         pad_bias(b_in), pad_bias(b_hn)]).reshape(1, 4 * _G)
    return (wx.astype(jnp.float32), wh.astype(jnp.float32),
            b.astype(jnp.float32))


def _kernel(x_ref,
            wx1, wh1, b1,
            wx2, wh2, b2,
            wx3, wh3, b3,
            wfc, bfc,
            out_ref,
            *, T, H1, H2, H3):
    B, K = out_ref.shape
    G = _G

    # Hoist bias broadcasts out of the unrolled time loop (JAX does not CSE
    # broadcast_in_dim inside loops).
    b1b = jnp.broadcast_to(b1[...], (B, 4 * G))
    b2b = jnp.broadcast_to(b2[...], (B, 4 * G))
    b3b = jnp.broadcast_to(b3[...], (B, 4 * G))
    bfb = jnp.broadcast_to(bfc[...], (B, K))

    def cell(x_in, h, wx_ref, wh_ref, bb, Hl):
        # One fused pre-activation: gates live in 128-lane-aligned blocks.
        g = (jnp.dot(x_in, wx_ref[...], preferred_element_type=jnp.float32)
             + jnp.dot(h, wh_ref[...], preferred_element_type=jnp.float32)
             + bb)
        r = jax.nn.sigmoid(g[:, 0:G])
        z = jax.nn.sigmoid(g[:, G:2 * G])
        n = jnp.tanh(g[:, 2 * G:3 * G] + r * g[:, 3 * G:4 * G])
        # Offset-0 slices back down to the true hidden width (no lane shifts).
        return (1.0 - z[:, :Hl]) * n[:, :Hl] + z[:, :Hl] * h

    h1 = jnp.zeros((B, H1), jnp.float32)
    h2 = jnp.zeros((B, H2), jnp.float32)
    h3 = jnp.zeros((B, H3), jnp.float32)
    acc = jnp.zeros((B, K), jnp.float32)

    for t in range(T):          # static unroll of the recurrence
        x_t = x_ref[t]          # (B, D), static slice
        h1 = cell(x_t, h1, wx1, wh1, b1b, H1)
        h2 = cell(h1, h2, wx2, wh2, b2b, H2)
        h3 = cell(h2, h3, wx3, wh3, b3b, H3)
        # hidden2keyword Linear + log_softmax, accumulated over time.
        scores = jnp.dot(h3, wfc[...], preferred_element_type=jnp.float32) + bfb
        m = jnp.max(scores, axis=-1, keepdims=True)
        s = scores - m
        acc = acc + (s - jnp.log(jnp.sum(jnp.exp(s), axis=-1, keepdims=True)))

    out_ref[...] = acc * (1.0 / float(T))


def gru_keyword_spotter_forward(x, params, hidden_dim, num_keywords):
    """x: (T, B, input_dim) float32 -> (B, num_keywords) float32."""
    T, B, D = x.shape
    H, K = hidden_dim, num_keywords

    # Host-side weight fusion / transposition (one-time, outside the kernel).
    wx1, wh1, b1 = _prep_gru_layer(params["w_ih1"], params["w_hh1"],
                                   params["b_ih1"], params["b_hh1"])
    wx2, wh2, b2 = _prep_gru_layer(params["w_ih2"], params["w_hh2"],
                                   params["b_ih2"], params["b_hh2"])
    wx3, wh3, b3 = _prep_gru_layer(params["w_ih3"], params["w_hh3"],
                                   params["b_ih3"], params["b_hh3"])
    wfc = params["w_fc"].T.astype(jnp.float32)              # (K_in, K)
    bfc = params["b_fc"].reshape(1, K).astype(jnp.float32)  # (1, K)

    inputs = [x.astype(jnp.float32),
              wx1, wh1, b1, wx2, wh2, b2, wx3, wh3, b3, wfc, bfc]

    def full_spec(arr):
        nd = arr.ndim
        return pl.BlockSpec(arr.shape, lambda i, _nd=nd: (0,) * _nd)

    kernel = functools.partial(_kernel, T=T, H1=H, H2=H, H3=K)

    return pl.pallas_call(
        kernel,
        out_shape=jax.ShapeDtypeStruct((B, K), jnp.float32),
        grid_spec=pltpu.PrefetchScalarGridSpec(
            num_scalar_prefetch=0,
            grid=(1,),                       # single step: whole seq in VMEM
            in_specs=[full_spec(a) for a in inputs],
            out_specs=pl.BlockSpec((B, K), lambda i: (0, 0)),
        ),
        compiler_params=pltpu.CompilerParams(
            dimension_semantics=("arbitrary",)),
    )(*inputs)


def init_params(key, input_dim, hidden_dim, num_keywords):
    """Deterministic synthetic parameters, PyTorch-style uniform init."""
    ks = list(jax.random.split(key, 14))

    def u(k, shape, scale):
        return jax.random.uniform(k, shape, jnp.float32, -scale, scale)

    s1 = 1.0 / math.sqrt(hidden_dim)
    s3 = 1.0 / math.sqrt(num_keywords)
    sf = 1.0 / math.sqrt(num_keywords)
    return dict(
        # gru1: input_dim -> hidden_dim
        w_ih1=u(ks[0], (3 * hidden_dim, input_dim), s1),
        w_hh1=u(ks[1], (3 * hidden_dim, hidden_dim), s1),
        b_ih1=u(ks[2], (3 * hidden_dim,), s1),
        b_hh1=u(ks[3], (3 * hidden_dim,), s1),
        # gru2: hidden_dim -> hidden_dim
        w_ih2=u(ks[4], (3 * hidden_dim, hidden_dim), s1),
        w_hh2=u(ks[5], (3 * hidden_dim, hidden_dim), s1),
        b_ih2=u(ks[6], (3 * hidden_dim,), s1),
        b_hh2=u(ks[7], (3 * hidden_dim,), s1),
        # gru3: hidden_dim -> num_keywords
        w_ih3=u(ks[8], (3 * num_keywords, hidden_dim), s3),
        w_hh3=u(ks[9], (3 * num_keywords, num_keywords), s3),
        b_ih3=u(ks[10], (3 * num_keywords,), s3),
        b_hh3=u(ks[11], (3 * num_keywords,), s3),
        # hidden2keyword Linear: num_keywords -> num_keywords
        w_fc=u(ks[12], (num_keywords, num_keywords), sf),
        b_fc=u(ks[13], (num_keywords,), sf),
    )


def reference_forward(x, params, hidden_dim, num_keywords):
    """Pure-JAX reference mirroring the PyTorch forward."""
    def gru_layer(xs, w_ih, w_hh, b_ih, b_hh, Hl):
        B = xs.shape[1]
        h0 = jnp.zeros((B, Hl), jnp.float32)

        def step(h, x_t):
            gi = x_t @ w_ih.T + b_ih
            gh = h @ w_hh.T + b_hh
            r = jax.nn.sigmoid(gi[:, :Hl] + gh[:, :Hl])
            z = jax.nn.sigmoid(gi[:, Hl:2 * Hl] + gh[:, Hl:2 * Hl])
            n = jnp.tanh(gi[:, 2 * Hl:] + r * gh[:, 2 * Hl:])
            h_new = (1.0 - z) * n + z * h
            return h_new, h_new

        _, ys = jax.lax.scan(step, h0, xs)
        return ys

    y = gru_layer(x, params["w_ih1"], params["w_hh1"], params["b_ih1"],
                  params["b_hh1"], hidden_dim)
    y = gru_layer(y, params["w_ih2"], params["w_hh2"], params["b_ih2"],
                  params["b_hh2"], hidden_dim)
    y = gru_layer(y, params["w_ih3"], params["w_hh3"], params["b_ih3"],
                  params["b_hh3"], num_keywords)
    scores = y @ params["w_fc"].T + params["b_fc"]
    log_probs = jax.nn.log_softmax(scores, axis=2)
    return log_probs.mean(axis=0)


if __name__ == "__main__":
    # Small shapes implied by the module: seq-major GRU input.
    T, B = 8, 2                # sequence length, batch
    input_dim = 16             # audio frame size
    hidden_dim = 32
    num_keywords = 16
    num_layers = 3             # exercises gru1, gru2, gru3

    key = jax.random.PRNGKey(0)
    k_x, k_p = jax.random.split(key)
    x = jax.random.normal(k_x, (T, B, input_dim), jnp.float32)
    params = init_params(k_p, input_dim, hidden_dim, num_keywords)

    out = gru_keyword_spotter_forward(x, params, hidden_dim, num_keywords)
    out = jax.block_until_ready(out)

    ref = jax.block_until_ready(
        reference_forward(x, params, hidden_dim, num_keywords))
    assert out.shape == (B, num_keywords)
    assert jnp.max(jnp.abs(out - ref)) < 2e-3, "mismatch vs JAX reference"

    print("KERNEL_OK")
</pallas_src>

<mosaic_0001>
module attributes {stable_mosaic.version = 11 : i64} {
  func.func @_kernel(%arg0: i32, %arg1: memref<8x2x16xf32, #tpu.memory_space<vmem>>, %arg2: memref<16x512xf32, #tpu.memory_space<vmem>>, %arg3: memref<32x512xf32, #tpu.memory_space<vmem>>, %arg4: memref<1x512xf32, #tpu.memory_space<vmem>>, %arg5: memref<32x512xf32, #tpu.memory_space<vmem>>, %arg6: memref<32x512xf32, #tpu.memory_space<vmem>>, %arg7: memref<1x512xf32, #tpu.memory_space<vmem>>, %arg8: memref<32x512xf32, #tpu.memory_space<vmem>>, %arg9: memref<16x512xf32, #tpu.memory_space<vmem>>, %arg10: memref<1x512xf32, #tpu.memory_space<vmem>>, %arg11: memref<16x16xf32, #tpu.memory_space<vmem>>, %arg12: memref<1x16xf32, #tpu.memory_space<vmem>>, %arg13: memref<2x16xf32, #tpu.memory_space<vmem>>) attributes {dimension_semantics = [#tpu.dimension_semantics<arbitrary>], iteration_bounds = array<i64: 1>, scalar_prefetch = 0 : i64, scratch_operands = 0 : i64, tpu.core_type = #tpu.core_type<tc>, window_params = [{pipeline_mode = #tpu.pipeline_mode<synchronous>, transform_indices = @transform_0, window_bounds = array<i64: 8, 2, 16>}, {pipeline_mode = #tpu.pipeline_mode<synchronous>, transform_indices = @transform_1, window_bounds = array<i64: 16, 512>}, {pipeline_mode = #tpu.pipeline_mode<synchronous>, transform_indices = @transform_2, window_bounds = array<i64: 32, 512>}, {pipeline_mode = #tpu.pipeline_mode<synchronous>, transform_indices = @transform_3, window_bounds = array<i64: 1, 512>}, {pipeline_mode = #tpu.pipeline_mode<synchronous>, transform_indices = @transform_4, window_bounds = array<i64: 32, 512>}, {pipeline_mode = #tpu.pipeline_mode<synchronous>, transform_indices = @transform_5, window_bounds = array<i64: 32, 512>}, {pipeline_mode = #tpu.pipeline_mode<synchronous>, transform_indices = @transform_6, window_bounds = array<i64: 1, 512>}, {pipeline_mode = #tpu.pipeline_mode<synchronous>, transform_indices = @transform_7, window_bounds = array<i64: 32, 512>}, {pipeline_mode = #tpu.pipeline_mode<synchronous>, transform_indices = @transform_8, window_bounds = array<i64: 16, 512>}, {pipeline_mode = #tpu.pipeline_mode<synchronous>, transform_indices = @transform_9, window_bounds = array<i64: 1, 512>}, {pipeline_mode = #tpu.pipeline_mode<synchronous>, transform_indices = @transform_10, window_bounds = array<i64: 16, 16>}, {pipeline_mode = #tpu.pipeline_mode<synchronous>, transform_indices = @transform_11, window_bounds = array<i64: 1, 16>}, {pipeline_mode = #tpu.pipeline_mode<synchronous>, transform_indices = @transform_12, window_bounds = array<i64: 2, 16>}]} {
    %c0 = arith.constant 0 : index
    %c0_0 = arith.constant 0 : index
    %0 = vector.load %arg4[%c0, %c0_0] : memref<1x512xf32, #tpu.memory_space<vmem>>, vector<1x512xf32>
    %1 = vector.shape_cast %0 : vector<1x512xf32> to vector<1x512xf32>
    %2 = vector.broadcast %1 : vector<1x512xf32> to vector<2x512xf32>
    %c0_1 = arith.constant 0 : index
    %c0_2 = arith.constant 0 : index
    %3 = vector.load %arg7[%c0_1, %c0_2] : memref<1x512xf32, #tpu.memory_space<vmem>>, vector<1x512xf32>
    %4 = vector.shape_cast %3 : vector<1x512xf32> to vector<1x512xf32>
    %5 = vector.broadcast %4 : vector<1x512xf32> to vector<2x512xf32>
    %c0_3 = arith.constant 0 : index
    %c0_4 = arith.constant 0 : index
    %6 = vector.load %arg10[%c0_3, %c0_4] : memref<1x512xf32, #tpu.memory_space<vmem>>, vector<1x512xf32>
    %7 = vector.shape_cast %6 : vector<1x512xf32> to vector<1x512xf32>
    %8 = vector.broadcast %7 : vector<1x512xf32> to vector<2x512xf32>
    %c0_5 = arith.constant 0 : index
    %c0_6 = arith.constant 0 : index
    %9 = vector.load %arg12[%c0_5, %c0_6] : memref<1x16xf32, #tpu.memory_space<vmem>>, vector<1x16xf32>
    %10 = vector.shape_cast %9 : vector<1x16xf32> to vector<1x16xf32>
    %11 = vector.broadcast %10 : vector<1x16xf32> to vector<2x16xf32>
    %cst = arith.constant 0.000000e+00 : f32
    %12 = vector.broadcast %cst : f32 to vector<2x32xf32>
    %cst_7 = arith.constant 0.000000e+00 : f32
    %13 = vector.broadcast %cst_7 : f32 to vector<2x32xf32>
    %cst_8 = arith.constant 0.000000e+00 : f32
    %14 = vector.broadcast %cst_8 : f32 to vector<2x16xf32>
    %cst_9 = arith.constant 0.000000e+00 : f32
    %15 = vector.broadcast %cst_9 : f32 to vector<2x16xf32>
    %c0_10 = arith.constant 0 : index
    %c0_11 = arith.constant 0 : index
    %c0_12 = arith.constant 0 : index
    %16 = vector.load %arg1[%c0_10, %c0_11, %c0_12] : memref<8x2x16xf32, #tpu.memory_space<vmem>>, vector<1x2x16xf32>
    %17 = vector.shape_cast %16 : vector<1x2x16xf32> to vector<2x16xf32>
    %c0_13 = arith.constant 0 : index
    %c0_14 = arith.constant 0 : index
    %18 = vector.load %arg2[%c0_13, %c0_14] : memref<16x512xf32, #tpu.memory_space<vmem>>, vector<16x512xf32>
    %cst_15 = arith.constant dense<0.000000e+00> : vector<2x512xf32>
    %19 = tpu.matmul %17, %18, %cst_15 {dimension_numbers = #tpu.dot_dimension_numbers<[1], [0], [0], [1], [0, 0, 1, 1], [], []>} : vector<2x16xf32>, vector<16x512xf32>, vector<2x512xf32> -> vector<2x512xf32>
    %c0_16 = arith.constant 0 : index
    %c0_17 = arith.constant 0 : index
    %20 = vector.load %arg3[%c0_16, %c0_17] : memref<32x512xf32, #tpu.memory_space<vmem>>, vector<32x512xf32>
    %cst_18 = arith.constant dense<0.000000e+00> : vector<2x512xf32>
    %21 = tpu.matmul %12, %20, %cst_18 {dimension_numbers = #tpu.dot_dimension_numbers<[1], [0], [0], [1], [0, 0, 1, 1], [], []>} : vector<2x32xf32>, vector<32x512xf32>, vector<2x512xf32> -> vector<2x512xf32>
    %22 = arith.addf %19, %21 : vector<2x512xf32>
    %23 = arith.addf %22, %2 : vector<2x512xf32>
    %24 = vector.extract_strided_slice %23 {offsets = [0, 0], sizes = [2, 128], strides = [1, 1]} : vector<2x512xf32> to vector<2x128xf32>
    %25 = arith.negf %24 : vector<2x128xf32>
    %26 = math.exp %25 : vector<2x128xf32>
    %cst_19 = arith.constant 1.000000e+00 : f32
    %27 = vector.broadcast %cst_19 : f32 to vector<2x128xf32>
    %28 = arith.addf %27, %26 : vector<2x128xf32>
    %29 = arith.divf %27, %28 : vector<2x128xf32>
    %30 = vector.extract_strided_slice %23 {offsets = [0, 128], sizes = [2, 128], strides = [1, 1]} : vector<2x512xf32> to vector<2x128xf32>
    %31 = arith.negf %30 : vector<2x128xf32>
    %32 = math.exp %31 : vector<2x128xf32>
    %cst_20 = arith.constant 1.000000e+00 : f32
    %33 = vector.broadcast %cst_20 : f32 to vector<2x128xf32>
    %34 = arith.addf %33, %32 : vector<2x128xf32>
    %35 = arith.divf %33, %34 : vector<2x128xf32>
    %36 = vector.extract_strided_slice %23 {offsets = [0, 256], sizes = [2, 128], strides = [1, 1]} : vector<2x512xf32> to vector<2x128xf32>
    %37 = vector.extract_strided_slice %23 {offsets = [0, 384], sizes = [2, 128], strides = [1, 1]} : vector<2x512xf32> to vector<2x128xf32>
    %38 = arith.mulf %29, %37 : vector<2x128xf32>
    %39 = arith.addf %36, %38 : vector<2x128xf32>
    %40 = math.tanh %39 : vector<2x128xf32>
    %41 = vector.extract_strided_slice %35 {offsets = [0, 0], sizes = [2, 32], strides = [1, 1]} : vector<2x128xf32> to vector<2x32xf32>
    %cst_21 = arith.constant 1.000000e+00 : f32
    %42 = vector.broadcast %cst_21 : f32 to vector<2x32xf32>
    %43 = arith.subf %42, %41 : vector<2x32xf32>
    %44 = vector.extract_strided_slice %40 {offsets = [0, 0], sizes = [2, 32], strides = [1, 1]} : vector<2x128xf32> to vector<2x32xf32>
    %45 = arith.mulf %43, %44 : vector<2x32xf32>
    %46 = vector.extract_strided_slice %35 {offsets = [0, 0], sizes = [2, 32], strides = [1, 1]} : vector<2x128xf32> to vector<2x32xf32>
    %47 = arith.mulf %46, %12 : vector<2x32xf32>
    %48 = arith.addf %45, %47 : vector<2x32xf32>
    %c0_22 = arith.constant 0 : index
    %c0_23 = arith.constant 0 : index
    %49 = vector.load %arg5[%c0_22, %c0_23] : memref<32x512xf32, #tpu.memory_space<vmem>>, vector<32x512xf32>
    %cst_24 = arith.constant dense<0.000000e+00> : vector<2x512xf32>
    %50 = tpu.matmul %48, %49, %cst_24 {dimension_numbers = #tpu.dot_dimension_numbers<[1], [0], [0], [1], [0, 0, 1, 1], [], []>} : vector<2x32xf32>, vector<32x512xf32>, vector<2x512xf32> -> vector<2x512xf32>
    %c0_25 = arith.constant 0 : index
    %c0_26 = arith.constant 0 : index
    %51 = vector.load %arg6[%c0_25, %c0_26] : memref<32x512xf32, #tpu.memory_space<vmem>>, vector<32x512xf32>
    %cst_27 = arith.constant dense<0.000000e+00> : vector<2x512xf32>
    %52 = tpu.matmul %13, %51, %cst_27 {dimension_numbers = #tpu.dot_dimension_numbers<[1], [0], [0], [1], [0, 0, 1, 1], [], []>} : vector<2x32xf32>, vector<32x512xf32>, vector<2x512xf32> -> vector<2x512xf32>
    %53 = arith.addf %50, %52 : vector<2x512xf32>
    %54 = arith.addf %53, %5 : vector<2x512xf32>
    %55 = vector.extract_strided_slice %54 {offsets = [0, 0], sizes = [2, 128], strides = [1, 1]} : vector<2x512xf32> to vector<2x128xf32>
    %56 = arith.negf %55 : vector<2x128xf32>
    %57 = math.exp %56 : vector<2x128xf32>
    %cst_28 = arith.constant 1.000000e+00 : f32
    %58 = vector.broadcast %cst_28 : f32 to vector<2x128xf32>
    %59 = arith.addf %58, %57 : vector<2x128xf32>
    %60 = arith.divf %58, %59 : vector<2x128xf32>
    %61 = vector.extract_strided_slice %54 {offsets = [0, 128], sizes = [2, 128], strides = [1, 1]} : vector<2x512xf32> to vector<2x128xf32>
    %62 = arith.negf %61 : vector<2x128xf32>
    %63 = math.exp %62 : vector<2x128xf32>
    %cst_29 = arith.constant 1.000000e+00 : f32
    %64 = vector.broadcast %cst_29 : f32 to vector<2x128xf32>
    %65 = arith.addf %64, %63 : vector<2x128xf32>
    %66 = arith.divf %64, %65 : vector<2x128xf32>
    %67 = vector.extract_strided_slice %54 {offsets = [0, 256], sizes = [2, 128], strides = [1, 1]} : vector<2x512xf32> to vector<2x128xf32>
    %68 = vector.extract_strided_slice %54 {offsets = [0, 384], sizes = [2, 128], strides = [1, 1]} : vector<2x512xf32> to vector<2x128xf32>
    %69 = arith.mulf %60, %68 : vector<2x128xf32>
    %70 = arith.addf %67, %69 : vector<2x128xf32>
    %71 = math.tanh %70 : vector<2x128xf32>
    %72 = vector.extract_strided_slice %66 {offsets = [0, 0], sizes = [2, 32], strides = [1, 1]} : vector<2x128xf32> to vector<2x32xf32>
    %cst_30 = arith.constant 1.000000e+00 : f32
    %73 = vector.broadcast %cst_30 : f32 to vector<2x32xf32>
    %74 = arith.subf %73, %72 : vector<2x32xf32>
    %75 = vector.extract_strided_slice %71 {offsets = [0, 0], sizes = [2, 32], strides = [1, 1]} : vector<2x128xf32> to vector<2x32xf32>
    %76 = arith.mulf %74, %75 : vector<2x32xf32>
    %77 = vector.extract_strided_slice %66 {offsets = [0, 0], sizes = [2, 32], strides = [1, 1]} : vector<2x128xf32> to vector<2x32xf32>
    %78 = arith.mulf %77, %13 : vector<2x32xf32>
    %79 = arith.addf %76, %78 : vector<2x32xf32>
    %c0_31 = arith.constant 0 : index
    %c0_32 = arith.constant 0 : index
    %80 = vector.load %arg8[%c0_31, %c0_32] : memref<32x512xf32, #tpu.memory_space<vmem>>, vector<32x512xf32>
    %cst_33 = arith.constant dense<0.000000e+00> : vector<2x512xf32>
    %81 = tpu.matmul %79, %80, %cst_33 {dimension_numbers = #tpu.dot_dimension_numbers<[1], [0], [0], [1], [0, 0, 1, 1], [], []>} : vector<2x32xf32>, vector<32x512xf32>, vector<2x512xf32> -> vector<2x512xf32>
    %c0_34 = arith.constant 0 : index
    %c0_35 = arith.constant 0 : index
    %82 = vector.load %arg9[%c0_34, %c0_35] : memref<16x512xf32, #tpu.memory_space<vmem>>, vector<16x512xf32>
    %cst_36 = arith.constant dense<0.000000e+00> : vector<2x512xf32>
    %83 = tpu.matmul %14, %82, %cst_36 {dimension_numbers = #tpu.dot_dimension_numbers<[1], [0], [0], [1], [0, 0, 1, 1], [], []>} : vector<2x16xf32>, vector<16x512xf32>, vector<2x512xf32> -> vector<2x512xf32>
    %84 = arith.addf %81, %83 : vector<2x512xf32>
    %85 = arith.addf %84, %8 : vector<2x512xf32>
    %86 = vector.extract_strided_slice %85 {offsets = [0, 0], sizes = [2, 128], strides = [1, 1]} : vector<2x512xf32> to vector<2x128xf32>
    %87 = arith.negf %86 : vector<2x128xf32>
    %88 = math.exp %87 : vector<2x128xf32>
    %cst_37 = arith.constant 1.000000e+00 : f32
    %89 = vector.broadcast %cst_37 : f32 to vector<2x128xf32>
    %90 = arith.addf %89, %88 : vector<2x128xf32>
    %91 = arith.divf %89, %90 : vector<2x128xf32>
    %92 = vector.extract_strided_slice %85 {offsets = [0, 128], sizes = [2, 128], strides = [1, 1]} : vector<2x512xf32> to vector<2x128xf32>
    %93 = arith.negf %92 : vector<2x128xf32>
    %94 = math.exp %93 : vector<2x128xf32>
    %cst_38 = arith.constant 1.000000e+00 : f32
    %95 = vector.broadcast %cst_38 : f32 to vector<2x128xf32>
    %96 = arith.addf %95, %94 : vector<2x128xf32>
    %97 = arith.divf %95, %96 : vector<2x128xf32>
    %98 = vector.extract_strided_slice %85 {offsets = [0, 256], sizes = [2, 128], strides = [1, 1]} : vector<2x512xf32> to vector<2x128xf32>
    %99 = vector.extract_strided_slice %85 {offsets = [0, 384], sizes = [2, 128], strides = [1, 1]} : vector<2x512xf32> to vector<2x128xf32>
    %100 = arith.mulf %91, %99 : vector<2x128xf32>
    %101 = arith.addf %98, %100 : vector<2x128xf32>
    %102 = math.tanh %101 : vector<2x128xf32>
    %103 = vector.extract_strided_slice %97 {offsets = [0, 0], sizes = [2, 16], strides = [1, 1]} : vector<2x128xf32> to vector<2x16xf32>
    %cst_39 = arith.constant 1.000000e+00 : f32
    %104 = vector.broadcast %cst_39 : f32 to vector<2x16xf32>
    %105 = arith.subf %104, %103 : vector<2x16xf32>
    %106 = vector.extract_strided_slice %102 {offsets = [0, 0], sizes = [2, 16], strides = [1, 1]} : vector<2x128xf32> to vector<2x16xf32>
    %107 = arith.mulf %105, %106 : vector<2x16xf32>
    %108 = vector.extract_strided_slice %97 {offsets = [0, 0], sizes = [2, 16], strides = [1, 1]} : vector<2x128xf32> to vector<2x16xf32>
    %109 = arith.mulf %108, %14 : vector<2x16xf32>
    %110 = arith.addf %107, %109 : vector<2x16xf32>
    %c0_40 = arith.constant 0 : index
    %c0_41 = arith.constant 0 : index
    %111 = vector.load %arg11[%c0_40, %c0_41] : memref<16x16xf32, #tpu.memory_space<vmem>>, vector<16x16xf32>
    %cst_42 = arith.constant dense<0.000000e+00> : vector<2x16xf32>
    %112 = tpu.matmul %110, %111, %cst_42 {dimension_numbers = #tpu.dot_dimension_numbers<[1], [0], [0], [1], [0, 0, 1, 1], [], []>} : vector<2x16xf32>, vector<16x16xf32>, vector<2x16xf32> -> vector<2x16xf32>
    %113 = arith.addf %112, %11 : vector<2x16xf32>
    %cst_43 = arith.constant dense<0xFF800000> : vector<2xf32>
    %114 = vector.multi_reduction <maximumf>, %113, %cst_43 [1] : vector<2x16xf32> to vector<2xf32>
    %115 = vector.shape_cast %114 : vector<2xf32> to vector<2x1xf32>
    %116 = vector.broadcast %115 : vector<2x1xf32> to vector<2x16xf32>
    %117 = arith.subf %113, %116 : vector<2x16xf32>
    %118 = math.exp %117 : vector<2x16xf32>
    %cst_44 = arith.constant dense<0.000000e+00> : vector<2xf32>
    %119 = vector.multi_reduction <add>, %118, %cst_44 [1] : vector<2x16xf32> to vector<2xf32>
    %120 = vector.shape_cast %119 : vector<2xf32> to vector<2x1xf32>
    %121 = math.log %120 : vector<2x1xf32>
    %122 = vector.broadcast %121 : vector<2x1xf32> to vector<2x16xf32>
    %123 = arith.subf %117, %122 : vector<2x16xf32>
    %124 = arith.addf %15, %123 : vector<2x16xf32>
    %c1 = arith.constant 1 : index
    %c0_45 = arith.constant 0 : index
    %c0_46 = arith.constant 0 : index
    %125 = vector.load %arg1[%c1, %c0_45, %c0_46] : memref<8x2x16xf32, #tpu.memory_space<vmem>>, vector<1x2x16xf32>
    %126 = vector.shape_cast %125 : vector<1x2x16xf32> to vector<2x16xf32>
    %c0_47 = arith.constant 0 : index
    %c0_48 = arith.constant 0 : index
    %127 = vector.load %arg2[%c0_47, %c0_48] : memref<16x512xf32, #tpu.memory_space<vmem>>, vector<16x512xf32>
    %cst_49 = arith.constant dense<0.000000e+00> : vector<2x512xf32>
    %128 = tpu.matmul %126, %127, %cst_49 {dimension_numbers = #tpu.dot_dimension_numbers<[1], [0], [0], [1], [0, 0, 1, 1], [], []>} : vector<2x16xf32>, vector<16x512xf32>, vector<2x512xf32> -> vector<2x512xf32>
    %c0_50 = arith.constant 0 : index
    %c0_51 = arith.constant 0 : index
    %129 = vector.load %arg3[%c0_50, %c0_51] : memref<32x512xf32, #tpu.memory_space<vmem>>, vector<32x512xf32>
    %cst_52 = arith.constant dense<0.000000e+00> : vector<2x512xf32>
    %130 = tpu.matmul %48, %129, %cst_52 {dimension_numbers = #tpu.dot_dimension_numbers<[1], [0], [0], [1], [0, 0, 1, 1], [], []>} : vector<2x32xf32>, vector<32x512xf32>, vector<2x512xf32> -> vector<2x512xf32>
    %131 = arith.addf %128, %130 : vector<2x512xf32>
    %132 = arith.addf %131, %2 : vector<2x512xf32>
    %133 = vector.extract_strided_slice %132 {offsets = [0, 0], sizes = [2, 128], strides = [1, 1]} : vector<2x512xf32> to vector<2x128xf32>
    %134 = arith.negf %133 : vector<2x128xf32>
    %135 = math.exp %134 : vector<2x128xf32>
    %cst_53 = arith.constant 1.000000e+00 : f32
    %136 = vector.broadcast %cst_53 : f32 to vector<2x128xf32>
    %137 = arith.addf %136, %135 : vector<2x128xf32>
    %138 = arith.divf %136, %137 : vector<2x128xf32>
    %139 = vector.extract_strided_slice %132 {offsets = [0, 128], sizes = [2, 128], strides = [1, 1]} : vector<2x512xf32> to vector<2x128xf32>
    %140 = arith.negf %139 : vector<2x128xf32>
    %141 = math.exp %140 : vector<2x128xf32>
    %cst_54 = arith.constant 1.000000e+00 : f32
    %142 = vector.broadcast %cst_54 : f32 to vector<2x128xf32>
    %143 = arith.addf %142, %141 : vector<2x128xf32>
    %144 = arith.divf %142, %143 : vector<2x128xf32>
    %145 = vector.extract_strided_slice %132 {offsets = [0, 256], sizes = [2, 128], strides = [1, 1]} : vector<2x512xf32> to vector<2x128xf32>
    %146 = vector.extract_strided_slice %132 {offsets = [0, 384], sizes = [2, 128], strides = [1, 1]} : vector<2x512xf32> to vector<2x128xf32>
    %147 = arith.mulf %138, %146 : vector<2x128xf32>
    %148 = arith.addf %145, %147 : vector<2x128xf32>
    %149 = math.tanh %148 : vector<2x128xf32>
    %150 = vector.extract_strided_slice %144 {offsets = [0, 0], sizes = [2, 32], strides = [1, 1]} : vector<2x128xf32> to vector<2x32xf32>
    %cst_55 = arith.constant 1.000000e+00 : f32
    %151 = vector.broadcast %cst_55 : f32 to vector<2x32xf32>
    %152 = arith.subf %151, %150 : vector<2x32xf32>
    %153 = vector.extract_strided_slice %149 {offsets = [0, 0], sizes = [2, 32], strides = [1, 1]} : vector<2x128xf32> to vector<2x32xf32>
    %154 = arith.mulf %152, %153 : vector<2x32xf32>
    %155 = vector.extract_strided_slice %144 {offsets = [0, 0], sizes = [2, 32], strides = [1, 1]} : vector<2x128xf32> to vector<2x32xf32>
    %156 = arith.mulf %155, %48 : vector<2x32xf32>
    %157 = arith.addf %154, %156 : vector<2x32xf32>
    %c0_56 = arith.constant 0 : index
    %c0_57 = arith.constant 0 : index
    %158 = vector.load %arg5[%c0_56, %c0_57] : memref<32x512xf32, #tpu.memory_space<vmem>>, vector<32x512xf32>
    %cst_58 = arith.constant dense<0.000000e+00> : vector<2x512xf32>
    %159 = tpu.matmul %157, %158, %cst_58 {dimension_numbers = #tpu.dot_dimension_numbers<[1], [0], [0], [1], [0, 0, 1, 1], [], []>} : vector<2x32xf32>, vector<32x512xf32>, vector<2x512xf32> -> vector<2x512xf32>
    %c0_59 = arith.constant 0 : index
    %c0_60 = arith.constant 0 : index
    %160 = vector.load %arg6[%c0_59, %c0_60] : memref<32x512xf32, #tpu.memory_space<vmem>>, vector<32x512xf32>
    %cst_61 = arith.constant dense<0.000000e+00> : vector<2x512xf32>
    %161 = tpu.matmul %79, %160, %cst_61 {dimension_numbers = #tpu.dot_dimension_numbers<[1], [0], [0], [1], [0, 0, 1, 1], [], []>} : vector<2x32xf32>, vector<32x512xf32>, vector<2x512xf32> -> vector<2x512xf32>
    %162 = arith.addf %159, %161 : vector<2x512xf32>
    %163 = arith.addf %162, %5 : vector<2x512xf32>
    %164 = vector.extract_strided_slice %163 {offsets = [0, 0], sizes = [2, 128], strides = [1, 1]} : vector<2x512xf32> to vector<2x128xf32>
    %165 = arith.negf %164 : vector<2x128xf32>
    %166 = math.exp %165 : vector<2x128xf32>
    %cst_62 = arith.constant 1.000000e+00 : f32
    %167 = vector.broadcast %cst_62 : f32 to vector<2x128xf32>
    %168 = arith.addf %167, %166 : vector<2x128xf32>
    %169 = arith.divf %167, %168 : vector<2x128xf32>
    %170 = vector.extract_strided_slice %163 {offsets = [0, 128], sizes = [2, 128], strides = [1, 1]} : vector<2x512xf32> to vector<2x128xf32>
    %171 = arith.negf %170 : vector<2x128xf32>
    %172 = math.exp %171 : vector<2x128xf32>
    %cst_63 = arith.constant 1.000000e+00 : f32
    %173 = vector.broadcast %cst_63 : f32 to vector<2x128xf32>
    %174 = arith.addf %173, %172 : vector<2x128xf32>
    %175 = arith.divf %173, %174 : vector<2x128xf32>
    %176 = vector.extract_strided_slice %163 {offsets = [0, 256], sizes = [2, 128], strides = [1, 1]} : vector<2x512xf32> to vector<2x128xf32>
    %177 = vector.extract_strided_slice %163 {offsets = [0, 384], sizes = [2, 128], strides = [1, 1]} : vector<2x512xf32> to vector<2x128xf32>
    %178 = arith.mulf %169, %177 : vector<2x128xf32>
    %179 = arith.addf %176, %178 : vector<2x128xf32>
    %180 = math.tanh %179 : vector<2x128xf32>
    %181 = vector.extract_strided_slice %175 {offsets = [0, 0], sizes = [2, 32], strides = [1, 1]} : vector<2x128xf32> to vector<2x32xf32>
    %cst_64 = arith.constant 1.000000e+00 : f32
    %182 = vector.broadcast %cst_64 : f32 to vector<2x32xf32>
    %183 = arith.subf %182, %181 : vector<2x32xf32>
    %184 = vector.extract_strided_slice %180 {offsets = [0, 0], sizes = [2, 32], strides = [1, 1]} : vector<2x128xf32> to vector<2x32xf32>
    %185 = arith.mulf %183, %184 : vector<2x32xf32>
    %186 = vector.extract_strided_slice %175 {offsets = [0, 0], sizes = [2, 32], strides = [1, 1]} : vector<2x128xf32> to vector<2x32xf32>
    %187 = arith.mulf %186, %79 : vector<2x32xf32>
    %188 = arith.addf %185, %187 : vector<2x32xf32>
    %c0_65 = arith.constant 0 : index
    %c0_66 = arith.constant 0 : index
    %189 = vector.load %arg8[%c0_65, %c0_66] : memref<32x512xf32, #tpu.memory_space<vmem>>, vector<32x512xf32>
    %cst_67 = arith.constant dense<0.000000e+00> : vector<2x512xf32>
    %190 = tpu.matmul %188, %189, %cst_67 {dimension_numbers = #tpu.dot_dimension_numbers<[1], [0], [0], [1], [0, 0, 1, 1], [], []>} : vector<2x32xf32>, vector<32x512xf32>, vector<2x512xf32> -> vector<2x512xf32>
    %c0_68 = arith.constant 0 : index
    %c0_69 = arith.constant 0 : index
    %191 = vector.load %arg9[%c0_68, %c0_69] : memref<16x512xf32, #tpu.memory_space<vmem>>, vector<16x512xf32>
    %cst_70 = arith.constant dense<0.000000e+00> : vector<2x512xf32>
    %192 = tpu.matmul %110, %191, %cst_70 {dimension_numbers = #tpu.dot_dimension_numbers<[1], [0], [0], [1], [0, 0, 1, 1], [], []>} : vector<2x16xf32>, vector<16x512xf32>, vector<2x512xf32> -> vector<2x512xf32>
    %193 = arith.addf %190, %192 : vector<2x512xf32>
    %194 = arith.addf %193, %8 : vector<2x512xf32>
    %195 = vector.extract_strided_slice %194 {offsets = [0, 0], sizes = [2, 128], strides = [1, 1]} : vector<2x512xf32> to vector<2x128xf32>
    %196 = arith.negf %195 : vector<2x128xf32>
    %197 = math.exp %196 : vector<2x128xf32>
    %cst_71 = arith.constant 1.000000e+00 : f32
    %198 = vector.broadcast %cst_71 : f32 to vector<2x128xf32>
    %199 = arith.addf %198, %197 : vector<2x128xf32>
    %200 = arith.divf %198, %199 : vector<2x128xf32>
    %201 = vector.extract_strided_slice %194 {offsets = [0, 128], sizes = [2, 128], strides = [1, 1]} : vector<2x512xf32> to vector<2x128xf32>
    %202 = arith.negf %201 : vector<2x128xf32>
    %203 = math.exp %202 : vector<2x128xf32>
    %cst_72 = arith.constant 1.000000e+00 : f32
    %204 = vector.broadcast %cst_72 : f32 to vector<2x128xf32>
    %205 = arith.addf %204, %203 : vector<2x128xf32>
    %206 = arith.divf %204, %205 : vector<2x128xf32>
    %207 = vector.extract_strided_slice %194 {offsets = [0, 256], sizes = [2, 128], strides = [1, 1]} : vector<2x512xf32> to vector<2x128xf32>
    %208 = vector.extract_strided_slice %194 {offsets = [0, 384], sizes = [2, 128], strides = [1, 1]} : vector<2x512xf32> to vector<2x128xf32>
    %209 = arith.mulf %200, %208 : vector<2x128xf32>
    %210 = arith.addf %207, %209 : vector<2x128xf32>
    %211 = math.tanh %210 : vector<2x128xf32>
    %212 = vector.extract_strided_slice %206 {offsets = [0, 0], sizes = [2, 16], strides = [1, 1]} : vector<2x128xf32> to vector<2x16xf32>
    %cst_73 = arith.constant 1.000000e+00 : f32
    %213 = vector.broadcast %cst_73 : f32 to vector<2x16xf32>
    %214 = arith.subf %213, %212 : vector<2x16xf32>
    %215 = vector.extract_strided_slice %211 {offsets = [0, 0], sizes = [2, 16], strides = [1, 1]} : vector<2x128xf32> to vector<2x16xf32>
    %216 = arith.mulf %214, %215 : vector<2x16xf32>
    %217 = vector.extract_strided_slice %206 {offsets = [0, 0], sizes = [2, 16], strides = [1, 1]} : vector<2x128xf32> to vector<2x16xf32>
    %218 = arith.mulf %217, %110 : vector<2x16xf32>
    %219 = arith.addf %216, %218 : vector<2x16xf32>
    %c0_74 = arith.constant 0 : index
    %c0_75 = arith.constant 0 : index
    %220 = vector.load %arg11[%c0_74, %c0_75] : memref<16x16xf32, #tpu.memory_space<vmem>>, vector<16x16xf32>
    %cst_76 = arith.constant dense<0.000000e+00> : vector<2x16xf32>
    %221 = tpu.matmul %219, %220, %cst_76 {dimension_numbers = #tpu.dot_dimension_numbers<[1], [0], [0], [1], [0, 0, 1, 1], [], []>} : vector<2x16xf32>, vector<16x16xf32>, vector<2x16xf32> -> vector<2x16xf32>
    %222 = arith.addf %221, %11 : vector<2x16xf32>
    %cst_77 = arith.constant dense<0xFF800000> : vector<2xf32>
    %223 = vector.multi_reduction <maximumf>, %222, %cst_77 [1] : vector<2x16xf32> to vector<2xf32>
    %224 = vector.shape_cast %223 : vector<2xf32> to vector<2x1xf32>
    %225 = vector.broadcast %224 : vector<2x1xf32> to vector<2x16xf32>
    %226 = arith.subf %222, %225 : vector<2x16xf32>
    %227 = math.exp %226 : vector<2x16xf32>
    %cst_78 = arith.constant dense<0.000000e+00> : vector<2xf32>
    %228 = vector.multi_reduction <add>, %227, %cst_78 [1] : vector<2x16xf32> to vector<2xf32>
    %229 = vector.shape_cast %228 : vector<2xf32> to vector<2x1xf32>
    %230 = math.log %229 : vector<2x1xf32>
    %231 = vector.broadcast %230 : vector<2x1xf32> to vector<2x16xf32>
    %232 = arith.subf %226, %231 : vector<2x16xf32>
    %233 = arith.addf %124, %232 : vector<2x16xf32>
    %c2 = arith.constant 2 : index
    %c0_79 = arith.constant 0 : index
    %c0_80 = arith.constant 0 : index
    %234 = vector.load %arg1[%c2, %c0_79, %c0_80] : memref<8x2x16xf32, #tpu.memory_space<vmem>>, vector<1x2x16xf32>
    %235 = vector.shape_cast %234 : vector<1x2x16xf32> to vector<2x16xf32>
    %c0_81 = arith.constant 0 : index
    %c0_82 = arith.constant 0 : index
    %236 = vector.load %arg2[%c0_81, %c0_82] : memref<16x512xf32, #tpu.memory_space<vmem>>, vector<16x512xf32>
    %cst_83 = arith.constant dense<0.000000e+00> : vector<2x512xf32>
    %237 = tpu.matmul %235, %236, %cst_83 {dimension_numbers = #tpu.dot_dimension_numbers<[1], [0], [0], [1], [0, 0, 1, 1], [], []>} : vector<2x16xf32>, vector<16x512xf32>, vector<2x512xf32> -> vector<2x512xf32>
    %c0_84 = arith.constant 0 : index
    %c0_85 = arith.constant 0 : index
    %238 = vector.load %arg3[%c0_84, %c0_85] : memref<32x512xf32, #tpu.memory_space<vmem>>, vector<32x512xf32>
    %cst_86 = arith.constant dense<0.000000e+00> : vector<2x512xf32>
    %239 = tpu.matmul %157, %238, %cst_86 {dimension_numbers = #tpu.dot_dimension_numbers<[1], [0], [0], [1], [0, 0, 1, 1], [], []>} : vector<2x32xf32>, vector<32x512xf32>, vector<2x512xf32> -> vector<2x512xf32>
    %240 = arith.addf %237, %239 : vector<2x512xf32>
    %241 = arith.addf %240, %2 : vector<2x512xf32>
    %242 = vector.extract_strided_slice %241 {offsets = [0, 0], sizes = [2, 128], strides = [1, 1]} : vector<2x512xf32> to vector<2x128xf32>
    %243 = arith.negf %242 : vector<2x128xf32>
    %244 = math.exp %243 : vector<2x128xf32>
    %cst_87 = arith.constant 1.000000e+00 : f32
    %245 = vector.broadcast %cst_87 : f32 to vector<2x128xf32>
    %246 = arith.addf %245, %244 : vector<2x128xf32>
    %247 = arith.divf %245, %246 : vector<2x128xf32>
    %248 = vector.extract_strided_slice %241 {offsets = [0, 128], sizes = [2, 128], strides = [1, 1]} : vector<2x512xf32> to vector<2x128xf32>
    %249 = arith.negf %248 : vector<2x128xf32>
    %250 = math.exp %249 : vector<2x128xf32>
    %cst_88 = arith.constant 1.000000e+00 : f32
    %251 = vector.broadcast %cst_88 : f32 to vector<2x128xf32>
    %252 = arith.addf %251, %250 : vector<2x128xf32>
    %253 = arith.divf %251, %252 : vector<2x128xf32>
    %254 = vector.extract_strided_slice %241 {offsets = [0, 256], sizes = [2, 128], strides = [1, 1]} : vector<2x512xf32> to vector<2x128xf32>
    %255 = vector.extract_strided_slice %241 {offsets = [0, 384], sizes = [2, 128], strides = [1, 1]} : vector<2x512xf32> to vector<2x128xf32>
    %256 = arith.mulf %247, %255 : vector<2x128xf32>
    %257 = arith.addf %254, %256 : vector<2x128xf32>
    %258 = math.tanh %257 : vector<2x128xf32>
    %259 = vector.extract_strided_slice %253 {offsets = [0, 0], sizes = [2, 32], strides = [1, 1]} : vector<2x128xf32> to vector<2x32xf32>
    %cst_89 = arith.constant 1.000000e+00 : f32
    %260 = vector.broadcast %cst_89 : f32 to vector<2x32xf32>
    %261 = arith.subf %260, %259 : vector<2x32xf32>
    %262 = vector.extract_strided_slice %258 {offsets = [0, 0], sizes = [2, 32], strides = [1, 1]} : vector<2x128xf32> to vector<2x32xf32>
    %263 = arith.mulf %261, %262 : vector<2x32xf32>
    %264 = vector.extract_strided_slice %253 {offsets = [0, 0], sizes = [2, 32], strides = [1, 1]} : vector<2x128xf32> to vector<2x32xf32>
    %265 = arith.mulf %264, %157 : vector<2x32xf32>
    %266 = arith.addf %263, %265 : vector<2x32xf32>
    %c0_90 = arith.constant 0 : index
    %c0_91 = arith.constant 0 : index
    %267 = vector.load %arg5[%c0_90, %c0_91] : memref<32x512xf32, #tpu.memory_space<vmem>>, vector<32x512xf32>
    %cst_92 = arith.constant dense<0.000000e+00> : vector<2x512xf32>
    %268 = tpu.matmul %266, %267, %cst_92 {dimension_numbers = #tpu.dot_dimension_numbers<[1], [0], [0], [1], [0, 0, 1, 1], [], []>} : vector<2x32xf32>, vector<32x512xf32>, vector<2x512xf32> -> vector<2x512xf32>
    %c0_93 = arith.constant 0 : index
    %c0_94 = arith.constant 0 : index
    %269 = vector.load %arg6[%c0_93, %c0_94] : memref<32x512xf32, #tpu.memory_space<vmem>>, vector<32x512xf32>
    %cst_95 = arith.constant dense<0.000000e+00> : vector<2x512xf32>
    %270 = tpu.matmul %188, %269, %cst_95 {dimension_numbers = #tpu.dot_dimension_numbers<[1], [0], [0], [1], [0, 0, 1, 1], [], []>} : vector<2x32xf32>, vector<32x512xf32>, vector<2x512xf32> -> vector<2x512xf32>
    %271 = arith.addf %268, %270 : vector<2x512xf32>
    %272 = arith.addf %271, %5 : vector<2x512xf32>
    %273 = vector.extract_strided_slice %272 {offsets = [0, 0], sizes = [2, 128], strides = [1, 1]} : vector<2x512xf32> to vector<2x128xf32>
    %274 = arith.negf %273 : vector<2x128xf32>
    %275 = math.exp %274 : vector<2x128xf32>
    %cst_96 = arith.constant 1.000000e+00 : f32
    %276 = vector.broadcast %cst_96 : f32 to vector<2x128xf32>
    %277 = arith.addf %276, %275 : vector<2x128xf32>
    %278 = arith.divf %276, %277 : vector<2x128xf32>
    %279 = vector.extract_strided_slice %272 {offsets = [0, 128], sizes = [2, 128], strides = [1, 1]} : vector<2x512xf32> to vector<2x128xf32>
    %280 = arith.negf %279 : vector<2x128xf32>
    %281 = math.exp %280 : vector<2x128xf32>
    %cst_97 = arith.constant 1.000000e+00 : f32
    %282 = vector.broadcast %cst_97 : f32 to vector<2x128xf32>
    %283 = arith.addf %282, %281 : vector<2x128xf32>
    %284 = arith.divf %282, %283 : vector<2x128xf32>
    %285 = vector.extract_strided_slice %272 {offsets = [0, 256], sizes = [2, 128], strides = [1, 1]} : vector<2x512xf32> to vector<2x128xf32>
    %286 = vector.extract_strided_slice %272 {offsets = [0, 384], sizes = [2, 128], strides = [1, 1]} : vector<2x512xf32> to vector<2x128xf32>
    %287 = arith.mulf %278, %286 : vector<2x128xf32>
    %288 = arith.addf %285, %287 : vector<2x128xf32>
    %289 = math.tanh %288 : vector<2x128xf32>
    %290 = vector.extract_strided_slice %284 {offsets = [0, 0], sizes = [2, 32], strides = [1, 1]} : vector<2x128xf32> to vector<2x32xf32>
    %cst_98 = arith.constant 1.000000e+00 : f32
    %291 = vector.broadcast %cst_98 : f32 to vector<2x32xf32>
    %292 = arith.subf %291, %290 : vector<2x32xf32>
    %293 = vector.extract_strided_slice %289 {offsets = [0, 0], sizes = [2, 32], strides = [1, 1]} : vector<2x128xf32> to vector<2x32xf32>
    %294 = arith.mulf %292, %293 : vector<2x32xf32>
    %295 = vector.extract_strided_slice %284 {offsets = [0, 0], sizes = [2, 32], strides = [1, 1]} : vector<2x128xf32> to vector<2x32xf32>
    %296 = arith.mulf %295, %188 : vector<2x32xf32>
    %297 = arith.addf %294, %296 : vector<2x32xf32>
    %c0_99 = arith.constant 0 : index
    %c0_100 = arith.constant 0 : index
    %298 = vector.load %arg8[%c0_99, %c0_100] : memref<32x512xf32, #tpu.memory_space<vmem>>, vector<32x512xf32>
    %cst_101 = arith.constant dense<0.000000e+00> : vector<2x512xf32>
    %299 = tpu.matmul %297, %298, %cst_101 {dimension_numbers = #tpu.dot_dimension_numbers<[1], [0], [0], [1], [0, 0, 1, 1], [], []>} : vector<2x32xf32>, vector<32x512xf32>, vector<2x512xf32> -> vector<2x512xf32>
    %c0_102 = arith.constant 0 : index
    %c0_103 = arith.constant 0 : index
    %300 = vector.load %arg9[%c0_102, %c0_103] : memref<16x512xf32, #tpu.memory_space<vmem>>, vector<16x512xf32>
    %cst_104 = arith.constant dense<0.000000e+00> : vector<2x512xf32>
    %301 = tpu.matmul %219, %300, %cst_104 {dimension_numbers = #tpu.dot_dimension_numbers<[1], [0], [0], [1], [0, 0, 1, 1], [], []>} : vector<2x16xf32>, vector<16x512xf32>, vector<2x512xf32> -> vector<2x512xf32>
    %302 = arith.addf %299, %301 : vector<2x512xf32>
    %303 = arith.addf %302, %8 : vector<2x512xf32>
    %304 = vector.extract_strided_slice %303 {offsets = [0, 0], sizes = [2, 128], strides = [1, 1]} : vector<2x512xf32> to vector<2x128xf32>
    %305 = arith.negf %304 : vector<2x128xf32>
    %306 = math.exp %305 : vector<2x128xf32>
    %cst_105 = arith.constant 1.000000e+00 : f32
    %307 = vector.broadcast %cst_105 : f32 to vector<2x128xf32>
    %308 = arith.addf %307, %306 : vector<2x128xf32>
    %309 = arith.divf %307, %308 : vector<2x128xf32>
    %310 = vector.extract_strided_slice %303 {offsets = [0, 128], sizes = [2, 128], strides = [1, 1]} : vector<2x512xf32> to vector<2x128xf32>
    %311 = arith.negf %310 : vector<2x128xf32>
    %312 = math.exp %311 : vector<2x128xf32>
    %cst_106 = arith.constant 1.000000e+00 : f32
    %313 = vector.broadcast %cst_106 : f32 to vector<2x128xf32>
    %314 = arith.addf %313, %312 : vector<2x128xf32>
    %315 = arith.divf %313, %314 : vector<2x128xf32>
    %316 = vector.extract_strided_slice %303 {offsets = [0, 256], sizes = [2, 128], strides = [1, 1]} : vector<2x512xf32> to vector<2x128xf32>
    %317 = vector.extract_strided_slice %303 {offsets = [0, 384], sizes = [2, 128], strides = [1, 1]} : vector<2x512xf32> to vector<2x128xf32>
    %318 = arith.mulf %309, %317 : vector<2x128xf32>
    %319 = arith.addf %316, %318 : vector<2x128xf32>
    %320 = math.tanh %319 : vector<2x128xf32>
    %321 = vector.extract_strided_slice %315 {offsets = [0, 0], sizes = [2, 16], strides = [1, 1]} : vector<2x128xf32> to vector<2x16xf32>
    %cst_107 = arith.constant 1.000000e+00 : f32
    %322 = vector.broadcast %cst_107 : f32 to vector<2x16xf32>
    %323 = arith.subf %322, %321 : vector<2x16xf32>
    %324 = vector.extract_strided_slice %320 {offsets = [0, 0], sizes = [2, 16], strides = [1, 1]} : vector<2x128xf32> to vector<2x16xf32>
    %325 = arith.mulf %323, %324 : vector<2x16xf32>
    %326 = vector.extract_strided_slice %315 {offsets = [0, 0], sizes = [2, 16], strides = [1, 1]} : vector<2x128xf32> to vector<2x16xf32>
    %327 = arith.mulf %326, %219 : vector<2x16xf32>
    %328 = arith.addf %325, %327 : vector<2x16xf32>
    %c0_108 = arith.constant 0 : index
    %c0_109 = arith.constant 0 : index
    %329 = vector.load %arg11[%c0_108, %c0_109] : memref<16x16xf32, #tpu.memory_space<vmem>>, vector<16x16xf32>
    %cst_110 = arith.constant dense<0.000000e+00> : vector<2x16xf32>
    %330 = tpu.matmul %328, %329, %cst_110 {dimension_numbers = #tpu.dot_dimension_numbers<[1], [0], [0], [1], [0, 0, 1, 1], [], []>} : vector<2x16xf32>, vector<16x16xf32>, vector<2x16xf32> -> vector<2x16xf32>
    %331 = arith.addf %330, %11 : vector<2x16xf32>
    %cst_111 = arith.constant dense<0xFF800000> : vector<2xf32>
    %332 = vector.multi_reduction <maximumf>, %331, %cst_111 [1] : vector<2x16xf32> to vector<2xf32>
    %333 = vector.shape_cast %332 : vector<2xf32> to vector<2x1xf32>
    %334 = vector.broadcast %333 : vector<2x1xf32> to vector<2x16xf32>
    %335 = arith.subf %331, %334 : vector<2x16xf32>
    %336 = math.exp %335 : vector<2x16xf32>
    %cst_112 = arith.constant dense<0.000000e+00> : vector<2xf32>
    %337 = vector.multi_reduction <add>, %336, %cst_112 [1] : vector<2x16xf32> to vector<2xf32>
    %338 = vector.shape_cast %337 : vector<2xf32> to vector<2x1xf32>
    %339 = math.log %338 : vector<2x1xf32>
    %340 = vector.broadcast %339 : vector<2x1xf32> to vector<2x16xf32>
    %341 = arith.subf %335, %340 : vector<2x16xf32>
    %342 = arith.addf %233, %341 : vector<2x16xf32>
    %c3 = arith.constant 3 : index
    %c0_113 = arith.constant 0 : index
    %c0_114 = arith.constant 0 : index
    %343 = vector.load %arg1[%c3, %c0_113, %c0_114] : memref<8x2x16xf32, #tpu.memory_space<vmem>>, vector<1x2x16xf32>
    %344 = vector.shape_cast %343 : vector<1x2x16xf32> to vector<2x16xf32>
    %c0_115 = arith.constant 0 : index
    %c0_116 = arith.constant 0 : index
    %345 = vector.load %arg2[%c0_115, %c0_116] : memref<16x512xf32, #tpu.memory_space<vmem>>, vector<16x512xf32>
    %cst_117 = arith.constant dense<0.000000e+00> : vector<2x512xf32>
    %346 = tpu.matmul %344, %345, %cst_117 {dimension_numbers = #tpu.dot_dimension_numbers<[1], [0], [0], [1], [0, 0, 1, 1], [], []>} : vector<2x16xf32>, vector<16x512xf32>, vector<2x512xf32> -> vector<2x512xf32>
    %c0_118 = arith.constant 0 : index
    %c0_119 = arith.constant 0 : index
    %347 = vector.load %arg3[%c0_118, %c0_119] : memref<32x512xf32, #tpu.memory_space<vmem>>, vector<32x512xf32>
    %cst_120 = arith.constant dense<0.000000e+00> : vector<2x512xf32>
    %348 = tpu.matmul %266, %347, %cst_120 {dimension_numbers = #tpu.dot_dimension_numbers<[1], [0], [0], [1], [0, 0, 1, 1], [], []>} : vector<2x32xf32>, vector<32x512xf32>, vector<2x512xf32> -> vector<2x512xf32>
    %349 = arith.addf %346, %348 : vector<2x512xf32>
    %350 = arith.addf %349, %2 : vector<2x512xf32>
    %351 = vector.extract_strided_slice %350 {offsets = [0, 0], sizes = [2, 128], strides = [1, 1]} : vector<2x512xf32> to vector<2x128xf32>
    %352 = arith.negf %351 : vector<2x128xf32>
    %353 = math.exp %352 : vector<2x128xf32>
    %cst_121 = arith.constant 1.000000e+00 : f32
    %354 = vector.broadcast %cst_121 : f32 to vector<2x128xf32>
    %355 = arith.addf %354, %353 : vector<2x128xf32>
    %356 = arith.divf %354, %355 : vector<2x128xf32>
    %357 = vector.extract_strided_slice %350 {offsets = [0, 128], sizes = [2, 128], strides = [1, 1]} : vector<2x512xf32> to vector<2x128xf32>
    %358 = arith.negf %357 : vector<2x128xf32>
    %359 = math.exp %358 : vector<2x128xf32>
    %cst_122 = arith.constant 1.000000e+00 : f32
    %360 = vector.broadcast %cst_122 : f32 to vector<2x128xf32>
    %361 = arith.addf %360, %359 : vector<2x128xf32>
    %362 = arith.divf %360, %361 : vector<2x128xf32>
    %363 = vector.extract_strided_slice %350 {offsets = [0, 256], sizes = [2, 128], strides = [1, 1]} : vector<2x512xf32> to vector<2x128xf32>
    %364 = vector.extract_strided_slice %350 {offsets = [0, 384], sizes = [2, 128], strides = [1, 1]} : vector<2x512xf32> to vector<2x128xf32>
    %365 = arith.mulf %356, %364 : vector<2x128xf32>
    %366 = arith.addf %363, %365 : vector<2x128xf32>
    %367 = math.tanh %366 : vector<2x128xf32>
    %368 = vector.extract_strided_slice %362 {offsets = [0, 0], sizes = [2, 32], strides = [1, 1]} : vector<2x128xf32> to vector<2x32xf32>
    %cst_123 = arith.constant 1.000000e+00 : f32
    %369 = vector.broadcast %cst_123 : f32 to vector<2x32xf32>
    %370 = arith.subf %369, %368 : vector<2x32xf32>
    %371 = vector.extract_strided_slice %367 {offsets = [0, 0], sizes = [2, 32], strides = [1, 1]} : vector<2x128xf32> to vector<2x32xf32>
    %372 = arith.mulf %370, %371 : vector<2x32xf32>
    %373 = vector.extract_strided_slice %362 {offsets = [0, 0], sizes = [2, 32], strides = [1, 1]} : vector<2x128xf32> to vector<2x32xf32>
    %374 = arith.mulf %373, %266 : vector<2x32xf32>
    %375 = arith.addf %372, %374 : vector<2x32xf32>
    %c0_124 = arith.constant 0 : index
    %c0_125 = arith.constant 0 : index
    %376 = vector.load %arg5[%c0_124, %c0_125] : memref<32x512xf32, #tpu.memory_space<vmem>>, vector<32x512xf32>
    %cst_126 = arith.constant dense<0.000000e+00> : vector<2x512xf32>
    %377 = tpu.matmul %375, %376, %cst_126 {dimension_numbers = #tpu.dot_dimension_numbers<[1], [0], [0], [1], [0, 0, 1, 1], [], []>} : vector<2x32xf32>, vector<32x512xf32>, vector<2x512xf32> -> vector<2x512xf32>
    %c0_127 = arith.constant 0 : index
    %c0_128 = arith.constant 0 : index
    %378 = vector.load %arg6[%c0_127, %c0_128] : memref<32x512xf32, #tpu.memory_space<vmem>>, vector<32x512xf32>
    %cst_129 = arith.constant dense<0.000000e+00> : vector<2x512xf32>
    %379 = tpu.matmul %297, %378, %cst_129 {dimension_numbers = #tpu.dot_dimension_numbers<[1], [0], [0], [1], [0, 0, 1, 1], [], []>} : vector<2x32xf32>, vector<32x512xf32>, vector<2x512xf32> -> vector<2x512xf32>
    %380 = arith.addf %377, %379 : vector<2x512xf32>
    %381 = arith.addf %380, %5 : vector<2x512xf32>
    %382 = vector.extract_strided_slice %381 {offsets = [0, 0], sizes = [2, 128], strides = [1, 1]} : vector<2x512xf32> to vector<2x128xf32>
    %383 = arith.negf %382 : vector<2x128xf32>
    %384 = math.exp %383 : vector<2x128xf32>
    %cst_130 = arith.constant 1.000000e+00 : f32
    %385 = vector.broadcast %cst_130 : f32 to vector<2x128xf32>
    %386 = arith.addf %385, %384 : vector<2x128xf32>
    %387 = arith.divf %385, %386 : vector<2x128xf32>
    %388 = vector.extract_strided_slice %381 {offsets = [0, 128], sizes = [2, 128], strides = [1, 1]} : vector<2x512xf32> to vector<2x128xf32>
    %389 = arith.negf %388 : vector<2x128xf32>
    %390 = math.exp %389 : vector<2x128xf32>
    %cst_131 = arith.constant 1.000000e+00 : f32
    %391 = vector.broadcast %cst_131 : f32 to vector<2x128xf32>
    %392 = arith.addf %391, %390 : vector<2x128xf32>
    %393 = arith.divf %391, %392 : vector<2x128xf32>
    %394 = vector.extract_strided_slice %381 {offsets = [0, 256], sizes = [2, 128], strides = [1, 1]} : vector<2x512xf32> to vector<2x128xf32>
    %395 = vector.extract_strided_slice %381 {offsets = [0, 384], sizes = [2, 128], strides = [1, 1]} : vector<2x512xf32> to vector<2x128xf32>
    %396 = arith.mulf %387, %395 : vector<2x128xf32>
    %397 = arith.addf %394, %396 : vector<2x128xf32>
    %398 = math.tanh %397 : vector<2x128xf32>
    %399 = vector.extract_strided_slice %393 {offsets = [0, 0], sizes = [2, 32], strides = [1, 1]} : vector<2x128xf32> to vector<2x32xf32>
    %cst_132 = arith.constant 1.000000e+00 : f32
    %400 = vector.broadcast %cst_132 : f32 to vector<2x32xf32>
    %401 = arith.subf %400, %399 : vector<2x32xf32>
    %402 = vector.extract_strided_slice %398 {offsets = [0, 0], sizes = [2, 32], strides = [1, 1]} : vector<2x128xf32> to vector<2x32xf32>
    %403 = arith.mulf %401, %402 : vector<2x32xf32>
    %404 = vector.extract_strided_slice %393 {offsets = [0, 0], sizes = [2, 32], strides = [1, 1]} : vector<2x128xf32> to vector<2x32xf32>
    %405 = arith.mulf %404, %297 : vector<2x32xf32>
    %406 = arith.addf %403, %405 : vector<2x32xf32>
    %c0_133 = arith.constant 0 : index
    %c0_134 = arith.constant 0 : index
    %407 = vector.load %arg8[%c0_133, %c0_134] : memref<32x512xf32, #tpu.memory_space<vmem>>, vector<32x512xf32>
    %cst_135 = arith.constant dense<0.000000e+00> : vector<2x512xf32>
    %408 = tpu.matmul %406, %407, %cst_135 {dimension_numbers = #tpu.dot_dimension_numbers<[1], [0], [0], [1], [0, 0, 1, 1], [], []>} : vector<2x32xf32>, vector<32x512xf32>, vector<2x512xf32> -> vector<2x512xf32>
    %c0_136 = arith.constant 0 : index
    %c0_137 = arith.constant 0 : index
    %409 = vector.load %arg9[%c0_136, %c0_137] : memref<16x512xf32, #tpu.memory_space<vmem>>, vector<16x512xf32>
    %cst_138 = arith.constant dense<0.000000e+00> : vector<2x512xf32>
    %410 = tpu.matmul %328, %409, %cst_138 {dimension_numbers = #tpu.dot_dimension_numbers<[1], [0], [0], [1], [0, 0, 1, 1], [], []>} : vector<2x16xf32>, vector<16x512xf32>, vector<2x512xf32> -> vector<2x512xf32>
    %411 = arith.addf %408, %410 : vector<2x512xf32>
    %412 = arith.addf %411, %8 : vector<2x512xf32>
    %413 = vector.extract_strided_slice %412 {offsets = [0, 0], sizes = [2, 128], strides = [1, 1]} : vector<2x512xf32> to vector<2x128xf32>
    %414 = arith.negf %413 : vector<2x128xf32>
    %415 = math.exp %414 : vector<2x128xf32>
    %cst_139 = arith.constant 1.000000e+00 : f32
    %416 = vector.broadcast %cst_139 : f32 to vector<2x128xf32>
    %417 = arith.addf %416, %415 : vector<2x128xf32>
    %418 = arith.divf %416, %417 : vector<2x128xf32>
    %419 = vector.extract_strided_slice %412 {offsets = [0, 128], sizes = [2, 128], strides = [1, 1]} : vector<2x512xf32> to vector<2x128xf32>
    %420 = arith.negf %419 : vector<2x128xf32>
    %421 = math.exp %420 : vector<2x128xf32>
    %cst_140 = arith.constant 1.000000e+00 : f32
    %422 = vector.broadcast %cst_140 : f32 to vector<2x128xf32>
    %423 = arith.addf %422, %421 : vector<2x128xf32>
    %424 = arith.divf %422, %423 : vector<2x128xf32>
    %425 = vector.extract_strided_slice %412 {offsets = [0, 256], sizes = [2, 128], strides = [1, 1]} : vector<2x512xf32> to vector<2x128xf32>
    %426 = vector.extract_strided_slice %412 {offsets = [0, 384], sizes = [2, 128], strides = [1, 1]} : vector<2x512xf32> to vector<2x128xf32>
    %427 = arith.mulf %418, %426 : vector<2x128xf32>
    %428 = arith.addf %425, %427 : vector<2x128xf32>
    %429 = math.tanh %428 : vector<2x128xf32>
    %430 = vector.extract_strided_slice %424 {offsets = [0, 0], sizes = [2, 16], strides = [1, 1]} : vector<2x128xf32> to vector<2x16xf32>
    %cst_141 = arith.constant 1.000000e+00 : f32
    %431 = vector.broadcast %cst_141 : f32 to vector<2x16xf32>
    %432 = arith.subf %431, %430 : vector<2x16xf32>
    %433 = vector.extract_strided_slice %429 {offsets = [0, 0], sizes = [2, 16], strides = [1, 1]} : vector<2x128xf32> to vector<2x16xf32>
    %434 = arith.mulf %432, %433 : vector<2x16xf32>
    %435 = vector.extract_strided_slice %424 {offsets = [0, 0], sizes = [2, 16], strides = [1, 1]} : vector<2x128xf32> to vector<2x16xf32>
    %436 = arith.mulf %435, %328 : vector<2x16xf32>
    %437 = arith.addf %434, %436 : vector<2x16xf32>
    %c0_142 = arith.constant 0 : index
    %c0_143 = arith.constant 0 : index
    %438 = vector.load %arg11[%c0_142, %c0_143] : memref<16x16xf32, #tpu.memory_space<vmem>>, vector<16x16xf32>
    %cst_144 = arith.constant dense<0.000000e+00> : vector<2x16xf32>
    %439 = tpu.matmul %437, %438, %cst_144 {dimension_numbers = #tpu.dot_dimension_numbers<[1], [0], [0], [1], [0, 0, 1, 1], [], []>} : vector<2x16xf32>, vector<16x16xf32>, vector<2x16xf32> -> vector<2x16xf32>
    %440 = arith.addf %439, %11 : vector<2x16xf32>
    %cst_145 = arith.constant dense<0xFF800000> : vector<2xf32>
    %441 = vector.multi_reduction <maximumf>, %440, %cst_145 [1] : vector<2x16xf32> to vector<2xf32>
    %442 = vector.shape_cast %441 : vector<2xf32> to vector<2x1xf32>
    %443 = vector.broadcast %442 : vector<2x1xf32> to vector<2x16xf32>
    %444 = arith.subf %440, %443 : vector<2x16xf32>
    %445 = math.exp %444 : vector<2x16xf32>
    %cst_146 = arith.constant dense<0.000000e+00> : vector<2xf32>
    %446 = vector.multi_reduction <add>, %445, %cst_146 [1] : vector<2x16xf32> to vector<2xf32>
    %447 = vector.shape_cast %446 : vector<2xf32> to vector<2x1xf32>
    %448 = math.log %447 : vector<2x1xf32>
    %449 = vector.broadcast %448 : vector<2x1xf32> to vector<2x16xf32>
    %450 = arith.subf %444, %449 : vector<2x16xf32>
    %451 = arith.addf %342, %450 : vector<2x16xf32>
    %c4 = arith.constant 4 : index
    %c0_147 = arith.constant 0 : index
    %c0_148 = arith.constant 0 : index
    %452 = vector.load %arg1[%c4, %c0_147, %c0_148] : memref<8x2x16xf32, #tpu.memory_space<vmem>>, vector<1x2x16xf32>
    %453 = vector.shape_cast %452 : vector<1x2x16xf32> to vector<2x16xf32>
    %c0_149 = arith.constant 0 : index
    %c0_150 = arith.constant 0 : index
    %454 = vector.load %arg2[%c0_149, %c0_150] : memref<16x512xf32, #tpu.memory_space<vmem>>, vector<16x512xf32>
    %cst_151 = arith.constant dense<0.000000e+00> : vector<2x512xf32>
    %455 = tpu.matmul %453, %454, %cst_151 {dimension_numbers = #tpu.dot_dimension_numbers<[1], [0], [0], [1], [0, 0, 1, 1], [], []>} : vector<2x16xf32>, vector<16x512xf32>, vector<2x512xf32> -> vector<2x512xf32>
    %c0_152 = arith.constant 0 : index
    %c0_153 = arith.constant 0 : index
    %456 = vector.load %arg3[%c0_152, %c0_153] : memref<32x512xf32, #tpu.memory_space<vmem>>, vector<32x512xf32>
    %cst_154 = arith.constant dense<0.000000e+00> : vector<2x512xf32>
    %457 = tpu.matmul %375, %456, %cst_154 {dimension_numbers = #tpu.dot_dimension_numbers<[1], [0], [0], [1], [0, 0, 1, 1], [], []>} : vector<2x32xf32>, vector<32x512xf32>, vector<2x512xf32> -> vector<2x512xf32>
    %458 = arith.addf %455, %457 : vector<2x512xf32>
    %459 = arith.addf %458, %2 : vector<2x512xf32>
    %460 = vector.extract_strided_slice %459 {offsets = [0, 0], sizes = [2, 128], strides = [1, 1]} : vector<2x512xf32> to vector<2x128xf32>
    %461 = arith.negf %460 : vector<2x128xf32>
    %462 = math.exp %461 : vector<2x128xf32>
    %cst_155 = arith.constant 1.000000e+00 : f32
    %463 = vector.broadcast %cst_155 : f32 to vector<2x128xf32>
    %464 = arith.addf %463, %462 : vector<2x128xf32>
    %465 = arith.divf %463, %464 : vector<2x128xf32>
    %466 = vector.extract_strided_slice %459 {offsets = [0, 128], sizes = [2, 128], strides = [1, 1]} : vector<2x512xf32> to vector<2x128xf32>
    %467 = arith.negf %466 : vector<2x128xf32>
    %468 = math.exp %467 : vector<2x128xf32>
    %cst_156 = arith.constant 1.000000e+00 : f32
    %469 = vector.broadcast %cst_156 : f32 to vector<2x128xf32>
    %470 = arith.addf %469, %468 : vector<2x128xf32>
    %471 = arith.divf %469, %470 : vector<2x128xf32>
    %472 = vector.extract_strided_slice %459 {offsets = [0, 256], sizes = [2, 128], strides = [1, 1]} : vector<2x512xf32> to vector<2x128xf32>
    %473 = vector.extract_strided_slice %459 {offsets = [0, 384], sizes = [2, 128], strides = [1, 1]} : vector<2x512xf32> to vector<2x128xf32>
    %474 = arith.mulf %465, %473 : vector<2x128xf32>
    %475 = arith.addf %472, %474 : vector<2x128xf32>
    %476 = math.tanh %475 : vector<2x128xf32>
    %477 = vector.extract_strided_slice %471 {offsets = [0, 0], sizes = [2, 32], strides = [1, 1]} : vector<2x128xf32> to vector<2x32xf32>
    %cst_157 = arith.constant 1.000000e+00 : f32
    %478 = vector.broadcast %cst_157 : f32 to vector<2x32xf32>
    %479 = arith.subf %478, %477 : vector<2x32xf32>
    %480 = vector.extract_strided_slice %476 {offsets = [0, 0], sizes = [2, 32], strides = [1, 1]} : vector<2x128xf32> to vector<2x32xf32>
    %481 = arith.mulf %479, %480 : vector<2x32xf32>
    %482 = vector.extract_strided_slice %471 {offsets = [0, 0], sizes = [2, 32], strides = [1, 1]} : vector<2x128xf32> to vector<2x32xf32>
    %483 = arith.mulf %482, %375 : vector<2x32xf32>
    %484 = arith.addf %481, %483 : vector<2x32xf32>
    %c0_158 = arith.constant 0 : index
    %c0_159 = arith.constant 0 : index
    %485 = vector.load %arg5[%c0_158, %c0_159] : memref<32x512xf32, #tpu.memory_space<vmem>>, vector<32x512xf32>
    %cst_160 = arith.constant dense<0.000000e+00> : vector<2x512xf32>
    %486 = tpu.matmul %484, %485, %cst_160 {dimension_numbers = #tpu.dot_dimension_numbers<[1], [0], [0], [1], [0, 0, 1, 1], [], []>} : vector<2x32xf32>, vector<32x512xf32>, vector<2x512xf32> -> vector<2x512xf32>
    %c0_161 = arith.constant 0 : index
    %c0_162 = arith.constant 0 : index
    %487 = vector.load %arg6[%c0_161, %c0_162] : memref<32x512xf32, #tpu.memory_space<vmem>>, vector<32x512xf32>
    %cst_163 = arith.constant dense<0.000000e+00> : vector<2x512xf32>
    %488 = tpu.matmul %406, %487, %cst_163 {dimension_numbers = #tpu.dot_dimension_numbers<[1], [0], [0], [1], [0, 0, 1, 1], [], []>} : vector<2x32xf32>, vector<32x512xf32>, vector<2x512xf32> -> vector<2x512xf32>
    %489 = arith.addf %486, %488 : vector<2x512xf32>
    %490 = arith.addf %489, %5 : vector<2x512xf32>
    %491 = vector.extract_strided_slice %490 {offsets = [0, 0], sizes = [2, 128], strides = [1, 1]} : vector<2x512xf32> to vector<2x128xf32>
    %492 = arith.negf %491 : vector<2x128xf32>
    %493 = math.exp %492 : vector<2x128xf32>
    %cst_164 = arith.constant 1.000000e+00 : f32
    %494 = vector.broadcast %cst_164 : f32 to vector<2x128xf32>
    %495 = arith.addf %494, %493 : vector<2x128xf32>
    %496 = arith.divf %494, %495 : vector<2x128xf32>
    %497 = vector.extract_strided_slice %490 {offsets = [0, 128], sizes = [2, 128], strides = [1, 1]} : vector<2x512xf32> to vector<2x128xf32>
    %498 = arith.negf %497 : vector<2x128xf32>
    %499 = math.exp %498 : vector<2x128xf32>
    %cst_165 = arith.constant 1.000000e+00 : f32
    %500 = vector.broadcast %cst_165 : f32 to vector<2x128xf32>
    %501 = arith.addf %500, %499 : vector<2x128xf32>
    %502 = arith.divf %500, %501 : vector<2x128xf32>
    %503 = vector.extract_strided_slice %490 {offsets = [0, 256], sizes = [2, 128], strides = [1, 1]} : vector<2x512xf32> to vector<2x128xf32>
    %504 = vector.extract_strided_slice %490 {offsets = [0, 384], sizes = [2, 128], strides = [1, 1]} : vector<2x512xf32> to vector<2x128xf32>
    %505 = arith.mulf %496, %504 : vector<2x128xf32>
    %506 = arith.addf %503, %505 : vector<2x128xf32>
    %507 = math.tanh %506 : vector<2x128xf32>
    %508 = vector.extract_strided_slice %502 {offsets = [0, 0], sizes = [2, 32], strides = [1, 1]} : vector<2x128xf32> to vector<2x32xf32>
    %cst_166 = arith.constant 1.000000e+00 : f32
    %509 = vector.broadcast %cst_166 : f32 to vector<2x32xf32>
    %510 = arith.subf %509, %508 : vector<2x32xf32>
    %511 = vector.extract_strided_slice %507 {offsets = [0, 0], sizes = [2, 32], strides = [1, 1]} : vector<2x128xf32> to vector<2x32xf32>
    %512 = arith.mulf %510, %511 : vector<2x32xf32>
    %513 = vector.extract_strided_slice %502 {offsets = [0, 0], sizes = [2, 32], strides = [1, 1]} : vector<2x128xf32> to vector<2x32xf32>
    %514 = arith.mulf %513, %406 : vector<2x32xf32>
    %515 = arith.addf %512, %514 : vector<2x32xf32>
    %c0_167 = arith.constant 0 : index
    %c0_168 = arith.constant 0 : index
    %516 = vector.load %arg8[%c0_167, %c0_168] : memref<32x512xf32, #tpu.memory_space<vmem>>, vector<32x512xf32>
    %cst_169 = arith.constant dense<0.000000e+00> : vector<2x512xf32>
    %517 = tpu.matmul %515, %516, %cst_169 {dimension_numbers = #tpu.dot_dimension_numbers<[1], [0], [0], [1], [0, 0, 1, 1], [], []>} : vector<2x32xf32>, vector<32x512xf32>, vector<2x512xf32> -> vector<2x512xf32>
    %c0_170 = arith.constant 0 : index
    %c0_171 = arith.constant 0 : index
    %518 = vector.load %arg9[%c0_170, %c0_171] : memref<16x512xf32, #tpu.memory_space<vmem>>, vector<16x512xf32>
    %cst_172 = arith.constant dense<0.000000e+00> : vector<2x512xf32>
    %519 = tpu.matmul %437, %518, %cst_172 {dimension_numbers = #tpu.dot_dimension_numbers<[1], [0], [0], [1], [0, 0, 1, 1], [], []>} : vector<2x16xf32>, vector<16x512xf32>, vector<2x512xf32> -> vector<2x512xf32>
    %520 = arith.addf %517, %519 : vector<2x512xf32>
    %521 = arith.addf %520, %8 : vector<2x512xf32>
    %522 = vector.extract_strided_slice %521 {offsets = [0, 0], sizes = [2, 128], strides = [1, 1]} : vector<2x512xf32> to vector<2x128xf32>
    %523 = arith.negf %522 : vector<2x128xf32>
    %524 = math.exp %523 : vector<2x128xf32>
    %cst_173 = arith.constant 1.000000e+00 : f32
    %525 = vector.broadcast %cst_173 : f32 to vector<2x128xf32>
    %526 = arith.addf %525, %524 : vector<2x128xf32>
    %527 = arith.divf %525, %526 : vector<2x128xf32>
    %528 = vector.extract_strided_slice %521 {offsets = [0, 128], sizes = [2, 128], strides = [1, 1]} : vector<2x512xf32> to vector<2x128xf32>
    %529 = arith.negf %528 : vector<2x128xf32>
    %530 = math.exp %529 : vector<2x128xf32>
    %cst_174 = arith.constant 1.000000e+00 : f32
    %531 = vector.broadcast %cst_174 : f32 to vector<2x128xf32>
    %532 = arith.addf %531, %530 : vector<2x128xf32>
    %533 = arith.divf %531, %532 : vector<2x128xf32>
    %534 = vector.extract_strided_slice %521 {offsets = [0, 256], sizes = [2, 128], strides = [1, 1]} : vector<2x512xf32> to vector<2x128xf32>
    %535 = vector.extract_strided_slice %521 {offsets = [0, 384], sizes = [2, 128], strides = [1, 1]} : vector<2x512xf32> to vector<2x128xf32>
    %536 = arith.mulf %527, %535 : vector<2x128xf32>
    %537 = arith.addf %534, %536 : vector<2x128xf32>
    %538 = math.tanh %537 : vector<2x128xf32>
    %539 = vector.extract_strided_slice %533 {offsets = [0, 0], sizes = [2, 16], strides = [1, 1]} : vector<2x128xf32> to vector<2x16xf32>
    %cst_175 = arith.constant 1.000000e+00 : f32
    %540 = vector.broadcast %cst_175 : f32 to vector<2x16xf32>
    %541 = arith.subf %540, %539 : vector<2x16xf32>
    %542 = vector.extract_strided_slice %538 {offsets = [0, 0], sizes = [2, 16], strides = [1, 1]} : vector<2x128xf32> to vector<2x16xf32>
    %543 = arith.mulf %541, %542 : vector<2x16xf32>
    %544 = vector.extract_strided_slice %533 {offsets = [0, 0], sizes = [2, 16], strides = [1, 1]} : vector<2x128xf32> to vector<2x16xf32>
    %545 = arith.mulf %544, %437 : vector<2x16xf32>
    %546 = arith.addf %543, %545 : vector<2x16xf32>
    %c0_176 = arith.constant 0 : index
    %c0_177 = arith.constant 0 : index
    %547 = vector.load %arg11[%c0_176, %c0_177] : memref<16x16xf32, #tpu.memory_space<vmem>>, vector<16x16xf32>
    %cst_178 = arith.constant dense<0.000000e+00> : vector<2x16xf32>
    %548 = tpu.matmul %546, %547, %cst_178 {dimension_numbers = #tpu.dot_dimension_numbers<[1], [0], [0], [1], [0, 0, 1, 1], [], []>} : vector<2x16xf32>, vector<16x16xf32>, vector<2x16xf32> -> vector<2x16xf32>
    %549 = arith.addf %548, %11 : vector<2x16xf32>
    %cst_179 = arith.constant dense<0xFF800000> : vector<2xf32>
    %550 = vector.multi_reduction <maximumf>, %549, %cst_179 [1] : vector<2x16xf32> to vector<2xf32>
    %551 = vector.shape_cast %550 : vector<2xf32> to vector<2x1xf32>
    %552 = vector.broadcast %551 : vector<2x1xf32> to vector<2x16xf32>
    %553 = arith.subf %549, %552 : vector<2x16xf32>
    %554 = math.exp %553 : vector<2x16xf32>
    %cst_180 = arith.constant dense<0.000000e+00> : vector<2xf32>
    %555 = vector.multi_reduction <add>, %554, %cst_180 [1] : vector<2x16xf32> to vector<2xf32>
    %556 = vector.shape_cast %555 : vector<2xf32> to vector<2x1xf32>
    %557 = math.log %556 : vector<2x1xf32>
    %558 = vector.broadcast %557 : vector<2x1xf32> to vector<2x16xf32>
    %559 = arith.subf %553, %558 : vector<2x16xf32>
    %560 = arith.addf %451, %559 : vector<2x16xf32>
    %c5 = arith.constant 5 : index
    %c0_181 = arith.constant 0 : index
    %c0_182 = arith.constant 0 : index
    %561 = vector.load %arg1[%c5, %c0_181, %c0_182] : memref<8x2x16xf32, #tpu.memory_space<vmem>>, vector<1x2x16xf32>
    %562 = vector.shape_cast %561 : vector<1x2x16xf32> to vector<2x16xf32>
    %c0_183 = arith.constant 0 : index
    %c0_184 = arith.constant 0 : index
    %563 = vector.load %arg2[%c0_183, %c0_184] : memref<16x512xf32, #tpu.memory_space<vmem>>, vector<16x512xf32>
    %cst_185 = arith.constant dense<0.000000e+00> : vector<2x512xf32>
    %564 = tpu.matmul %562, %563, %cst_185 {dimension_numbers = #tpu.dot_dimension_numbers<[1], [0], [0], [1], [0, 0, 1, 1], [], []>} : vector<2x16xf32>, vector<16x512xf32>, vector<2x512xf32> -> vector<2x512xf32>
    %c0_186 = arith.constant 0 : index
    %c0_187 = arith.constant 0 : index
    %565 = vector.load %arg3[%c0_186, %c0_187] : memref<32x512xf32, #tpu.memory_space<vmem>>, vector<32x512xf32>
    %cst_188 = arith.constant dense<0.000000e+00> : vector<2x512xf32>
    %566 = tpu.matmul %484, %565, %cst_188 {dimension_numbers = #tpu.dot_dimension_numbers<[1], [0], [0], [1], [0, 0, 1, 1], [], []>} : vector<2x32xf32>, vector<32x512xf32>, vector<2x512xf32> -> vector<2x512xf32>
    %567 = arith.addf %564, %566 : vector<2x512xf32>
    %568 = arith.addf %567, %2 : vector<2x512xf32>
    %569 = vector.extract_strided_slice %568 {offsets = [0, 0], sizes = [2, 128], strides = [1, 1]} : vector<2x512xf32> to vector<2x128xf32>
    %570 = arith.negf %569 : vector<2x128xf32>
    %571 = math.exp %570 : vector<2x128xf32>
    %cst_189 = arith.constant 1.000000e+00 : f32
    %572 = vector.broadcast %cst_189 : f32 to vector<2x128xf32>
    %573 = arith.addf %572, %571 : vector<2x128xf32>
    %574 = arith.divf %572, %573 : vector<2x128xf32>
    %575 = vector.extract_strided_slice %568 {offsets = [0, 128], sizes = [2, 128], strides = [1, 1]} : vector<2x512xf32> to vector<2x128xf32>
    %576 = arith.negf %575 : vector<2x128xf32>
    %577 = math.exp %576 : vector<2x128xf32>
    %cst_190 = arith.constant 1.000000e+00 : f32
    %578 = vector.broadcast %cst_190 : f32 to vector<2x128xf32>
    %579 = arith.addf %578, %577 : vector<2x128xf32>
    %580 = arith.divf %578, %579 : vector<2x128xf32>
    %581 = vector.extract_strided_slice %568 {offsets = [0, 256], sizes = [2, 128], strides = [1, 1]} : vector<2x512xf32> to vector<2x128xf32>
    %582 = vector.extract_strided_slice %568 {offsets = [0, 384], sizes = [2, 128], strides = [1, 1]} : vector<2x512xf32> to vector<2x128xf32>
    %583 = arith.mulf %574, %582 : vector<2x128xf32>
    %584 = arith.addf %581, %583 : vector<2x128xf32>
    %585 = math.tanh %584 : vector<2x128xf32>
    %586 = vector.extract_strided_slice %580 {offsets = [0, 0], sizes = [2, 32], strides = [1, 1]} : vector<2x128xf32> to vector<2x32xf32>
    %cst_191 = arith.constant 1.000000e+00 : f32
    %587 = vector.broadcast %cst_191 : f32 to vector<2x32xf32>
    %588 = arith.subf %587, %586 : vector<2x32xf32>
    %589 = vector.extract_strided_slice %585 {offsets = [0, 0], sizes = [2, 32], strides = [1, 1]} : vector<2x128xf32> to vector<2x32xf32>
    %590 = arith.mulf %588, %589 : vector<2x32xf32>
    %591 = vector.extract_strided_slice %580 {offsets = [0, 0], sizes = [2, 32], strides = [1, 1]} : vector<2x128xf32> to vector<2x32xf32>
    %592 = arith.mulf %591, %484 : vector<2x32xf32>
    %593 = arith.addf %590, %592 : vector<2x32xf32>
    %c0_192 = arith.constant 0 : index
    %c0_193 = arith.constant 0 : index
    %594 = vector.load %arg5[%c0_192, %c0_193] : memref<32x512xf32, #tpu.memory_space<vmem>>, vector<32x512xf32>
    %cst_194 = arith.constant dense<0.000000e+00> : vector<2x512xf32>
    %595 = tpu.matmul %593, %594, %cst_194 {dimension_numbers = #tpu.dot_dimension_numbers<[1], [0], [0], [1], [0, 0, 1, 1], [], []>} : vector<2x32xf32>, vector<32x512xf32>, vector<2x512xf32> -> vector<2x512xf32>
    %c0_195 = arith.constant 0 : index
    %c0_196 = arith.constant 0 : index
    %596 = vector.load %arg6[%c0_195, %c0_196] : memref<32x512xf32, #tpu.memory_space<vmem>>, vector<32x512xf32>
    %cst_197 = arith.constant dense<0.000000e+00> : vector<2x512xf32>
    %597 = tpu.matmul %515, %596, %cst_197 {dimension_numbers = #tpu.dot_dimension_numbers<[1], [0], [0], [1], [0, 0, 1, 1], [], []>} : vector<2x32xf32>, vector<32x512xf32>, vector<2x512xf32> -> vector<2x512xf32>
    %598 = arith.addf %595, %597 : vector<2x512xf32>
    %599 = arith.addf %598, %5 : vector<2x512xf32>
    %600 = vector.extract_strided_slice %599 {offsets = [0, 0], sizes = [2, 128], strides = [1, 1]} : vector<2x512xf32> to vector<2x128xf32>
    %601 = arith.negf %600 : vector<2x128xf32>
    %602 = math.exp %601 : vector<2x128xf32>
    %cst_198 = arith.constant 1.000000e+00 : f32
    %603 = vector.broadcast %cst_198 : f32 to vector<2x128xf32>
    %604 = arith.addf %603, %602 : vector<2x128xf32>
    %605 = arith.divf %603, %604 : vector<2x128xf32>
    %606 = vector.extract_strided_slice %599 {offsets = [0, 128], sizes = [2, 128], strides = [1, 1]} : vector<2x512xf32> to vector<2x128xf32>
    %607 = arith.negf %606 : vector<2x128xf32>
    %608 = math.exp %607 : vector<2x128xf32>
    %cst_199 = arith.constant 1.000000e+00 : f32
    %609 = vector.broadcast %cst_199 : f32 to vector<2x128xf32>
    %610 = arith.addf %609, %608 : vector<2x128xf32>
    %611 = arith.divf %609, %610 : vector<2x128xf32>
    %612 = vector.extract_strided_slice %599 {offsets = [0, 256], sizes = [2, 128], strides = [1, 1]} : vector<2x512xf32> to vector<2x128xf32>
    %613 = vector.extract_strided_slice %599 {offsets = [0, 384], sizes = [2, 128], strides = [1, 1]} : vector<2x512xf32> to vector<2x128xf32>
    %614 = arith.mulf %605, %613 : vector<2x128xf32>
    %615 = arith.addf %612, %614 : vector<2x128xf32>
    %616 = math.tanh %615 : vector<2x128xf32>
    %617 = vector.extract_strided_slice %611 {offsets = [0, 0], sizes = [2, 32], strides = [1, 1]} : vector<2x128xf32> to vector<2x32xf32>
    %cst_200 = arith.constant 1.000000e+00 : f32
    %618 = vector.broadcast %cst_200 : f32 to vector<2x32xf32>
    %619 = arith.subf %618, %617 : vector<2x32xf32>
    %620 = vector.extract_strided_slice %616 {offsets = [0, 0], sizes = [2, 32], strides = [1, 1]} : vector<2x128xf32> to vector<2x32xf32>
    %621 = arith.mulf %619, %620 : vector<2x32xf32>
    %622 = vector.extract_strided_slice %611 {offsets = [0, 0], sizes = [2, 32], strides = [1, 1]} : vector<2x128xf32> to vector<2x32xf32>
    %623 = arith.mulf %622, %515 : vector<2x32xf32>
    %624 = arith.addf %621, %623 : vector<2x32xf32>
    %c0_201 = arith.constant 0 : index
    %c0_202 = arith.constant 0 : index
    %625 = vector.load %arg8[%c0_201, %c0_202] : memref<32x512xf32, #tpu.memory_space<vmem>>, vector<32x512xf32>
    %cst_203 = arith.constant dense<0.000000e+00> : vector<2x512xf32>
    %626 = tpu.matmul %624, %625, %cst_203 {dimension_numbers = #tpu.dot_dimension_numbers<[1], [0], [0], [1], [0, 0, 1, 1], [], []>} : vector<2x32xf32>, vector<32x512xf32>, vector<2x512xf32> -> vector<2x512xf32>
    %c0_204 = arith.constant 0 : index
    %c0_205 = arith.constant 0 : index
    %627 = vector.load %arg9[%c0_204, %c0_205] : memref<16x512xf32, #tpu.memory_space<vmem>>, vector<16x512xf32>
    %cst_206 = arith.constant dense<0.000000e+00> : vector<2x512xf32>
    %628 = tpu.matmul %546, %627, %cst_206 {dimension_numbers = #tpu.dot_dimension_numbers<[1], [0], [0], [1], [0, 0, 1, 1], [], []>} : vector<2x16xf32>, vector<16x512xf32>, vector<2x512xf32> -> vector<2x512xf32>
    %629 = arith.addf %626, %628 : vector<2x512xf32>
    %630 = arith.addf %629, %8 : vector<2x512xf32>
    %631 = vector.extract_strided_slice %630 {offsets = [0, 0], sizes = [2, 128], strides = [1, 1]} : vector<2x512xf32> to vector<2x128xf32>
    %632 = arith.negf %631 : vector<2x128xf32>
    %633 = math.exp %632 : vector<2x128xf32>
    %cst_207 = arith.constant 1.000000e+00 : f32
    %634 = vector.broadcast %cst_207 : f32 to vector<2x128xf32>
    %635 = arith.addf %634, %633 : vector<2x128xf32>
    %636 = arith.divf %634, %635 : vector<2x128xf32>
    %637 = vector.extract_strided_slice %630 {offsets = [0, 128], sizes = [2, 128], strides = [1, 1]} : vector<2x512xf32> to vector<2x128xf32>
    %638 = arith.negf %637 : vector<2x128xf32>
    %639 = math.exp %638 : vector<2x128xf32>
    %cst_208 = arith.constant 1.000000e+00 : f32
    %640 = vector.broadcast %cst_208 : f32 to vector<2x128xf32>
    %641 = arith.addf %640, %639 : vector<2x128xf32>
    %642 = arith.divf %640, %641 : vector<2x128xf32>
    %643 = vector.extract_strided_slice %630 {offsets = [0, 256], sizes = [2, 128], strides = [1, 1]} : vector<2x512xf32> to vector<2x128xf32>
    %644 = vector.extract_strided_slice %630 {offsets = [0, 384], sizes = [2, 128], strides = [1, 1]} : vector<2x512xf32> to vector<2x128xf32>
    %645 = arith.mulf %636, %644 : vector<2x128xf32>
    %646 = arith.addf %643, %645 : vector<2x128xf32>
    %647 = math.tanh %646 : vector<2x128xf32>
    %648 = vector.extract_strided_slice %642 {offsets = [0, 0], sizes = [2, 16], strides = [1, 1]} : vector<2x128xf32> to vector<2x16xf32>
    %cst_209 = arith.constant 1.000000e+00 : f32
    %649 = vector.broadcast %cst_209 : f32 to vector<2x16xf32>
    %650 = arith.subf %649, %648 : vector<2x16xf32>
    %651 = vector.extract_strided_slice %647 {offsets = [0, 0], sizes = [2, 16], strides = [1, 1]} : vector<2x128xf32> to vector<2x16xf32>
    %652 = arith.mulf %650, %651 : vector<2x16xf32>
    %653 = vector.extract_strided_slice %642 {offsets = [0, 0], sizes = [2, 16], strides = [1, 1]} : vector<2x128xf32> to vector<2x16xf32>
    %654 = arith.mulf %653, %546 : vector<2x16xf32>
    %655 = arith.addf %652, %654 : vector<2x16xf32>
    %c0_210 = arith.constant 0 : index
    %c0_211 = arith.constant 0 : index
    %656 = vector.load %arg11[%c0_210, %c0_211] : memref<16x16xf32, #tpu.memory_space<vmem>>, vector<16x16xf32>
    %cst_212 = arith.constant dense<0.000000e+00> : vector<2x16xf32>
    %657 = tpu.matmul %655, %656, %cst_212 {dimension_numbers = #tpu.dot_dimension_numbers<[1], [0], [0], [1], [0, 0, 1, 1], [], []>} : vector<2x16xf32>, vector<16x16xf32>, vector<2x16xf32> -> vector<2x16xf32>
    %658 = arith.addf %657, %11 : vector<2x16xf32>
    %cst_213 = arith.constant dense<0xFF800000> : vector<2xf32>
    %659 = vector.multi_reduction <maximumf>, %658, %cst_213 [1] : vector<2x16xf32> to vector<2xf32>
    %660 = vector.shape_cast %659 : vector<2xf32> to vector<2x1xf32>
    %661 = vector.broadcast %660 : vector<2x1xf32> to vector<2x16xf32>
    %662 = arith.subf %658, %661 : vector<2x16xf32>
    %663 = math.exp %662 : vector<2x16xf32>
    %cst_214 = arith.constant dense<0.000000e+00> : vector<2xf32>
    %664 = vector.multi_reduction <add>, %663, %cst_214 [1] : vector<2x16xf32> to vector<2xf32>
    %665 = vector.shape_cast %664 : vector<2xf32> to vector<2x1xf32>
    %666 = math.log %665 : vector<2x1xf32>
    %667 = vector.broadcast %666 : vector<2x1xf32> to vector<2x16xf32>
    %668 = arith.subf %662, %667 : vector<2x16xf32>
    %669 = arith.addf %560, %668 : vector<2x16xf32>
    %c6 = arith.constant 6 : index
    %c0_215 = arith.constant 0 : index
    %c0_216 = arith.constant 0 : index
    %670 = vector.load %arg1[%c6, %c0_215, %c0_216] : memref<8x2x16xf32, #tpu.memory_space<vmem>>, vector<1x2x16xf32>
    %671 = vector.shape_cast %670 : vector<1x2x16xf32> to vector<2x16xf32>
    %c0_217 = arith.constant 0 : index
    %c0_218 = arith.constant 0 : index
    %672 = vector.load %arg2[%c0_217, %c0_218] : memref<16x512xf32, #tpu.memory_space<vmem>>, vector<16x512xf32>
    %cst_219 = arith.constant dense<0.000000e+00> : vector<2x512xf32>
    %673 = tpu.matmul %671, %672, %cst_219 {dimension_numbers = #tpu.dot_dimension_numbers<[1], [0], [0], [1], [0, 0, 1, 1], [], []>} : vector<2x16xf32>, vector<16x512xf32>, vector<2x512xf32> -> vector<2x512xf32>
    %c0_220 = arith.constant 0 : index
    %c0_221 = arith.constant 0 : index
    %674 = vector.load %arg3[%c0_220, %c0_221] : memref<32x512xf32, #tpu.memory_space<vmem>>, vector<32x512xf32>
    %cst_222 = arith.constant dense<0.000000e+00> : vector<2x512xf32>
    %675 = tpu.matmul %593, %674, %cst_222 {dimension_numbers = #tpu.dot_dimension_numbers<[1], [0], [0], [1], [0, 0, 1, 1], [], []>} : vector<2x32xf32>, vector<32x512xf32>, vector<2x512xf32> -> vector<2x512xf32>
    %676 = arith.addf %673, %675 : vector<2x512xf32>
    %677 = arith.addf %676, %2 : vector<2x512xf32>
    %678 = vector.extract_strided_slice %677 {offsets = [0, 0], sizes = [2, 128], strides = [1, 1]} : vector<2x512xf32> to vector<2x128xf32>
    %679 = arith.negf %678 : vector<2x128xf32>
    %680 = math.exp %679 : vector<2x128xf32>
    %cst_223 = arith.constant 1.000000e+00 : f32
    %681 = vector.broadcast %cst_223 : f32 to vector<2x128xf32>
    %682 = arith.addf %681, %680 : vector<2x128xf32>
    %683 = arith.divf %681, %682 : vector<2x128xf32>
    %684 = vector.extract_strided_slice %677 {offsets = [0, 128], sizes = [2, 128], strides = [1, 1]} : vector<2x512xf32> to vector<2x128xf32>
    %685 = arith.negf %684 : vector<2x128xf32>
    %686 = math.exp %685 : vector<2x128xf32>
    %cst_224 = arith.constant 1.000000e+00 : f32
    %687 = vector.broadcast %cst_224 : f32 to vector<2x128xf32>
    %688 = arith.addf %687, %686 : vector<2x128xf32>
    %689 = arith.divf %687, %688 : vector<2x128xf32>
    %690 = vector.extract_strided_slice %677 {offsets = [0, 256], sizes = [2, 128], strides = [1, 1]} : vector<2x512xf32> to vector<2x128xf32>
    %691 = vector.extract_strided_slice %677 {offsets = [0, 384], sizes = [2, 128], strides = [1, 1]} : vector<2x512xf32> to vector<2x128xf32>
    %692 = arith.mulf %683, %691 : vector<2x128xf32>
    %693 = arith.addf %690, %692 : vector<2x128xf32>
    %694 = math.tanh %693 : vector<2x128xf32>
    %695 = vector.extract_strided_slice %689 {offsets = [0, 0], sizes = [2, 32], strides = [1, 1]} : vector<2x128xf32> to vector<2x32xf32>
    %cst_225 = arith.constant 1.000000e+00 : f32
    %696 = vector.broadcast %cst_225 : f32 to vector<2x32xf32>
    %697 = arith.subf %696, %695 : vector<2x32xf32>
    %698 = vector.extract_strided_slice %694 {offsets = [0, 0], sizes = [2, 32], strides = [1, 1]} : vector<2x128xf32> to vector<2x32xf32>
    %699 = arith.mulf %697, %698 : vector<2x32xf32>
    %700 = vector.extract_strided_slice %689 {offsets = [0, 0], sizes = [2, 32], strides = [1, 1]} : vector<2x128xf32> to vector<2x32xf32>
    %701 = arith.mulf %700, %593 : vector<2x32xf32>
    %702 = arith.addf %699, %701 : vector<2x32xf32>
    %c0_226 = arith.constant 0 : index
    %c0_227 = arith.constant 0 : index
    %703 = vector.load %arg5[%c0_226, %c0_227] : memref<32x512xf32, #tpu.memory_space<vmem>>, vector<32x512xf32>
    %cst_228 = arith.constant dense<0.000000e+00> : vector<2x512xf32>
    %704 = tpu.matmul %702, %703, %cst_228 {dimension_numbers = #tpu.dot_dimension_numbers<[1], [0], [0], [1], [0, 0, 1, 1], [], []>} : vector<2x32xf32>, vector<32x512xf32>, vector<2x512xf32> -> vector<2x512xf32>
    %c0_229 = arith.constant 0 : index
    %c0_230 = arith.constant 0 : index
    %705 = vector.load %arg6[%c0_229, %c0_230] : memref<32x512xf32, #tpu.memory_space<vmem>>, vector<32x512xf32>
    %cst_231 = arith.constant dense<0.000000e+00> : vector<2x512xf32>
    %706 = tpu.matmul %624, %705, %cst_231 {dimension_numbers = #tpu.dot_dimension_numbers<[1], [0], [0], [1], [0, 0, 1, 1], [], []>} : vector<2x32xf32>, vector<32x512xf32>, vector<2x512xf32> -> vector<2x512xf32>
    %707 = arith.addf %704, %706 : vector<2x512xf32>
    %708 = arith.addf %707, %5 : vector<2x512xf32>
    %709 = vector.extract_strided_slice %708 {offsets = [0, 0], sizes = [2, 128], strides = [1, 1]} : vector<2x512xf32> to vector<2x128xf32>
    %710 = arith.negf %709 : vector<2x128xf32>
    %711 = math.exp %710 : vector<2x128xf32>
    %cst_232 = arith.constant 1.000000e+00 : f32
    %712 = vector.broadcast %cst_232 : f32 to vector<2x128xf32>
    %713 = arith.addf %712, %711 : vector<2x128xf32>
    %714 = arith.divf %712, %713 : vector<2x128xf32>
    %715 = vector.extract_strided_slice %708 {offsets = [0, 128], sizes = [2, 128], strides = [1, 1]} : vector<2x512xf32> to vector<2x128xf32>
    %716 = arith.negf %715 : vector<2x128xf32>
    %717 = math.exp %716 : vector<2x128xf32>
    %cst_233 = arith.constant 1.000000e+00 : f32
    %718 = vector.broadcast %cst_233 : f32 to vector<2x128xf32>
    %719 = arith.addf %718, %717 : vector<2x128xf32>
    %720 = arith.divf %718, %719 : vector<2x128xf32>
    %721 = vector.extract_strided_slice %708 {offsets = [0, 256], sizes = [2, 128], strides = [1, 1]} : vector<2x512xf32> to vector<2x128xf32>
    %722 = vector.extract_strided_slice %708 {offsets = [0, 384], sizes = [2, 128], strides = [1, 1]} : vector<2x512xf32> to vector<2x128xf32>
    %723 = arith.mulf %714, %722 : vector<2x128xf32>
    %724 = arith.addf %721, %723 : vector<2x128xf32>
    %725 = math.tanh %724 : vector<2x128xf32>
    %726 = vector.extract_strided_slice %720 {offsets = [0, 0], sizes = [2, 32], strides = [1, 1]} : vector<2x128xf32> to vector<2x32xf32>
    %cst_234 = arith.constant 1.000000e+00 : f32
    %727 = vector.broadcast %cst_234 : f32 to vector<2x32xf32>
    %728 = arith.subf %727, %726 : vector<2x32xf32>
    %729 = vector.extract_strided_slice %725 {offsets = [0, 0], sizes = [2, 32], strides = [1, 1]} : vector<2x128xf32> to vector<2x32xf32>
    %730 = arith.mulf %728, %729 : vector<2x32xf32>
    %731 = vector.extract_strided_slice %720 {offsets = [0, 0], sizes = [2, 32], strides = [1, 1]} : vector<2x128xf32> to vector<2x32xf32>
    %732 = arith.mulf %731, %624 : vector<2x32xf32>
    %733 = arith.addf %730, %732 : vector<2x32xf32>
    %c0_235 = arith.constant 0 : index
    %c0_236 = arith.constant 0 : index
    %734 = vector.load %arg8[%c0_235, %c0_236] : memref<32x512xf32, #tpu.memory_space<vmem>>, vector<32x512xf32>
    %cst_237 = arith.constant dense<0.000000e+00> : vector<2x512xf32>
    %735 = tpu.matmul %733, %734, %cst_237 {dimension_numbers = #tpu.dot_dimension_numbers<[1], [0], [0], [1], [0, 0, 1, 1], [], []>} : vector<2x32xf32>, vector<32x512xf32>, vector<2x512xf32> -> vector<2x512xf32>
    %c0_238 = arith.constant 0 : index
    %c0_239 = arith.constant 0 : index
    %736 = vector.load %arg9[%c0_238, %c0_239] : memref<16x512xf32, #tpu.memory_space<vmem>>, vector<16x512xf32>
    %cst_240 = arith.constant dense<0.000000e+00> : vector<2x512xf32>
    %737 = tpu.matmul %655, %736, %cst_240 {dimension_numbers = #tpu.dot_dimension_numbers<[1], [0], [0], [1], [0, 0, 1, 1], [], []>} : vector<2x16xf32>, vector<16x512xf32>, vector<2x512xf32> -> vector<2x512xf32>
    %738 = arith.addf %735, %737 : vector<2x512xf32>
    %739 = arith.addf %738, %8 : vector<2x512xf32>
    %740 = vector.extract_strided_slice %739 {offsets = [0, 0], sizes = [2, 128], strides = [1, 1]} : vector<2x512xf32> to vector<2x128xf32>
    %741 = arith.negf %740 : vector<2x128xf32>
    %742 = math.exp %741 : vector<2x128xf32>
    %cst_241 = arith.constant 1.000000e+00 : f32
    %743 = vector.broadcast %cst_241 : f32 to vector<2x128xf32>
    %744 = arith.addf %743, %742 : vector<2x128xf32>
    %745 = arith.divf %743, %744 : vector<2x128xf32>
    %746 = vector.extract_strided_slice %739 {offsets = [0, 128], sizes = [2, 128], strides = [1, 1]} : vector<2x512xf32> to vector<2x128xf32>
    %747 = arith.negf %746 : vector<2x128xf32>
    %748 = math.exp %747 : vector<2x128xf32>
    %cst_242 = arith.constant 1.000000e+00 : f32
    %749 = vector.broadcast %cst_242 : f32 to vector<2x128xf32>
    %750 = arith.addf %749, %748 : vector<2x128xf32>
    %751 = arith.divf %749, %750 : vector<2x128xf32>
    %752 = vector.extract_strided_slice %739 {offsets = [0, 256], sizes = [2, 128], strides = [1, 1]} : vector<2x512xf32> to vector<2x128xf32>
    %753 = vector.extract_strided_slice %739 {offsets = [0, 384], sizes = [2, 128], strides = [1, 1]} : vector<2x512xf32> to vector<2x128xf32>
    %754 = arith.mulf %745, %753 : vector<2x128xf32>
    %755 = arith.addf %752, %754 : vector<2x128xf32>
    %756 = math.tanh %755 : vector<2x128xf32>
    %757 = vector.extract_strided_slice %751 {offsets = [0, 0], sizes = [2, 16], strides = [1, 1]} : vector<2x128xf32> to vector<2x16xf32>
    %cst_243 = arith.constant 1.000000e+00 : f32
    %758 = vector.broadcast %cst_243 : f32 to vector<2x16xf32>
    %759 = arith.subf %758, %757 : vector<2x16xf32>
    %760 = vector.extract_strided_slice %756 {offsets = [0, 0], sizes = [2, 16], strides = [1, 1]} : vector<2x128xf32> to vector<2x16xf32>
    %761 = arith.mulf %759, %760 : vector<2x16xf32>
    %762 = vector.extract_strided_slice %751 {offsets = [0, 0], sizes = [2, 16], strides = [1, 1]} : vector<2x128xf32> to vector<2x16xf32>
    %763 = arith.mulf %762, %655 : vector<2x16xf32>
    %764 = arith.addf %761, %763 : vector<2x16xf32>
    %c0_244 = arith.constant 0 : index
    %c0_245 = arith.constant 0 : index
    %765 = vector.load %arg11[%c0_244, %c0_245] : memref<16x16xf32, #tpu.memory_space<vmem>>, vector<16x16xf32>
    %cst_246 = arith.constant dense<0.000000e+00> : vector<2x16xf32>
    %766 = tpu.matmul %764, %765, %cst_246 {dimension_numbers = #tpu.dot_dimension_numbers<[1], [0], [0], [1], [0, 0, 1, 1], [], []>} : vector<2x16xf32>, vector<16x16xf32>, vector<2x16xf32> -> vector<2x16xf32>
    %767 = arith.addf %766, %11 : vector<2x16xf32>
    %cst_247 = arith.constant dense<0xFF800000> : vector<2xf32>
    %768 = vector.multi_reduction <maximumf>, %767, %cst_247 [1] : vector<2x16xf32> to vector<2xf32>
    %769 = vector.shape_cast %768 : vector<2xf32> to vector<2x1xf32>
    %770 = vector.broadcast %769 : vector<2x1xf32> to vector<2x16xf32>
    %771 = arith.subf %767, %770 : vector<2x16xf32>
    %772 = math.exp %771 : vector<2x16xf32>
    %cst_248 = arith.constant dense<0.000000e+00> : vector<2xf32>
    %773 = vector.multi_reduction <add>, %772, %cst_248 [1] : vector<2x16xf32> to vector<2xf32>
    %774 = vector.shape_cast %773 : vector<2xf32> to vector<2x1xf32>
    %775 = math.log %774 : vector<2x1xf32>
    %776 = vector.broadcast %775 : vector<2x1xf32> to vector<2x16xf32>
    %777 = arith.subf %771, %776 : vector<2x16xf32>
    %778 = arith.addf %669, %777 : vector<2x16xf32>
    %c7 = arith.constant 7 : index
    %c0_249 = arith.constant 0 : index
    %c0_250 = arith.constant 0 : index
    %779 = vector.load %arg1[%c7, %c0_249, %c0_250] : memref<8x2x16xf32, #tpu.memory_space<vmem>>, vector<1x2x16xf32>
    %780 = vector.shape_cast %779 : vector<1x2x16xf32> to vector<2x16xf32>
    %c0_251 = arith.constant 0 : index
    %c0_252 = arith.constant 0 : index
    %781 = vector.load %arg2[%c0_251, %c0_252] : memref<16x512xf32, #tpu.memory_space<vmem>>, vector<16x512xf32>
    %cst_253 = arith.constant dense<0.000000e+00> : vector<2x512xf32>
    %782 = tpu.matmul %780, %781, %cst_253 {dimension_numbers = #tpu.dot_dimension_numbers<[1], [0], [0], [1], [0, 0, 1, 1], [], []>} : vector<2x16xf32>, vector<16x512xf32>, vector<2x512xf32> -> vector<2x512xf32>
    %c0_254 = arith.constant 0 : index
    %c0_255 = arith.constant 0 : index
    %783 = vector.load %arg3[%c0_254, %c0_255] : memref<32x512xf32, #tpu.memory_space<vmem>>, vector<32x512xf32>
    %cst_256 = arith.constant dense<0.000000e+00> : vector<2x512xf32>
    %784 = tpu.matmul %702, %783, %cst_256 {dimension_numbers = #tpu.dot_dimension_numbers<[1], [0], [0], [1], [0, 0, 1, 1], [], []>} : vector<2x32xf32>, vector<32x512xf32>, vector<2x512xf32> -> vector<2x512xf32>
    %785 = arith.addf %782, %784 : vector<2x512xf32>
    %786 = arith.addf %785, %2 : vector<2x512xf32>
    %787 = vector.extract_strided_slice %786 {offsets = [0, 0], sizes = [2, 128], strides = [1, 1]} : vector<2x512xf32> to vector<2x128xf32>
    %788 = arith.negf %787 : vector<2x128xf32>
    %789 = math.exp %788 : vector<2x128xf32>
    %cst_257 = arith.constant 1.000000e+00 : f32
    %790 = vector.broadcast %cst_257 : f32 to vector<2x128xf32>
    %791 = arith.addf %790, %789 : vector<2x128xf32>
    %792 = arith.divf %790, %791 : vector<2x128xf32>
    %793 = vector.extract_strided_slice %786 {offsets = [0, 128], sizes = [2, 128], strides = [1, 1]} : vector<2x512xf32> to vector<2x128xf32>
    %794 = arith.negf %793 : vector<2x128xf32>
    %795 = math.exp %794 : vector<2x128xf32>
    %cst_258 = arith.constant 1.000000e+00 : f32
    %796 = vector.broadcast %cst_258 : f32 to vector<2x128xf32>
    %797 = arith.addf %796, %795 : vector<2x128xf32>
    %798 = arith.divf %796, %797 : vector<2x128xf32>
    %799 = vector.extract_strided_slice %786 {offsets = [0, 256], sizes = [2, 128], strides = [1, 1]} : vector<2x512xf32> to vector<2x128xf32>
    %800 = vector.extract_strided_slice %786 {offsets = [0, 384], sizes = [2, 128], strides = [1, 1]} : vector<2x512xf32> to vector<2x128xf32>
    %801 = arith.mulf %792, %800 : vector<2x128xf32>
    %802 = arith.addf %799, %801 : vector<2x128xf32>
    %803 = math.tanh %802 : vector<2x128xf32>
    %804 = vector.extract_strided_slice %798 {offsets = [0, 0], sizes = [2, 32], strides = [1, 1]} : vector<2x128xf32> to vector<2x32xf32>
    %cst_259 = arith.constant 1.000000e+00 : f32
    %805 = vector.broadcast %cst_259 : f32 to vector<2x32xf32>
    %806 = arith.subf %805, %804 : vector<2x32xf32>
    %807 = vector.extract_strided_slice %803 {offsets = [0, 0], sizes = [2, 32], strides = [1, 1]} : vector<2x128xf32> to vector<2x32xf32>
    %808 = arith.mulf %806, %807 : vector<2x32xf32>
    %809 = vector.extract_strided_slice %798 {offsets = [0, 0], sizes = [2, 32], strides = [1, 1]} : vector<2x128xf32> to vector<2x32xf32>
    %810 = arith.mulf %809, %702 : vector<2x32xf32>
    %811 = arith.addf %808, %810 : vector<2x32xf32>
    %c0_260 = arith.constant 0 : index
    %c0_261 = arith.constant 0 : index
    %812 = vector.load %arg5[%c0_260, %c0_261] : memref<32x512xf32, #tpu.memory_space<vmem>>, vector<32x512xf32>
    %cst_262 = arith.constant dense<0.000000e+00> : vector<2x512xf32>
    %813 = tpu.matmul %811, %812, %cst_262 {dimension_numbers = #tpu.dot_dimension_numbers<[1], [0], [0], [1], [0, 0, 1, 1], [], []>} : vector<2x32xf32>, vector<32x512xf32>, vector<2x512xf32> -> vector<2x512xf32>
    %c0_263 = arith.constant 0 : index
    %c0_264 = arith.constant 0 : index
    %814 = vector.load %arg6[%c0_263, %c0_264] : memref<32x512xf32, #tpu.memory_space<vmem>>, vector<32x512xf32>
    %cst_265 = arith.constant dense<0.000000e+00> : vector<2x512xf32>
    %815 = tpu.matmul %733, %814, %cst_265 {dimension_numbers = #tpu.dot_dimension_numbers<[1], [0], [0], [1], [0, 0, 1, 1], [], []>} : vector<2x32xf32>, vector<32x512xf32>, vector<2x512xf32> -> vector<2x512xf32>
    %816 = arith.addf %813, %815 : vector<2x512xf32>
    %817 = arith.addf %816, %5 : vector<2x512xf32>
    %818 = vector.extract_strided_slice %817 {offsets = [0, 0], sizes = [2, 128], strides = [1, 1]} : vector<2x512xf32> to vector<2x128xf32>
    %819 = arith.negf %818 : vector<2x128xf32>
    %820 = math.exp %819 : vector<2x128xf32>
    %cst_266 = arith.constant 1.000000e+00 : f32
    %821 = vector.broadcast %cst_266 : f32 to vector<2x128xf32>
    %822 = arith.addf %821, %820 : vector<2x128xf32>
    %823 = arith.divf %821, %822 : vector<2x128xf32>
    %824 = vector.extract_strided_slice %817 {offsets = [0, 128], sizes = [2, 128], strides = [1, 1]} : vector<2x512xf32> to vector<2x128xf32>
    %825 = arith.negf %824 : vector<2x128xf32>
    %826 = math.exp %825 : vector<2x128xf32>
    %cst_267 = arith.constant 1.000000e+00 : f32
    %827 = vector.broadcast %cst_267 : f32 to vector<2x128xf32>
    %828 = arith.addf %827, %826 : vector<2x128xf32>
    %829 = arith.divf %827, %828 : vector<2x128xf32>
    %830 = vector.extract_strided_slice %817 {offsets = [0, 256], sizes = [2, 128], strides = [1, 1]} : vector<2x512xf32> to vector<2x128xf32>
    %831 = vector.extract_strided_slice %817 {offsets = [0, 384], sizes = [2, 128], strides = [1, 1]} : vector<2x512xf32> to vector<2x128xf32>
    %832 = arith.mulf %823, %831 : vector<2x128xf32>
    %833 = arith.addf %830, %832 : vector<2x128xf32>
    %834 = math.tanh %833 : vector<2x128xf32>
    %835 = vector.extract_strided_slice %829 {offsets = [0, 0], sizes = [2, 32], strides = [1, 1]} : vector<2x128xf32> to vector<2x32xf32>
    %cst_268 = arith.constant 1.000000e+00 : f32
    %836 = vector.broadcast %cst_268 : f32 to vector<2x32xf32>
    %837 = arith.subf %836, %835 : vector<2x32xf32>
    %838 = vector.extract_strided_slice %834 {offsets = [0, 0], sizes = [2, 32], strides = [1, 1]} : vector<2x128xf32> to vector<2x32xf32>
    %839 = arith.mulf %837, %838 : vector<2x32xf32>
    %840 = vector.extract_strided_slice %829 {offsets = [0, 0], sizes = [2, 32], strides = [1, 1]} : vector<2x128xf32> to vector<2x32xf32>
    %841 = arith.mulf %840, %733 : vector<2x32xf32>
    %842 = arith.addf %839, %841 : vector<2x32xf32>
    %c0_269 = arith.constant 0 : index
    %c0_270 = arith.constant 0 : index
    %843 = vector.load %arg8[%c0_269, %c0_270] : memref<32x512xf32, #tpu.memory_space<vmem>>, vector<32x512xf32>
    %cst_271 = arith.constant dense<0.000000e+00> : vector<2x512xf32>
    %844 = tpu.matmul %842, %843, %cst_271 {dimension_numbers = #tpu.dot_dimension_numbers<[1], [0], [0], [1], [0, 0, 1, 1], [], []>} : vector<2x32xf32>, vector<32x512xf32>, vector<2x512xf32> -> vector<2x512xf32>
    %c0_272 = arith.constant 0 : index
    %c0_273 = arith.constant 0 : index
    %845 = vector.load %arg9[%c0_272, %c0_273] : memref<16x512xf32, #tpu.memory_space<vmem>>, vector<16x512xf32>
    %cst_274 = arith.constant dense<0.000000e+00> : vector<2x512xf32>
    %846 = tpu.matmul %764, %845, %cst_274 {dimension_numbers = #tpu.dot_dimension_numbers<[1], [0], [0], [1], [0, 0, 1, 1], [], []>} : vector<2x16xf32>, vector<16x512xf32>, vector<2x512xf32> -> vector<2x512xf32>
    %847 = arith.addf %844, %846 : vector<2x512xf32>
    %848 = arith.addf %847, %8 : vector<2x512xf32>
    %849 = vector.extract_strided_slice %848 {offsets = [0, 0], sizes = [2, 128], strides = [1, 1]} : vector<2x512xf32> to vector<2x128xf32>
    %850 = arith.negf %849 : vector<2x128xf32>
    %851 = math.exp %850 : vector<2x128xf32>
    %cst_275 = arith.constant 1.000000e+00 : f32
    %852 = vector.broadcast %cst_275 : f32 to vector<2x128xf32>
    %853 = arith.addf %852, %851 : vector<2x128xf32>
    %854 = arith.divf %852, %853 : vector<2x128xf32>
    %855 = vector.extract_strided_slice %848 {offsets = [0, 128], sizes = [2, 128], strides = [1, 1]} : vector<2x512xf32> to vector<2x128xf32>
    %856 = arith.negf %855 : vector<2x128xf32>
    %857 = math.exp %856 : vector<2x128xf32>
    %cst_276 = arith.constant 1.000000e+00 : f32
    %858 = vector.broadcast %cst_276 : f32 to vector<2x128xf32>
    %859 = arith.addf %858, %857 : vector<2x128xf32>
    %860 = arith.divf %858, %859 : vector<2x128xf32>
    %861 = vector.extract_strided_slice %848 {offsets = [0, 256], sizes = [2, 128], strides = [1, 1]} : vector<2x512xf32> to vector<2x128xf32>
    %862 = vector.extract_strided_slice %848 {offsets = [0, 384], sizes = [2, 128], strides = [1, 1]} : vector<2x512xf32> to vector<2x128xf32>
    %863 = arith.mulf %854, %862 : vector<2x128xf32>
    %864 = arith.addf %861, %863 : vector<2x128xf32>
    %865 = math.tanh %864 : vector<2x128xf32>
    %866 = vector.extract_strided_slice %860 {offsets = [0, 0], sizes = [2, 16], strides = [1, 1]} : vector<2x128xf32> to vector<2x16xf32>
    %cst_277 = arith.constant 1.000000e+00 : f32
    %867 = vector.broadcast %cst_277 : f32 to vector<2x16xf32>
    %868 = arith.subf %867, %866 : vector<2x16xf32>
    %869 = vector.extract_strided_slice %865 {offsets = [0, 0], sizes = [2, 16], strides = [1, 1]} : vector<2x128xf32> to vector<2x16xf32>
    %870 = arith.mulf %868, %869 : vector<2x16xf32>
    %871 = vector.extract_strided_slice %860 {offsets = [0, 0], sizes = [2, 16], strides = [1, 1]} : vector<2x128xf32> to vector<2x16xf32>
    %872 = arith.mulf %871, %764 : vector<2x16xf32>
    %873 = arith.addf %870, %872 : vector<2x16xf32>
    %c0_278 = arith.constant 0 : index
    %c0_279 = arith.constant 0 : index
    %874 = vector.load %arg11[%c0_278, %c0_279] : memref<16x16xf32, #tpu.memory_space<vmem>>, vector<16x16xf32>
    %cst_280 = arith.constant dense<0.000000e+00> : vector<2x16xf32>
    %875 = tpu.matmul %873, %874, %cst_280 {dimension_numbers = #tpu.dot_dimension_numbers<[1], [0], [0], [1], [0, 0, 1, 1], [], []>} : vector<2x16xf32>, vector<16x16xf32>, vector<2x16xf32> -> vector<2x16xf32>
    %876 = arith.addf %875, %11 : vector<2x16xf32>
    %cst_281 = arith.constant dense<0xFF800000> : vector<2xf32>
    %877 = vector.multi_reduction <maximumf>, %876, %cst_281 [1] : vector<2x16xf32> to vector<2xf32>
    %878 = vector.shape_cast %877 : vector<2xf32> to vector<2x1xf32>
    %879 = vector.broadcast %878 : vector<2x1xf32> to vector<2x16xf32>
    %880 = arith.subf %876, %879 : vector<2x16xf32>
    %881 = math.exp %880 : vector<2x16xf32>
    %cst_282 = arith.constant dense<0.000000e+00> : vector<2xf32>
    %882 = vector.multi_reduction <add>, %881, %cst_282 [1] : vector<2x16xf32> to vector<2xf32>
    %883 = vector.shape_cast %882 : vector<2xf32> to vector<2x1xf32>
    %884 = math.log %883 : vector<2x1xf32>
    %885 = vector.broadcast %884 : vector<2x1xf32> to vector<2x16xf32>
    %886 = arith.subf %880, %885 : vector<2x16xf32>
    %887 = arith.addf %778, %886 : vector<2x16xf32>
    %cst_283 = arith.constant 1.250000e-01 : f32
    %888 = vector.broadcast %cst_283 : f32 to vector<2x16xf32>
    %889 = arith.mulf %887, %888 : vector<2x16xf32>
    %c0_284 = arith.constant 0 : index
    %c0_285 = arith.constant 0 : index
    %890 = vector.load %arg13[%c0_284, %c0_285] : memref<2x16xf32, #tpu.memory_space<vmem>>, vector<2x16xf32>
    tpu.vector_store %arg13[%c0_284, %c0_285], %889 {strides = array<i32>} : memref<2x16xf32, #tpu.memory_space<vmem>>, vector<2x16xf32>,
    return
  }
  func.func @transform_0(%arg0: i32) -> (i32, i32, i32) {
    %c0_i32 = arith.constant 0 : i32
    %c0_i32_0 = arith.constant 0 : i32
    %c0_i32_1 = arith.constant 0 : i32
    %c0_i32_2 = arith.constant 0 : i32
    return %c0_i32, %c0_i32_0, %c0_i32_1 : i32, i32, i32
  }
  func.func @transform_1(%arg0: i32) -> (i32, i32) {
    %c0_i32 = arith.constant 0 : i32
    %c0_i32_0 = arith.constant 0 : i32
    %c0_i32_1 = arith.constant 0 : i32
    return %c0_i32, %c0_i32_0 : i32, i32
  }
  func.func @transform_2(%arg0: i32) -> (i32, i32) {
    %c0_i32 = arith.constant 0 : i32
    %c0_i32_0 = arith.constant 0 : i32
    %c0_i32_1 = arith.constant 0 : i32
    return %c0_i32, %c0_i32_0 : i32, i32
  }
  func.func @transform_3(%arg0: i32) -> (i32, i32) {
    %c0_i32 = arith.constant 0 : i32
    %c0_i32_0 = arith.constant 0 : i32
    %c0_i32_1 = arith.constant 0 : i32
    return %c0_i32, %c0_i32_0 : i32, i32
  }
  func.func @transform_4(%arg0: i32) -> (i32, i32) {
    %c0_i32 = arith.constant 0 : i32
    %c0_i32_0 = arith.constant 0 : i32
    %c0_i32_1 = arith.constant 0 : i32
    return %c0_i32, %c0_i32_0 : i32, i32
  }
  func.func @transform_5(%arg0: i32) -> (i32, i32) {
    %c0_i32 = arith.constant 0 : i32
    %c0_i32_0 = arith.constant 0 : i32
    %c0_i32_1 = arith.constant 0 : i32
    return %c0_i32, %c0_i32_0 : i32, i32
  }
  func.func @transform_6(%arg0: i32) -> (i32, i32) {
    %c0_i32 = arith.constant 0 : i32
    %c0_i32_0 = arith.constant 0 : i32
    %c0_i32_1 = arith.constant 0 : i32
    return %c0_i32, %c0_i32_0 : i32, i32
  }
  func.func @transform_7(%arg0: i32) -> (i32, i32) {
    %c0_i32 = arith.constant 0 : i32
    %c0_i32_0 = arith.constant 0 : i32
    %c0_i32_1 = arith.constant 0 : i32
    return %c0_i32, %c0_i32_0 : i32, i32
  }
  func.func @transform_8(%arg0: i32) -> (i32, i32) {
    %c0_i32 = arith.constant 0 : i32
    %c0_i32_0 = arith.constant 0 : i32
    %c0_i32_1 = arith.constant 0 : i32
    return %c0_i32, %c0_i32_0 : i32, i32
  }
  func.func @transform_9(%arg0: i32) -> (i32, i32) {
    %c0_i32 = arith.constant 0 : i32
    %c0_i32_0 = arith.constant 0 : i32
    %c0_i32_1 = arith.constant 0 : i32
    return %c0_i32, %c0_i32_0 : i32, i32
  }
  func.func @transform_10(%arg0: i32) -> (i32, i32) {
    %c0_i32 = arith.constant 0 : i32
    %c0_i32_0 = arith.constant 0 : i32
    %c0_i32_1 = arith.constant 0 : i32
    return %c0_i32, %c0_i32_0 : i32, i32
  }
  func.func @transform_11(%arg0: i32) -> (i32, i32) {
    %c0_i32 = arith.constant 0 : i32
    %c0_i32_0 = arith.constant 0 : i32
    %c0_i32_1 = arith.constant 0 : i32
    return %c0_i32, %c0_i32_0 : i32, i32
  }
  func.func @transform_12(%arg0: i32) -> (i32, i32) {
    %c0_i32 = arith.constant 0 : i32
    %c0_i32_0 = arith.constant 0 : i32
    %c0_i32_1 = arith.constant 0 : i32
    return %c0_i32, %c0_i32_0 : i32, i32
  }
}

</mosaic_0001>

<llo_original>
// kernel: tpu_custom_call.1
$region0: #{tpu_custom_call.1}
  #allocation0 [shape = 'u32[]', space=smem, size = 0x4, offset = 0x4, fixed_abs, tag = 'smem constant byte address 0x4 - core index']
  #allocation1 [shape = 'u32[72,128]{1,0:T(1,128)}', space=vmem, size = 0x9000, scoped, tag = 'internal scratch']
  %s0 = inlined_call_operand.hbm [shape: f32[8,2,16], index: 0, kind: input, shape index: {}]
  %s1 = inlined_call_operand.hbm [shape: f32[16,512], index: 1, kind: input, shape index: {}]
  %s2 = inlined_call_operand.hbm [shape: f32[32,512], index: 2, kind: input, shape index: {}]
  %s3 = inlined_call_operand.hbm [shape: f32[1,512], index: 3, kind: input, shape index: {}]
  %s4 = inlined_call_operand.hbm [shape: f32[32,512], index: 4, kind: input, shape index: {}]
  %s5 = inlined_call_operand.hbm [shape: f32[32,512], index: 5, kind: input, shape index: {}]
  %s6 = inlined_call_operand.vmem [shape: f32[1,512], index: 6, kind: input, shape index: {}]
  %s7 = inlined_call_operand.hbm [shape: f32[32,512], index: 7, kind: input, shape index: {}]
  %s8 = inlined_call_operand.hbm [shape: f32[16,512], index: 8, kind: input, shape index: {}]
  %s9 = inlined_call_operand.vmem [shape: f32[1,512], index: 9, kind: input, shape index: {}]
  %s10 = inlined_call_operand.hbm [shape: f32[16,16], index: 10, kind: input, shape index: {}]
  %s11 = inlined_call_operand.vmem [shape: f32[1,16], index: 11, kind: input, shape index: {}]
  %s12 = inlined_call_operand.hbm [shape: f32[2,16], index: 12, kind: output, shape index: {}]
  %s13 = sld [smem:[#allocation0]]
  $region94: #{tpu_custom_call.1} parent=0
    _
  %s15 = ssub.s32 1, %s13
  %s16 = scalar_select 0, %s15, %s13
  $region1: #{tpu_custom_call.1} parent=0
    #allocation2 [shape = 'u8[8192]{0}', space=vmem, size = 0x2000, scoped, tag = 'input window, operand 0, single buffered']
    #allocation3 [shape = 's32[1]{0}', space=sflag, size = 0x4, scoped, tag = 'scoped memory for tpu_custom_call.1']
    #allocation4 [shape = 's32[1]{0}', space=sflag, size = 0x4, scoped, tag = 'scoped memory for tpu_custom_call.1']
    #allocation5 [shape = 'u8[32768]{0}', space=vmem, size = 0x8000, scoped, tag = 'input window, operand 1, single buffered']
    #allocation6 [shape = 's32[1]{0}', space=sflag, size = 0x4, scoped, tag = 'scoped memory for tpu_custom_call.1']
    #allocation7 [shape = 'u8[65536]{0}', space=vmem, size = 0x10000, scoped, tag = 'input window, operand 2, single buffered']
    #allocation8 [shape = 'u8[2048]{0}', space=vmem, size = 0x800, scoped, tag = 'input window, operand 3, single buffered']
    #allocation9 [shape = 's32[1]{0}', space=sflag, size = 0x4, scoped, tag = 'scoped memory for tpu_custom_call.1']
    #allocation10 [shape = 'u8[65536]{0}', space=vmem, size = 0x10000, scoped, tag = 'input window, operand 4, single buffered']
    #allocation11 [shape = 'u8[65536]{0}', space=vmem, size = 0x10000, scoped, tag = 'input window, operand 5, single buffered']
    #allocation12 [shape = 's32[1]{0}', space=sflag, size = 0x4, scoped, tag = 'scoped memory for tpu_custom_call.1']
    #allocation13 [shape = 'u8[65536]{0}', space=vmem, size = 0x10000, scoped, tag = 'input window, operand 7, single buffered']
    #allocation14 [shape = 'u8[32768]{0}', space=vmem, size = 0x8000, scoped, tag = 'input window, operand 8, single buffered']
    #allocation15 [shape = 's32[1]{0}', space=sflag, size = 0x4, scoped, tag = 'scoped memory for tpu_custom_call.1']
    #allocation16 [shape = 'u8[8192]{0}', space=vmem, size = 0x2000, scoped, tag = 'input window, operand 10, single buffered']
    #allocation17 [shape = 'u8[1024]{0}', space=vmem, size = 0x400, scoped, tag = 'output window, operand 0, single buffered']
    %17 = vsyncpa [#allocation3], 0
    %18 = vsyncpa [#allocation6], 0
    %19 = vsyncpa [#allocation9], 0
    %20 = vsyncpa [#allocation12], 0
    %21 = vsyncpa [#allocation15], 0
    %22 = vsyncpa [#allocation4], 0
    // Predicated region
    $region2: #{tpu_custom_call.1} parent=1 // pred_check
      _
    $region3: #{tpu_custom_call.1} parent=1 // pred_check_branch
      %24 = sbr.rel (0) target = $region5
    $region4: #{tpu_custom_call.1} parent=1 // pred_region
      %26 = vsyncadd [#allocation3], 0
      %s27 = sshll.u32 %s0, 4
      %s28 = int_to_ptr.hbm [resolvable:$true] %s27
      %s29 = sshll.u32 [#allocation2], 4
      %s30 = int_to_ptr.vmem [resolvable:$true] %s29
      %35 = dma.hbm_to_vmem [thread:$0]  %s28, 256, %s30, [#allocation3], 32, 32, 2
    $region5: #{tpu_custom_call.1} parent=1 // pred_fallthru
      _
    // Predicated region
    $region6: #{tpu_custom_call.1} parent=1 // pred_check
      _
    $region7: #{tpu_custom_call.1} parent=1 // pred_check_branch
      %37 = sbr.rel (0) target = $region9
    $region8: #{tpu_custom_call.1} parent=1 // pred_region
      %39 = vsyncadd [#allocation6], 0
      %s40 = sshll.u32 %s1, 4
      %s41 = int_to_ptr.hbm [resolvable:$true] %s40
      %s42 = sshll.u32 [#allocation5], 4
      %s43 = int_to_ptr.vmem [resolvable:$true] %s42
      %48 = dma.hbm_to_vmem [thread:$0]  %s41, 1024, %s43, [#allocation6], 512, 512, 32
    $region9: #{tpu_custom_call.1} parent=1 // pred_fallthru
      _
    // Predicated region
    $region10: #{tpu_custom_call.1} parent=1 // pred_check
      _
    $region11: #{tpu_custom_call.1} parent=1 // pred_check_branch
      %50 = sbr.rel (0) target = $region13
    $region12: #{tpu_custom_call.1} parent=1 // pred_region
      %52 = vsyncadd [#allocation6], 0
      %s53 = sshll.u32 %s2, 4
      %s54 = int_to_ptr.hbm [resolvable:$true] %s53
      %s55 = sshll.u32 [#allocation7], 4
      %s56 = int_to_ptr.vmem [resolvable:$true] %s55
      %61 = dma.hbm_to_vmem [thread:$0]  %s54, 2048, %s56, [#allocation6], 512, 512, 32
    $region13: #{tpu_custom_call.1} parent=1 // pred_fallthru
      _
    // Predicated region
    $region14: #{tpu_custom_call.1} parent=1 // pred_check
      _
    $region15: #{tpu_custom_call.1} parent=1 // pred_check_branch
      %63 = sbr.rel (0) target = $region17
    $region16: #{tpu_custom_call.1} parent=1 // pred_region
      %65 = vsyncadd [#allocation9], 0
      %s67 = sshll.u32 %s3, 4
      %s68 = int_to_ptr.hbm [resolvable:$true] %s67
      %s69 = sshll.u32 [#allocation8], 4
      %s70 = int_to_ptr.vmem [resolvable:$true] %s69
      %72 = dma.hbm_to_vmem [thread:$0]  %s68, 64, %s70, [#allocation9]
    $region17: #{tpu_custom_call.1} parent=1 // pred_fallthru
      _
    // Predicated region
    $region18: #{tpu_custom_call.1} parent=1 // pred_check
      _
    $region19: #{tpu_custom_call.1} parent=1 // pred_check_branch
      %74 = sbr.rel (0) target = $region21
    $region20: #{tpu_custom_call.1} parent=1 // pred_region
      %76 = vsyncadd [#allocation9], 0
      %s77 = sshll.u32 %s4, 4
      %s78 = int_to_ptr.hbm [resolvable:$true] %s77
      %s79 = sshll.u32 [#allocation10], 4
      %s80 = int_to_ptr.vmem [resolvable:$true] %s79
      %85 = dma.hbm_to_vmem [thread:$0]  %s78, 2048, %s80, [#allocation9], 512, 512, 32
    $region21: #{tpu_custom_call.1} parent=1 // pred_fallthru
      _
    // Predicated region
    $region22: #{tpu_custom_call.1} parent=1 // pred_check
      _
    $region23: #{tpu_custom_call.1} parent=1 // pred_check_branch
      %87 = sbr.rel (0) target = $region25
    $region24: #{tpu_custom_call.1} parent=1 // pred_region
      %89 = vsyncadd [#allocation12], 0
      %s90 = sshll.u32 %s5, 4
      %s91 = int_to_ptr.hbm [resolvable:$true] %s90
      %s92 = sshll.u32 [#allocation11], 4
      %s93 = int_to_ptr.vmem [resolvable:$true] %s92
      %98 = dma.hbm_to_vmem [thread:$0]  %s91, 2048, %s93, [#allocation12], 512, 512, 32
    $region25: #{tpu_custom_call.1} parent=1 // pred_fallthru
      _
    // Predicated region
    $region26: #{tpu_custom_call.1} parent=1 // pred_check
      _
    $region27: #{tpu_custom_call.1} parent=1 // pred_check_branch
      %100 = sbr.rel (0) target = $region29
    $region28: #{tpu_custom_call.1} parent=1 // pred_region
      _
    $region29: #{tpu_custom_call.1} parent=1 // pred_fallthru
      _
    // Predicated region
    $region30: #{tpu_custom_call.1} parent=1 // pred_check
      _
    $region31: #{tpu_custom_call.1} parent=1 // pred_check_branch
      %102 = sbr.rel (0) target = $region33
    $region32: #{tpu_custom_call.1} parent=1 // pred_region
      %104 = vsyncadd [#allocation12], 0
      %s105 = sshll.u32 %s7, 4
      %s106 = int_to_ptr.hbm [resolvable:$true] %s105
      %s107 = sshll.u32 [#allocation13], 4
      %s108 = int_to_ptr.vmem [resolvable:$true] %s107
      %113 = dma.hbm_to_vmem [thread:$0]  %s106, 2048, %s108, [#allocation12], 512, 512, 32
    $region33: #{tpu_custom_call.1} parent=1 // pred_fallthru
      _
    // Predicated region
    $region34: #{tpu_custom_call.1} parent=1 // pred_check
      _
    $region35: #{tpu_custom_call.1} parent=1 // pred_check_branch
      %115 = sbr.rel (0) target = $region37
    $region36: #{tpu_custom_call.1} parent=1 // pred_region
      %117 = vsyncadd [#allocation15], 0
      %s118 = sshll.u32 %s8, 4
      %s119 = int_to_ptr.hbm [resolvable:$true] %s118
      %s120 = sshll.u32 [#allocation14], 4
      %s121 = int_to_ptr.vmem [resolvable:$true] %s120
      %126 = dma.hbm_to_vmem [thread:$0]  %s119, 1024, %s121, [#allocation15], 512, 512, 32
    $region37: #{tpu_custom_call.1} parent=1 // pred_fallthru
      _
    // Predicated region
    $region38: #{tpu_custom_call.1} parent=1 // pred_check
      _
    $region39: #{tpu_custom_call.1} parent=1 // pred_check_branch
      %128 = sbr.rel (0) target = $region41
    $region40: #{tpu_custom_call.1} parent=1 // pred_region
      _
    $region41: #{tpu_custom_call.1} parent=1 // pred_fallthru
      _
    // Predicated region
    $region42: #{tpu_custom_call.1} parent=1 // pred_check
      _
    $region43: #{tpu_custom_call.1} parent=1 // pred_check_branch
      %130 = sbr.rel (0) target = $region45
    $region44: #{tpu_custom_call.1} parent=1 // pred_region
      %132 = vsyncadd [#allocation15], 0
      %s133 = sshll.u32 %s10, 4
      %s134 = int_to_ptr.hbm [resolvable:$true] %s133
      %s135 = sshll.u32 [#allocation16], 4
      %s136 = int_to_ptr.vmem [resolvable:$true] %s135
      %141 = dma.hbm_to_vmem [thread:$0]  %s134, 256, %s136, [#allocation15], 128, 128, 8
    $region45: #{tpu_custom_call.1} parent=1 // pred_fallthru
      _
    // Predicated region
    $region46: #{tpu_custom_call.1} parent=1 // pred_check
      _
    $region47: #{tpu_custom_call.1} parent=1 // pred_check_branch
      %143 = sbr.rel (0) target = $region49
    $region48: #{tpu_custom_call.1} parent=1 // pred_region
      _
    $region49: #{tpu_custom_call.1} parent=1 // pred_fallthru
      _
    // Predicated region
    $region50: #{tpu_custom_call.1} parent=1 // pred_check
      _
    $region51: #{tpu_custom_call.1} parent=1 // pred_check_branch
      %145 = sbr.rel (0) target = $region53
    $region52: #{tpu_custom_call.1} parent=1 // pred_region
      %147 = dma.done [#allocation3], 256
    $region53: #{tpu_custom_call.1} parent=1 // pred_fallthru
      _
    // Predicated region
    $region54: #{tpu_custom_call.1} parent=1 // pred_check
      _
    $region55: #{tpu_custom_call.1} parent=1 // pred_check_branch
      %149 = sbr.rel (0) target = $region57
    $region56: #{tpu_custom_call.1} parent=1 // pred_region
      %151 = dma.done [#allocation6], 1024
    $region57: #{tpu_custom_call.1} parent=1 // pred_fallthru
      _
    // Predicated region
    $region58: #{tpu_custom_call.1} parent=1 // pred_check
      _
    $region59: #{tpu_custom_call.1} parent=1 // pred_check_branch
      %153 = sbr.rel (0) target = $region61
    $region60: #{tpu_custom_call.1} parent=1 // pred_region
      %155 = dma.done [#allocation6], 2048
    $region61: #{tpu_custom_call.1} parent=1 // pred_fallthru
      _
    // Predicated region
    $region62: #{tpu_custom_call.1} parent=1 // pred_check
      _
    $region63: #{tpu_custom_call.1} parent=1 // pred_check_branch
      %157 = sbr.rel (0) target = $region65
    $region64: #{tpu_custom_call.1} parent=1 // pred_region
      %159 = dma.done [#allocation9], 64
    $region65: #{tpu_custom_call.1} parent=1 // pred_fallthru
      _
    // Predicated region
    $region66: #{tpu_custom_call.1} parent=1 // pred_check
      _
    $region67: #{tpu_custom_call.1} parent=1 // pred_check_branch
      %161 = sbr.rel (0) target = $region69
    $region68: #{tpu_custom_call.1} parent=1 // pred_region
      %163 = dma.done [#allocation9], 2048
    $region69: #{tpu_custom_call.1} parent=1 // pred_fallthru
      _
    // Predicated region
    $region70: #{tpu_custom_call.1} parent=1 // pred_check
      _
    $region71: #{tpu_custom_call.1} parent=1 // pred_check_branch
      %165 = sbr.rel (0) target = $region73
    $region72: #{tpu_custom_call.1} parent=1 // pred_region
      %167 = dma.done [#allocation12], 2048
    $region73: #{tpu_custom_call.1} parent=1 // pred_fallthru
      _
    // Predicated region
    $region74: #{tpu_custom_call.1} parent=1 // pred_check
      _
    $region75: #{tpu_custom_call.1} parent=1 // pred_check_branch
      %169 = sbr.rel (0) target = $region77
    $region76: #{tpu_custom_call.1} parent=1 // pred_region
      %171 = dma.done [#allocation12], 2048
    $region77: #{tpu_custom_call.1} parent=1 // pred_fallthru
      _
    // Predicated region
    $region78: #{tpu_custom_call.1} parent=1 // pred_check
      _
    $region79: #{tpu_custom_call.1} parent=1 // pred_check_branch
      %173 = sbr.rel (0) target = $region81
    $region80: #{tpu_custom_call.1} parent=1 // pred_region
      %175 = dma.done [#allocation15], 1024
    $region81: #{tpu_custom_call.1} parent=1 // pred_fallthru
      _
    // Predicated region
    $region82: #{tpu_custom_call.1} parent=1 // pred_check
      _
    $region83: #{tpu_custom_call.1} parent=1 // pred_check_branch
      %177 = sbr.rel (0) target = $region85
    $region84: #{tpu_custom_call.1} parent=1 // pred_region
      %179 = dma.done [#allocation15], 256
    $region85: #{tpu_custom_call.1} parent=1 // pred_fallthru
      _
    %v180 = vld [vmem:[#allocation8] sm:$0xf]
    %v182 = vperm.slane %v180, 0
    %v183 = vperm.slane %v180, 1
    %v184 = vperm.slane %v180, 2
    %v185 = vperm.slane %v180, 3
    %v190 = vld [vmem:[%s6] sm:$0xf]
    %v192 = vperm.slane %v190, 0
    %v193 = vperm.slane %v190, 1
    %v194 = vperm.slane %v190, 2
    %v195 = vperm.slane %v190, 3
    %v200 = vld [vmem:[%s9] sm:$0xf]
    %v202 = vperm.slane %v200, 0
    %v203 = vperm.slane %v200, 1
    %v204 = vperm.slane %v200, 2
    %v205 = vperm.slane %v200, 3
    %v210 = vld [vmem:[%s11] sm:$0x1]
    %v212 = vperm.slane %v210, 0
    %v214 = vld [vmem:[#allocation2] sm:$0x3]
    %v215 = vld [vmem:[#allocation5] sm:$0xff]
    %v216 = vld [vmem:[#allocation5 + $0x8] sm:$0xff]
    %v217 = vld [vmem:[#allocation5 + $0x10] sm:$0xff]
    %v218 = vld [vmem:[#allocation5 + $0x18] sm:$0xff]
    %v219 = vld [vmem:[#allocation5 + $0x20] sm:$0xff]
    %v220 = vld [vmem:[#allocation5 + $0x28] sm:$0xff]
    %v221 = vld [vmem:[#allocation5 + $0x30] sm:$0xff]
    %v222 = vld [vmem:[#allocation5 + $0x38] sm:$0xff]
    %v223 = vld [vmem:[#allocation7] sm:$0xff]
    %v224 = vld [vmem:[#allocation7 + $0x8] sm:$0xff]
    %v225 = vld [vmem:[#allocation7 + $0x10] sm:$0xff]
    %v226 = vld [vmem:[#allocation7 + $0x18] sm:$0xff]
    %v227 = vld [vmem:[#allocation7 + $0x20] sm:$0xff]
    %v228 = vld [vmem:[#allocation7 + $0x28] sm:$0xff]
    %v229 = vld [vmem:[#allocation7 + $0x30] sm:$0xff]
    %v230 = vld [vmem:[#allocation7 + $0x38] sm:$0xff]
    %v231 = vld [vmem:[#allocation7 + $0x40] sm:$0xff]
    %v232 = vld [vmem:[#allocation7 + $0x48] sm:$0xff]
    %v233 = vld [vmem:[#allocation7 + $0x50] sm:$0xff]
    %v234 = vld [vmem:[#allocation7 + $0x58] sm:$0xff]
    %v235 = vld [vmem:[#allocation7 + $0x60] sm:$0xff]
    %v236 = vld [vmem:[#allocation7 + $0x68] sm:$0xff]
    %v237 = vld [vmem:[#allocation7 + $0x70] sm:$0xff]
    %v238 = vld [vmem:[#allocation7 + $0x78] sm:$0xff]
    %vm239 = vcmask 261120
    %v241 = vsel %vm239, 0.0, 0
    %243 = vmatpush.msra.mxu0 0.0
    %244 = vmatpush.msra.mxu0 0.0
    %245 = vmatpush.msra.mxu0 0.0
    %246 = vmatpush.msra.mxu0 0.0
    %247 = vmatpush.msra.mxu0 0.0
    %248 = vmatpush.msra.mxu0 0.0
    %249 = vmatpush.msra.mxu0 0.0
    %250 = vmatpush.msra.mxu0 0.0
    %251 = vmatpush.msra.mxu0 0.0
    %252 = vmatpush.msra.mxu0 0.0
    %253 = vmatpush.msra.mxu0 0.0
    %254 = vmatpush.msra.mxu0 0.0
    %255 = vmatpush.msra.mxu0 %v235
    %256 = vmatpush.msra.mxu0 %v231
    %257 = vmatpush.msra.mxu0 %v227
    %258 = vmatpush.msra.mxu0 %v223
    %259 = vmatmul.f32.gmra.mxu0 %v241
    %v260 = vpop.f32.mrf.mxu0
    %v261 = vadd.f32 0.0, %v260
    %262 = vdwg.mxu0
    %263 = vmatpush.msra.mxu0 0.0
    %264 = vmatpush.msra.mxu0 0.0
    %265 = vmatpush.msra.mxu0 0.0
    %266 = vmatpush.msra.mxu0 0.0
    %267 = vmatpush.msra.mxu0 0.0
    %268 = vmatpush.msra.mxu0 0.0
    %269 = vmatpush.msra.mxu0 0.0
    %270 = vmatpush.msra.mxu0 0.0
    %271 = vmatpush.msra.mxu0 0.0
    %272 = vmatpush.msra.mxu0 0.0
    %273 = vmatpush.msra.mxu0 0.0
    %274 = vmatpush.msra.mxu0 0.0
    %275 = vmatpush.msra.mxu0 %v236
    %276 = vmatpush.msra.mxu0 %v232
    %277 = vmatpush.msra.mxu0 %v228
    %278 = vmatpush.msra.mxu0 %v224
    %279 = vmatmul.f32.gmra.mxu0 %v241
    %v280 = vpop.f32.mrf.mxu0
    %v281 = vadd.f32 0.0, %v280
    %282 = vdwg.mxu0
    %283 = vmatpush.msra.mxu0 0.0
    %284 = vmatpush.msra.mxu0 0.0
    %285 = vmatpush.msra.mxu0 0.0
    %286 = vmatpush.msra.mxu0 0.0
    %287 = vmatpush.msra.mxu0 0.0
    %288 = vmatpush.msra.mxu0 0.0
    %289 = vmatpush.msra.mxu0 0.0
    %290 = vmatpush.msra.mxu0 0.0
    %291 = vmatpush.msra.mxu0 0.0
    %292 = vmatpush.msra.mxu0 0.0
    %293 = vmatpush.msra.mxu0 0.0
    %294 = vmatpush.msra.mxu0 0.0
    %295 = vmatpush.msra.mxu0 %v237
    %296 = vmatpush.msra.mxu0 %v233
    %297 = vmatpush.msra.mxu0 %v229
    %298 = vmatpush.msra.mxu0 %v225
    %299 = vmatmul.f32.gmra.mxu0 %v241
    %v300 = vpop.f32.mrf.mxu0
    %v301 = vadd.f32 0.0, %v300
    %302 = vdwg.mxu0
    %303 = vmatpush.msra.mxu0 0.0
    %304 = vmatpush.msra.mxu0 0.0
    %305 = vmatpush.msra.mxu0 0.0
    %306 = vmatpush.msra.mxu0 0.0
    %307 = vmatpush.msra.mxu0 0.0
    %308 = vmatpush.msra.mxu0 0.0
    %309 = vmatpush.msra.mxu0 0.0
    %310 = vmatpush.msra.mxu0 0.0
    %311 = vmatpush.msra.mxu0 0.0
    %312 = vmatpush.msra.mxu0 0.0
    %313 = vmatpush.msra.mxu0 0.0
    %314 = vmatpush.msra.mxu0 0.0
    %315 = vmatpush.msra.mxu0 %v238
    %316 = vmatpush.msra.mxu0 %v234
    %317 = vmatpush.msra.mxu0 %v230
    %318 = vmatpush.msra.mxu0 %v226
    %319 = vmatmul.f32.gmra.mxu0 %v241
    %v320 = vpop.f32.mrf.mxu0
    %v321 = vadd.f32 0.0, %v320
    %322 = vdwg.mxu0
    %vm323 = vcmask 130048
    %v325 = vsel %vm323, %v214, 0
    %327 = vmatpush.msra.mxu0 0.0
    %328 = vmatpush.msra.mxu0 0.0
    %329 = vmatpush.msra.mxu0 0.0
    %330 = vmatpush.msra.mxu0 0.0
    %331 = vmatpush.msra.mxu0 0.0
    %332 = vmatpush.msra.mxu0 0.0
    %333 = vmatpush.msra.mxu0 0.0
    %334 = vmatpush.msra.mxu0 0.0
    %335 = vmatpush.msra.mxu0 0.0
    %336 = vmatpush.msra.mxu0 0.0
    %337 = vmatpush.msra.mxu0 0.0
    %338 = vmatpush.msra.mxu0 0.0
    %339 = vmatpush.msra.mxu0 0.0
    %340 = vmatpush.msra.mxu0 0.0
    %341 = vmatpush.msra.mxu0 %v219
    %342 = vmatpush.msra.mxu0 %v215
    %343 = vmatmul.f32.gmra.mxu0 %v325
    %v344 = vpop.f32.mrf.mxu0
    %v345 = vadd.f32 %v261, %v344
    %346 = vdwg.mxu0
    %347 = vmatpush.msra.mxu0 0.0
    %348 = vmatpush.msra.mxu0 0.0
    %349 = vmatpush.msra.mxu0 0.0
    %350 = vmatpush.msra.mxu0 0.0
    %351 = vmatpush.msra.mxu0 0.0
    %352 = vmatpush.msra.mxu0 0.0
    %353 = vmatpush.msra.mxu0 0.0
    %354 = vmatpush.msra.mxu0 0.0
    %355 = vmatpush.msra.mxu0 0.0
    %356 = vmatpush.msra.mxu0 0.0
    %357 = vmatpush.msra.mxu0 0.0
    %358 = vmatpush.msra.mxu0 0.0
    %359 = vmatpush.msra.mxu0 0.0
    %360 = vmatpush.msra.mxu0 0.0
    %361 = vmatpush.msra.mxu0 %v220
    %362 = vmatpush.msra.mxu0 %v216
    %363 = vmatmul.f32.gmra.mxu0 %v325
    %v364 = vpop.f32.mrf.mxu0
    %v365 = vadd.f32 %v281, %v364
    %366 = vdwg.mxu0
    %367 = vmatpush.msra.mxu0 0.0
    %368 = vmatpush.msra.mxu0 0.0
    %369 = vmatpush.msra.mxu0 0.0
    %370 = vmatpush.msra.mxu0 0.0
    %371 = vmatpush.msra.mxu0 0.0
    %372 = vmatpush.msra.mxu0 0.0
    %373 = vmatpush.msra.mxu0 0.0
    %374 = vmatpush.msra.mxu0 0.0
    %375 = vmatpush.msra.mxu0 0.0
    %376 = vmatpush.msra.mxu0 0.0
    %377 = vmatpush.msra.mxu0 0.0
    %378 = vmatpush.msra.mxu0 0.0
    %379 = vmatpush.msra.mxu0 0.0
    %380 = vmatpush.msra.mxu0 0.0
    %381 = vmatpush.msra.mxu0 %v221
    %382 = vmatpush.msra.mxu0 %v217
    %383 = vmatmul.f32.gmra.mxu0 %v325
    %v384 = vpop.f32.mrf.mxu0
    %v385 = vadd.f32 %v301, %v384
    %386 = vdwg.mxu0
    %387 = vmatpush.msra.mxu0 0.0
    %388 = vmatpush.msra.mxu0 0.0
    %389 = vmatpush.msra.mxu0 0.0
    %390 = vmatpush.msra.mxu0 0.0
    %391 = vmatpush.msra.mxu0 0.0
    %392 = vmatpush.msra.mxu0 0.0
    %393 = vmatpush.msra.mxu0 0.0
    %394 = vmatpush.msra.mxu0 0.0
    %395 = vmatpush.msra.mxu0 0.0
    %396 = vmatpush.msra.mxu0 0.0
    %397 = vmatpush.msra.mxu0 0.0
    %398 = vmatpush.msra.mxu0 0.0
    %399 = vmatpush.msra.mxu0 0.0
    %400 = vmatpush.msra.mxu0 0.0
    %401 = vmatpush.msra.mxu0 %v222
    %402 = vmatpush.msra.mxu0 %v218
    %403 = vmatmul.f32.gmra.mxu0 %v325
    %v404 = vpop.f32.mrf.mxu0
    %v405 = vadd.f32 %v321, %v404
    %406 = vdwg.mxu0
    %v407 = vadd.f32 %v345, %v182
    %v408 = vadd.f32 %v365, %v183
    %v409 = vadd.f32 %v385, %v184
    %v410 = vadd.f32 %v405, %v185
    %v411 = vxor.u32 %v407, 2147483648
    %v412 = vmul.f32 %v411, 1.442695
    %v413 = vpow.pop %v412
    %v414 = vadd.f32 %v413, 1.0
    %v415 = vrcp.pop %v414
    %v416 = vmul.f32 %v414, %v415
    %v417 = vsub.f32 1.0, %v416
    %v418 = vmul.f32 %v415, %v417
    %v419 = vadd.f32 %v415, %v418
    %vm420 = vweird.f32 %v414
    %vm421 = vweird.f32 %v415
    %vm422 = vmor %vm420, %vm421
    %v423 = vsel %vm422, %v415, %v419
    %v424 = vand.u32 2147483647, %v414
    %vm425 = vcmp.eq.f32.partialorder %v424, 8.507059e+37
    %v426 = vand.u32 %v414, 2147483648
    %v427 = vor.u32 1.1754944e-38, %v426
    %v428 = vsel %vm425, %v427, %v423
    %v429 = vmul.f32 1.0, %v428
    %v430 = vxor.u32 %v408, 2147483648
    %v431 = vmul.f32 %v430, 1.442695
    %v432 = vpow.pop %v431
    %v433 = vadd.f32 %v432, 1.0
    %v434 = vrcp.pop %v433
    %v435 = vmul.f32 %v433, %v434
    %v436 = vsub.f32 1.0, %v435
    %v437 = vmul.f32 %v434, %v436
    %v438 = vadd.f32 %v434, %v437
    %vm439 = vweird.f32 %v433
    %vm440 = vweird.f32 %v434
    %vm441 = vmor %vm439, %vm440
    %v442 = vsel %vm441, %v434, %v438
    %v443 = vand.u32 2147483647, %v433
    %vm444 = vcmp.eq.f32.partialorder %v443, 8.507059e+37
    %v445 = vand.u32 %v433, 2147483648
    %v446 = vor.u32 1.1754944e-38, %v445
    %v447 = vsel %vm444, %v446, %v442
    %v448 = vmul.f32 1.0, %v447
    %v449 = vmul.f32 %v429, %v410
    %v450 = vadd.f32 %v409, %v449
    %v451 = vtanh.pop %v450
    %v452 = vsub.f32 1.0, %v448
    %v453 = vmul.f32 %v452, %v451
    %v454 = vmul.f32 %v448, 0.0
    %v455 = vadd.f32 %v453, %v454
    %v456 = vld [vmem:[#allocation10] sm:$0xff]
    %v457 = vld [vmem:[#allocation10 + $0x8] sm:$0xff]
    %v458 = vld [vmem:[#allocation10 + $0x10] sm:$0xff]
    %v459 = vld [vmem:[#allocation10 + $0x18] sm:$0xff]
    %v460 = vld [vmem:[#allocation10 + $0x20] sm:$0xff]
    %v461 = vld [vmem:[#allocation10 + $0x28] sm:$0xff]
    %v462 = vld [vmem:[#allocation10 + $0x30] sm:$0xff]
    %v463 = vld [vmem:[#allocation10 + $0x38] sm:$0xff]
    %v464 = vld [vmem:[#allocation10 + $0x40] sm:$0xff]
    %v465 = vld [vmem:[#allocation10 + $0x48] sm:$0xff]
    %v466 = vld [vmem:[#allocation10 + $0x50] sm:$0xff]
    %v467 = vld [vmem:[#allocation10 + $0x58] sm:$0xff]
    %v468 = vld [vmem:[#allocation10 + $0x60] sm:$0xff]
    %v469 = vld [vmem:[#allocation10 + $0x68] sm:$0xff]
    %v470 = vld [vmem:[#allocation10 + $0x70] sm:$0xff]
    %v471 = vld [vmem:[#allocation10 + $0x78] sm:$0xff]
    %v472 = vld [vmem:[#allocation11] sm:$0xff]
    %v473 = vld [vmem:[#allocation11 + $0x8] sm:$0xff]
    %v474 = vld [vmem:[#allocation11 + $0x10] sm:$0xff]
    %v475 = vld [vmem:[#allocation11 + $0x18] sm:$0xff]
    %v476 = vld [vmem:[#allocation11 + $0x20] sm:$0xff]
    %v477 = vld [vmem:[#allocation11 + $0x28] sm:$0xff]
    %v478 = vld [vmem:[#allocation11 + $0x30] sm:$0xff]
    %v479 = vld [vmem:[#allocation11 + $0x38] sm:$0xff]
    %v480 = vld [vmem:[#allocation11 + $0x40] sm:$0xff]
    %v481 = vld [vmem:[#allocation11 + $0x48] sm:$0xff]
    %v482 = vld [vmem:[#allocation11 + $0x50] sm:$0xff]
    %v483 = vld [vmem:[#allocation11 + $0x58] sm:$0xff]
    %v484 = vld [vmem:[#allocation11 + $0x60] sm:$0xff]
    %v485 = vld [vmem:[#allocation11 + $0x68] sm:$0xff]
    %v486 = vld [vmem:[#allocation11 + $0x70] sm:$0xff]
    %v487 = vld [vmem:[#allocation11 + $0x78] sm:$0xff]
    %488 = vmatpush.msra.mxu0 0.0
    %489 = vmatpush.msra.mxu0 0.0
    %490 = vmatpush.msra.mxu0 0.0
    %491 = vmatpush.msra.mxu0 0.0
    %492 = vmatpush.msra.mxu0 0.0
    %493 = vmatpush.msra.mxu0 0.0
    %494 = vmatpush.msra.mxu0 0.0
    %495 = vmatpush.msra.mxu0 0.0
    %496 = vmatpush.msra.mxu0 0.0
    %497 = vmatpush.msra.mxu0 0.0
    %498 = vmatpush.msra.mxu0 0.0
    %499 = vmatpush.msra.mxu0 0.0
    %500 = vmatpush.msra.mxu0 %v484
    %501 = vmatpush.msra.mxu0 %v480
    %502 = vmatpush.msra.mxu0 %v476
    %503 = vmatpush.msra.mxu0 %v472
    %504 = vmatmul.f32.gmra.mxu0 %v241
    %v505 = vpop.f32.mrf.mxu0
    %v506 = vadd.f32 0.0, %v505
    %507 = vdwg.mxu0
    %508 = vmatpush.msra.mxu0 0.0
    %509 = vmatpush.msra.mxu0 0.0
    %510 = vmatpush.msra.mxu0 0.0
    %511 = vmatpush.msra.mxu0 0.0
    %512 = vmatpush.msra.mxu0 0.0
    %513 = vmatpush.msra.mxu0 0.0
    %514 = vmatpush.msra.mxu0 0.0
    %515 = vmatpush.msra.mxu0 0.0
    %516 = vmatpush.msra.mxu0 0.0
    %517 = vmatpush.msra.mxu0 0.0
    %518 = vmatpush.msra.mxu0 0.0
    %519 = vmatpush.msra.mxu0 0.0
    %520 = vmatpush.msra.mxu0 %v485
    %521 = vmatpush.msra.mxu0 %v481
    %522 = vmatpush.msra.mxu0 %v477
    %523 = vmatpush.msra.mxu0 %v473
    %524 = vmatmul.f32.gmra.mxu0 %v241
    %v525 = vpop.f32.mrf.mxu0
    %v526 = vadd.f32 0.0, %v525
    %527 = vdwg.mxu0
    %528 = vmatpush.msra.mxu0 0.0
    %529 = vmatpush.msra.mxu0 0.0
    %530 = vmatpush.msra.mxu0 0.0
    %531 = vmatpush.msra.mxu0 0.0
    %532 = vmatpush.msra.mxu0 0.0
    %533 = vmatpush.msra.mxu0 0.0
    %534 = vmatpush.msra.mxu0 0.0
    %535 = vmatpush.msra.mxu0 0.0
    %536 = vmatpush.msra.mxu0 0.0
    %537 = vmatpush.msra.mxu0 0.0
    %538 = vmatpush.msra.mxu0 0.0
    %539 = vmatpush.msra.mxu0 0.0
    %540 = vmatpush.msra.mxu0 %v486
    %541 = vmatpush.msra.mxu0 %v482
    %542 = vmatpush.msra.mxu0 %v478
    %543 = vmatpush.msra.mxu0 %v474
    %544 = vmatmul.f32.gmra.mxu0 %v241
    %v545 = vpop.f32.mrf.mxu0
    %v546 = vadd.f32 0.0, %v545
    %547 = vdwg.mxu0
    %548 = vmatpush.msra.mxu0 0.0
    %549 = vmatpush.msra.mxu0 0.0
    %550 = vmatpush.msra.mxu0 0.0
    %551 = vmatpush.msra.mxu0 0.0
    %552 = vmatpush.msra.mxu0 0.0
    %553 = vmatpush.msra.mxu0 0.0
    %554 = vmatpush.msra.mxu0 0.0
    %555 = vmatpush.msra.mxu0 0.0
    %556 = vmatpush.msra.mxu0 0.0
    %557 = vmatpush.msra.mxu0 0.0
    %558 = vmatpush.msra.mxu0 0.0
    %559 = vmatpush.msra.mxu0 0.0
    %560 = vmatpush.msra.mxu0 %v487
    %561 = vmatpush.msra.mxu0 %v483
    %562 = vmatpush.msra.mxu0 %v479
    %563 = vmatpush.msra.mxu0 %v475
    %564 = vmatmul.f32.gmra.mxu0 %v241
    %v565 = vpop.f32.mrf.mxu0
    %v566 = vadd.f32 0.0, %v565
    %567 = vdwg.mxu0
    %v569 = vsel %vm239, %v455, 0
    %571 = vmatpush.msra.mxu0 0.0
    %572 = vmatpush.msra.mxu0 0.0
    %573 = vmatpush.msra.mxu0 0.0
    %574 = vmatpush.msra.mxu0 0.0
    %575 = vmatpush.msra.mxu0 0.0
    %576 = vmatpush.msra.mxu0 0.0
    %577 = vmatpush.msra.mxu0 0.0
    %578 = vmatpush.msra.mxu0 0.0
    %579 = vmatpush.msra.mxu0 0.0
    %580 = vmatpush.msra.mxu0 0.0
    %581 = vmatpush.msra.mxu0 0.0
    %582 = vmatpush.msra.mxu0 0.0
    %583 = vmatpush.msra.mxu0 %v468
    %584 = vmatpush.msra.mxu0 %v464
    %585 = vmatpush.msra.mxu0 %v460
    %586 = vmatpush.msra.mxu0 %v456
    %587 = vmatmul.f32.gmra.mxu0 %v569
    %v588 = vpop.f32.mrf.mxu0
    %v589 = vadd.f32 %v506, %v588
    %590 = vdwg.mxu0
    %591 = vmatpush.msra.mxu0 0.0
    %592 = vmatpush.msra.mxu0 0.0
    %593 = vmatpush.msra.mxu0 0.0
    %594 = vmatpush.msra.mxu0 0.0
    %595 = vmatpush.msra.mxu0 0.0
    %596 = vmatpush.msra.mxu0 0.0
    %597 = vmatpush.msra.mxu0 0.0
    %598 = vmatpush.msra.mxu0 0.0
    %599 = vmatpush.msra.mxu0 0.0
    %600 = vmatpush.msra.mxu0 0.0
    %601 = vmatpush.msra.mxu0 0.0
    %602 = vmatpush.msra.mxu0 0.0
    %603 = vmatpush.msra.mxu0 %v469
    %604 = vmatpush.msra.mxu0 %v465
    %605 = vmatpush.msra.mxu0 %v461
    %606 = vmatpush.msra.mxu0 %v457
    %607 = vmatmul.f32.gmra.mxu0 %v569
    %v608 = vpop.f32.mrf.mxu0
    %v609 = vadd.f32 %v526, %v608
    %610 = vdwg.mxu0
    %611 = vmatpush.msra.mxu0 0.0
    %612 = vmatpush.msra.mxu0 0.0
    %613 = vmatpush.msra.mxu0 0.0
    %614 = vmatpush.msra.mxu0 0.0
    %615 = vmatpush.msra.mxu0 0.0
    %616 = vmatpush.msra.mxu0 0.0
    %617 = vmatpush.msra.mxu0 0.0
    %618 = vmatpush.msra.mxu0 0.0
    %619 = vmatpush.msra.mxu0 0.0
    %620 = vmatpush.msra.mxu0 0.0
    %621 = vmatpush.msra.mxu0 0.0
    %622 = vmatpush.msra.mxu0 0.0
    %623 = vmatpush.msra.mxu0 %v470
    %624 = vmatpush.msra.mxu0 %v466
    %625 = vmatpush.msra.mxu0 %v462
    %626 = vmatpush.msra.mxu0 %v458
    %627 = vmatmul.f32.gmra.mxu0 %v569
    %v628 = vpop.f32.mrf.mxu0
    %v629 = vadd.f32 %v546, %v628
    %630 = vdwg.mxu0
    %631 = vmatpush.msra.mxu0 0.0
    %632 = vmatpush.msra.mxu0 0.0
    %633 = vmatpush.msra.mxu0 0.0
    %634 = vmatpush.msra.mxu0 0.0
    %635 = vmatpush.msra.mxu0 0.0
    %636 = vmatpush.msra.mxu0 0.0
    %637 = vmatpush.msra.mxu0 0.0
    %638 = vmatpush.msra.mxu0 0.0
    %639 = vmatpush.msra.mxu0 0.0
    %640 = vmatpush.msra.mxu0 0.0
    %641 = vmatpush.msra.mxu0 0.0
    %642 = vmatpush.msra.mxu0 0.0
    %643 = vmatpush.msra.mxu0 %v471
    %644 = vmatpush.msra.mxu0 %v467
    %645 = vmatpush.msra.mxu0 %v463
    %646 = vmatpush.msra.mxu0 %v459
    %647 = vmatmul.f32.gmra.mxu0 %v569
    %v648 = vpop.f32.mrf.mxu0
    %v649 = vadd.f32 %v566, %v648
    %650 = vdwg.mxu0
    %v651 = vadd.f32 %v589, %v192
    %v652 = vadd.f32 %v609, %v193
    %v653 = vadd.f32 %v629, %v194
    %v654 = vadd.f32 %v649, %v195
    %v655 = vxor.u32 %v651, 2147483648
    %v656 = vmul.f32 %v655, 1.442695
    %v657 = vpow.pop %v656
    %v658 = vadd.f32 %v657, 1.0
    %v659 = vrcp.pop %v658
    %v660 = vmul.f32 %v658, %v659
    %v661 = vsub.f32 1.0, %v660
    %v662 = vmul.f32 %v659, %v661
    %v663 = vadd.f32 %v659, %v662
    %vm664 = vweird.f32 %v658
    %vm665 = vweird.f32 %v659
    %vm666 = vmor %vm664, %vm665
    %v667 = vsel %vm666, %v659, %v663
    %v668 = vand.u32 2147483647, %v658
    %vm669 = vcmp.eq.f32.partialorder %v668, 8.507059e+37
    %v670 = vand.u32 %v658, 2147483648
    %v671 = vor.u32 1.1754944e-38, %v670
    %v672 = vsel %vm669, %v671, %v667
    %v673 = vmul.f32 1.0, %v672
    %v674 = vxor.u32 %v652, 2147483648
    %v675 = vmul.f32 %v674, 1.442695
    %v676 = vpow.pop %v675
    %v677 = vadd.f32 %v676, 1.0
    %v678 = vrcp.pop %v677
    %v679 = vmul.f32 %v677, %v678
    %v680 = vsub.f32 1.0, %v679
    %v681 = vmul.f32 %v678, %v680
    %v682 = vadd.f32 %v678, %v681
    %vm683 = vweird.f32 %v677
    %vm684 = vweird.f32 %v678
    %vm685 = vmor %vm683, %vm684
    %v686 = vsel %vm685, %v678, %v682
    %v687 = vand.u32 2147483647, %v677
    %vm688 = vcmp.eq.f32.partialorder %v687, 8.507059e+37
    %v689 = vand.u32 %v677, 2147483648
    %v690 = vor.u32 1.1754944e-38, %v689
    %v691 = vsel %vm688, %v690, %v686
    %v692 = vmul.f32 1.0, %v691
    %v693 = vmul.f32 %v673, %v654
    %v694 = vadd.f32 %v653, %v693
    %v695 = vtanh.pop %v694
    %v696 = vsub.f32 1.0, %v692
    %v697 = vmul.f32 %v696, %v695
    %v698 = vmul.f32 %v692, 0.0
    %v699 = vadd.f32 %v697, %v698
    %v700 = vld [vmem:[#allocation13] sm:$0xff]
    %v701 = vld [vmem:[#allocation13 + $0x8] sm:$0xff]
    %v702 = vld [vmem:[#allocation13 + $0x10] sm:$0xff]
    %v703 = vld [vmem:[#allocation13 + $0x18] sm:$0xff]
    %v704 = vld [vmem:[#allocation13 + $0x20] sm:$0xff]
    %v705 = vld [vmem:[#allocation13 + $0x28] sm:$0xff]
    %v706 = vld [vmem:[#allocation13 + $0x30] sm:$0xff]
    %v707 = vld [vmem:[#allocation13 + $0x38] sm:$0xff]
    %v708 = vld [vmem:[#allocation13 + $0x40] sm:$0xff]
    %v709 = vld [vmem:[#allocation13 + $0x48] sm:$0xff]
    %v710 = vld [vmem:[#allocation13 + $0x50] sm:$0xff]
    %v711 = vld [vmem:[#allocation13 + $0x58] sm:$0xff]
    %v712 = vld [vmem:[#allocation13 + $0x60] sm:$0xff]
    %v713 = vld [vmem:[#allocation13 + $0x68] sm:$0xff]
    %v714 = vld [vmem:[#allocation13 + $0x70] sm:$0xff]
    %v715 = vld [vmem:[#allocation13 + $0x78] sm:$0xff]
    %v716 = vld [vmem:[#allocation14] sm:$0xff]
    %v717 = vld [vmem:[#allocation14 + $0x8] sm:$0xff]
    %v718 = vld [vmem:[#allocation14 + $0x10] sm:$0xff]
    %v719 = vld [vmem:[#allocation14 + $0x18] sm:$0xff]
    %v720 = vld [vmem:[#allocation14 + $0x20] sm:$0xff]
    %v721 = vld [vmem:[#allocation14 + $0x28] sm:$0xff]
    %v722 = vld [vmem:[#allocation14 + $0x30] sm:$0xff]
    %v723 = vld [vmem:[#allocation14 + $0x38] sm:$0xff]
    %v724 = vsel %vm323, 0.0, 0
    %726 = vmatpush.msra.mxu0 0.0
    %727 = vmatpush.msra.mxu0 0.0
    %728 = vmatpush.msra.mxu0 0.0
    %729 = vmatpush.msra.mxu0 0.0
    %730 = vmatpush.msra.mxu0 0.0
    %731 = vmatpush.msra.mxu0 0.0
    %732 = vmatpush.msra.mxu0 0.0
    %733 = vmatpush.msra.mxu0 0.0
    %734 = vmatpush.msra.mxu0 0.0
    %735 = vmatpush.msra.mxu0 0.0
    %736 = vmatpush.msra.mxu0 0.0
    %737 = vmatpush.msra.mxu0 0.0
    %738 = vmatpush.msra.mxu0 0.0
    %739 = vmatpush.msra.mxu0 0.0
    %740 = vmatpush.msra.mxu0 %v720
    %741 = vmatpush.msra.mxu0 %v716
    %742 = vmatmul.f32.gmra.mxu0 %v724
    %v743 = vpop.f32.mrf.mxu0
    %v744 = vadd.f32 0.0, %v743
    %745 = vdwg.mxu0
    %746 = vmatpush.msra.mxu0 0.0
    %747 = vmatpush.msra.mxu0 0.0
    %748 = vmatpush.msra.mxu0 0.0
    %749 = vmatpush.msra.mxu0 0.0
    %750 = vmatpush.msra.mxu0 0.0
    %751 = vmatpush.msra.mxu0 0.0
    %752 = vmatpush.msra.mxu0 0.0
    %753 = vmatpush.msra.mxu0 0.0
    %754 = vmatpush.msra.mxu0 0.0
    %755 = vmatpush.msra.mxu0 0.0
    %756 = vmatpush.msra.mxu0 0.0
    %757 = vmatpush.msra.mxu0 0.0
    %758 = vmatpush.msra.mxu0 0.0
    %759 = vmatpush.msra.mxu0 0.0
    %760 = vmatpush.msra.mxu0 %v721
    %761 = vmatpush.msra.mxu0 %v717
    %762 = vmatmul.f32.gmra.mxu0 %v724
    %v763 = vpop.f32.mrf.mxu0
    %v764 = vadd.f32 0.0, %v763
    %765 = vdwg.mxu0
    %766 = vmatpush.msra.mxu0 0.0
    %767 = vmatpush.msra.mxu0 0.0
    %768 = vmatpush.msra.mxu0 0.0
    %769 = vmatpush.msra.mxu0 0.0
    %770 = vmatpush.msra.mxu0 0.0
    %771 = vmatpush.msra.mxu0 0.0
    %772 = vmatpush.msra.mxu0 0.0
    %773 = vmatpush.msra.mxu0 0.0
    %774 = vmatpush.msra.mxu0 0.0
    %775 = vmatpush.msra.mxu0 0.0
    %776 = vmatpush.msra.mxu0 0.0
    %777 = vmatpush.msra.mxu0 0.0
    %778 = vmatpush.msra.mxu0 0.0
    %779 = vmatpush.msra.mxu0 0.0
    %780 = vmatpush.msra.mxu0 %v722
    %781 = vmatpush.msra.mxu0 %v718
    %782 = vmatmul.f32.gmra.mxu0 %v724
    %v783 = vpop.f32.mrf.mxu0
    %v784 = vadd.f32 0.0, %v783
    %785 = vdwg.mxu0
    %786 = vmatpush.msra.mxu0 0.0
    %787 = vmatpush.msra.mxu0 0.0
    %788 = vmatpush.msra.mxu0 0.0
    %789 = vmatpush.msra.mxu0 0.0
    %790 = vmatpush.msra.mxu0 0.0
    %791 = vmatpush.msra.mxu0 0.0
    %792 = vmatpush.msra.mxu0 0.0
    %793 = vmatpush.msra.mxu0 0.0
    %794 = vmatpush.msra.mxu0 0.0
    %795 = vmatpush.msra.mxu0 0.0
    %796 = vmatpush.msra.mxu0 0.0
    %797 = vmatpush.msra.mxu0 0.0
    %798 = vmatpush.msra.mxu0 0.0
    %799 = vmatpush.msra.mxu0 0.0
    %800 = vmatpush.msra.mxu0 %v723
    %801 = vmatpush.msra.mxu0 %v719
    %802 = vmatmul.f32.gmra.mxu0 %v724
    %v803 = vpop.f32.mrf.mxu0
    %v804 = vadd.f32 0.0, %v803
    %805 = vdwg.mxu0
    %v807 = vsel %vm239, %v699, 0
    %809 = vmatpush.msra.mxu0 0.0
    %810 = vmatpush.msra.mxu0 0.0
    %811 = vmatpush.msra.mxu0 0.0
    %812 = vmatpush.msra.mxu0 0.0
    %813 = vmatpush.msra.mxu0 0.0
    %814 = vmatpush.msra.mxu0 0.0
    %815 = vmatpush.msra.mxu0 0.0
    %816 = vmatpush.msra.mxu0 0.0
    %817 = vmatpush.msra.mxu0 0.0
    %818 = vmatpush.msra.mxu0 0.0
    %819 = vmatpush.msra.mxu0 0.0
    %820 = vmatpush.msra.mxu0 0.0
    %821 = vmatpush.msra.mxu0 %v712
    %822 = vmatpush.msra.mxu0 %v708
    %823 = vmatpush.msra.mxu0 %v704
    %824 = vmatpush.msra.mxu0 %v700
    %825 = vmatmul.f32.gmra.mxu0 %v807
    %v826 = vpop.f32.mrf.mxu0
    %v827 = vadd.f32 %v744, %v826
    %828 = vdwg.mxu0
    %829 = vmatpush.msra.mxu0 0.0
    %830 = vmatpush.msra.mxu0 0.0
    %831 = vmatpush.msra.mxu0 0.0
    %832 = vmatpush.msra.mxu0 0.0
    %833 = vmatpush.msra.mxu0 0.0
    %834 = vmatpush.msra.mxu0 0.0
    %835 = vmatpush.msra.mxu0 0.0
    %836 = vmatpush.msra.mxu0 0.0
    %837 = vmatpush.msra.mxu0 0.0
    %838 = vmatpush.msra.mxu0 0.0
    %839 = vmatpush.msra.mxu0 0.0
    %840 = vmatpush.msra.mxu0 0.0
    %841 = vmatpush.msra.mxu0 %v713
    %842 = vmatpush.msra.mxu0 %v709
    %843 = vmatpush.msra.mxu0 %v705
    %844 = vmatpush.msra.mxu0 %v701
    %845 = vmatmul.f32.gmra.mxu0 %v807
    %v846 = vpop.f32.mrf.mxu0
    %v847 = vadd.f32 %v764, %v846
    %848 = vdwg.mxu0
    %849 = vmatpush.msra.mxu0 0.0
    %850 = vmatpush.msra.mxu0 0.0
    %851 = vmatpush.msra.mxu0 0.0
    %852 = vmatpush.msra.mxu0 0.0
    %853 = vmatpush.msra.mxu0 0.0
    %854 = vmatpush.msra.mxu0 0.0
    %855 = vmatpush.msra.mxu0 0.0
    %856 = vmatpush.msra.mxu0 0.0
    %857 = vmatpush.msra.mxu0 0.0
    %858 = vmatpush.msra.mxu0 0.0
    %859 = vmatpush.msra.mxu0 0.0
    %860 = vmatpush.msra.mxu0 0.0
    %861 = vmatpush.msra.mxu0 %v714
    %862 = vmatpush.msra.mxu0 %v710
    %863 = vmatpush.msra.mxu0 %v706
    %864 = vmatpush.msra.mxu0 %v702
    %865 = vmatmul.f32.gmra.mxu0 %v807
    %v866 = vpop.f32.mrf.mxu0
    %v867 = vadd.f32 %v784, %v866
    %868 = vdwg.mxu0
    %869 = vmatpush.msra.mxu0 0.0
    %870 = vmatpush.msra.mxu0 0.0
    %871 = vmatpush.msra.mxu0 0.0
    %872 = vmatpush.msra.mxu0 0.0
    %873 = vmatpush.msra.mxu0 0.0
    %874 = vmatpush.msra.mxu0 0.0
    %875 = vmatpush.msra.mxu0 0.0
    %876 = vmatpush.msra.mxu0 0.0
    %877 = vmatpush.msra.mxu0 0.0
    %878 = vmatpush.msra.mxu0 0.0
    %879 = vmatpush.msra.mxu0 0.0
    %880 = vmatpush.msra.mxu0 0.0
    %881 = vmatpush.msra.mxu0 %v715
    %882 = vmatpush.msra.mxu0 %v711
    %883 = vmatpush.msra.mxu0 %v707
    %884 = vmatpush.msra.mxu0 %v703
    %885 = vmatmul.f32.gmra.mxu0 %v807
    %v886 = vpop.f32.mrf.mxu0
    %v887 = vadd.f32 %v804, %v886
    %888 = vdwg.mxu0
    %v889 = vadd.f32 %v827, %v202
    %v890 = vadd.f32 %v847, %v203
    %v891 = vadd.f32 %v867, %v204
    %v892 = vadd.f32 %v887, %v205
    %v893 = vxor.u32 %v889, 2147483648
    %v894 = vmul.f32 %v893, 1.442695
    %v895 = vpow.pop %v894
    %v896 = vadd.f32 %v895, 1.0
    %v897 = vrcp.pop %v896
    %v898 = vmul.f32 %v896, %v897
    %v899 = vsub.f32 1.0, %v898
    %v900 = vmul.f32 %v897, %v899
    %v901 = vadd.f32 %v897, %v900
    %vm902 = vweird.f32 %v896
    %vm903 = vweird.f32 %v897
    %vm904 = vmor %vm902, %vm903
    %v905 = vsel %vm904, %v897, %v901
    %v906 = vand.u32 2147483647, %v896
    %vm907 = vcmp.eq.f32.partialorder %v906, 8.507059e+37
    %v908 = vand.u32 %v896, 2147483648
    %v909 = vor.u32 1.1754944e-38, %v908
    %v910 = vsel %vm907, %v909, %v905
    %v911 = vmul.f32 1.0, %v910
    %v912 = vxor.u32 %v890, 2147483648
    %v913 = vmul.f32 %v912, 1.442695
    %v914 = vpow.pop %v913
    %v915 = vadd.f32 %v914, 1.0
    %v916 = vrcp.pop %v915
    %v917 = vmul.f32 %v915, %v916
    %v918 = vsub.f32 1.0, %v917
    %v919 = vmul.f32 %v916, %v918
    %v920 = vadd.f32 %v916, %v919
    %vm921 = vweird.f32 %v915
    %vm922 = vweird.f32 %v916
    %vm923 = vmor %vm921, %vm922
    %v924 = vsel %vm923, %v916, %v920
    %v925 = vand.u32 2147483647, %v915
    %vm926 = vcmp.eq.f32.partialorder %v925, 8.507059e+37
    %v927 = vand.u32 %v915, 2147483648
    %v928 = vor.u32 1.1754944e-38, %v927
    %v929 = vsel %vm926, %v928, %v924
    %v930 = vmul.f32 1.0, %v929
    %v931 = vmul.f32 %v911, %v892
    %v932 = vadd.f32 %v891, %v931
    %v933 = vtanh.pop %v932
    %v934 = vsub.f32 1.0, %v930
    %v935 = vmul.f32 %v934, %v933
    %v936 = vmul.f32 %v930, 0.0
    %v937 = vadd.f32 %v935, %v936
    %v938 = vld [vmem:[#allocation16] sm:$0xff]
    %v939 = vld [vmem:[#allocation16 + $0x8] sm:$0xff]
    %v941 = vsel %vm323, %v937, 0
    %943 = vmatpush.msra.mxu0 0.0
    %944 = vmatpush.msra.mxu0 0.0
    %945 = vmatpush.msra.mxu0 0.0
    %946 = vmatpush.msra.mxu0 0.0
    %947 = vmatpush.msra.mxu0 0.0
    %948 = vmatpush.msra.mxu0 0.0
    %949 = vmatpush.msra.mxu0 0.0
    %950 = vmatpush.msra.mxu0 0.0
    %951 = vmatpush.msra.mxu0 0.0
    %952 = vmatpush.msra.mxu0 0.0
    %953 = vmatpush.msra.mxu0 0.0
    %954 = vmatpush.msra.mxu0 0.0
    %955 = vmatpush.msra.mxu0 0.0
    %956 = vmatpush.msra.mxu0 0.0
    %957 = vmatpush.msra.mxu0 %v939
    %958 = vmatpush.msra.mxu0 %v938
    %959 = vmatmul.f32.gmra.mxu0 %v941
    %v960 = vpop.f32.mrf.mxu0
    %v961 = vadd.f32 %v212, %v960
    %962 = vdwg.mxu0
    %vm963 = vcmask 123904
    %v964 = vsel %vm963, %v961, -inf
    %965 = vmax.xlane.f32.xlu0 %v964
    %v966 = vpop.xlane.xlu0 %965
    %v967 = vsub.f32 %v961, %v966
    %v968 = vmul.f32 %v967, 1.442695
    %v969 = vpow.pop %v968
    %v970 = vsel %vm963, %v969, 0.0
    %971 = vadd.xlane.f32.xlu0 %v970
    %v972 = vpop.xlane.xlu0 %971
    %v973 = vlog2.pop %v972
    %v974 = vmul.f32 %v973, 0.6931472
    %v975 = vsub.f32 %v967, %v974
    %v976 = vadd.f32 %v975, 0.0
    %s977 = scalar_lea.vmem [#allocation2], 2
    %v978 = vld [vmem:[%s977] sm:$0x3]
    %979 = vmatpush.msra.mxu0 0.0
    %980 = vmatpush.msra.mxu0 0.0
    %981 = vmatpush.msra.mxu0 0.0
    %982 = vmatpush.msra.mxu0 0.0
    %983 = vmatpush.msra.mxu0 0.0
    %984 = vmatpush.msra.mxu0 0.0
    %985 = vmatpush.msra.mxu0 0.0
    %986 = vmatpush.msra.mxu0 0.0
    %987 = vmatpush.msra.mxu0 0.0
    %988 = vmatpush.msra.mxu0 0.0
    %989 = vmatpush.msra.mxu0 0.0
    %990 = vmatpush.msra.mxu0 0.0
    %991 = vmatpush.msra.mxu0 %v235
    %992 = vmatpush.msra.mxu0 %v231
    %993 = vmatpush.msra.mxu0 %v227
    %994 = vmatpush.msra.mxu0 %v223
    %995 = vmatmul.f32.gmra.mxu0 %v569
    %v996 = vpop.f32.mrf.mxu0
    %v997 = vadd.f32 0.0, %v996
    %998 = vdwg.mxu0
    %999 = vmatpush.msra.mxu0 0.0
    %1000 = vmatpush.msra.mxu0 0.0
    %1001 = vmatpush.msra.mxu0 0.0
    %1002 = vmatpush.msra.mxu0 0.0
    %1003 = vmatpush.msra.mxu0 0.0
    %1004 = vmatpush.msra.mxu0 0.0
    %1005 = vmatpush.msra.mxu0 0.0
    %1006 = vmatpush.msra.mxu0 0.0
    %1007 = vmatpush.msra.mxu0 0.0
    %1008 = vmatpush.msra.mxu0 0.0
    %1009 = vmatpush.msra.mxu0 0.0
    %1010 = vmatpush.msra.mxu0 0.0
    %1011 = vmatpush.msra.mxu0 %v236
    %1012 = vmatpush.msra.mxu0 %v232
    %1013 = vmatpush.msra.mxu0 %v228
    %1014 = vmatpush.msra.mxu0 %v224
    %1015 = vmatmul.f32.gmra.mxu0 %v569
    %v1016 = vpop.f32.mrf.mxu0
    %v1017 = vadd.f32 0.0, %v1016
    %1018 = vdwg.mxu0
    %1019 = vmatpush.msra.mxu0 0.0
    %1020 = vmatpush.msra.mxu0 0.0
    %1021 = vmatpush.msra.mxu0 0.0
    %1022 = vmatpush.msra.mxu0 0.0
    %1023 = vmatpush.msra.mxu0 0.0
    %1024 = vmatpush.msra.mxu0 0.0
    %1025 = vmatpush.msra.mxu0 0.0
    %1026 = vmatpush.msra.mxu0 0.0
    %1027 = vmatpush.msra.mxu0 0.0
    %1028 = vmatpush.msra.mxu0 0.0
    %1029 = vmatpush.msra.mxu0 0.0
    %1030 = vmatpush.msra.mxu0 0.0
    %1031 = vmatpush.msra.mxu0 %v237
    %1032 = vmatpush.msra.mxu0 %v233
    %1033 = vmatpush.msra.mxu0 %v229
    %1034 = vmatpush.msra.mxu0 %v225
    %1035 = vmatmul.f32.gmra.mxu0 %v569
    %v1036 = vpop.f32.mrf.mxu0
    %v1037 = vadd.f32 0.0, %v1036
    %1038 = vdwg.mxu0
    %1039 = vmatpush.msra.mxu0 0.0
    %1040 = vmatpush.msra.mxu0 0.0
    %1041 = vmatpush.msra.mxu0 0.0
    %1042 = vmatpush.msra.mxu0 0.0
    %1043 = vmatpush.msra.mxu0 0.0
    %1044 = vmatpush.msra.mxu0 0.0
    %1045 = vmatpush.msra.mxu0 0.0
    %1046 = vmatpush.msra.mxu0 0.0
    %1047 = vmatpush.msra.mxu0 0.0
    %1048 = vmatpush.msra.mxu0 0.0
    %1049 = vmatpush.msra.mxu0 0.0
    %1050 = vmatpush.msra.mxu0 0.0
    %1051 = vmatpush.msra.mxu0 %v238
    %1052 = vmatpush.msra.mxu0 %v234
    %1053 = vmatpush.msra.mxu0 %v230
    %1054 = vmatpush.msra.mxu0 %v226
    %1055 = vmatmul.f32.gmra.mxu0 %v569
    %v1056 = vpop.f32.mrf.mxu0
    %v1057 = vadd.f32 0.0, %v1056
    %1058 = vdwg.mxu0
    %v1060 = vsel %vm323, %v978, 0
    %1062 = vmatpush.msra.mxu0 0.0
    %1063 = vmatpush.msra.mxu0 0.0
    %1064 = vmatpush.msra.mxu0 0.0
    %1065 = vmatpush.msra.mxu0 0.0
    %1066 = vmatpush.msra.mxu0 0.0
    %1067 = vmatpush.msra.mxu0 0.0
    %1068 = vmatpush.msra.mxu0 0.0
    %1069 = vmatpush.msra.mxu0 0.0
    %1070 = vmatpush.msra.mxu0 0.0
    %1071 = vmatpush.msra.mxu0 0.0
    %1072 = vmatpush.msra.mxu0 0.0
    %1073 = vmatpush.msra.mxu0 0.0
    %1074 = vmatpush.msra.mxu0 0.0
    %1075 = vmatpush.msra.mxu0 0.0
    %1076 = vmatpush.msra.mxu0 %v219
    %1077 = vmatpush.msra.mxu0 %v215
    %1078 = vmatmul.f32.gmra.mxu0 %v1060
    %v1079 = vpop.f32.mrf.mxu0
    %v1080 = vadd.f32 %v997, %v1079
    %1081 = vdwg.mxu0
    %1082 = vmatpush.msra.mxu0 0.0
    %1083 = vmatpush.msra.mxu0 0.0
    %1084 = vmatpush.msra.mxu0 0.0
    %1085 = vmatpush.msra.mxu0 0.0
    %1086 = vmatpush.msra.mxu0 0.0
    %1087 = vmatpush.msra.mxu0 0.0
    %1088 = vmatpush.msra.mxu0 0.0
    %1089 = vmatpush.msra.mxu0 0.0
    %1090 = vmatpush.msra.mxu0 0.0
    %1091 = vmatpush.msra.mxu0 0.0
    %1092 = vmatpush.msra.mxu0 0.0
    %1093 = vmatpush.msra.mxu0 0.0
    %1094 = vmatpush.msra.mxu0 0.0
    %1095 = vmatpush.msra.mxu0 0.0
    %1096 = vmatpush.msra.mxu0 %v220
    %1097 = vmatpush.msra.mxu0 %v216
    %1098 = vmatmul.f32.gmra.mxu0 %v1060
    %v1099 = vpop.f32.mrf.mxu0
    %v1100 = vadd.f32 %v1017, %v1099
    %1101 = vdwg.mxu0
    %1102 = vmatpush.msra.mxu0 0.0
    %1103 = vmatpush.msra.mxu0 0.0
    %1104 = vmatpush.msra.mxu0 0.0
    %1105 = vmatpush.msra.mxu0 0.0
    %1106 = vmatpush.msra.mxu0 0.0
    %1107 = vmatpush.msra.mxu0 0.0
    %1108 = vmatpush.msra.mxu0 0.0
    %1109 = vmatpush.msra.mxu0 0.0
    %1110 = vmatpush.msra.mxu0 0.0
    %1111 = vmatpush.msra.mxu0 0.0
    %1112 = vmatpush.msra.mxu0 0.0
    %1113 = vmatpush.msra.mxu0 0.0
    %1114 = vmatpush.msra.mxu0 0.0
    %1115 = vmatpush.msra.mxu0 0.0
    %1116 = vmatpush.msra.mxu0 %v221
    %1117 = vmatpush.msra.mxu0 %v217
    %1118 = vmatmul.f32.gmra.mxu0 %v1060
    %v1119 = vpop.f32.mrf.mxu0
    %v1120 = vadd.f32 %v1037, %v1119
    %1121 = vdwg.mxu0
    %1122 = vmatpush.msra.mxu0 0.0
    %1123 = vmatpush.msra.mxu0 0.0
    %1124 = vmatpush.msra.mxu0 0.0
    %1125 = vmatpush.msra.mxu0 0.0
    %1126 = vmatpush.msra.mxu0 0.0
    %1127 = vmatpush.msra.mxu0 0.0
    %1128 = vmatpush.msra.mxu0 0.0
    %1129 = vmatpush.msra.mxu0 0.0
    %1130 = vmatpush.msra.mxu0 0.0
    %1131 = vmatpush.msra.mxu0 0.0
    %1132 = vmatpush.msra.mxu0 0.0
    %1133 = vmatpush.msra.mxu0 0.0
    %1134 = vmatpush.msra.mxu0 0.0
    %1135 = vmatpush.msra.mxu0 0.0
    %1136 = vmatpush.msra.mxu0 %v222
    %1137 = vmatpush.msra.mxu0 %v218
    %1138 = vmatmul.f32.gmra.mxu0 %v1060
    %v1139 = vpop.f32.mrf.mxu0
    %v1140 = vadd.f32 %v1057, %v1139
    %1141 = vdwg.mxu0
    %v1142 = vadd.f32 %v1080, %v182
    %v1143 = vadd.f32 %v1100, %v183
    %v1144 = vadd.f32 %v1120, %v184
    %v1145 = vadd.f32 %v1140, %v185
    %v1146 = vxor.u32 %v1142, 2147483648
    %v1147 = vmul.f32 %v1146, 1.442695
    %v1148 = vpow.pop %v1147
    %v1149 = vadd.f32 %v1148, 1.0
    %v1150 = vrcp.pop %v1149
    %v1151 = vmul.f32 %v1149, %v1150
    %v1152 = vsub.f32 1.0, %v1151
    %v1153 = vmul.f32 %v1150, %v1152
    %v1154 = vadd.f32 %v1150, %v1153
    %vm1155 = vweird.f32 %v1149
    %vm1156 = vweird.f32 %v1150
    %vm1157 = vmor %vm1155, %vm1156
    %v1158 = vsel %vm1157, %v1150, %v1154
    %v1159 = vand.u32 2147483647, %v1149
    %vm1160 = vcmp.eq.f32.partialorder %v1159, 8.507059e+37
    %v1161 = vand.u32 %v1149, 2147483648
    %v1162 = vor.u32 1.1754944e-38, %v1161
    %v1163 = vsel %vm1160, %v1162, %v1158
    %v1164 = vmul.f32 1.0, %v1163
    %v1165 = vxor.u32 %v1143, 2147483648
    %v1166 = vmul.f32 %v1165, 1.442695
    %v1167 = vpow.pop %v1166
    %v1168 = vadd.f32 %v1167, 1.0
    %v1169 = vrcp.pop %v1168
    %v1170 = vmul.f32 %v1168, %v1169
    %v1171 = vsub.f32 1.0, %v1170
    %v1172 = vmul.f32 %v1169, %v1171
    %v1173 = vadd.f32 %v1169, %v1172
    %vm1174 = vweird.f32 %v1168
    %vm1175 = vweird.f32 %v1169
    %vm1176 = vmor %vm1174, %vm1175
    %v1177 = vsel %vm1176, %v1169, %v1173
    %v1178 = vand.u32 2147483647, %v1168
    %vm1179 = vcmp.eq.f32.partialorder %v1178, 8.507059e+37
    %v1180 = vand.u32 %v1168, 2147483648
    %v1181 = vor.u32 1.1754944e-38, %v1180
    %v1182 = vsel %vm1179, %v1181, %v1177
    %v1183 = vmul.f32 1.0, %v1182
    %v1184 = vmul.f32 %v1164, %v1145
    %v1185 = vadd.f32 %v1144, %v1184
    %v1186 = vtanh.pop %v1185
    %v1187 = vsub.f32 1.0, %v1183
    %v1188 = vmul.f32 %v1187, %v1186
    %v1189 = vmul.f32 %v1183, %v455
    %v1190 = vadd.f32 %v1188, %v1189
    %1191 = vmatpush.msra.mxu0 0.0
    %1192 = vmatpush.msra.mxu0 0.0
    %1193 = vmatpush.msra.mxu0 0.0
    %1194 = vmatpush.msra.mxu0 0.0
    %1195 = vmatpush.msra.mxu0 0.0
    %1196 = vmatpush.msra.mxu0 0.0
    %1197 = vmatpush.msra.mxu0 0.0
    %1198 = vmatpush.msra.mxu0 0.0
    %1199 = vmatpush.msra.mxu0 0.0
    %1200 = vmatpush.msra.mxu0 0.0
    %1201 = vmatpush.msra.mxu0 0.0
    %1202 = vmatpush.msra.mxu0 0.0
    %1203 = vmatpush.msra.mxu0 %v484
    %1204 = vmatpush.msra.mxu0 %v480
    %1205 = vmatpush.msra.mxu0 %v476
    %1206 = vmatpush.msra.mxu0 %v472
    %1207 = vmatmul.f32.gmra.mxu0 %v807
    %v1208 = vpop.f32.mrf.mxu0
    %v1209 = vadd.f32 0.0, %v1208
    %1210 = vdwg.mxu0
    %1211 = vmatpush.msra.mxu0 0.0
    %1212 = vmatpush.msra.mxu0 0.0
    %1213 = vmatpush.msra.mxu0 0.0
    %1214 = vmatpush.msra.mxu0 0.0
    %1215 = vmatpush.msra.mxu0 0.0
    %1216 = vmatpush.msra.mxu0 0.0
    %1217 = vmatpush.msra.mxu0 0.0
    %1218 = vmatpush.msra.mxu0 0.0
    %1219 = vmatpush.msra.mxu0 0.0
    %1220 = vmatpush.msra.mxu0 0.0
    %1221 = vmatpush.msra.mxu0 0.0
    %1222 = vmatpush.msra.mxu0 0.0
    %1223 = vmatpush.msra.mxu0 %v485
    %1224 = vmatpush.msra.mxu0 %v481
    %1225 = vmatpush.msra.mxu0 %v477
    %1226 = vmatpush.msra.mxu0 %v473
    %1227 = vmatmul.f32.gmra.mxu0 %v807
    %v1228 = vpop.f32.mrf.mxu0
    %v1229 = vadd.f32 0.0, %v1228
    %1230 = vdwg.mxu0
    %1231 = vmatpush.msra.mxu0 0.0
    %1232 = vmatpush.msra.mxu0 0.0
    %1233 = vmatpush.msra.mxu0 0.0
    %1234 = vmatpush.msra.mxu0 0.0
    %1235 = vmatpush.msra.mxu0 0.0
    %1236 = vmatpush.msra.mxu0 0.0
    %1237 = vmatpush.msra.mxu0 0.0
    %1238 = vmatpush.msra.mxu0 0.0
    %1239 = vmatpush.msra.mxu0 0.0
    %1240 = vmatpush.msra.mxu0 0.0
    %1241 = vmatpush.msra.mxu0 0.0
    %1242 = vmatpush.msra.mxu0 0.0
    %1243 = vmatpush.msra.mxu0 %v486
    %1244 = vmatpush.msra.mxu0 %v482
    %1245 = vmatpush.msra.mxu0 %v478
    %1246 = vmatpush.msra.mxu0 %v474
    %1247 = vmatmul.f32.gmra.mxu0 %v807
    %v1248 = vpop.f32.mrf.mxu0
    %v1249 = vadd.f32 0.0, %v1248
    %1250 = vdwg.mxu0
    %1251 = vmatpush.msra.mxu0 0.0
    %1252 = vmatpush.msra.mxu0 0.0
    %1253 = vmatpush.msra.mxu0 0.0
    %1254 = vmatpush.msra.mxu0 0.0
    %1255 = vmatpush.msra.mxu0 0.0
    %1256 = vmatpush.msra.mxu0 0.0
    %1257 = vmatpush.msra.mxu0 0.0
    %1258 = vmatpush.msra.mxu0 0.0
    %1259 = vmatpush.msra.mxu0 0.0
    %1260 = vmatpush.msra.mxu0 0.0
    %1261 = vmatpush.msra.mxu0 0.0
    %1262 = vmatpush.msra.mxu0 0.0
    %1263 = vmatpush.msra.mxu0 %v487
    %1264 = vmatpush.msra.mxu0 %v483
    %1265 = vmatpush.msra.mxu0 %v479
    %1266 = vmatpush.msra.mxu0 %v475
    %1267 = vmatmul.f32.gmra.mxu0 %v807
    %v1268 = vpop.f32.mrf.mxu0
    %v1269 = vadd.f32 0.0, %v1268
    %1270 = vdwg.mxu0
    %v1272 = vsel %vm239, %v1190, 0
    %1274 = vmatpush.msra.mxu0 0.0
    %1275 = vmatpush.msra.mxu0 0.0
    %1276 = vmatpush.msra.mxu0 0.0
    %1277 = vmatpush.msra.mxu0 0.0
    %1278 = vmatpush.msra.mxu0 0.0
    %1279 = vmatpush.msra.mxu0 0.0
    %1280 = vmatpush.msra.mxu0 0.0
    %1281 = vmatpush.msra.mxu0 0.0
    %1282 = vmatpush.msra.mxu0 0.0
    %1283 = vmatpush.msra.mxu0 0.0
    %1284 = vmatpush.msra.mxu0 0.0
    %1285 = vmatpush.msra.mxu0 0.0
    %1286 = vmatpush.msra.mxu0 %v468
    %1287 = vmatpush.msra.mxu0 %v464
    %1288 = vmatpush.msra.mxu0 %v460
    %1289 = vmatpush.msra.mxu0 %v456
    %1290 = vmatmul.f32.gmra.mxu0 %v1272
    %v1291 = vpop.f32.mrf.mxu0
    %v1292 = vadd.f32 %v1209, %v1291
    %1293 = vdwg.mxu0
    %1294 = vmatpush.msra.mxu0 0.0
    %1295 = vmatpush.msra.mxu0 0.0
    %1296 = vmatpush.msra.mxu0 0.0
    %1297 = vmatpush.msra.mxu0 0.0
    %1298 = vmatpush.msra.mxu0 0.0
    %1299 = vmatpush.msra.mxu0 0.0
    %1300 = vmatpush.msra.mxu0 0.0
    %1301 = vmatpush.msra.mxu0 0.0
    %1302 = vmatpush.msra.mxu0 0.0
    %1303 = vmatpush.msra.mxu0 0.0
    %1304 = vmatpush.msra.mxu0 0.0
    %1305 = vmatpush.msra.mxu0 0.0
    %1306 = vmatpush.msra.mxu0 %v469
    %1307 = vmatpush.msra.mxu0 %v465
    %1308 = vmatpush.msra.mxu0 %v461
    %1309 = vmatpush.msra.mxu0 %v457
    %1310 = vmatmul.f32.gmra.mxu0 %v1272
    %v1311 = vpop.f32.mrf.mxu0
    %v1312 = vadd.f32 %v1229, %v1311
    %1313 = vdwg.mxu0
    %1314 = vmatpush.msra.mxu0 0.0
    %1315 = vmatpush.msra.mxu0 0.0
    %1316 = vmatpush.msra.mxu0 0.0
    %1317 = vmatpush.msra.mxu0 0.0
    %1318 = vmatpush.msra.mxu0 0.0
    %1319 = vmatpush.msra.mxu0 0.0
    %1320 = vmatpush.msra.mxu0 0.0
    %1321 = vmatpush.msra.mxu0 0.0
    %1322 = vmatpush.msra.mxu0 0.0
    %1323 = vmatpush.msra.mxu0 0.0
    %1324 = vmatpush.msra.mxu0 0.0
    %1325 = vmatpush.msra.mxu0 0.0
    %1326 = vmatpush.msra.mxu0 %v470
    %1327 = vmatpush.msra.mxu0 %v466
    %1328 = vmatpush.msra.mxu0 %v462
    %1329 = vmatpush.msra.mxu0 %v458
    %1330 = vmatmul.f32.gmra.mxu0 %v1272
    %v1331 = vpop.f32.mrf.mxu0
    %v1332 = vadd.f32 %v1249, %v1331
    %1333 = vdwg.mxu0
    %1334 = vmatpush.msra.mxu0 0.0
    %1335 = vmatpush.msra.mxu0 0.0
    %1336 = vmatpush.msra.mxu0 0.0
    %1337 = vmatpush.msra.mxu0 0.0
    %1338 = vmatpush.msra.mxu0 0.0
    %1339 = vmatpush.msra.mxu0 0.0
    %1340 = vmatpush.msra.mxu0 0.0
    %1341 = vmatpush.msra.mxu0 0.0
    %1342 = vmatpush.msra.mxu0 0.0
    %1343 = vmatpush.msra.mxu0 0.0
    %1344 = vmatpush.msra.mxu0 0.0
    %1345 = vmatpush.msra.mxu0 0.0
    %1346 = vmatpush.msra.mxu0 %v471
    %1347 = vmatpush.msra.mxu0 %v467
    %1348 = vmatpush.msra.mxu0 %v463
    %1349 = vmatpush.msra.mxu0 %v459
    %1350 = vmatmul.f32.gmra.mxu0 %v1272
    %v1351 = vpop.f32.mrf.mxu0
    %v1352 = vadd.f32 %v1269, %v1351
    %1353 = vdwg.mxu0
    %v1354 = vadd.f32 %v1292, %v192
    %v1355 = vadd.f32 %v1312, %v193
    %v1356 = vadd.f32 %v1332, %v194
    %v1357 = vadd.f32 %v1352, %v195
    %v1358 = vxor.u32 %v1354, 2147483648
    %v1359 = vmul.f32 %v1358, 1.442695
    %v1360 = vpow.pop %v1359
    %v1361 = vadd.f32 %v1360, 1.0
    %v1362 = vrcp.pop %v1361
    %v1363 = vmul.f32 %v1361, %v1362
    %v1364 = vsub.f32 1.0, %v1363
    %v1365 = vmul.f32 %v1362, %v1364
    %v1366 = vadd.f32 %v1362, %v1365
    %vm1367 = vweird.f32 %v1361
    %vm1368 = vweird.f32 %v1362
    %vm1369 = vmor %vm1367, %vm1368
    %v1370 = vsel %vm1369, %v1362, %v1366
    %v1371 = vand.u32 2147483647, %v1361
    %vm1372 = vcmp.eq.f32.partialorder %v1371, 8.507059e+37
    %v1373 = vand.u32 %v1361, 2147483648
    %v1374 = vor.u32 1.1754944e-38, %v1373
    %v1375 = vsel %vm1372, %v1374, %v1370
    %v1376 = vmul.f32 1.0, %v1375
    %v1377 = vxor.u32 %v1355, 2147483648
    %v1378 = vmul.f32 %v1377, 1.442695
    %v1379 = vpow.pop %v1378
    %v1380 = vadd.f32 %v1379, 1.0
    %v1381 = vrcp.pop %v1380
    %v1382 = vmul.f32 %v1380, %v1381
    %v1383 = vsub.f32 1.0, %v1382
    %v1384 = vmul.f32 %v1381, %v1383
    %v1385 = vadd.f32 %v1381, %v1384
    %vm1386 = vweird.f32 %v1380
    %vm1387 = vweird.f32 %v1381
    %vm1388 = vmor %vm1386, %vm1387
    %v1389 = vsel %vm1388, %v1381, %v1385
    %v1390 = vand.u32 2147483647, %v1380
    %vm1391 = vcmp.eq.f32.partialorder %v1390, 8.507059e+37
    %v1392 = vand.u32 %v1380, 2147483648
    %v1393 = vor.u32 1.1754944e-38, %v1392
    %v1394 = vsel %vm1391, %v1393, %v1389
    %v1395 = vmul.f32 1.0, %v1394
    %v1396 = vmul.f32 %v1376, %v1357
    %v1397 = vadd.f32 %v1356, %v1396
    %v1398 = vtanh.pop %v1397
    %v1399 = vsub.f32 1.0, %v1395
    %v1400 = vmul.f32 %v1399, %v1398
    %v1401 = vmul.f32 %v1395, %v699
    %v1402 = vadd.f32 %v1400, %v1401
    %1403 = vmatpush.msra.mxu0 0.0
    %1404 = vmatpush.msra.mxu0 0.0
    %1405 = vmatpush.msra.mxu0 0.0
    %1406 = vmatpush.msra.mxu0 0.0
    %1407 = vmatpush.msra.mxu0 0.0
    %1408 = vmatpush.msra.mxu0 0.0
    %1409 = vmatpush.msra.mxu0 0.0
    %1410 = vmatpush.msra.mxu0 0.0
    %1411 = vmatpush.msra.mxu0 0.0
    %1412 = vmatpush.msra.mxu0 0.0
    %1413 = vmatpush.msra.mxu0 0.0
    %1414 = vmatpush.msra.mxu0 0.0
    %1415 = vmatpush.msra.mxu0 0.0
    %1416 = vmatpush.msra.mxu0 0.0
    %1417 = vmatpush.msra.mxu0 %v720
    %1418 = vmatpush.msra.mxu0 %v716
    %1419 = vmatmul.f32.gmra.mxu0 %v941
    %v1420 = vpop.f32.mrf.mxu0
    %v1421 = vadd.f32 0.0, %v1420
    %1422 = vdwg.mxu0
    %1423 = vmatpush.msra.mxu0 0.0
    %1424 = vmatpush.msra.mxu0 0.0
    %1425 = vmatpush.msra.mxu0 0.0
    %1426 = vmatpush.msra.mxu0 0.0
    %1427 = vmatpush.msra.mxu0 0.0
    %1428 = vmatpush.msra.mxu0 0.0
    %1429 = vmatpush.msra.mxu0 0.0
    %1430 = vmatpush.msra.mxu0 0.0
    %1431 = vmatpush.msra.mxu0 0.0
    %1432 = vmatpush.msra.mxu0 0.0
    %1433 = vmatpush.msra.mxu0 0.0
    %1434 = vmatpush.msra.mxu0 0.0
    %1435 = vmatpush.msra.mxu0 0.0
    %1436 = vmatpush.msra.mxu0 0.0
    %1437 = vmatpush.msra.mxu0 %v721
    %1438 = vmatpush.msra.mxu0 %v717
    %1439 = vmatmul.f32.gmra.mxu0 %v941
    %v1440 = vpop.f32.mrf.mxu0
    %v1441 = vadd.f32 0.0, %v1440
    %1442 = vdwg.mxu0
    %1443 = vmatpush.msra.mxu0 0.0
    %1444 = vmatpush.msra.mxu0 0.0
    %1445 = vmatpush.msra.mxu0 0.0
    %1446 = vmatpush.msra.mxu0 0.0
    %1447 = vmatpush.msra.mxu0 0.0
    %1448 = vmatpush.msra.mxu0 0.0
    %1449 = vmatpush.msra.mxu0 0.0
    %1450 = vmatpush.msra.mxu0 0.0
    %1451 = vmatpush.msra.mxu0 0.0
    %1452 = vmatpush.msra.mxu0 0.0
    %1453 = vmatpush.msra.mxu0 0.0
    %1454 = vmatpush.msra.mxu0 0.0
    %1455 = vmatpush.msra.mxu0 0.0
    %1456 = vmatpush.msra.mxu0 0.0
    %1457 = vmatpush.msra.mxu0 %v722
    %1458 = vmatpush.msra.mxu0 %v718
    %1459 = vmatmul.f32.gmra.mxu0 %v941
    %v1460 = vpop.f32.mrf.mxu0
    %v1461 = vadd.f32 0.0, %v1460
    %1462 = vdwg.mxu0
    %1463 = vmatpush.msra.mxu0 0.0
    %1464 = vmatpush.msra.mxu0 0.0
    %1465 = vmatpush.msra.mxu0 0.0
    %1466 = vmatpush.msra.mxu0 0.0
    %1467 = vmatpush.msra.mxu0 0.0
    %1468 = vmatpush.msra.mxu0 0.0
    %1469 = vmatpush.msra.mxu0 0.0
    %1470 = vmatpush.msra.mxu0 0.0
    %1471 = vmatpush.msra.mxu0 0.0
    %1472 = vmatpush.msra.mxu0 0.0
    %1473 = vmatpush.msra.mxu0 0.0
    %1474 = vmatpush.msra.mxu0 0.0
    %1475 = vmatpush.msra.mxu0 0.0
    %1476 = vmatpush.msra.mxu0 0.0
    %1477 = vmatpush.msra.mxu0 %v723
    %1478 = vmatpush.msra.mxu0 %v719
    %1479 = vmatmul.f32.gmra.mxu0 %v941
    %v1480 = vpop.f32.mrf.mxu0
    %v1481 = vadd.f32 0.0, %v1480
    %1482 = vdwg.mxu0
    %v1484 = vsel %vm239, %v1402, 0
    %1486 = vmatpush.msra.mxu0 0.0
    %1487 = vmatpush.msra.mxu0 0.0
    %1488 = vmatpush.msra.mxu0 0.0
    %1489 = vmatpush.msra.mxu0 0.0
    %1490 = vmatpush.msra.mxu0 0.0
    %1491 = vmatpush.msra.mxu0 0.0
    %1492 = vmatpush.msra.mxu0 0.0
    %1493 = vmatpush.msra.mxu0 0.0
    %1494 = vmatpush.msra.mxu0 0.0
    %1495 = vmatpush.msra.mxu0 0.0
    %1496 = vmatpush.msra.mxu0 0.0
    %1497 = vmatpush.msra.mxu0 0.0
    %1498 = vmatpush.msra.mxu0 %v712
    %1499 = vmatpush.msra.mxu0 %v708
    %1500 = vmatpush.msra.mxu0 %v704
    %1501 = vmatpush.msra.mxu0 %v700
    %1502 = vmatmul.f32.gmra.mxu0 %v1484
    %v1503 = vpop.f32.mrf.mxu0
    %v1504 = vadd.f32 %v1421, %v1503
    %1505 = vdwg.mxu0
    %1506 = vmatpush.msra.mxu0 0.0
    %1507 = vmatpush.msra.mxu0 0.0
    %1508 = vmatpush.msra.mxu0 0.0
    %1509 = vmatpush.msra.mxu0 0.0
    %1510 = vmatpush.msra.mxu0 0.0
    %1511 = vmatpush.msra.mxu0 0.0
    %1512 = vmatpush.msra.mxu0 0.0
    %1513 = vmatpush.msra.mxu0 0.0
    %1514 = vmatpush.msra.mxu0 0.0
    %1515 = vmatpush.msra.mxu0 0.0
    %1516 = vmatpush.msra.mxu0 0.0
    %1517 = vmatpush.msra.mxu0 0.0
    %1518 = vmatpush.msra.mxu0 %v713
    %1519 = vmatpush.msra.mxu0 %v709
    %1520 = vmatpush.msra.mxu0 %v705
    %1521 = vmatpush.msra.mxu0 %v701
    %1522 = vmatmul.f32.gmra.mxu0 %v1484
    %v1523 = vpop.f32.mrf.mxu0
    %v1524 = vadd.f32 %v1441, %v1523
    %1525 = vdwg.mxu0
    %1526 = vmatpush.msra.mxu0 0.0
    %1527 = vmatpush.msra.mxu0 0.0
    %1528 = vmatpush.msra.mxu0 0.0
    %1529 = vmatpush.msra.mxu0 0.0
    %1530 = vmatpush.msra.mxu0 0.0
    %1531 = vmatpush.msra.mxu0 0.0
    %1532 = vmatpush.msra.mxu0 0.0
    %1533 = vmatpush.msra.mxu0 0.0
    %1534 = vmatpush.msra.mxu0 0.0
    %1535 = vmatpush.msra.mxu0 0.0
    %1536 = vmatpush.msra.mxu0 0.0
    %1537 = vmatpush.msra.mxu0 0.0
    %1538 = vmatpush.msra.mxu0 %v714
    %1539 = vmatpush.msra.mxu0 %v710
    %1540 = vmatpush.msra.mxu0 %v706
    %1541 = vmatpush.msra.mxu0 %v702
    %1542 = vmatmul.f32.gmra.mxu0 %v1484
    %v1543 = vpop.f32.mrf.mxu0
    %v1544 = vadd.f32 %v1461, %v1543
    %1545 = vdwg.mxu0
    %1546 = vmatpush.msra.mxu0 0.0
    %1547 = vmatpush.msra.mxu0 0.0
    %1548 = vmatpush.msra.mxu0 0.0
    %1549 = vmatpush.msra.mxu0 0.0
    %1550 = vmatpush.msra.mxu0 0.0
    %1551 = vmatpush.msra.mxu0 0.0
    %1552 = vmatpush.msra.mxu0 0.0
    %1553 = vmatpush.msra.mxu0 0.0
    %1554 = vmatpush.msra.mxu0 0.0
    %1555 = vmatpush.msra.mxu0 0.0
    %1556 = vmatpush.msra.mxu0 0.0
    %1557 = vmatpush.msra.mxu0 0.0
    %1558 = vmatpush.msra.mxu0 %v715
    %1559 = vmatpush.msra.mxu0 %v711
    %1560 = vmatpush.msra.mxu0 %v707
    %1561 = vmatpush.msra.mxu0 %v703
    %1562 = vmatmul.f32.gmra.mxu0 %v1484
    %v1563 = vpop.f32.mrf.mxu0
    %v1564 = vadd.f32 %v1481, %v1563
    %1565 = vdwg.mxu0
    %v1566 = vadd.f32 %v1504, %v202
    %v1567 = vadd.f32 %v1524, %v203
    %v1568 = vadd.f32 %v1544, %v204
    %v1569 = vadd.f32 %v1564, %v205
    %v1570 = vxor.u32 %v1566, 2147483648
    %v1571 = vmul.f32 %v1570, 1.442695
    %v1572 = vpow.pop %v1571
    %v1573 = vadd.f32 %v1572, 1.0
    %v1574 = vrcp.pop %v1573
    %v1575 = vmul.f32 %v1573, %v1574
    %v1576 = vsub.f32 1.0, %v1575
    %v1577 = vmul.f32 %v1574, %v1576
    %v1578 = vadd.f32 %v1574, %v1577
    %vm1579 = vweird.f32 %v1573
    %vm1580 = vweird.f32 %v1574
    %vm1581 = vmor %vm1579, %vm1580
    %v1582 = vsel %vm1581, %v1574, %v1578
    %v1583 = vand.u32 2147483647, %v1573
    %vm1584 = vcmp.eq.f32.partialorder %v1583, 8.507059e+37
    %v1585 = vand.u32 %v1573, 2147483648
    %v1586 = vor.u32 1.1754944e-38, %v1585
    %v1587 = vsel %vm1584, %v1586, %v1582
    %v1588 = vmul.f32 1.0, %v1587
    %v1589 = vxor.u32 %v1567, 2147483648
    %v1590 = vmul.f32 %v1589, 1.442695
    %v1591 = vpow.pop %v1590
    %v1592 = vadd.f32 %v1591, 1.0
    %v1593 = vrcp.pop %v1592
    %v1594 = vmul.f32 %v1592, %v1593
    %v1595 = vsub.f32 1.0, %v1594
    %v1596 = vmul.f32 %v1593, %v1595
    %v1597 = vadd.f32 %v1593, %v1596
    %vm1598 = vweird.f32 %v1592
    %vm1599 = vweird.f32 %v1593
    %vm1600 = vmor %vm1598, %vm1599
    %v1601 = vsel %vm1600, %v1593, %v1597
    %v1602 = vand.u32 2147483647, %v1592
    %vm1603 = vcmp.eq.f32.partialorder %v1602, 8.507059e+37
    %v1604 = vand.u32 %v1592, 2147483648
    %v1605 = vor.u32 1.1754944e-38, %v1604
    %v1606 = vsel %vm1603, %v1605, %v1601
    %v1607 = vmul.f32 1.0, %v1606
    %v1608 = vmul.f32 %v1588, %v1569
    %v1609 = vadd.f32 %v1568, %v1608
    %v1610 = vtanh.pop %v1609
    %v1611 = vsub.f32 1.0, %v1607
    %v1612 = vmul.f32 %v1611, %v1610
    %v1613 = vmul.f32 %v1607, %v937
    %v1614 = vadd.f32 %v1612, %v1613
    %v1616 = vsel %vm323, %v1614, 0
    %1618 = vmatpush.msra.mxu0 0.0
    %1619 = vmatpush.msra.mxu0 0.0
    %1620 = vmatpush.msra.mxu0 0.0
    %1621 = vmatpush.msra.mxu0 0.0
    %1622 = vmatpush.msra.mxu0 0.0
    %1623 = vmatpush.msra.mxu0 0.0
    %1624 = vmatpush.msra.mxu0 0.0
    %1625 = vmatpush.msra.mxu0 0.0
    %1626 = vmatpush.msra.mxu0 0.0
    %1627 = vmatpush.msra.mxu0 0.0
    %1628 = vmatpush.msra.mxu0 0.0
    %1629 = vmatpush.msra.mxu0 0.0
    %1630 = vmatpush.msra.mxu0 0.0
    %1631 = vmatpush.msra.mxu0 0.0
    %1632 = vmatpush.msra.mxu0 %v939
    %1633 = vmatpush.msra.mxu0 %v938
    %1634 = vmatmul.f32.gmra.mxu0 %v1616
    %v1635 = vpop.f32.mrf.mxu0
    %v1636 = vadd.f32 %v212, %v1635
    %1637 = vdwg.mxu0
    %v1638 = vsel %vm963, %v1636, -inf
    %1639 = vmax.xlane.f32.xlu0 %v1638
    %v1640 = vpop.xlane.xlu0 %1639
    %v1641 = vsub.f32 %v1636, %v1640
    %v1642 = vmul.f32 %v1641, 1.442695
    %v1643 = vpow.pop %v1642
    %v1644 = vsel %vm963, %v1643, 0.0
    %1645 = vadd.xlane.f32.xlu0 %v1644
    %v1646 = vpop.xlane.xlu0 %1645
    %v1647 = vlog2.pop %v1646
    %v1648 = vmul.f32 %v1647, 0.6931472
    %v1649 = vsub.f32 %v1641, %v1648
    %v1650 = vadd.f32 %v976, %v1649
    %s1651 = scalar_lea.vmem [#allocation2], 4
    %v1652 = vld [vmem:[%s1651] sm:$0x3]
    %1653 = vmatpush.msra.mxu0 0.0
    %1654 = vmatpush.msra.mxu0 0.0
    %1655 = vmatpush.msra.mxu0 0.0
    %1656 = vmatpush.msra.mxu0 0.0
    %1657 = vmatpush.msra.mxu0 0.0
    %1658 = vmatpush.msra.mxu0 0.0
    %1659 = vmatpush.msra.mxu0 0.0
    %1660 = vmatpush.msra.mxu0 0.0
    %1661 = vmatpush.msra.mxu0 0.0
    %1662 = vmatpush.msra.mxu0 0.0
    %1663 = vmatpush.msra.mxu0 0.0
    %1664 = vmatpush.msra.mxu0 0.0
    %1665 = vmatpush.msra.mxu0 %v235
    %1666 = vmatpush.msra.mxu0 %v231
    %1667 = vmatpush.msra.mxu0 %v227
    %1668 = vmatpush.msra.mxu0 %v223
    %1669 = vmatmul.f32.gmra.mxu0 %v1272
    %v1670 = vpop.f32.mrf.mxu0
    %v1671 = vadd.f32 0.0, %v1670
    %1672 = vdwg.mxu0
    %1673 = vmatpush.msra.mxu0 0.0
    %1674 = vmatpush.msra.mxu0 0.0
    %1675 = vmatpush.msra.mxu0 0.0
    %1676 = vmatpush.msra.mxu0 0.0
    %1677 = vmatpush.msra.mxu0 0.0
    %1678 = vmatpush.msra.mxu0 0.0
    %1679 = vmatpush.msra.mxu0 0.0
    %1680 = vmatpush.msra.mxu0 0.0
    %1681 = vmatpush.msra.mxu0 0.0
    %1682 = vmatpush.msra.mxu0 0.0
    %1683 = vmatpush.msra.mxu0 0.0
    %1684 = vmatpush.msra.mxu0 0.0
    %1685 = vmatpush.msra.mxu0 %v236
    %1686 = vmatpush.msra.mxu0 %v232
    %1687 = vmatpush.msra.mxu0 %v228
    %1688 = vmatpush.msra.mxu0 %v224
    %1689 = vmatmul.f32.gmra.mxu0 %v1272
    %v1690 = vpop.f32.mrf.mxu0
    %v1691 = vadd.f32 0.0, %v1690
    %1692 = vdwg.mxu0
    %1693 = vmatpush.msra.mxu0 0.0
    %1694 = vmatpush.msra.mxu0 0.0
    %1695 = vmatpush.msra.mxu0 0.0
    %1696 = vmatpush.msra.mxu0 0.0
    %1697 = vmatpush.msra.mxu0 0.0
    %1698 = vmatpush.msra.mxu0 0.0
    %1699 = vmatpush.msra.mxu0 0.0
    %1700 = vmatpush.msra.mxu0 0.0
    %1701 = vmatpush.msra.mxu0 0.0
    %1702 = vmatpush.msra.mxu0 0.0
    %1703 = vmatpush.msra.mxu0 0.0
    %1704 = vmatpush.msra.mxu0 0.0
    %1705 = vmatpush.msra.mxu0 %v237
    %1706 = vmatpush.msra.mxu0 %v233
    %1707 = vmatpush.msra.mxu0 %v229
    %1708 = vmatpush.msra.mxu0 %v225
    %1709 = vmatmul.f32.gmra.mxu0 %v1272
    %v1710 = vpop.f32.mrf.mxu0
    %v1711 = vadd.f32 0.0, %v1710
    %1712 = vdwg.mxu0
    %1713 = vmatpush.msra.mxu0 0.0
    %1714 = vmatpush.msra.mxu0 0.0
    %1715 = vmatpush.msra.mxu0 0.0
    %1716 = vmatpush.msra.mxu0 0.0
    %1717 = vmatpush.msra.mxu0 0.0
    %1718 = vmatpush.msra.mxu0 0.0
    %1719 = vmatpush.msra.mxu0 0.0
    %1720 = vmatpush.msra.mxu0 0.0
    %1721 = vmatpush.msra.mxu0 0.0
    %1722 = vmatpush.msra.mxu0 0.0
    %1723 = vmatpush.msra.mxu0 0.0
    %1724 = vmatpush.msra.mxu0 0.0
    %1725 = vmatpush.msra.mxu0 %v238
    %1726 = vmatpush.msra.mxu0 %v234
    %1727 = vmatpush.msra.mxu0 %v230
    %1728 = vmatpush.msra.mxu0 %v226
    %1729 = vmatmul.f32.gmra.mxu0 %v1272
    %v1730 = vpop.f32.mrf.mxu0
    %v1731 = vadd.f32 0.0, %v1730
    %1732 = vdwg.mxu0
    %v1734 = vsel %vm323, %v1652, 0
    %1736 = vmatpush.msra.mxu0 0.0
    %1737 = vmatpush.msra.mxu0 0.0
    %1738 = vmatpush.msra.mxu0 0.0
    %1739 = vmatpush.msra.mxu0 0.0
    %1740 = vmatpush.msra.mxu0 0.0
    %1741 = vmatpush.msra.mxu0 0.0
    %1742 = vmatpush.msra.mxu0 0.0
    %1743 = vmatpush.msra.mxu0 0.0
    %1744 = vmatpush.msra.mxu0 0.0
    %1745 = vmatpush.msra.mxu0 0.0
    %1746 = vmatpush.msra.mxu0 0.0
    %1747 = vmatpush.msra.mxu0 0.0
    %1748 = vmatpush.msra.mxu0 0.0
    %1749 = vmatpush.msra.mxu0 0.0
    %1750 = vmatpush.msra.mxu0 %v219
    %1751 = vmatpush.msra.mxu0 %v215
    %1752 = vmatmul.f32.gmra.mxu0 %v1734
    %v1753 = vpop.f32.mrf.mxu0
    %v1754 = vadd.f32 %v1671, %v1753
    %1755 = vdwg.mxu0
    %1756 = vmatpush.msra.mxu0 0.0
    %1757 = vmatpush.msra.mxu0 0.0
    %1758 = vmatpush.msra.mxu0 0.0
    %1759 = vmatpush.msra.mxu0 0.0
    %1760 = vmatpush.msra.mxu0 0.0
    %1761 = vmatpush.msra.mxu0 0.0
    %1762 = vmatpush.msra.mxu0 0.0
    %1763 = vmatpush.msra.mxu0 0.0
    %1764 = vmatpush.msra.mxu0 0.0
    %1765 = vmatpush.msra.mxu0 0.0
    %1766 = vmatpush.msra.mxu0 0.0
    %1767 = vmatpush.msra.mxu0 0.0
    %1768 = vmatpush.msra.mxu0 0.0
    %1769 = vmatpush.msra.mxu0 0.0
    %1770 = vmatpush.msra.mxu0 %v220
    %1771 = vmatpush.msra.mxu0 %v216
    %1772 = vmatmul.f32.gmra.mxu0 %v1734
    %v1773 = vpop.f32.mrf.mxu0
    %v1774 = vadd.f32 %v1691, %v1773
    %1775 = vdwg.mxu0
    %1776 = vmatpush.msra.mxu0 0.0
    %1777 = vmatpush.msra.mxu0 0.0
    %1778 = vmatpush.msra.mxu0 0.0
    %1779 = vmatpush.msra.mxu0 0.0
    %1780 = vmatpush.msra.mxu0 0.0
    %1781 = vmatpush.msra.mxu0 0.0
    %1782 = vmatpush.msra.mxu0 0.0
    %1783 = vmatpush.msra.mxu0 0.0
    %1784 = vmatpush.msra.mxu0 0.0
    %1785 = vmatpush.msra.mxu0 0.0
    %1786 = vmatpush.msra.mxu0 0.0
    %1787 = vmatpush.msra.mxu0 0.0
    %1788 = vmatpush.msra.mxu0 0.0
    %1789 = vmatpush.msra.mxu0 0.0
    %1790 = vmatpush.msra.mxu0 %v221
    %1791 = vmatpush.msra.mxu0 %v217
    %1792 = vmatmul.f32.gmra.mxu0 %v1734
    %v1793 = vpop.f32.mrf.mxu0
    %v1794 = vadd.f32 %v1711, %v1793
    %1795 = vdwg.mxu0
    %1796 = vmatpush.msra.mxu0 0.0
    %1797 = vmatpush.msra.mxu0 0.0
    %1798 = vmatpush.msra.mxu0 0.0
    %1799 = vmatpush.msra.mxu0 0.0
    %1800 = vmatpush.msra.mxu0 0.0
    %1801 = vmatpush.msra.mxu0 0.0
    %1802 = vmatpush.msra.mxu0 0.0
    %1803 = vmatpush.msra.mxu0 0.0
    %1804 = vmatpush.msra.mxu0 0.0
    %1805 = vmatpush.msra.mxu0 0.0
    %1806 = vmatpush.msra.mxu0 0.0
    %1807 = vmatpush.msra.mxu0 0.0
    %1808 = vmatpush.msra.mxu0 0.0
    %1809 = vmatpush.msra.mxu0 0.0
    %1810 = vmatpush.msra.mxu0 %v222
    %1811 = vmatpush.msra.mxu0 %v218
    %1812 = vmatmul.f32.gmra.mxu0 %v1734
    %v1813 = vpop.f32.mrf.mxu0
    %v1814 = vadd.f32 %v1731, %v1813
    %1815 = vdwg.mxu0
    %v1816 = vadd.f32 %v1754, %v182
    %v1817 = vadd.f32 %v1774, %v183
    %v1818 = vadd.f32 %v1794, %v184
    %v1819 = vadd.f32 %v1814, %v185
    %v1820 = vxor.u32 %v1816, 2147483648
    %v1821 = vmul.f32 %v1820, 1.442695
    %v1822 = vpow.pop %v1821
    %v1823 = vadd.f32 %v1822, 1.0
    %v1824 = vrcp.pop %v1823
    %v1825 = vmul.f32 %v1823, %v1824
    %v1826 = vsub.f32 1.0, %v1825
    %v1827 = vmul.f32 %v1824, %v1826
    %v1828 = vadd.f32 %v1824, %v1827
    %vm1829 = vweird.f32 %v1823
    %vm1830 = vweird.f32 %v1824
    %vm1831 = vmor %vm1829, %vm1830
    %v1832 = vsel %vm1831, %v1824, %v1828
    %v1833 = vand.u32 2147483647, %v1823
    %vm1834 = vcmp.eq.f32.partialorder %v1833, 8.507059e+37
    %v1835 = vand.u32 %v1823, 2147483648
    %v1836 = vor.u32 1.1754944e-38, %v1835
    %v1837 = vsel %vm1834, %v1836, %v1832
    %v1838 = vmul.f32 1.0, %v1837
    %v1839 = vxor.u32 %v1817, 2147483648
    %v1840 = vmul.f32 %v1839, 1.442695
    %v1841 = vpow.pop %v1840
    %v1842 = vadd.f32 %v1841, 1.0
    %v1843 = vrcp.pop %v1842
    %v1844 = vmul.f32 %v1842, %v1843
    %v1845 = vsub.f32 1.0, %v1844
    %v1846 = vmul.f32 %v1843, %v1845
    %v1847 = vadd.f32 %v1843, %v1846
    %vm1848 = vweird.f32 %v1842
    %vm1849 = vweird.f32 %v1843
    %vm1850 = vmor %vm1848, %vm1849
    %v1851 = vsel %vm1850, %v1843, %v1847
    %v1852 = vand.u32 2147483647, %v1842
    %vm1853 = vcmp.eq.f32.partialorder %v1852, 8.507059e+37
    %v1854 = vand.u32 %v1842, 2147483648
    %v1855 = vor.u32 1.1754944e-38, %v1854
    %v1856 = vsel %vm1853, %v1855, %v1851
    %v1857 = vmul.f32 1.0, %v1856
    %v1858 = vmul.f32 %v1838, %v1819
    %v1859 = vadd.f32 %v1818, %v1858
    %v1860 = vtanh.pop %v1859
    %v1861 = vsub.f32 1.0, %v1857
    %v1862 = vmul.f32 %v1861, %v1860
    %v1863 = vmul.f32 %v1857, %v1190
    %v1864 = vadd.f32 %v1862, %v1863
    %1865 = vmatpush.msra.mxu0 0.0
    %1866 = vmatpush.msra.mxu0 0.0
    %1867 = vmatpush.msra.mxu0 0.0
    %1868 = vmatpush.msra.mxu0 0.0
    %1869 = vmatpush.msra.mxu0 0.0
    %1870 = vmatpush.msra.mxu0 0.0
    %1871 = vmatpush.msra.mxu0 0.0
    %1872 = vmatpush.msra.mxu0 0.0
    %1873 = vmatpush.msra.mxu0 0.0
    %1874 = vmatpush.msra.mxu0 0.0
    %1875 = vmatpush.msra.mxu0 0.0
    %1876 = vmatpush.msra.mxu0 0.0
    %1877 = vmatpush.msra.mxu0 %v484
    %1878 = vmatpush.msra.mxu0 %v480
    %1879 = vmatpush.msra.mxu0 %v476
    %1880 = vmatpush.msra.mxu0 %v472
    %1881 = vmatmul.f32.gmra.mxu0 %v1484
    %v1882 = vpop.f32.mrf.mxu0
    %v1883 = vadd.f32 0.0, %v1882
    %1884 = vdwg.mxu0
    %1885 = vmatpush.msra.mxu0 0.0
    %1886 = vmatpush.msra.mxu0 0.0
    %1887 = vmatpush.msra.mxu0 0.0
    %1888 = vmatpush.msra.mxu0 0.0
    %1889 = vmatpush.msra.mxu0 0.0
    %1890 = vmatpush.msra.mxu0 0.0
    %1891 = vmatpush.msra.mxu0 0.0
    %1892 = vmatpush.msra.mxu0 0.0
    %1893 = vmatpush.msra.mxu0 0.0
    %1894 = vmatpush.msra.mxu0 0.0
    %1895 = vmatpush.msra.mxu0 0.0
    %1896 = vmatpush.msra.mxu0 0.0
    %1897 = vmatpush.msra.mxu0 %v485
    %1898 = vmatpush.msra.mxu0 %v481
    %1899 = vmatpush.msra.mxu0 %v477
    %1900 = vmatpush.msra.mxu0 %v473
    %1901 = vmatmul.f32.gmra.mxu0 %v1484
    %v1902 = vpop.f32.mrf.mxu0
    %v1903 = vadd.f32 0.0, %v1902
    %1904 = vdwg.mxu0
    %1905 = vmatpush.msra.mxu0 0.0
    %1906 = vmatpush.msra.mxu0 0.0
    %1907 = vmatpush.msra.mxu0 0.0
    %1908 = vmatpush.msra.mxu0 0.0
    %1909 = vmatpush.msra.mxu0 0.0
    %1910 = vmatpush.msra.mxu0 0.0
    %1911 = vmatpush.msra.mxu0 0.0
    %1912 = vmatpush.msra.mxu0 0.0
    %1913 = vmatpush.msra.mxu0 0.0
    %1914 = vmatpush.msra.mxu0 0.0
    %1915 = vmatpush.msra.mxu0 0.0
    %1916 = vmatpush.msra.mxu0 0.0
    %1917 = vmatpush.msra.mxu0 %v486
    %1918 = vmatpush.msra.mxu0 %v482
    %1919 = vmatpush.msra.mxu0 %v478
    %1920 = vmatpush.msra.mxu0 %v474
    %1921 = vmatmul.f32.gmra.mxu0 %v1484
    %v1922 = vpop.f32.mrf.mxu0
    %v1923 = vadd.f32 0.0, %v1922
    %1924 = vdwg.mxu0
    %1925 = vmatpush.msra.mxu0 0.0
    %1926 = vmatpush.msra.mxu0 0.0
    %1927 = vmatpush.msra.mxu0 0.0
    %1928 = vmatpush.msra.mxu0 0.0
    %1929 = vmatpush.msra.mxu0 0.0
    %1930 = vmatpush.msra.mxu0 0.0
    %1931 = vmatpush.msra.mxu0 0.0
    %1932 = vmatpush.msra.mxu0 0.0
    %1933 = vmatpush.msra.mxu0 0.0
    %1934 = vmatpush.msra.mxu0 0.0
    %1935 = vmatpush.msra.mxu0 0.0
    %1936 = vmatpush.msra.mxu0 0.0
    %1937 = vmatpush.msra.mxu0 %v487
    %1938 = vmatpush.msra.mxu0 %v483
    %1939 = vmatpush.msra.mxu0 %v479
    %1940 = vmatpush.msra.mxu0 %v475
    %1941 = vmatmul.f32.gmra.mxu0 %v1484
    %v1942 = vpop.f32.mrf.mxu0
    %v1943 = vadd.f32 0.0, %v1942
    %1944 = vdwg.mxu0
    %v1946 = vsel %vm239, %v1864, 0
    %1948 = vmatpush.msra.mxu0 0.0
    %1949 = vmatpush.msra.mxu0 0.0
    %1950 = vmatpush.msra.mxu0 0.0
    %1951 = vmatpush.msra.mxu0 0.0
    %1952 = vmatpush.msra.mxu0 0.0
    %1953 = vmatpush.msra.mxu0 0.0
    %1954 = vmatpush.msra.mxu0 0.0
    %1955 = vmatpush.msra.mxu0 0.0
    %1956 = vmatpush.msra.mxu0 0.0
    %1957 = vmatpush.msra.mxu0 0.0
    %1958 = vmatpush.msra.mxu0 0.0
    %1959 = vmatpush.msra.mxu0 0.0
    %1960 = vmatpush.msra.mxu0 %v468
    %1961 = vmatpush.msra.mxu0 %v464
    %1962 = vmatpush.msra.mxu0 %v460
    %1963 = vmatpush.msra.mxu0 %v456
    %1964 = vmatmul.f32.gmra.mxu0 %v1946
    %v1965 = vpop.f32.mrf.mxu0
    %v1966 = vadd.f32 %v1883, %v1965
    %1967 = vdwg.mxu0
    %1968 = vmatpush.msra.mxu0 0.0
    %1969 = vmatpush.msra.mxu0 0.0
    %1970 = vmatpush.msra.mxu0 0.0
    %1971 = vmatpush.msra.mxu0 0.0
    %1972 = vmatpush.msra.mxu0 0.0
    %1973 = vmatpush.msra.mxu0 0.0
    %1974 = vmatpush.msra.mxu0 0.0
    %1975 = vmatpush.msra.mxu0 0.0
    %1976 = vmatpush.msra.mxu0 0.0
    %1977 = vmatpush.msra.mxu0 0.0
    %1978 = vmatpush.msra.mxu0 0.0
    %1979 = vmatpush.msra.mxu0 0.0
    %1980 = vmatpush.msra.mxu0 %v469
    %1981 = vmatpush.msra.mxu0 %v465
    %1982 = vmatpush.msra.mxu0 %v461
    %1983 = vmatpush.msra.mxu0 %v457
    %1984 = vmatmul.f32.gmra.mxu0 %v1946
    %v1985 = vpop.f32.mrf.mxu0
    %v1986 = vadd.f32 %v1903, %v1985
    %1987 = vdwg.mxu0
    %1988 = vmatpush.msra.mxu0 0.0
    %1989 = vmatpush.msra.mxu0 0.0
    %1990 = vmatpush.msra.mxu0 0.0
    %1991 = vmatpush.msra.mxu0 0.0
    %1992 = vmatpush.msra.mxu0 0.0
    %1993 = vmatpush.msra.mxu0 0.0
    %1994 = vmatpush.msra.mxu0 0.0
    %1995 = vmatpush.msra.mxu0 0.0
    %1996 = vmatpush.msra.mxu0 0.0
    %1997 = vmatpush.msra.mxu0 0.0
    %1998 = vmatpush.msra.mxu0 0.0
    %1999 = vmatpush.msra.mxu0 0.0
    %2000 = vmatpush.msra.mxu0 %v470
    %2001 = vmatpush.msra.mxu0 %v466
    %2002 = vmatpush.msra.mxu0 %v462
    %2003 = vmatpush.msra.mxu0 %v458
    %2004 = vmatmul.f32.gmra.mxu0 %v1946
    %v2005 = vpop.f32.mrf.mxu0
    %v2006 = vadd.f32 %v1923, %v2005
    %2007 = vdwg.mxu0
    %2008 = vmatpush.msra.mxu0 0.0
    %2009 = vmatpush.msra.mxu0 0.0
    %2010 = vmatpush.msra.mxu0 0.0
    %2011 = vmatpush.msra.mxu0 0.0
    %2012 = vmatpush.msra.mxu0 0.0
    %2013 = vmatpush.msra.mxu0 0.0
    %2014 = vmatpush.msra.mxu0 0.0
    %2015 = vmatpush.msra.mxu0 0.0
    %2016 = vmatpush.msra.mxu0 0.0
    %2017 = vmatpush.msra.mxu0 0.0
    %2018 = vmatpush.msra.mxu0 0.0
    %2019 = vmatpush.msra.mxu0 0.0
    %2020 = vmatpush.msra.mxu0 %v471
    %2021 = vmatpush.msra.mxu0 %v467
    %2022 = vmatpush.msra.mxu0 %v463
    %2023 = vmatpush.msra.mxu0 %v459
    %2024 = vmatmul.f32.gmra.mxu0 %v1946
    %v2025 = vpop.f32.mrf.mxu0
    %v2026 = vadd.f32 %v1943, %v2025
    %2027 = vdwg.mxu0
    %v2028 = vadd.f32 %v1966, %v192
    %v2029 = vadd.f32 %v1986, %v193
    %v2030 = vadd.f32 %v2006, %v194
    %v2031 = vadd.f32 %v2026, %v195
    %v2032 = vxor.u32 %v2028, 2147483648
    %v2033 = vmul.f32 %v2032, 1.442695
    %v2034 = vpow.pop %v2033
    %v2035 = vadd.f32 %v2034, 1.0
    %v2036 = vrcp.pop %v2035
    %v2037 = vmul.f32 %v2035, %v2036
    %v2038 = vsub.f32 1.0, %v2037
    %v2039 = vmul.f32 %v2036, %v2038
    %v2040 = vadd.f32 %v2036, %v2039
    %vm2041 = vweird.f32 %v2035
    %vm2042 = vweird.f32 %v2036
    %vm2043 = vmor %vm2041, %vm2042
    %v2044 = vsel %vm2043, %v2036, %v2040
    %v2045 = vand.u32 2147483647, %v2035
    %vm2046 = vcmp.eq.f32.partialorder %v2045, 8.507059e+37
    %v2047 = vand.u32 %v2035, 2147483648
    %v2048 = vor.u32 1.1754944e-38, %v2047
    %v2049 = vsel %vm2046, %v2048, %v2044
    %v2050 = vmul.f32 1.0, %v2049
    %v2051 = vxor.u32 %v2029, 2147483648
    %v2052 = vmul.f32 %v2051, 1.442695
    %v2053 = vpow.pop %v2052
    %v2054 = vadd.f32 %v2053, 1.0
    %v2055 = vrcp.pop %v2054
    %v2056 = vmul.f32 %v2054, %v2055
    %v2057 = vsub.f32 1.0, %v2056
    %v2058 = vmul.f32 %v2055, %v2057
    %v2059 = vadd.f32 %v2055, %v2058
    %vm2060 = vweird.f32 %v2054
    %vm2061 = vweird.f32 %v2055
    %vm2062 = vmor %vm2060, %vm2061
    %v2063 = vsel %vm2062, %v2055, %v2059
    %v2064 = vand.u32 2147483647, %v2054
    %vm2065 = vcmp.eq.f32.partialorder %v2064, 8.507059e+37
    %v2066 = vand.u32 %v2054, 2147483648
    %v2067 = vor.u32 1.1754944e-38, %v2066
    %v2068 = vsel %vm2065, %v2067, %v2063
    %v2069 = vmul.f32 1.0, %v2068
    %v2070 = vmul.f32 %v2050, %v2031
    %v2071 = vadd.f32 %v2030, %v2070
    %v2072 = vtanh.pop %v2071
    %v2073 = vsub.f32 1.0, %v2069
    %v2074 = vmul.f32 %v2073, %v2072
    %v2075 = vmul.f32 %v2069, %v1402
    %v2076 = vadd.f32 %v2074, %v2075
    %2077 = vmatpush.msra.mxu0 0.0
    %2078 = vmatpush.msra.mxu0 0.0
    %2079 = vmatpush.msra.mxu0 0.0
    %2080 = vmatpush.msra.mxu0 0.0
    %2081 = vmatpush.msra.mxu0 0.0
    %2082 = vmatpush.msra.mxu0 0.0
    %2083 = vmatpush.msra.mxu0 0.0
    %2084 = vmatpush.msra.mxu0 0.0
    %2085 = vmatpush.msra.mxu0 0.0
    %2086 = vmatpush.msra.mxu0 0.0
    %2087 = vmatpush.msra.mxu0 0.0
    %2088 = vmatpush.msra.mxu0 0.0
    %2089 = vmatpush.msra.mxu0 0.0
    %2090 = vmatpush.msra.mxu0 0.0
    %2091 = vmatpush.msra.mxu0 %v720
    %2092 = vmatpush.msra.mxu0 %v716
    %2093 = vmatmul.f32.gmra.mxu0 %v1616
    %v2094 = vpop.f32.mrf.mxu0
    %v2095 = vadd.f32 0.0, %v2094
    %2096 = vdwg.mxu0
    %2097 = vmatpush.msra.mxu0 0.0
    %2098 = vmatpush.msra.mxu0 0.0
    %2099 = vmatpush.msra.mxu0 0.0
    %2100 = vmatpush.msra.mxu0 0.0
    %2101 = vmatpush.msra.mxu0 0.0
    %2102 = vmatpush.msra.mxu0 0.0
    %2103 = vmatpush.msra.mxu0 0.0
    %2104 = vmatpush.msra.mxu0 0.0
    %2105 = vmatpush.msra.mxu0 0.0
    %2106 = vmatpush.msra.mxu0 0.0
    %2107 = vmatpush.msra.mxu0 0.0
    %2108 = vmatpush.msra.mxu0 0.0
    %2109 = vmatpush.msra.mxu0 0.0
    %2110 = vmatpush.msra.mxu0 0.0
    %2111 = vmatpush.msra.mxu0 %v721
    %2112 = vmatpush.msra.mxu0 %v717
    %2113 = vmatmul.f32.gmra.mxu0 %v1616
    %v2114 = vpop.f32.mrf.mxu0
    %v2115 = vadd.f32 0.0, %v2114
    %2116 = vdwg.mxu0
    %2117 = vmatpush.msra.mxu0 0.0
    %2118 = vmatpush.msra.mxu0 0.0
    %2119 = vmatpush.msra.mxu0 0.0
    %2120 = vmatpush.msra.mxu0 0.0
    %2121 = vmatpush.msra.mxu0 0.0
    %2122 = vmatpush.msra.mxu0 0.0
    %2123 = vmatpush.msra.mxu0 0.0
    %2124 = vmatpush.msra.mxu0 0.0
    %2125 = vmatpush.msra.mxu0 0.0
    %2126 = vmatpush.msra.mxu0 0.0
    %2127 = vmatpush.msra.mxu0 0.0
    %2128 = vmatpush.msra.mxu0 0.0
    %2129 = vmatpush.msra.mxu0 0.0
    %2130 = vmatpush.msra.mxu0 0.0
    %2131 = vmatpush.msra.mxu0 %v722
    %2132 = vmatpush.msra.mxu0 %v718
    %2133 = vmatmul.f32.gmra.mxu0 %v1616
    %v2134 = vpop.f32.mrf.mxu0
    %v2135 = vadd.f32 0.0, %v2134
    %2136 = vdwg.mxu0
    %2137 = vmatpush.msra.mxu0 0.0
    %2138 = vmatpush.msra.mxu0 0.0
    %2139 = vmatpush.msra.mxu0 0.0
    %2140 = vmatpush.msra.mxu0 0.0
    %2141 = vmatpush.msra.mxu0 0.0
    %2142 = vmatpush.msra.mxu0 0.0
    %2143 = vmatpush.msra.mxu0 0.0
    %2144 = vmatpush.msra.mxu0 0.0
    %2145 = vmatpush.msra.mxu0 0.0
    %2146 = vmatpush.msra.mxu0 0.0
    %2147 = vmatpush.msra.mxu0 0.0
    %2148 = vmatpush.msra.mxu0 0.0
    %2149 = vmatpush.msra.mxu0 0.0
    %2150 = vmatpush.msra.mxu0 0.0
    %2151 = vmatpush.msra.mxu0 %v723
    %2152 = vmatpush.msra.mxu0 %v719
    %2153 = vmatmul.f32.gmra.mxu0 %v1616
    %v2154 = vpop.f32.mrf.mxu0
    %v2155 = vadd.f32 0.0, %v2154
    %2156 = vdwg.mxu0
    %v2158 = vsel %vm239, %v2076, 0
    %2160 = vmatpush.msra.mxu0 0.0
    %2161 = vmatpush.msra.mxu0 0.0
    %2162 = vmatpush.msra.mxu0 0.0
    %2163 = vmatpush.msra.mxu0 0.0
    %2164 = vmatpush.msra.mxu0 0.0
    %2165 = vmatpush.msra.mxu0 0.0
    %2166 = vmatpush.msra.mxu0 0.0
    %2167 = vmatpush.msra.mxu0 0.0
    %2168 = vmatpush.msra.mxu0 0.0
    %2169 = vmatpush.msra.mxu0 0.0
    %2170 = vmatpush.msra.mxu0 0.0
    %2171 = vmatpush.msra.mxu0 0.0
    %2172 = vmatpush.msra.mxu0 %v712
    %2173 = vmatpush.msra.mxu0 %v708
    %2174 = vmatpush.msra.mxu0 %v704
    %2175 = vmatpush.msra.mxu0 %v700
    %2176 = vmatmul.f32.gmra.mxu0 %v2158
    %v2177 = vpop.f32.mrf.mxu0
    %v2178 = vadd.f32 %v2095, %v2177
    %2179 = vdwg.mxu0
    %2180 = vmatpush.msra.mxu0 0.0
    %2181 = vmatpush.msra.mxu0 0.0
    %2182 = vmatpush.msra.mxu0 0.0
    %2183 = vmatpush.msra.mxu0 0.0
    %2184 = vmatpush.msra.mxu0 0.0
    %2185 = vmatpush.msra.mxu0 0.0
    %2186 = vmatpush.msra.mxu0 0.0
    %2187 = vmatpush.msra.mxu0 0.0
    %2188 = vmatpush.msra.mxu0 0.0
    %2189 = vmatpush.msra.mxu0 0.0
    %2190 = vmatpush.msra.mxu0 0.0
    %2191 = vmatpush.msra.mxu0 0.0
    %2192 = vmatpush.msra.mxu0 %v713
    %2193 = vmatpush.msra.mxu0 %v709
    %2194 = vmatpush.msra.mxu0 %v705
    %2195 = vmatpush.msra.mxu0 %v701
    %2196 = vmatmul.f32.gmra.mxu0 %v2158
    %v2197 = vpop.f32.mrf.mxu0
    %v2198 = vadd.f32 %v2115, %v2197
    %2199 = vdwg.mxu0
    %2200 = vmatpush.msra.mxu0 0.0
    %2201 = vmatpush.msra.mxu0 0.0
    %2202 = vmatpush.msra.mxu0 0.0
    %2203 = vmatpush.msra.mxu0 0.0
    %2204 = vmatpush.msra.mxu0 0.0
    %2205 = vmatpush.msra.mxu0 0.0
    %2206 = vmatpush.msra.mxu0 0.0
    %2207 = vmatpush.msra.mxu0 0.0
    %2208 = vmatpush.msra.mxu0 0.0
    %2209 = vmatpush.msra.mxu0 0.0
    %2210 = vmatpush.msra.mxu0 0.0
    %2211 = vmatpush.msra.mxu0 0.0
    %2212 = vmatpush.msra.mxu0 %v714
    %2213 = vmatpush.msra.mxu0 %v710
    %2214 = vmatpush.msra.mxu0 %v706
    %2215 = vmatpush.msra.mxu0 %v702
    %2216 = vmatmul.f32.gmra.mxu0 %v2158
    %v2217 = vpop.f32.mrf.mxu0
    %v2218 = vadd.f32 %v2135, %v2217
    %2219 = vdwg.mxu0
    %2220 = vmatpush.msra.mxu0 0.0
    %2221 = vmatpush.msra.mxu0 0.0
    %2222 = vmatpush.msra.mxu0 0.0
    %2223 = vmatpush.msra.mxu0 0.0
    %2224 = vmatpush.msra.mxu0 0.0
    %2225 = vmatpush.msra.mxu0 0.0
    %2226 = vmatpush.msra.mxu0 0.0
    %2227 = vmatpush.msra.mxu0 0.0
    %2228 = vmatpush.msra.mxu0 0.0
    %2229 = vmatpush.msra.mxu0 0.0
    %2230 = vmatpush.msra.mxu0 0.0
    %2231 = vmatpush.msra.mxu0 0.0
    %2232 = vmatpush.msra.mxu0 %v715
    %2233 = vmatpush.msra.mxu0 %v711
    %2234 = vmatpush.msra.mxu0 %v707
    %2235 = vmatpush.msra.mxu0 %v703
    %2236 = vmatmul.f32.gmra.mxu0 %v2158
    %v2237 = vpop.f32.mrf.mxu0
    %v2238 = vadd.f32 %v2155, %v2237
    %2239 = vdwg.mxu0
    %v2240 = vadd.f32 %v2178, %v202
    %v2241 = vadd.f32 %v2198, %v203
    %v2242 = vadd.f32 %v2218, %v204
    %v2243 = vadd.f32 %v2238, %v205
    %v2244 = vxor.u32 %v2240, 2147483648
    %v2245 = vmul.f32 %v2244, 1.442695
    %v2246 = vpow.pop %v2245
    %v2247 = vadd.f32 %v2246, 1.0
    %v2248 = vrcp.pop %v2247
    %v2249 = vmul.f32 %v2247, %v2248
    %v2250 = vsub.f32 1.0, %v2249
    %v2251 = vmul.f32 %v2248, %v2250
    %v2252 = vadd.f32 %v2248, %v2251
    %vm2253 = vweird.f32 %v2247
    %vm2254 = vweird.f32 %v2248
    %vm2255 = vmor %vm2253, %vm2254
    %v2256 = vsel %vm2255, %v2248, %v2252
    %v2257 = vand.u32 2147483647, %v2247
    %vm2258 = vcmp.eq.f32.partialorder %v2257, 8.507059e+37
    %v2259 = vand.u32 %v2247, 2147483648
    %v2260 = vor.u32 1.1754944e-38, %v2259
    %v2261 = vsel %vm2258, %v2260, %v2256
    %v2262 = vmul.f32 1.0, %v2261
    %v2263 = vxor.u32 %v2241, 2147483648
    %v2264 = vmul.f32 %v2263, 1.442695
    %v2265 = vpow.pop %v2264
    %v2266 = vadd.f32 %v2265, 1.0
    %v2267 = vrcp.pop %v2266
    %v2268 = vmul.f32 %v2266, %v2267
    %v2269 = vsub.f32 1.0, %v2268
    %v2270 = vmul.f32 %v2267, %v2269
    %v2271 = vadd.f32 %v2267, %v2270
    %vm2272 = vweird.f32 %v2266
    %vm2273 = vweird.f32 %v2267
    %vm2274 = vmor %vm2272, %vm2273
    %v2275 = vsel %vm2274, %v2267, %v2271
    %v2276 = vand.u32 2147483647, %v2266
    %vm2277 = vcmp.eq.f32.partialorder %v2276, 8.507059e+37
    %v2278 = vand.u32 %v2266, 2147483648
    %v2279 = vor.u32 1.1754944e-38, %v2278
    %v2280 = vsel %vm2277, %v2279, %v2275
    %v2281 = vmul.f32 1.0, %v2280
    %v2282 = vmul.f32 %v2262, %v2243
    %v2283 = vadd.f32 %v2242, %v2282
    %v2284 = vtanh.pop %v2283
    %v2285 = vsub.f32 1.0, %v2281
    %v2286 = vmul.f32 %v2285, %v2284
    %v2287 = vmul.f32 %v2281, %v1614
    %v2288 = vadd.f32 %v2286, %v2287
    %v2290 = vsel %vm323, %v2288, 0
    %2292 = vmatpush.msra.mxu0 0.0
    %2293 = vmatpush.msra.mxu0 0.0
    %2294 = vmatpush.msra.mxu0 0.0
    %2295 = vmatpush.msra.mxu0 0.0
    %2296 = vmatpush.msra.mxu0 0.0
    %2297 = vmatpush.msra.mxu0 0.0
    %2298 = vmatpush.msra.mxu0 0.0
    %2299 = vmatpush.msra.mxu0 0.0
    %2300 = vmatpush.msra.mxu0 0.0
    %2301 = vmatpush.msra.mxu0 0.0
    %2302 = vmatpush.msra.mxu0 0.0
    %2303 = vmatpush.msra.mxu0 0.0
    %2304 = vmatpush.msra.mxu0 0.0
    %2305 = vmatpush.msra.mxu0 0.0
    %2306 = vmatpush.msra.mxu0 %v939
    %2307 = vmatpush.msra.mxu0 %v938
    %2308 = vmatmul.f32.gmra.mxu0 %v2290
    %v2309 = vpop.f32.mrf.mxu0
    %v2310 = vadd.f32 %v212, %v2309
    %2311 = vdwg.mxu0
    %v2312 = vsel %vm963, %v2310, -inf
    %2313 = vmax.xlane.f32.xlu0 %v2312
    %v2314 = vpop.xlane.xlu0 %2313
    %v2315 = vsub.f32 %v2310, %v2314
    %v2316 = vmul.f32 %v2315, 1.442695
    %v2317 = vpow.pop %v2316
    %v2318 = vsel %vm963, %v2317, 0.0
    %2319 = vadd.xlane.f32.xlu0 %v2318
    %v2320 = vpop.xlane.xlu0 %2319
    %v2321 = vlog2.pop %v2320
    %v2322 = vmul.f32 %v2321, 0.6931472
    %v2323 = vsub.f32 %v2315, %v2322
    %v2324 = vadd.f32 %v1650, %v2323
    %s2325 = scalar_lea.vmem [#allocation2], 6
    %v2326 = vld [vmem:[%s2325] sm:$0x3]
    %2327 = vmatpush.msra.mxu0 0.0
    %2328 = vmatpush.msra.mxu0 0.0
    %2329 = vmatpush.msra.mxu0 0.0
    %2330 = vmatpush.msra.mxu0 0.0
    %2331 = vmatpush.msra.mxu0 0.0
    %2332 = vmatpush.msra.mxu0 0.0
    %2333 = vmatpush.msra.mxu0 0.0
    %2334 = vmatpush.msra.mxu0 0.0
    %2335 = vmatpush.msra.mxu0 0.0
    %2336 = vmatpush.msra.mxu0 0.0
    %2337 = vmatpush.msra.mxu0 0.0
    %2338 = vmatpush.msra.mxu0 0.0
    %2339 = vmatpush.msra.mxu0 %v235
    %2340 = vmatpush.msra.mxu0 %v231
    %2341 = vmatpush.msra.mxu0 %v227
    %2342 = vmatpush.msra.mxu0 %v223
    %2343 = vmatmul.f32.gmra.mxu0 %v1946
    %v2344 = vpop.f32.mrf.mxu0
    %v2345 = vadd.f32 0.0, %v2344
    %2346 = vdwg.mxu0
    %2347 = vmatpush.msra.mxu0 0.0
    %2348 = vmatpush.msra.mxu0 0.0
    %2349 = vmatpush.msra.mxu0 0.0
    %2350 = vmatpush.msra.mxu0 0.0
    %2351 = vmatpush.msra.mxu0 0.0
    %2352 = vmatpush.msra.mxu0 0.0
    %2353 = vmatpush.msra.mxu0 0.0
    %2354 = vmatpush.msra.mxu0 0.0
    %2355 = vmatpush.msra.mxu0 0.0
    %2356 = vmatpush.msra.mxu0 0.0
    %2357 = vmatpush.msra.mxu0 0.0
    %2358 = vmatpush.msra.mxu0 0.0
    %2359 = vmatpush.msra.mxu0 %v236
    %2360 = vmatpush.msra.mxu0 %v232
    %2361 = vmatpush.msra.mxu0 %v228
    %2362 = vmatpush.msra.mxu0 %v224
    %2363 = vmatmul.f32.gmra.mxu0 %v1946
    %v2364 = vpop.f32.mrf.mxu0
    %v2365 = vadd.f32 0.0, %v2364
    %2366 = vdwg.mxu0
    %2367 = vmatpush.msra.mxu0 0.0
    %2368 = vmatpush.msra.mxu0 0.0
    %2369 = vmatpush.msra.mxu0 0.0
    %2370 = vmatpush.msra.mxu0 0.0
    %2371 = vmatpush.msra.mxu0 0.0
    %2372 = vmatpush.msra.mxu0 0.0
    %2373 = vmatpush.msra.mxu0 0.0
    %2374 = vmatpush.msra.mxu0 0.0
    %2375 = vmatpush.msra.mxu0 0.0
    %2376 = vmatpush.msra.mxu0 0.0
    %2377 = vmatpush.msra.mxu0 0.0
    %2378 = vmatpush.msra.mxu0 0.0
    %2379 = vmatpush.msra.mxu0 %v237
    %2380 = vmatpush.msra.mxu0 %v233
    %2381 = vmatpush.msra.mxu0 %v229
    %2382 = vmatpush.msra.mxu0 %v225
    %2383 = vmatmul.f32.gmra.mxu0 %v1946
    %v2384 = vpop.f32.mrf.mxu0
    %v2385 = vadd.f32 0.0, %v2384
    %2386 = vdwg.mxu0
    %2387 = vmatpush.msra.mxu0 0.0
    %2388 = vmatpush.msra.mxu0 0.0
    %2389 = vmatpush.msra.mxu0 0.0
    %2390 = vmatpush.msra.mxu0 0.0
    %2391 = vmatpush.msra.mxu0 0.0
    %2392 = vmatpush.msra.mxu0 0.0
    %2393 = vmatpush.msra.mxu0 0.0
    %2394 = vmatpush.msra.mxu0 0.0
    %2395 = vmatpush.msra.mxu0 0.0
    %2396 = vmatpush.msra.mxu0 0.0
    %2397 = vmatpush.msra.mxu0 0.0
    %2398 = vmatpush.msra.mxu0 0.0
    %2399 = vmatpush.msra.mxu0 %v238
    %2400 = vmatpush.msra.mxu0 %v234
    %2401 = vmatpush.msra.mxu0 %v230
    %2402 = vmatpush.msra.mxu0 %v226
    %2403 = vmatmul.f32.gmra.mxu0 %v1946
    %v2404 = vpop.f32.mrf.mxu0
    %v2405 = vadd.f32 0.0, %v2404
    %2406 = vdwg.mxu0
    %v2408 = vsel %vm323, %v2326, 0
    %2410 = vmatpush.msra.mxu0 0.0
    %2411 = vmatpush.msra.mxu0 0.0
    %2412 = vmatpush.msra.mxu0 0.0
    %2413 = vmatpush.msra.mxu0 0.0
    %2414 = vmatpush.msra.mxu0 0.0
    %2415 = vmatpush.msra.mxu0 0.0
    %2416 = vmatpush.msra.mxu0 0.0
    %2417 = vmatpush.msra.mxu0 0.0
    %2418 = vmatpush.msra.mxu0 0.0
    %2419 = vmatpush.msra.mxu0 0.0
    %2420 = vmatpush.msra.mxu0 0.0
    %2421 = vmatpush.msra.mxu0 0.0
    %2422 = vmatpush.msra.mxu0 0.0
    %2423 = vmatpush.msra.mxu0 0.0
    %2424 = vmatpush.msra.mxu0 %v219
    %2425 = vmatpush.msra.mxu0 %v215
    %2426 = vmatmul.f32.gmra.mxu0 %v2408
    %v2427 = vpop.f32.mrf.mxu0
    %v2428 = vadd.f32 %v2345, %v2427
    %2429 = vdwg.mxu0
    %2430 = vmatpush.msra.mxu0 0.0
    %2431 = vmatpush.msra.mxu0 0.0
    %2432 = vmatpush.msra.mxu0 0.0
    %2433 = vmatpush.msra.mxu0 0.0
    %2434 = vmatpush.msra.mxu0 0.0
    %2435 = vmatpush.msra.mxu0 0.0
    %2436 = vmatpush.msra.mxu0 0.0
    %2437 = vmatpush.msra.mxu0 0.0
    %2438 = vmatpush.msra.mxu0 0.0
    %2439 = vmatpush.msra.mxu0 0.0
    %2440 = vmatpush.msra.mxu0 0.0
    %2441 = vmatpush.msra.mxu0 0.0
    %2442 = vmatpush.msra.mxu0 0.0
    %2443 = vmatpush.msra.mxu0 0.0
    %2444 = vmatpush.msra.mxu0 %v220
    %2445 = vmatpush.msra.mxu0 %v216
    %2446 = vmatmul.f32.gmra.mxu0 %v2408
    %v2447 = vpop.f32.mrf.mxu0
    %v2448 = vadd.f32 %v2365, %v2447
    %2449 = vdwg.mxu0
    %2450 = vmatpush.msra.mxu0 0.0
    %2451 = vmatpush.msra.mxu0 0.0
    %2452 = vmatpush.msra.mxu0 0.0
    %2453 = vmatpush.msra.mxu0 0.0
    %2454 = vmatpush.msra.mxu0 0.0
    %2455 = vmatpush.msra.mxu0 0.0
    %2456 = vmatpush.msra.mxu0 0.0
    %2457 = vmatpush.msra.mxu0 0.0
    %2458 = vmatpush.msra.mxu0 0.0
    %2459 = vmatpush.msra.mxu0 0.0
    %2460 = vmatpush.msra.mxu0 0.0
    %2461 = vmatpush.msra.mxu0 0.0
    %2462 = vmatpush.msra.mxu0 0.0
    %2463 = vmatpush.msra.mxu0 0.0
    %2464 = vmatpush.msra.mxu0 %v221
    %2465 = vmatpush.msra.mxu0 %v217
    %2466 = vmatmul.f32.gmra.mxu0 %v2408
    %v2467 = vpop.f32.mrf.mxu0
    %v2468 = vadd.f32 %v2385, %v2467
    %2469 = vdwg.mxu0
    %2470 = vmatpush.msra.mxu0 0.0
    %2471 = vmatpush.msra.mxu0 0.0
    %2472 = vmatpush.msra.mxu0 0.0
    %2473 = vmatpush.msra.mxu0 0.0
    %2474 = vmatpush.msra.mxu0 0.0
    %2475 = vmatpush.msra.mxu0 0.0
    %2476 = vmatpush.msra.mxu0 0.0
    %2477 = vmatpush.msra.mxu0 0.0
    %2478 = vmatpush.msra.mxu0 0.0
    %2479 = vmatpush.msra.mxu0 0.0
    %2480 = vmatpush.msra.mxu0 0.0
    %2481 = vmatpush.msra.mxu0 0.0
    %2482 = vmatpush.msra.mxu0 0.0
    %2483 = vmatpush.msra.mxu0 0.0
    %2484 = vmatpush.msra.mxu0 %v222
    %2485 = vmatpush.msra.mxu0 %v218
    %2486 = vmatmul.f32.gmra.mxu0 %v2408
    %v2487 = vpop.f32.mrf.mxu0
    %v2488 = vadd.f32 %v2405, %v2487
    %2489 = vdwg.mxu0
    %v2490 = vadd.f32 %v2428, %v182
    %v2491 = vadd.f32 %v2448, %v183
    %v2492 = vadd.f32 %v2468, %v184
    %v2493 = vadd.f32 %v2488, %v185
    %v2494 = vxor.u32 %v2490, 2147483648
    %v2495 = vmul.f32 %v2494, 1.442695
    %v2496 = vpow.pop %v2495
    %v2497 = vadd.f32 %v2496, 1.0
    %v2498 = vrcp.pop %v2497
    %v2499 = vmul.f32 %v2497, %v2498
    %v2500 = vsub.f32 1.0, %v2499
    %v2501 = vmul.f32 %v2498, %v2500
    %v2502 = vadd.f32 %v2498, %v2501
    %vm2503 = vweird.f32 %v2497
    %vm2504 = vweird.f32 %v2498
    %vm2505 = vmor %vm2503, %vm2504
    %v2506 = vsel %vm2505, %v2498, %v2502
    %v2507 = vand.u32 2147483647, %v2497
    %vm2508 = vcmp.eq.f32.partialorder %v2507, 8.507059e+37
    %v2509 = vand.u32 %v2497, 2147483648
    %v2510 = vor.u32 1.1754944e-38, %v2509
    %v2511 = vsel %vm2508, %v2510, %v2506
    %v2512 = vmul.f32 1.0, %v2511
    %v2513 = vxor.u32 %v2491, 2147483648
    %v2514 = vmul.f32 %v2513, 1.442695
    %v2515 = vpow.pop %v2514
    %v2516 = vadd.f32 %v2515, 1.0
    %v2517 = vrcp.pop %v2516
    %v2518 = vmul.f32 %v2516, %v2517
    %v2519 = vsub.f32 1.0, %v2518
    %v2520 = vmul.f32 %v2517, %v2519
    %v2521 = vadd.f32 %v2517, %v2520
    %vm2522 = vweird.f32 %v2516
    %vm2523 = vweird.f32 %v2517
    %vm2524 = vmor %vm2522, %vm2523
    %v2525 = vsel %vm2524, %v2517, %v2521
    %v2526 = vand.u32 2147483647, %v2516
    %vm2527 = vcmp.eq.f32.partialorder %v2526, 8.507059e+37
    %v2528 = vand.u32 %v2516, 2147483648
    %v2529 = vor.u32 1.1754944e-38, %v2528
    %v2530 = vsel %vm2527, %v2529, %v2525
    %v2531 = vmul.f32 1.0, %v2530
    %v2532 = vmul.f32 %v2512, %v2493
    %v2533 = vadd.f32 %v2492, %v2532
    %v2534 = vtanh.pop %v2533
    %v2535 = vsub.f32 1.0, %v2531
    %v2536 = vmul.f32 %v2535, %v2534
    %v2537 = vmul.f32 %v2531, %v1864
    %v2538 = vadd.f32 %v2536, %v2537
    %2539 = vmatpush.msra.mxu0 0.0
    %2540 = vmatpush.msra.mxu0 0.0
    %2541 = vmatpush.msra.mxu0 0.0
    %2542 = vmatpush.msra.mxu0 0.0
    %2543 = vmatpush.msra.mxu0 0.0
    %2544 = vmatpush.msra.mxu0 0.0
    %2545 = vmatpush.msra.mxu0 0.0
    %2546 = vmatpush.msra.mxu0 0.0
    %2547 = vmatpush.msra.mxu0 0.0
    %2548 = vmatpush.msra.mxu0 0.0
    %2549 = vmatpush.msra.mxu0 0.0
    %2550 = vmatpush.msra.mxu0 0.0
    %2551 = vmatpush.msra.mxu0 %v484
    %2552 = vmatpush.msra.mxu0 %v480
    %2553 = vmatpush.msra.mxu0 %v476
    %2554 = vmatpush.msra.mxu0 %v472
    %2555 = vmatmul.f32.gmra.mxu0 %v2158
    %v2556 = vpop.f32.mrf.mxu0
    %v2557 = vadd.f32 0.0, %v2556
    %2558 = vdwg.mxu0
    %2559 = vmatpush.msra.mxu0 0.0
    %2560 = vmatpush.msra.mxu0 0.0
    %2561 = vmatpush.msra.mxu0 0.0
    %2562 = vmatpush.msra.mxu0 0.0
    %2563 = vmatpush.msra.mxu0 0.0
    %2564 = vmatpush.msra.mxu0 0.0
    %2565 = vmatpush.msra.mxu0 0.0
    %2566 = vmatpush.msra.mxu0 0.0
    %2567 = vmatpush.msra.mxu0 0.0
    %2568 = vmatpush.msra.mxu0 0.0
    %2569 = vmatpush.msra.mxu0 0.0
    %2570 = vmatpush.msra.mxu0 0.0
    %2571 = vmatpush.msra.mxu0 %v485
    %2572 = vmatpush.msra.mxu0 %v481
    %2573 = vmatpush.msra.mxu0 %v477
    %2574 = vmatpush.msra.mxu0 %v473
    %2575 = vmatmul.f32.gmra.mxu0 %v2158
    %v2576 = vpop.f32.mrf.mxu0
    %v2577 = vadd.f32 0.0, %v2576
    %2578 = vdwg.mxu0
    %2579 = vmatpush.msra.mxu0 0.0
    %2580 = vmatpush.msra.mxu0 0.0
    %2581 = vmatpush.msra.mxu0 0.0
    %2582 = vmatpush.msra.mxu0 0.0
    %2583 = vmatpush.msra.mxu0 0.0
    %2584 = vmatpush.msra.mxu0 0.0
    %2585 = vmatpush.msra.mxu0 0.0
    %2586 = vmatpush.msra.mxu0 0.0
    %2587 = vmatpush.msra.mxu0 0.0
    %2588 = vmatpush.msra.mxu0 0.0
    %2589 = vmatpush.msra.mxu0 0.0
    %2590 = vmatpush.msra.mxu0 0.0
    %2591 = vmatpush.msra.mxu0 %v486
    %2592 = vmatpush.msra.mxu0 %v482
    %2593 = vmatpush.msra.mxu0 %v478
    %2594 = vmatpush.msra.mxu0 %v474
    %2595 = vmatmul.f32.gmra.mxu0 %v2158
    %v2596 = vpop.f32.mrf.mxu0
    %v2597 = vadd.f32 0.0, %v2596
    %2598 = vdwg.mxu0
    %2599 = vmatpush.msra.mxu0 0.0
    %2600 = vmatpush.msra.mxu0 0.0
    %2601 = vmatpush.msra.mxu0 0.0
    %2602 = vmatpush.msra.mxu0 0.0
    %2603 = vmatpush.msra.mxu0 0.0
    %2604 = vmatpush.msra.mxu0 0.0
    %2605 = vmatpush.msra.mxu0 0.0
    %2606 = vmatpush.msra.mxu0 0.0
    %2607 = vmatpush.msra.mxu0 0.0
    %2608 = vmatpush.msra.mxu0 0.0
    %2609 = vmatpush.msra.mxu0 0.0
    %2610 = vmatpush.msra.mxu0 0.0
    %2611 = vmatpush.msra.mxu0 %v487
    %2612 = vmatpush.msra.mxu0 %v483
    %2613 = vmatpush.msra.mxu0 %v479
    %2614 = vmatpush.msra.mxu0 %v475
    %2615 = vmatmul.f32.gmra.mxu0 %v2158
    %v2616 = vpop.f32.mrf.mxu0
    %v2617 = vadd.f32 0.0, %v2616
    %2618 = vdwg.mxu0
    %v2620 = vsel %vm239, %v2538, 0
    %2622 = vmatpush.msra.mxu0 0.0
    %2623 = vmatpush.msra.mxu0 0.0
    %2624 = vmatpush.msra.mxu0 0.0
    %2625 = vmatpush.msra.mxu0 0.0
    %2626 = vmatpush.msra.mxu0 0.0
    %2627 = vmatpush.msra.mxu0 0.0
    %2628 = vmatpush.msra.mxu0 0.0
    %2629 = vmatpush.msra.mxu0 0.0
    %2630 = vmatpush.msra.mxu0 0.0
    %2631 = vmatpush.msra.mxu0 0.0
    %2632 = vmatpush.msra.mxu0 0.0
    %2633 = vmatpush.msra.mxu0 0.0
    %2634 = vmatpush.msra.mxu0 %v468
    %2635 = vmatpush.msra.mxu0 %v464
    %2636 = vmatpush.msra.mxu0 %v460
    %2637 = vmatpush.msra.mxu0 %v456
    %2638 = vmatmul.f32.gmra.mxu0 %v2620
    %v2639 = vpop.f32.mrf.mxu0
    %v2640 = vadd.f32 %v2557, %v2639
    %2641 = vdwg.mxu0
    %2642 = vmatpush.msra.mxu0 0.0
    %2643 = vmatpush.msra.mxu0 0.0
    %2644 = vmatpush.msra.mxu0 0.0
    %2645 = vmatpush.msra.mxu0 0.0
    %2646 = vmatpush.msra.mxu0 0.0
    %2647 = vmatpush.msra.mxu0 0.0
    %2648 = vmatpush.msra.mxu0 0.0
    %2649 = vmatpush.msra.mxu0 0.0
    %2650 = vmatpush.msra.mxu0 0.0
    %2651 = vmatpush.msra.mxu0 0.0
    %2652 = vmatpush.msra.mxu0 0.0
    %2653 = vmatpush.msra.mxu0 0.0
    %2654 = vmatpush.msra.mxu0 %v469
    %2655 = vmatpush.msra.mxu0 %v465
    %2656 = vmatpush.msra.mxu0 %v461
    %2657 = vmatpush.msra.mxu0 %v457
    %2658 = vmatmul.f32.gmra.mxu0 %v2620
    %v2659 = vpop.f32.mrf.mxu0
    %v2660 = vadd.f32 %v2577, %v2659
    %2661 = vdwg.mxu0
    %2662 = vmatpush.msra.mxu0 0.0
    %2663 = vmatpush.msra.mxu0 0.0
    %2664 = vmatpush.msra.mxu0 0.0
    %2665 = vmatpush.msra.mxu0 0.0
    %2666 = vmatpush.msra.mxu0 0.0
    %2667 = vmatpush.msra.mxu0 0.0
    %2668 = vmatpush.msra.mxu0 0.0
    %2669 = vmatpush.msra.mxu0 0.0
    %2670 = vmatpush.msra.mxu0 0.0
    %2671 = vmatpush.msra.mxu0 0.0
    %2672 = vmatpush.msra.mxu0 0.0
    %2673 = vmatpush.msra.mxu0 0.0
    %2674 = vmatpush.msra.mxu0 %v470
    %2675 = vmatpush.msra.mxu0 %v466
    %2676 = vmatpush.msra.mxu0 %v462
    %2677 = vmatpush.msra.mxu0 %v458
    %2678 = vmatmul.f32.gmra.mxu0 %v2620
    %v2679 = vpop.f32.mrf.mxu0
    %v2680 = vadd.f32 %v2597, %v2679
    %2681 = vdwg.mxu0
    %2682 = vmatpush.msra.mxu0 0.0
    %2683 = vmatpush.msra.mxu0 0.0
    %2684 = vmatpush.msra.mxu0 0.0
    %2685 = vmatpush.msra.mxu0 0.0
    %2686 = vmatpush.msra.mxu0 0.0
    %2687 = vmatpush.msra.mxu0 0.0
    %2688 = vmatpush.msra.mxu0 0.0
    %2689 = vmatpush.msra.mxu0 0.0
    %2690 = vmatpush.msra.mxu0 0.0
    %2691 = vmatpush.msra.mxu0 0.0
    %2692 = vmatpush.msra.mxu0 0.0
    %2693 = vmatpush.msra.mxu0 0.0
    %2694 = vmatpush.msra.mxu0 %v471
    %2695 = vmatpush.msra.mxu0 %v467
    %2696 = vmatpush.msra.mxu0 %v463
    %2697 = vmatpush.msra.mxu0 %v459
    %2698 = vmatmul.f32.gmra.mxu0 %v2620
    %v2699 = vpop.f32.mrf.mxu0
    %v2700 = vadd.f32 %v2617, %v2699
    %2701 = vdwg.mxu0
    %v2702 = vadd.f32 %v2640, %v192
    %v2703 = vadd.f32 %v2660, %v193
    %v2704 = vadd.f32 %v2680, %v194
    %v2705 = vadd.f32 %v2700, %v195
    %v2706 = vxor.u32 %v2702, 2147483648
    %v2707 = vmul.f32 %v2706, 1.442695
    %v2708 = vpow.pop %v2707
    %v2709 = vadd.f32 %v2708, 1.0
    %v2710 = vrcp.pop %v2709
    %v2711 = vmul.f32 %v2709, %v2710
    %v2712 = vsub.f32 1.0, %v2711
    %v2713 = vmul.f32 %v2710, %v2712
    %v2714 = vadd.f32 %v2710, %v2713
    %vm2715 = vweird.f32 %v2709
    %vm2716 = vweird.f32 %v2710
    %vm2717 = vmor %vm2715, %vm2716
    %v2718 = vsel %vm2717, %v2710, %v2714
    %v2719 = vand.u32 2147483647, %v2709
    %vm2720 = vcmp.eq.f32.partialorder %v2719, 8.507059e+37
    %v2721 = vand.u32 %v2709, 2147483648
    %v2722 = vor.u32 1.1754944e-38, %v2721
    %v2723 = vsel %vm2720, %v2722, %v2718
    %v2724 = vmul.f32 1.0, %v2723
    %v2725 = vxor.u32 %v2703, 2147483648
    %v2726 = vmul.f32 %v2725, 1.442695
    %v2727 = vpow.pop %v2726
    %v2728 = vadd.f32 %v2727, 1.0
    %v2729 = vrcp.pop %v2728
    %v2730 = vmul.f32 %v2728, %v2729
    %v2731 = vsub.f32 1.0, %v2730
    %v2732 = vmul.f32 %v2729, %v2731
    %v2733 = vadd.f32 %v2729, %v2732
    %vm2734 = vweird.f32 %v2728
    %vm2735 = vweird.f32 %v2729
    %vm2736 = vmor %vm2734, %vm2735
    %v2737 = vsel %vm2736, %v2729, %v2733
    %v2738 = vand.u32 2147483647, %v2728
    %vm2739 = vcmp.eq.f32.partialorder %v2738, 8.507059e+37
    %v2740 = vand.u32 %v2728, 2147483648
    %v2741 = vor.u32 1.1754944e-38, %v2740
    %v2742 = vsel %vm2739, %v2741, %v2737
    %v2743 = vmul.f32 1.0, %v2742
    %v2744 = vmul.f32 %v2724, %v2705
    %v2745 = vadd.f32 %v2704, %v2744
    %v2746 = vtanh.pop %v2745
    %v2747 = vsub.f32 1.0, %v2743
    %v2748 = vmul.f32 %v2747, %v2746
    %v2749 = vmul.f32 %v2743, %v2076
    %v2750 = vadd.f32 %v2748, %v2749
    %2751 = vmatpush.msra.mxu0 0.0
    %2752 = vmatpush.msra.mxu0 0.0
    %2753 = vmatpush.msra.mxu0 0.0
    %2754 = vmatpush.msra.mxu0 0.0
    %2755 = vmatpush.msra.mxu0 0.0
    %2756 = vmatpush.msra.mxu0 0.0
    %2757 = vmatpush.msra.mxu0 0.0
    %2758 = vmatpush.msra.mxu0 0.0
    %2759 = vmatpush.msra.mxu0 0.0
    %2760 = vmatpush.msra.mxu0 0.0
    %2761 = vmatpush.msra.mxu0 0.0
    %2762 = vmatpush.msra.mxu0 0.0
    %2763 = vmatpush.msra.mxu0 0.0
    %2764 = vmatpush.msra.mxu0 0.0
    %2765 = vmatpush.msra.mxu0 %v720
    %2766 = vmatpush.msra.mxu0 %v716
    %2767 = vmatmul.f32.gmra.mxu0 %v2290
    %v2768 = vpop.f32.mrf.mxu0
    %v2769 = vadd.f32 0.0, %v2768
    %2770 = vdwg.mxu0
    %2771 = vmatpush.msra.mxu0 0.0
    %2772 = vmatpush.msra.mxu0 0.0
    %2773 = vmatpush.msra.mxu0 0.0
    %2774 = vmatpush.msra.mxu0 0.0
    %2775 = vmatpush.msra.mxu0 0.0
    %2776 = vmatpush.msra.mxu0 0.0
    %2777 = vmatpush.msra.mxu0 0.0
    %2778 = vmatpush.msra.mxu0 0.0
    %2779 = vmatpush.msra.mxu0 0.0
    %2780 = vmatpush.msra.mxu0 0.0
    %2781 = vmatpush.msra.mxu0 0.0
    %2782 = vmatpush.msra.mxu0 0.0
    %2783 = vmatpush.msra.mxu0 0.0
    %2784 = vmatpush.msra.mxu0 0.0
    %2785 = vmatpush.msra.mxu0 %v721
    %2786 = vmatpush.msra.mxu0 %v717
    %2787 = vmatmul.f32.gmra.mxu0 %v2290
    %v2788 = vpop.f32.mrf.mxu0
    %v2789 = vadd.f32 0.0, %v2788
    %2790 = vdwg.mxu0
    %2791 = vmatpush.msra.mxu0 0.0
    %2792 = vmatpush.msra.mxu0 0.0
    %2793 = vmatpush.msra.mxu0 0.0
    %2794 = vmatpush.msra.mxu0 0.0
    %2795 = vmatpush.msra.mxu0 0.0
    %2796 = vmatpush.msra.mxu0 0.0
    %2797 = vmatpush.msra.mxu0 0.0
    %2798 = vmatpush.msra.mxu0 0.0
    %2799 = vmatpush.msra.mxu0 0.0
    %2800 = vmatpush.msra.mxu0 0.0
    %2801 = vmatpush.msra.mxu0 0.0
    %2802 = vmatpush.msra.mxu0 0.0
    %2803 = vmatpush.msra.mxu0 0.0
    %2804 = vmatpush.msra.mxu0 0.0
    %2805 = vmatpush.msra.mxu0 %v722
    %2806 = vmatpush.msra.mxu0 %v718
    %2807 = vmatmul.f32.gmra.mxu0 %v2290
    %v2808 = vpop.f32.mrf.mxu0
    %v2809 = vadd.f32 0.0, %v2808
    %2810 = vdwg.mxu0
    %2811 = vmatpush.msra.mxu0 0.0
    %2812 = vmatpush.msra.mxu0 0.0
    %2813 = vmatpush.msra.mxu0 0.0
    %2814 = vmatpush.msra.mxu0 0.0
    %2815 = vmatpush.msra.mxu0 0.0
    %2816 = vmatpush.msra.mxu0 0.0
    %2817 = vmatpush.msra.mxu0 0.0
    %2818 = vmatpush.msra.mxu0 0.0
    %2819 = vmatpush.msra.mxu0 0.0
    %2820 = vmatpush.msra.mxu0 0.0
    %2821 = vmatpush.msra.mxu0 0.0
    %2822 = vmatpush.msra.mxu0 0.0
    %2823 = vmatpush.msra.mxu0 0.0
    %2824 = vmatpush.msra.mxu0 0.0
    %2825 = vmatpush.msra.mxu0 %v723
    %2826 = vmatpush.msra.mxu0 %v719
    %2827 = vmatmul.f32.gmra.mxu0 %v2290
    %v2828 = vpop.f32.mrf.mxu0
    %v2829 = vadd.f32 0.0, %v2828
    %2830 = vdwg.mxu0
    %v2832 = vsel %vm239, %v2750, 0
    %2834 = vmatpush.msra.mxu0 0.0
    %2835 = vmatpush.msra.mxu0 0.0
    %2836 = vmatpush.msra.mxu0 0.0
    %2837 = vmatpush.msra.mxu0 0.0
    %2838 = vmatpush.msra.mxu0 0.0
    %2839 = vmatpush.msra.mxu0 0.0
    %2840 = vmatpush.msra.mxu0 0.0
    %2841 = vmatpush.msra.mxu0 0.0
    %2842 = vmatpush.msra.mxu0 0.0
    %2843 = vmatpush.msra.mxu0 0.0
    %2844 = vmatpush.msra.mxu0 0.0
    %2845 = vmatpush.msra.mxu0 0.0
    %2846 = vmatpush.msra.mxu0 %v712
    %2847 = vmatpush.msra.mxu0 %v708
    %2848 = vmatpush.msra.mxu0 %v704
    %2849 = vmatpush.msra.mxu0 %v700
    %2850 = vmatmul.f32.gmra.mxu0 %v2832
    %v2851 = vpop.f32.mrf.mxu0
    %v2852 = vadd.f32 %v2769, %v2851
    %2853 = vdwg.mxu0
    %2854 = vmatpush.msra.mxu0 0.0
    %2855 = vmatpush.msra.mxu0 0.0
    %2856 = vmatpush.msra.mxu0 0.0
    %2857 = vmatpush.msra.mxu0 0.0
    %2858 = vmatpush.msra.mxu0 0.0
    %2859 = vmatpush.msra.mxu0 0.0
    %2860 = vmatpush.msra.mxu0 0.0
    %2861 = vmatpush.msra.mxu0 0.0
    %2862 = vmatpush.msra.mxu0 0.0
    %2863 = vmatpush.msra.mxu0 0.0
    %2864 = vmatpush.msra.mxu0 0.0
    %2865 = vmatpush.msra.mxu0 0.0
    %2866 = vmatpush.msra.mxu0 %v713
    %2867 = vmatpush.msra.mxu0 %v709
    %2868 = vmatpush.msra.mxu0 %v705
    %2869 = vmatpush.msra.mxu0 %v701
    %2870 = vmatmul.f32.gmra.mxu0 %v2832
    %v2871 = vpop.f32.mrf.mxu0
    %v2872 = vadd.f32 %v2789, %v2871
    %2873 = vdwg.mxu0
    %2874 = vmatpush.msra.mxu0 0.0
    %2875 = vmatpush.msra.mxu0 0.0
    %2876 = vmatpush.msra.mxu0 0.0
    %2877 = vmatpush.msra.mxu0 0.0
    %2878 = vmatpush.msra.mxu0 0.0
    %2879 = vmatpush.msra.mxu0 0.0
    %2880 = vmatpush.msra.mxu0 0.0
    %2881 = vmatpush.msra.mxu0 0.0
    %2882 = vmatpush.msra.mxu0 0.0
    %2883 = vmatpush.msra.mxu0 0.0
    %2884 = vmatpush.msra.mxu0 0.0
    %2885 = vmatpush.msra.mxu0 0.0
    %2886 = vmatpush.msra.mxu0 %v714
    %2887 = vmatpush.msra.mxu0 %v710
    %2888 = vmatpush.msra.mxu0 %v706
    %2889 = vmatpush.msra.mxu0 %v702
    %2890 = vmatmul.f32.gmra.mxu0 %v2832
    %v2891 = vpop.f32.mrf.mxu0
    %v2892 = vadd.f32 %v2809, %v2891
    %2893 = vdwg.mxu0
    %2894 = vmatpush.msra.mxu0 0.0
    %2895 = vmatpush.msra.mxu0 0.0
    %2896 = vmatpush.msra.mxu0 0.0
    %2897 = vmatpush.msra.mxu0 0.0
    %2898 = vmatpush.msra.mxu0 0.0
    %2899 = vmatpush.msra.mxu0 0.0
    %2900 = vmatpush.msra.mxu0 0.0
    %2901 = vmatpush.msra.mxu0 0.0
    %2902 = vmatpush.msra.mxu0 0.0
    %2903 = vmatpush.msra.mxu0 0.0
    %2904 = vmatpush.msra.mxu0 0.0
    %2905 = vmatpush.msra.mxu0 0.0
    %2906 = vmatpush.msra.mxu0 %v715
    %2907 = vmatpush.msra.mxu0 %v711
    %2908 = vmatpush.msra.mxu0 %v707
    %2909 = vmatpush.msra.mxu0 %v703
    %2910 = vmatmul.f32.gmra.mxu0 %v2832
    %v2911 = vpop.f32.mrf.mxu0
    %v2912 = vadd.f32 %v2829, %v2911
    %2913 = vdwg.mxu0
    %v2914 = vadd.f32 %v2852, %v202
    %v2915 = vadd.f32 %v2872, %v203
    %v2916 = vadd.f32 %v2892, %v204
    %v2917 = vadd.f32 %v2912, %v205
    %v2918 = vxor.u32 %v2914, 2147483648
    %v2919 = vmul.f32 %v2918, 1.442695
    %v2920 = vpow.pop %v2919
    %v2921 = vadd.f32 %v2920, 1.0
    %v2922 = vrcp.pop %v2921
    %v2923 = vmul.f32 %v2921, %v2922
    %v2924 = vsub.f32 1.0, %v2923
    %v2925 = vmul.f32 %v2922, %v2924
    %v2926 = vadd.f32 %v2922, %v2925
    %vm2927 = vweird.f32 %v2921
    %vm2928 = vweird.f32 %v2922
    %vm2929 = vmor %vm2927, %vm2928
    %v2930 = vsel %vm2929, %v2922, %v2926
    %v2931 = vand.u32 2147483647, %v2921
    %vm2932 = vcmp.eq.f32.partialorder %v2931, 8.507059e+37
    %v2933 = vand.u32 %v2921, 2147483648
    %v2934 = vor.u32 1.1754944e-38, %v2933
    %v2935 = vsel %vm2932, %v2934, %v2930
    %v2936 = vmul.f32 1.0, %v2935
    %v2937 = vxor.u32 %v2915, 2147483648
    %v2938 = vmul.f32 %v2937, 1.442695
    %v2939 = vpow.pop %v2938
    %v2940 = vadd.f32 %v2939, 1.0
    %v2941 = vrcp.pop %v2940
    %v2942 = vmul.f32 %v2940, %v2941
    %v2943 = vsub.f32 1.0, %v2942
    %v2944 = vmul.f32 %v2941, %v2943
    %v2945 = vadd.f32 %v2941, %v2944
    %vm2946 = vweird.f32 %v2940
    %vm2947 = vweird.f32 %v2941
    %vm2948 = vmor %vm2946, %vm2947
    %v2949 = vsel %vm2948, %v2941, %v2945
    %v2950 = vand.u32 2147483647, %v2940
    %vm2951 = vcmp.eq.f32.partialorder %v2950, 8.507059e+37
    %v2952 = vand.u32 %v2940, 2147483648
    %v2953 = vor.u32 1.1754944e-38, %v2952
    %v2954 = vsel %vm2951, %v2953, %v2949
    %v2955 = vmul.f32 1.0, %v2954
    %v2956 = vmul.f32 %v2936, %v2917
    %v2957 = vadd.f32 %v2916, %v2956
    %v2958 = vtanh.pop %v2957
    %v2959 = vsub.f32 1.0, %v2955
    %v2960 = vmul.f32 %v2959, %v2958
    %v2961 = vmul.f32 %v2955, %v2288
    %v2962 = vadd.f32 %v2960, %v2961
    %v2964 = vsel %vm323, %v2962, 0
    %2966 = vmatpush.msra.mxu0 0.0
    %2967 = vmatpush.msra.mxu0 0.0
    %2968 = vmatpush.msra.mxu0 0.0
    %2969 = vmatpush.msra.mxu0 0.0
    %2970 = vmatpush.msra.mxu0 0.0
    %2971 = vmatpush.msra.mxu0 0.0
    %2972 = vmatpush.msra.mxu0 0.0
    %2973 = vmatpush.msra.mxu0 0.0
    %2974 = vmatpush.msra.mxu0 0.0
    %2975 = vmatpush.msra.mxu0 0.0
    %2976 = vmatpush.msra.mxu0 0.0
    %2977 = vmatpush.msra.mxu0 0.0
    %2978 = vmatpush.msra.mxu0 0.0
    %2979 = vmatpush.msra.mxu0 0.0
    %2980 = vmatpush.msra.mxu0 %v939
    %2981 = vmatpush.msra.mxu0 %v938
    %2982 = vmatmul.f32.gmra.mxu0 %v2964
    %v2983 = vpop.f32.mrf.mxu0
    %v2984 = vadd.f32 %v212, %v2983
    %2985 = vdwg.mxu0
    %v2986 = vsel %vm963, %v2984, -inf
    %2987 = vmax.xlane.f32.xlu0 %v2986
    %v2988 = vpop.xlane.xlu0 %2987
    %v2989 = vsub.f32 %v2984, %v2988
    %v2990 = vmul.f32 %v2989, 1.442695
    %v2991 = vpow.pop %v2990
    %v2992 = vsel %vm963, %v2991, 0.0
    %2993 = vadd.xlane.f32.xlu0 %v2992
    %v2994 = vpop.xlane.xlu0 %2993
    %v2995 = vlog2.pop %v2994
    %v2996 = vmul.f32 %v2995, 0.6931472
    %v2997 = vsub.f32 %v2989, %v2996
    %v2998 = vadd.f32 %v2324, %v2997
    %s2999 = scalar_lea.vmem [#allocation2], 8
    %v3000 = vld [vmem:[%s2999] sm:$0x3]
    %3001 = vmatpush.msra.mxu0 0.0
    %3002 = vmatpush.msra.mxu0 0.0
    %3003 = vmatpush.msra.mxu0 0.0
    %3004 = vmatpush.msra.mxu0 0.0
    %3005 = vmatpush.msra.mxu0 0.0
    %3006 = vmatpush.msra.mxu0 0.0
    %3007 = vmatpush.msra.mxu0 0.0
    %3008 = vmatpush.msra.mxu0 0.0
    %3009 = vmatpush.msra.mxu0 0.0
    %3010 = vmatpush.msra.mxu0 0.0
    %3011 = vmatpush.msra.mxu0 0.0
    %3012 = vmatpush.msra.mxu0 0.0
    %3013 = vmatpush.msra.mxu0 %v235
    %3014 = vmatpush.msra.mxu0 %v231
    %3015 = vmatpush.msra.mxu0 %v227
    %3016 = vmatpush.msra.mxu0 %v223
    %3017 = vmatmul.f32.gmra.mxu0 %v2620
    %v3018 = vpop.f32.mrf.mxu0
    %v3019 = vadd.f32 0.0, %v3018
    %3020 = vdwg.mxu0
    %3021 = vmatpush.msra.mxu0 0.0
    %3022 = vmatpush.msra.mxu0 0.0
    %3023 = vmatpush.msra.mxu0 0.0
    %3024 = vmatpush.msra.mxu0 0.0
    %3025 = vmatpush.msra.mxu0 0.0
    %3026 = vmatpush.msra.mxu0 0.0
    %3027 = vmatpush.msra.mxu0 0.0
    %3028 = vmatpush.msra.mxu0 0.0
    %3029 = vmatpush.msra.mxu0 0.0
    %3030 = vmatpush.msra.mxu0 0.0
    %3031 = vmatpush.msra.mxu0 0.0
    %3032 = vmatpush.msra.mxu0 0.0
    %3033 = vmatpush.msra.mxu0 %v236
    %3034 = vmatpush.msra.mxu0 %v232
    %3035 = vmatpush.msra.mxu0 %v228
    %3036 = vmatpush.msra.mxu0 %v224
    %3037 = vmatmul.f32.gmra.mxu0 %v2620
    %v3038 = vpop.f32.mrf.mxu0
    %v3039 = vadd.f32 0.0, %v3038
    %3040 = vdwg.mxu0
    %3041 = vmatpush.msra.mxu0 0.0
    %3042 = vmatpush.msra.mxu0 0.0
    %3043 = vmatpush.msra.mxu0 0.0
    %3044 = vmatpush.msra.mxu0 0.0
    %3045 = vmatpush.msra.mxu0 0.0
    %3046 = vmatpush.msra.mxu0 0.0
    %3047 = vmatpush.msra.mxu0 0.0
    %3048 = vmatpush.msra.mxu0 0.0
    %3049 = vmatpush.msra.mxu0 0.0
    %3050 = vmatpush.msra.mxu0 0.0
    %3051 = vmatpush.msra.mxu0 0.0
    %3052 = vmatpush.msra.mxu0 0.0
    %3053 = vmatpush.msra.mxu0 %v237
    %3054 = vmatpush.msra.mxu0 %v233
    %3055 = vmatpush.msra.mxu0 %v229
    %3056 = vmatpush.msra.mxu0 %v225
    %3057 = vmatmul.f32.gmra.mxu0 %v2620
    %v3058 = vpop.f32.mrf.mxu0
    %v3059 = vadd.f32 0.0, %v3058
    %3060 = vdwg.mxu0
    %3061 = vmatpush.msra.mxu0 0.0
    %3062 = vmatpush.msra.mxu0 0.0
    %3063 = vmatpush.msra.mxu0 0.0
    %3064 = vmatpush.msra.mxu0 0.0
    %3065 = vmatpush.msra.mxu0 0.0
    %3066 = vmatpush.msra.mxu0 0.0
    %3067 = vmatpush.msra.mxu0 0.0
    %3068 = vmatpush.msra.mxu0 0.0
    %3069 = vmatpush.msra.mxu0 0.0
    %3070 = vmatpush.msra.mxu0 0.0
    %3071 = vmatpush.msra.mxu0 0.0
    %3072 = vmatpush.msra.mxu0 0.0
    %3073 = vmatpush.msra.mxu0 %v238
    %3074 = vmatpush.msra.mxu0 %v234
    %3075 = vmatpush.msra.mxu0 %v230
    %3076 = vmatpush.msra.mxu0 %v226
    %3077 = vmatmul.f32.gmra.mxu0 %v2620
    %v3078 = vpop.f32.mrf.mxu0
    %v3079 = vadd.f32 0.0, %v3078
    %3080 = vdwg.mxu0
    %v3082 = vsel %vm323, %v3000, 0
    %3084 = vmatpush.msra.mxu0 0.0
    %3085 = vmatpush.msra.mxu0 0.0
    %3086 = vmatpush.msra.mxu0 0.0
    %3087 = vmatpush.msra.mxu0 0.0
    %3088 = vmatpush.msra.mxu0 0.0
    %3089 = vmatpush.msra.mxu0 0.0
    %3090 = vmatpush.msra.mxu0 0.0
    %3091 = vmatpush.msra.mxu0 0.0
    %3092 = vmatpush.msra.mxu0 0.0
    %3093 = vmatpush.msra.mxu0 0.0
    %3094 = vmatpush.msra.mxu0 0.0
    %3095 = vmatpush.msra.mxu0 0.0
    %3096 = vmatpush.msra.mxu0 0.0
    %3097 = vmatpush.msra.mxu0 0.0
    %3098 = vmatpush.msra.mxu0 %v219
    %3099 = vmatpush.msra.mxu0 %v215
    %3100 = vmatmul.f32.gmra.mxu0 %v3082
    %v3101 = vpop.f32.mrf.mxu0
    %v3102 = vadd.f32 %v3019, %v3101
    %3103 = vdwg.mxu0
    %3104 = vmatpush.msra.mxu0 0.0
    %3105 = vmatpush.msra.mxu0 0.0
    %3106 = vmatpush.msra.mxu0 0.0
    %3107 = vmatpush.msra.mxu0 0.0
    %3108 = vmatpush.msra.mxu0 0.0
    %3109 = vmatpush.msra.mxu0 0.0
    %3110 = vmatpush.msra.mxu0 0.0
    %3111 = vmatpush.msra.mxu0 0.0
    %3112 = vmatpush.msra.mxu0 0.0
    %3113 = vmatpush.msra.mxu0 0.0
    %3114 = vmatpush.msra.mxu0 0.0
    %3115 = vmatpush.msra.mxu0 0.0
    %3116 = vmatpush.msra.mxu0 0.0
    %3117 = vmatpush.msra.mxu0 0.0
    %3118 = vmatpush.msra.mxu0 %v220
    %3119 = vmatpush.msra.mxu0 %v216
    %3120 = vmatmul.f32.gmra.mxu0 %v3082
    %v3121 = vpop.f32.mrf.mxu0
    %v3122 = vadd.f32 %v3039, %v3121
    %3123 = vdwg.mxu0
    %3124 = vmatpush.msra.mxu0 0.0
    %3125 = vmatpush.msra.mxu0 0.0
    %3126 = vmatpush.msra.mxu0 0.0
    %3127 = vmatpush.msra.mxu0 0.0
    %3128 = vmatpush.msra.mxu0 0.0
    %3129 = vmatpush.msra.mxu0 0.0
    %3130 = vmatpush.msra.mxu0 0.0
    %3131 = vmatpush.msra.mxu0 0.0
    %3132 = vmatpush.msra.mxu0 0.0
    %3133 = vmatpush.msra.mxu0 0.0
    %3134 = vmatpush.msra.mxu0 0.0
    %3135 = vmatpush.msra.mxu0 0.0
    %3136 = vmatpush.msra.mxu0 0.0
    %3137 = vmatpush.msra.mxu0 0.0
    %3138 = vmatpush.msra.mxu0 %v221
    %3139 = vmatpush.msra.mxu0 %v217
    %3140 = vmatmul.f32.gmra.mxu0 %v3082
    %v3141 = vpop.f32.mrf.mxu0
    %v3142 = vadd.f32 %v3059, %v3141
    %3143 = vdwg.mxu0
    %3144 = vmatpush.msra.mxu0 0.0
    %3145 = vmatpush.msra.mxu0 0.0
    %3146 = vmatpush.msra.mxu0 0.0
    %3147 = vmatpush.msra.mxu0 0.0
    %3148 = vmatpush.msra.mxu0 0.0
    %3149 = vmatpush.msra.mxu0 0.0
    %3150 = vmatpush.msra.mxu0 0.0
    %3151 = vmatpush.msra.mxu0 0.0
    %3152 = vmatpush.msra.mxu0 0.0
    %3153 = vmatpush.msra.mxu0 0.0
    %3154 = vmatpush.msra.mxu0 0.0
    %3155 = vmatpush.msra.mxu0 0.0
    %3156 = vmatpush.msra.mxu0 0.0
    %3157 = vmatpush.msra.mxu0 0.0
    %3158 = vmatpush.msra.mxu0 %v222
    %3159 = vmatpush.msra.mxu0 %v218
    %3160 = vmatmul.f32.gmra.mxu0 %v3082
    %v3161 = vpop.f32.mrf.mxu0
    %v3162 = vadd.f32 %v3079, %v3161
    %3163 = vdwg.mxu0
    %v3164 = vadd.f32 %v3102, %v182
    %v3165 = vadd.f32 %v3122, %v183
    %v3166 = vadd.f32 %v3142, %v184
    %v3167 = vadd.f32 %v3162, %v185
    %v3168 = vxor.u32 %v3164, 2147483648
    %v3169 = vmul.f32 %v3168, 1.442695
    %v3170 = vpow.pop %v3169
    %v3171 = vadd.f32 %v3170, 1.0
    %v3172 = vrcp.pop %v3171
    %v3173 = vmul.f32 %v3171, %v3172
    %v3174 = vsub.f32 1.0, %v3173
    %v3175 = vmul.f32 %v3172, %v3174
    %v3176 = vadd.f32 %v3172, %v3175
    %vm3177 = vweird.f32 %v3171
    %vm3178 = vweird.f32 %v3172
    %vm3179 = vmor %vm3177, %vm3178
    %v3180 = vsel %vm3179, %v3172, %v3176
    %v3181 = vand.u32 2147483647, %v3171
    %vm3182 = vcmp.eq.f32.partialorder %v3181, 8.507059e+37
    %v3183 = vand.u32 %v3171, 2147483648
    %v3184 = vor.u32 1.1754944e-38, %v3183
    %v3185 = vsel %vm3182, %v3184, %v3180
    %v3186 = vmul.f32 1.0, %v3185
    %v3187 = vxor.u32 %v3165, 2147483648
    %v3188 = vmul.f32 %v3187, 1.442695
    %v3189 = vpow.pop %v3188
    %v3190 = vadd.f32 %v3189, 1.0
    %v3191 = vrcp.pop %v3190
    %v3192 = vmul.f32 %v3190, %v3191
    %v3193 = vsub.f32 1.0, %v3192
    %v3194 = vmul.f32 %v3191, %v3193
    %v3195 = vadd.f32 %v3191, %v3194
    %vm3196 = vweird.f32 %v3190
    %vm3197 = vweird.f32 %v3191
    %vm3198 = vmor %vm3196, %vm3197
    %v3199 = vsel %vm3198, %v3191, %v3195
    %v3200 = vand.u32 2147483647, %v3190
    %vm3201 = vcmp.eq.f32.partialorder %v3200, 8.507059e+37
    %v3202 = vand.u32 %v3190, 2147483648
    %v3203 = vor.u32 1.1754944e-38, %v3202
    %v3204 = vsel %vm3201, %v3203, %v3199
    %v3205 = vmul.f32 1.0, %v3204
    %v3206 = vmul.f32 %v3186, %v3167
    %v3207 = vadd.f32 %v3166, %v3206
    %v3208 = vtanh.pop %v3207
    %v3209 = vsub.f32 1.0, %v3205
    %v3210 = vmul.f32 %v3209, %v3208
    %v3211 = vmul.f32 %v3205, %v2538
    %v3212 = vadd.f32 %v3210, %v3211
    %3213 = vmatpush.msra.mxu0 0.0
    %3214 = vmatpush.msra.mxu0 0.0
    %3215 = vmatpush.msra.mxu0 0.0
    %3216 = vmatpush.msra.mxu0 0.0
    %3217 = vmatpush.msra.mxu0 0.0
    %3218 = vmatpush.msra.mxu0 0.0
    %3219 = vmatpush.msra.mxu0 0.0
    %3220 = vmatpush.msra.mxu0 0.0
    %3221 = vmatpush.msra.mxu0 0.0
    %3222 = vmatpush.msra.mxu0 0.0
    %3223 = vmatpush.msra.mxu0 0.0
    %3224 = vmatpush.msra.mxu0 0.0
    %3225 = vmatpush.msra.mxu0 %v484
    %3226 = vmatpush.msra.mxu0 %v480
    %3227 = vmatpush.msra.mxu0 %v476
    %3228 = vmatpush.msra.mxu0 %v472
    %3229 = vmatmul.f32.gmra.mxu0 %v2832
    %v3230 = vpop.f32.mrf.mxu0
    %v3231 = vadd.f32 0.0, %v3230
    %3232 = vdwg.mxu0
    %3233 = vmatpush.msra.mxu0 0.0
    %3234 = vmatpush.msra.mxu0 0.0
    %3235 = vmatpush.msra.mxu0 0.0
    %3236 = vmatpush.msra.mxu0 0.0
    %3237 = vmatpush.msra.mxu0 0.0
    %3238 = vmatpush.msra.mxu0 0.0
    %3239 = vmatpush.msra.mxu0 0.0
    %3240 = vmatpush.msra.mxu0 0.0
    %3241 = vmatpush.msra.mxu0 0.0
    %3242 = vmatpush.msra.mxu0 0.0
    %3243 = vmatpush.msra.mxu0 0.0
    %3244 = vmatpush.msra.mxu0 0.0
    %3245 = vmatpush.msra.mxu0 %v485
    %3246 = vmatpush.msra.mxu0 %v481
    %3247 = vmatpush.msra.mxu0 %v477
    %3248 = vmatpush.msra.mxu0 %v473
    %3249 = vmatmul.f32.gmra.mxu0 %v2832
    %v3250 = vpop.f32.mrf.mxu0
    %v3251 = vadd.f32 0.0, %v3250
    %3252 = vdwg.mxu0
    %3253 = vmatpush.msra.mxu0 0.0
    %3254 = vmatpush.msra.mxu0 0.0
    %3255 = vmatpush.msra.mxu0 0.0
    %3256 = vmatpush.msra.mxu0 0.0
    %3257 = vmatpush.msra.mxu0 0.0
    %3258 = vmatpush.msra.mxu0 0.0
    %3259 = vmatpush.msra.mxu0 0.0
    %3260 = vmatpush.msra.mxu0 0.0
    %3261 = vmatpush.msra.mxu0 0.0
    %3262 = vmatpush.msra.mxu0 0.0
    %3263 = vmatpush.msra.mxu0 0.0
    %3264 = vmatpush.msra.mxu0 0.0
    %3265 = vmatpush.msra.mxu0 %v486
    %3266 = vmatpush.msra.mxu0 %v482
    %3267 = vmatpush.msra.mxu0 %v478
    %3268 = vmatpush.msra.mxu0 %v474
    %3269 = vmatmul.f32.gmra.mxu0 %v2832
    %v3270 = vpop.f32.mrf.mxu0
    %v3271 = vadd.f32 0.0, %v3270
    %3272 = vdwg.mxu0
    %3273 = vmatpush.msra.mxu0 0.0
    %3274 = vmatpush.msra.mxu0 0.0
    %3275 = vmatpush.msra.mxu0 0.0
    %3276 = vmatpush.msra.mxu0 0.0
    %3277 = vmatpush.msra.mxu0 0.0
    %3278 = vmatpush.msra.mxu0 0.0
    %3279 = vmatpush.msra.mxu0 0.0
    %3280 = vmatpush.msra.mxu0 0.0
    %3281 = vmatpush.msra.mxu0 0.0
    %3282 = vmatpush.msra.mxu0 0.0
    %3283 = vmatpush.msra.mxu0 0.0
    %3284 = vmatpush.msra.mxu0 0.0
    %3285 = vmatpush.msra.mxu0 %v487
    %3286 = vmatpush.msra.mxu0 %v483
    %3287 = vmatpush.msra.mxu0 %v479
    %3288 = vmatpush.msra.mxu0 %v475
    %3289 = vmatmul.f32.gmra.mxu0 %v2832
    %v3290 = vpop.f32.mrf.mxu0
    %v3291 = vadd.f32 0.0, %v3290
    %3292 = vdwg.mxu0
    %v3294 = vsel %vm239, %v3212, 0
    %3296 = vmatpush.msra.mxu0 0.0
    %3297 = vmatpush.msra.mxu0 0.0
    %3298 = vmatpush.msra.mxu0 0.0
    %3299 = vmatpush.msra.mxu0 0.0
    %3300 = vmatpush.msra.mxu0 0.0
    %3301 = vmatpush.msra.mxu0 0.0
    %3302 = vmatpush.msra.mxu0 0.0
    %3303 = vmatpush.msra.mxu0 0.0
    %3304 = vmatpush.msra.mxu0 0.0
    %3305 = vmatpush.msra.mxu0 0.0
    %3306 = vmatpush.msra.mxu0 0.0
    %3307 = vmatpush.msra.mxu0 0.0
    %3308 = vmatpush.msra.mxu0 %v468
    %3309 = vmatpush.msra.mxu0 %v464
    %3310 = vmatpush.msra.mxu0 %v460
    %3311 = vmatpush.msra.mxu0 %v456
    %3312 = vmatmul.f32.gmra.mxu0 %v3294
    %v3313 = vpop.f32.mrf.mxu0
    %v3314 = vadd.f32 %v3231, %v3313
    %3315 = vdwg.mxu0
    %3316 = vmatpush.msra.mxu0 0.0
    %3317 = vmatpush.msra.mxu0 0.0
    %3318 = vmatpush.msra.mxu0 0.0
    %3319 = vmatpush.msra.mxu0 0.0
    %3320 = vmatpush.msra.mxu0 0.0
    %3321 = vmatpush.msra.mxu0 0.0
    %3322 = vmatpush.msra.mxu0 0.0
    %3323 = vmatpush.msra.mxu0 0.0
    %3324 = vmatpush.msra.mxu0 0.0
    %3325 = vmatpush.msra.mxu0 0.0
    %3326 = vmatpush.msra.mxu0 0.0
    %3327 = vmatpush.msra.mxu0 0.0
    %3328 = vmatpush.msra.mxu0 %v469
    %3329 = vmatpush.msra.mxu0 %v465
    %3330 = vmatpush.msra.mxu0 %v461
    %3331 = vmatpush.msra.mxu0 %v457
    %3332 = vmatmul.f32.gmra.mxu0 %v3294
    %v3333 = vpop.f32.mrf.mxu0
    %v3334 = vadd.f32 %v3251, %v3333
    %3335 = vdwg.mxu0
    %3336 = vmatpush.msra.mxu0 0.0
    %3337 = vmatpush.msra.mxu0 0.0
    %3338 = vmatpush.msra.mxu0 0.0
    %3339 = vmatpush.msra.mxu0 0.0
    %3340 = vmatpush.msra.mxu0 0.0
    %3341 = vmatpush.msra.mxu0 0.0
    %3342 = vmatpush.msra.mxu0 0.0
    %3343 = vmatpush.msra.mxu0 0.0
    %3344 = vmatpush.msra.mxu0 0.0
    %3345 = vmatpush.msra.mxu0 0.0
    %3346 = vmatpush.msra.mxu0 0.0
    %3347 = vmatpush.msra.mxu0 0.0
    %3348 = vmatpush.msra.mxu0 %v470
    %3349 = vmatpush.msra.mxu0 %v466
    %3350 = vmatpush.msra.mxu0 %v462
    %3351 = vmatpush.msra.mxu0 %v458
    %3352 = vmatmul.f32.gmra.mxu0 %v3294
    %v3353 = vpop.f32.mrf.mxu0
    %v3354 = vadd.f32 %v3271, %v3353
    %3355 = vdwg.mxu0
    %3356 = vmatpush.msra.mxu0 0.0
    %3357 = vmatpush.msra.mxu0 0.0
    %3358 = vmatpush.msra.mxu0 0.0
    %3359 = vmatpush.msra.mxu0 0.0
    %3360 = vmatpush.msra.mxu0 0.0
    %3361 = vmatpush.msra.mxu0 0.0
    %3362 = vmatpush.msra.mxu0 0.0
    %3363 = vmatpush.msra.mxu0 0.0
    %3364 = vmatpush.msra.mxu0 0.0
    %3365 = vmatpush.msra.mxu0 0.0
    %3366 = vmatpush.msra.mxu0 0.0
    %3367 = vmatpush.msra.mxu0 0.0
    %3368 = vmatpush.msra.mxu0 %v471
    %3369 = vmatpush.msra.mxu0 %v467
    %3370 = vmatpush.msra.mxu0 %v463
    %3371 = vmatpush.msra.mxu0 %v459
    %3372 = vmatmul.f32.gmra.mxu0 %v3294
    %v3373 = vpop.f32.mrf.mxu0
    %v3374 = vadd.f32 %v3291, %v3373
    %3375 = vdwg.mxu0
    %v3376 = vadd.f32 %v3314, %v192
    %v3377 = vadd.f32 %v3334, %v193
    %v3378 = vadd.f32 %v3354, %v194
    %v3379 = vadd.f32 %v3374, %v195
    %v3380 = vxor.u32 %v3376, 2147483648
    %v3381 = vmul.f32 %v3380, 1.442695
    %v3382 = vpow.pop %v3381
    %v3383 = vadd.f32 %v3382, 1.0
    %v3384 = vrcp.pop %v3383
    %v3385 = vmul.f32 %v3383, %v3384
    %v3386 = vsub.f32 1.0, %v3385
    %v3387 = vmul.f32 %v3384, %v3386
    %v3388 = vadd.f32 %v3384, %v3387
    %vm3389 = vweird.f32 %v3383
    %vm3390 = vweird.f32 %v3384
    %vm3391 = vmor %vm3389, %vm3390
    %v3392 = vsel %vm3391, %v3384, %v3388
    %v3393 = vand.u32 2147483647, %v3383
    %vm3394 = vcmp.eq.f32.partialorder %v3393, 8.507059e+37
    %v3395 = vand.u32 %v3383, 2147483648
    %v3396 = vor.u32 1.1754944e-38, %v3395
    %v3397 = vsel %vm3394, %v3396, %v3392
    %v3398 = vmul.f32 1.0, %v3397
    %v3399 = vxor.u32 %v3377, 2147483648
    %v3400 = vmul.f32 %v3399, 1.442695
    %v3401 = vpow.pop %v3400
    %v3402 = vadd.f32 %v3401, 1.0
    %v3403 = vrcp.pop %v3402
    %v3404 = vmul.f32 %v3402, %v3403
    %v3405 = vsub.f32 1.0, %v3404
    %v3406 = vmul.f32 %v3403, %v3405
    %v3407 = vadd.f32 %v3403, %v3406
    %vm3408 = vweird.f32 %v3402
    %vm3409 = vweird.f32 %v3403
    %vm3410 = vmor %vm3408, %vm3409
    %v3411 = vsel %vm3410, %v3403, %v3407
    %v3412 = vand.u32 2147483647, %v3402
    %vm3413 = vcmp.eq.f32.partialorder %v3412, 8.507059e+37
    %v3414 = vand.u32 %v3402, 2147483648
    %v3415 = vor.u32 1.1754944e-38, %v3414
    %v3416 = vsel %vm3413, %v3415, %v3411
    %v3417 = vmul.f32 1.0, %v3416
    %v3418 = vmul.f32 %v3398, %v3379
    %v3419 = vadd.f32 %v3378, %v3418
    %v3420 = vtanh.pop %v3419
    %v3421 = vsub.f32 1.0, %v3417
    %v3422 = vmul.f32 %v3421, %v3420
    %v3423 = vmul.f32 %v3417, %v2750
    %v3424 = vadd.f32 %v3422, %v3423
    %3425 = vmatpush.msra.mxu0 0.0
    %3426 = vmatpush.msra.mxu0 0.0
    %3427 = vmatpush.msra.mxu0 0.0
    %3428 = vmatpush.msra.mxu0 0.0
    %3429 = vmatpush.msra.mxu0 0.0
    %3430 = vmatpush.msra.mxu0 0.0
    %3431 = vmatpush.msra.mxu0 0.0
    %3432 = vmatpush.msra.mxu0 0.0
    %3433 = vmatpush.msra.mxu0 0.0
    %3434 = vmatpush.msra.mxu0 0.0
    %3435 = vmatpush.msra.mxu0 0.0
    %3436 = vmatpush.msra.mxu0 0.0
    %3437 = vmatpush.msra.mxu0 0.0
    %3438 = vmatpush.msra.mxu0 0.0
    %3439 = vmatpush.msra.mxu0 %v720
    %3440 = vmatpush.msra.mxu0 %v716
    %3441 = vmatmul.f32.gmra.mxu0 %v2964
    %v3442 = vpop.f32.mrf.mxu0
    %v3443 = vadd.f32 0.0, %v3442
    %3444 = vdwg.mxu0
    %3445 = vmatpush.msra.mxu0 0.0
    %3446 = vmatpush.msra.mxu0 0.0
    %3447 = vmatpush.msra.mxu0 0.0
    %3448 = vmatpush.msra.mxu0 0.0
    %3449 = vmatpush.msra.mxu0 0.0
    %3450 = vmatpush.msra.mxu0 0.0
    %3451 = vmatpush.msra.mxu0 0.0
    %3452 = vmatpush.msra.mxu0 0.0
    %3453 = vmatpush.msra.mxu0 0.0
    %3454 = vmatpush.msra.mxu0 0.0
    %3455 = vmatpush.msra.mxu0 0.0
    %3456 = vmatpush.msra.mxu0 0.0
    %3457 = vmatpush.msra.mxu0 0.0
    %3458 = vmatpush.msra.mxu0 0.0
    %3459 = vmatpush.msra.mxu0 %v721
    %3460 = vmatpush.msra.mxu0 %v717
    %3461 = vmatmul.f32.gmra.mxu0 %v2964
    %v3462 = vpop.f32.mrf.mxu0
    %v3463 = vadd.f32 0.0, %v3462
    %3464 = vdwg.mxu0
    %3465 = vmatpush.msra.mxu0 0.0
    %3466 = vmatpush.msra.mxu0 0.0
    %3467 = vmatpush.msra.mxu0 0.0
    %3468 = vmatpush.msra.mxu0 0.0
    %3469 = vmatpush.msra.mxu0 0.0
    %3470 = vmatpush.msra.mxu0 0.0
    %3471 = vmatpush.msra.mxu0 0.0
    %3472 = vmatpush.msra.mxu0 0.0
    %3473 = vmatpush.msra.mxu0 0.0
    %3474 = vmatpush.msra.mxu0 0.0
    %3475 = vmatpush.msra.mxu0 0.0
    %3476 = vmatpush.msra.mxu0 0.0
    %3477 = vmatpush.msra.mxu0 0.0
    %3478 = vmatpush.msra.mxu0 0.0
    %3479 = vmatpush.msra.mxu0 %v722
    %3480 = vmatpush.msra.mxu0 %v718
    %3481 = vmatmul.f32.gmra.mxu0 %v2964
    %v3482 = vpop.f32.mrf.mxu0
    %v3483 = vadd.f32 0.0, %v3482
    %3484 = vdwg.mxu0
    %3485 = vmatpush.msra.mxu0 0.0
    %3486 = vmatpush.msra.mxu0 0.0
    %3487 = vmatpush.msra.mxu0 0.0
    %3488 = vmatpush.msra.mxu0 0.0
    %3489 = vmatpush.msra.mxu0 0.0
    %3490 = vmatpush.msra.mxu0 0.0
    %3491 = vmatpush.msra.mxu0 0.0
    %3492 = vmatpush.msra.mxu0 0.0
    %3493 = vmatpush.msra.mxu0 0.0
    %3494 = vmatpush.msra.mxu0 0.0
    %3495 = vmatpush.msra.mxu0 0.0
    %3496 = vmatpush.msra.mxu0 0.0
    %3497 = vmatpush.msra.mxu0 0.0
    %3498 = vmatpush.msra.mxu0 0.0
    %3499 = vmatpush.msra.mxu0 %v723
    %3500 = vmatpush.msra.mxu0 %v719
    %3501 = vmatmul.f32.gmra.mxu0 %v2964
    %v3502 = vpop.f32.mrf.mxu0
    %v3503 = vadd.f32 0.0, %v3502
    %3504 = vdwg.mxu0
    %v3506 = vsel %vm239, %v3424, 0
    %3508 = vmatpush.msra.mxu0 0.0
    %3509 = vmatpush.msra.mxu0 0.0
    %3510 = vmatpush.msra.mxu0 0.0
    %3511 = vmatpush.msra.mxu0 0.0
    %3512 = vmatpush.msra.mxu0 0.0
    %3513 = vmatpush.msra.mxu0 0.0
    %3514 = vmatpush.msra.mxu0 0.0
    %3515 = vmatpush.msra.mxu0 0.0
    %3516 = vmatpush.msra.mxu0 0.0
    %3517 = vmatpush.msra.mxu0 0.0
    %3518 = vmatpush.msra.mxu0 0.0
    %3519 = vmatpush.msra.mxu0 0.0
    %3520 = vmatpush.msra.mxu0 %v712
    %3521 = vmatpush.msra.mxu0 %v708
    %3522 = vmatpush.msra.mxu0 %v704
    %3523 = vmatpush.msra.mxu0 %v700
    %3524 = vmatmul.f32.gmra.mxu0 %v3506
    %v3525 = vpop.f32.mrf.mxu0
    %v3526 = vadd.f32 %v3443, %v3525
    %3527 = vdwg.mxu0
    %3528 = vmatpush.msra.mxu0 0.0
    %3529 = vmatpush.msra.mxu0 0.0
    %3530 = vmatpush.msra.mxu0 0.0
    %3531 = vmatpush.msra.mxu0 0.0
    %3532 = vmatpush.msra.mxu0 0.0
    %3533 = vmatpush.msra.mxu0 0.0
    %3534 = vmatpush.msra.mxu0 0.0
    %3535 = vmatpush.msra.mxu0 0.0
    %3536 = vmatpush.msra.mxu0 0.0
    %3537 = vmatpush.msra.mxu0 0.0
    %3538 = vmatpush.msra.mxu0 0.0
    %3539 = vmatpush.msra.mxu0 0.0
    %3540 = vmatpush.msra.mxu0 %v713
    %3541 = vmatpush.msra.mxu0 %v709
    %3542 = vmatpush.msra.mxu0 %v705
    %3543 = vmatpush.msra.mxu0 %v701
    %3544 = vmatmul.f32.gmra.mxu0 %v3506
    %v3545 = vpop.f32.mrf.mxu0
    %v3546 = vadd.f32 %v3463, %v3545
    %3547 = vdwg.mxu0
    %3548 = vmatpush.msra.mxu0 0.0
    %3549 = vmatpush.msra.mxu0 0.0
    %3550 = vmatpush.msra.mxu0 0.0
    %3551 = vmatpush.msra.mxu0 0.0
    %3552 = vmatpush.msra.mxu0 0.0
    %3553 = vmatpush.msra.mxu0 0.0
    %3554 = vmatpush.msra.mxu0 0.0
    %3555 = vmatpush.msra.mxu0 0.0
    %3556 = vmatpush.msra.mxu0 0.0
    %3557 = vmatpush.msra.mxu0 0.0
    %3558 = vmatpush.msra.mxu0 0.0
    %3559 = vmatpush.msra.mxu0 0.0
    %3560 = vmatpush.msra.mxu0 %v714
    %3561 = vmatpush.msra.mxu0 %v710
    %3562 = vmatpush.msra.mxu0 %v706
    %3563 = vmatpush.msra.mxu0 %v702
    %3564 = vmatmul.f32.gmra.mxu0 %v3506
    %v3565 = vpop.f32.mrf.mxu0
    %v3566 = vadd.f32 %v3483, %v3565
    %3567 = vdwg.mxu0
    %3568 = vmatpush.msra.mxu0 0.0
    %3569 = vmatpush.msra.mxu0 0.0
    %3570 = vmatpush.msra.mxu0 0.0
    %3571 = vmatpush.msra.mxu0 0.0
    %3572 = vmatpush.msra.mxu0 0.0
    %3573 = vmatpush.msra.mxu0 0.0
    %3574 = vmatpush.msra.mxu0 0.0
    %3575 = vmatpush.msra.mxu0 0.0
    %3576 = vmatpush.msra.mxu0 0.0
    %3577 = vmatpush.msra.mxu0 0.0
    %3578 = vmatpush.msra.mxu0 0.0
    %3579 = vmatpush.msra.mxu0 0.0
    %3580 = vmatpush.msra.mxu0 %v715
    %3581 = vmatpush.msra.mxu0 %v711
    %3582 = vmatpush.msra.mxu0 %v707
    %3583 = vmatpush.msra.mxu0 %v703
    %3584 = vmatmul.f32.gmra.mxu0 %v3506
    %v3585 = vpop.f32.mrf.mxu0
    %v3586 = vadd.f32 %v3503, %v3585
    %3587 = vdwg.mxu0
    %v3588 = vadd.f32 %v3526, %v202
    %v3589 = vadd.f32 %v3546, %v203
    %v3590 = vadd.f32 %v3566, %v204
    %v3591 = vadd.f32 %v3586, %v205
    %v3592 = vxor.u32 %v3588, 2147483648
    %v3593 = vmul.f32 %v3592, 1.442695
    %v3594 = vpow.pop %v3593
    %v3595 = vadd.f32 %v3594, 1.0
    %v3596 = vrcp.pop %v3595
    %v3597 = vmul.f32 %v3595, %v3596
    %v3598 = vsub.f32 1.0, %v3597
    %v3599 = vmul.f32 %v3596, %v3598
    %v3600 = vadd.f32 %v3596, %v3599
    %vm3601 = vweird.f32 %v3595
    %vm3602 = vweird.f32 %v3596
    %vm3603 = vmor %vm3601, %vm3602
    %v3604 = vsel %vm3603, %v3596, %v3600
    %v3605 = vand.u32 2147483647, %v3595
    %vm3606 = vcmp.eq.f32.partialorder %v3605, 8.507059e+37
    %v3607 = vand.u32 %v3595, 2147483648
    %v3608 = vor.u32 1.1754944e-38, %v3607
    %v3609 = vsel %vm3606, %v3608, %v3604
    %v3610 = vmul.f32 1.0, %v3609
    %v3611 = vxor.u32 %v3589, 2147483648
    %v3612 = vmul.f32 %v3611, 1.442695
    %v3613 = vpow.pop %v3612
    %v3614 = vadd.f32 %v3613, 1.0
    %v3615 = vrcp.pop %v3614
    %v3616 = vmul.f32 %v3614, %v3615
    %v3617 = vsub.f32 1.0, %v3616
    %v3618 = vmul.f32 %v3615, %v3617
    %v3619 = vadd.f32 %v3615, %v3618
    %vm3620 = vweird.f32 %v3614
    %vm3621 = vweird.f32 %v3615
    %vm3622 = vmor %vm3620, %vm3621
    %v3623 = vsel %vm3622, %v3615, %v3619
    %v3624 = vand.u32 2147483647, %v3614
    %vm3625 = vcmp.eq.f32.partialorder %v3624, 8.507059e+37
    %v3626 = vand.u32 %v3614, 2147483648
    %v3627 = vor.u32 1.1754944e-38, %v3626
    %v3628 = vsel %vm3625, %v3627, %v3623
    %v3629 = vmul.f32 1.0, %v3628
    %v3630 = vmul.f32 %v3610, %v3591
    %v3631 = vadd.f32 %v3590, %v3630
    %v3632 = vtanh.pop %v3631
    %v3633 = vsub.f32 1.0, %v3629
    %v3634 = vmul.f32 %v3633, %v3632
    %v3635 = vmul.f32 %v3629, %v2962
    %v3636 = vadd.f32 %v3634, %v3635
    %v3638 = vsel %vm323, %v3636, 0
    %3640 = vmatpush.msra.mxu0 0.0
    %3641 = vmatpush.msra.mxu0 0.0
    %3642 = vmatpush.msra.mxu0 0.0
    %3643 = vmatpush.msra.mxu0 0.0
    %3644 = vmatpush.msra.mxu0 0.0
    %3645 = vmatpush.msra.mxu0 0.0
    %3646 = vmatpush.msra.mxu0 0.0
    %3647 = vmatpush.msra.mxu0 0.0
    %3648 = vmatpush.msra.mxu0 0.0
    %3649 = vmatpush.msra.mxu0 0.0
    %3650 = vmatpush.msra.mxu0 0.0
    %3651 = vmatpush.msra.mxu0 0.0
    %3652 = vmatpush.msra.mxu0 0.0
    %3653 = vmatpush.msra.mxu0 0.0
    %3654 = vmatpush.msra.mxu0 %v939
    %3655 = vmatpush.msra.mxu0 %v938
    %3656 = vmatmul.f32.gmra.mxu0 %v3638
    %v3657 = vpop.f32.mrf.mxu0
    %v3658 = vadd.f32 %v212, %v3657
    %3659 = vdwg.mxu0
    %v3660 = vsel %vm963, %v3658, -inf
    %3661 = vmax.xlane.f32.xlu0 %v3660
    %v3662 = vpop.xlane.xlu0 %3661
    %v3663 = vsub.f32 %v3658, %v3662
    %v3664 = vmul.f32 %v3663, 1.442695
    %v3665 = vpow.pop %v3664
    %v3666 = vsel %vm963, %v3665, 0.0
    %3667 = vadd.xlane.f32.xlu0 %v3666
    %v3668 = vpop.xlane.xlu0 %3667
    %v3669 = vlog2.pop %v3668
    %v3670 = vmul.f32 %v3669, 0.6931472
    %v3671 = vsub.f32 %v3663, %v3670
    %v3672 = vadd.f32 %v2998, %v3671
    %s3673 = scalar_lea.vmem [#allocation2], 10
    %v3674 = vld [vmem:[%s3673] sm:$0x3]
    %3675 = vmatpush.msra.mxu0 0.0
    %3676 = vmatpush.msra.mxu0 0.0
    %3677 = vmatpush.msra.mxu0 0.0
    %3678 = vmatpush.msra.mxu0 0.0
    %3679 = vmatpush.msra.mxu0 0.0
    %3680 = vmatpush.msra.mxu0 0.0
    %3681 = vmatpush.msra.mxu0 0.0
    %3682 = vmatpush.msra.mxu0 0.0
    %3683 = vmatpush.msra.mxu0 0.0
    %3684 = vmatpush.msra.mxu0 0.0
    %3685 = vmatpush.msra.mxu0 0.0
    %3686 = vmatpush.msra.mxu0 0.0
    %3687 = vmatpush.msra.mxu0 %v235
    %3688 = vmatpush.msra.mxu0 %v231
    %3689 = vmatpush.msra.mxu0 %v227
    %3690 = vmatpush.msra.mxu0 %v223
    %3691 = vmatmul.f32.gmra.mxu0 %v3294
    %v3692 = vpop.f32.mrf.mxu0
    %v3693 = vadd.f32 0.0, %v3692
    %3694 = vdwg.mxu0
    %3695 = vmatpush.msra.mxu0 0.0
    %3696 = vmatpush.msra.mxu0 0.0
    %3697 = vmatpush.msra.mxu0 0.0
    %3698 = vmatpush.msra.mxu0 0.0
    %3699 = vmatpush.msra.mxu0 0.0
    %3700 = vmatpush.msra.mxu0 0.0
    %3701 = vmatpush.msra.mxu0 0.0
    %3702 = vmatpush.msra.mxu0 0.0
    %3703 = vmatpush.msra.mxu0 0.0
    %3704 = vmatpush.msra.mxu0 0.0
    %3705 = vmatpush.msra.mxu0 0.0
    %3706 = vmatpush.msra.mxu0 0.0
    %3707 = vmatpush.msra.mxu0 %v236
    %3708 = vmatpush.msra.mxu0 %v232
    %3709 = vmatpush.msra.mxu0 %v228
    %3710 = vmatpush.msra.mxu0 %v224
    %3711 = vmatmul.f32.gmra.mxu0 %v3294
    %v3712 = vpop.f32.mrf.mxu0
    %v3713 = vadd.f32 0.0, %v3712
    %3714 = vdwg.mxu0
    %3715 = vmatpush.msra.mxu0 0.0
    %3716 = vmatpush.msra.mxu0 0.0
    %3717 = vmatpush.msra.mxu0 0.0
    %3718 = vmatpush.msra.mxu0 0.0
    %3719 = vmatpush.msra.mxu0 0.0
    %3720 = vmatpush.msra.mxu0 0.0
    %3721 = vmatpush.msra.mxu0 0.0
    %3722 = vmatpush.msra.mxu0 0.0
    %3723 = vmatpush.msra.mxu0 0.0
    %3724 = vmatpush.msra.mxu0 0.0
    %3725 = vmatpush.msra.mxu0 0.0
    %3726 = vmatpush.msra.mxu0 0.0
    %3727 = vmatpush.msra.mxu0 %v237
    %3728 = vmatpush.msra.mxu0 %v233
    %3729 = vmatpush.msra.mxu0 %v229
    %3730 = vmatpush.msra.mxu0 %v225
    %3731 = vmatmul.f32.gmra.mxu0 %v3294
    %v3732 = vpop.f32.mrf.mxu0
    %v3733 = vadd.f32 0.0, %v3732
    %3734 = vdwg.mxu0
    %3735 = vmatpush.msra.mxu0 0.0
    %3736 = vmatpush.msra.mxu0 0.0
    %3737 = vmatpush.msra.mxu0 0.0
    %3738 = vmatpush.msra.mxu0 0.0
    %3739 = vmatpush.msra.mxu0 0.0
    %3740 = vmatpush.msra.mxu0 0.0
    %3741 = vmatpush.msra.mxu0 0.0
    %3742 = vmatpush.msra.mxu0 0.0
    %3743 = vmatpush.msra.mxu0 0.0
    %3744 = vmatpush.msra.mxu0 0.0
    %3745 = vmatpush.msra.mxu0 0.0
    %3746 = vmatpush.msra.mxu0 0.0
    %3747 = vmatpush.msra.mxu0 %v238
    %3748 = vmatpush.msra.mxu0 %v234
    %3749 = vmatpush.msra.mxu0 %v230
    %3750 = vmatpush.msra.mxu0 %v226
    %3751 = vmatmul.f32.gmra.mxu0 %v3294
    %v3752 = vpop.f32.mrf.mxu0
    %v3753 = vadd.f32 0.0, %v3752
    %3754 = vdwg.mxu0
    %v3756 = vsel %vm323, %v3674, 0
    %3758 = vmatpush.msra.mxu0 0.0
    %3759 = vmatpush.msra.mxu0 0.0
    %3760 = vmatpush.msra.mxu0 0.0
    %3761 = vmatpush.msra.mxu0 0.0
    %3762 = vmatpush.msra.mxu0 0.0
    %3763 = vmatpush.msra.mxu0 0.0
    %3764 = vmatpush.msra.mxu0 0.0
    %3765 = vmatpush.msra.mxu0 0.0
    %3766 = vmatpush.msra.mxu0 0.0
    %3767 = vmatpush.msra.mxu0 0.0
    %3768 = vmatpush.msra.mxu0 0.0
    %3769 = vmatpush.msra.mxu0 0.0
    %3770 = vmatpush.msra.mxu0 0.0
    %3771 = vmatpush.msra.mxu0 0.0
    %3772 = vmatpush.msra.mxu0 %v219
    %3773 = vmatpush.msra.mxu0 %v215
    %3774 = vmatmul.f32.gmra.mxu0 %v3756
    %v3775 = vpop.f32.mrf.mxu0
    %v3776 = vadd.f32 %v3693, %v3775
    %3777 = vdwg.mxu0
    %3778 = vmatpush.msra.mxu0 0.0
    %3779 = vmatpush.msra.mxu0 0.0
    %3780 = vmatpush.msra.mxu0 0.0
    %3781 = vmatpush.msra.mxu0 0.0
    %3782 = vmatpush.msra.mxu0 0.0
    %3783 = vmatpush.msra.mxu0 0.0
    %3784 = vmatpush.msra.mxu0 0.0
    %3785 = vmatpush.msra.mxu0 0.0
    %3786 = vmatpush.msra.mxu0 0.0
    %3787 = vmatpush.msra.mxu0 0.0
    %3788 = vmatpush.msra.mxu0 0.0
    %3789 = vmatpush.msra.mxu0 0.0
    %3790 = vmatpush.msra.mxu0 0.0
    %3791 = vmatpush.msra.mxu0 0.0
    %3792 = vmatpush.msra.mxu0 %v220
    %3793 = vmatpush.msra.mxu0 %v216
    %3794 = vmatmul.f32.gmra.mxu0 %v3756
    %v3795 = vpop.f32.mrf.mxu0
    %v3796 = vadd.f32 %v3713, %v3795
    %3797 = vdwg.mxu0
    %3798 = vmatpush.msra.mxu0 0.0
    %3799 = vmatpush.msra.mxu0 0.0
    %3800 = vmatpush.msra.mxu0 0.0
    %3801 = vmatpush.msra.mxu0 0.0
    %3802 = vmatpush.msra.mxu0 0.0
    %3803 = vmatpush.msra.mxu0 0.0
    %3804 = vmatpush.msra.mxu0 0.0
    %3805 = vmatpush.msra.mxu0 0.0
    %3806 = vmatpush.msra.mxu0 0.0
    %3807 = vmatpush.msra.mxu0 0.0
    %3808 = vmatpush.msra.mxu0 0.0
    %3809 = vmatpush.msra.mxu0 0.0
    %3810 = vmatpush.msra.mxu0 0.0
    %3811 = vmatpush.msra.mxu0 0.0
    %3812 = vmatpush.msra.mxu0 %v221
    %3813 = vmatpush.msra.mxu0 %v217
    %3814 = vmatmul.f32.gmra.mxu0 %v3756
    %v3815 = vpop.f32.mrf.mxu0
    %v3816 = vadd.f32 %v3733, %v3815
    %3817 = vdwg.mxu0
    %3818 = vmatpush.msra.mxu0 0.0
    %3819 = vmatpush.msra.mxu0 0.0
    %3820 = vmatpush.msra.mxu0 0.0
    %3821 = vmatpush.msra.mxu0 0.0
    %3822 = vmatpush.msra.mxu0 0.0
    %3823 = vmatpush.msra.mxu0 0.0
    %3824 = vmatpush.msra.mxu0 0.0
    %3825 = vmatpush.msra.mxu0 0.0
    %3826 = vmatpush.msra.mxu0 0.0
    %3827 = vmatpush.msra.mxu0 0.0
    %3828 = vmatpush.msra.mxu0 0.0
    %3829 = vmatpush.msra.mxu0 0.0
    %3830 = vmatpush.msra.mxu0 0.0
    %3831 = vmatpush.msra.mxu0 0.0
    %3832 = vmatpush.msra.mxu0 %v222
    %3833 = vmatpush.msra.mxu0 %v218
    %3834 = vmatmul.f32.gmra.mxu0 %v3756
    %v3835 = vpop.f32.mrf.mxu0
    %v3836 = vadd.f32 %v3753, %v3835
    %3837 = vdwg.mxu0
    %v3838 = vadd.f32 %v3776, %v182
    %v3839 = vadd.f32 %v3796, %v183
    %v3840 = vadd.f32 %v3816, %v184
    %v3841 = vadd.f32 %v3836, %v185
    %v3842 = vxor.u32 %v3838, 2147483648
    %v3843 = vmul.f32 %v3842, 1.442695
    %v3844 = vpow.pop %v3843
    %v3845 = vadd.f32 %v3844, 1.0
    %v3846 = vrcp.pop %v3845
    %v3847 = vmul.f32 %v3845, %v3846
    %v3848 = vsub.f32 1.0, %v3847
    %v3849 = vmul.f32 %v3846, %v3848
    %v3850 = vadd.f32 %v3846, %v3849
    %vm3851 = vweird.f32 %v3845
    %vm3852 = vweird.f32 %v3846
    %vm3853 = vmor %vm3851, %vm3852
    %v3854 = vsel %vm3853, %v3846, %v3850
    %v3855 = vand.u32 2147483647, %v3845
    %vm3856 = vcmp.eq.f32.partialorder %v3855, 8.507059e+37
    %v3857 = vand.u32 %v3845, 2147483648
    %v3858 = vor.u32 1.1754944e-38, %v3857
    %v3859 = vsel %vm3856, %v3858, %v3854
    %v3860 = vmul.f32 1.0, %v3859
    %v3861 = vxor.u32 %v3839, 2147483648
    %v3862 = vmul.f32 %v3861, 1.442695
    %v3863 = vpow.pop %v3862
    %v3864 = vadd.f32 %v3863, 1.0
    %v3865 = vrcp.pop %v3864
    %v3866 = vmul.f32 %v3864, %v3865
    %v3867 = vsub.f32 1.0, %v3866
    %v3868 = vmul.f32 %v3865, %v3867
    %v3869 = vadd.f32 %v3865, %v3868
    %vm3870 = vweird.f32 %v3864
    %vm3871 = vweird.f32 %v3865
    %vm3872 = vmor %vm3870, %vm3871
    %v3873 = vsel %vm3872, %v3865, %v3869
    %v3874 = vand.u32 2147483647, %v3864
    %vm3875 = vcmp.eq.f32.partialorder %v3874, 8.507059e+37
    %v3876 = vand.u32 %v3864, 2147483648
    %v3877 = vor.u32 1.1754944e-38, %v3876
    %v3878 = vsel %vm3875, %v3877, %v3873
    %v3879 = vmul.f32 1.0, %v3878
    %v3880 = vmul.f32 %v3860, %v3841
    %v3881 = vadd.f32 %v3840, %v3880
    %v3882 = vtanh.pop %v3881
    %v3883 = vsub.f32 1.0, %v3879
    %v3884 = vmul.f32 %v3883, %v3882
    %v3885 = vmul.f32 %v3879, %v3212
    %v3886 = vadd.f32 %v3884, %v3885
    %3887 = vmatpush.msra.mxu0 0.0
    %3888 = vmatpush.msra.mxu0 0.0
    %3889 = vmatpush.msra.mxu0 0.0
    %3890 = vmatpush.msra.mxu0 0.0
    %3891 = vmatpush.msra.mxu0 0.0
    %3892 = vmatpush.msra.mxu0 0.0
    %3893 = vmatpush.msra.mxu0 0.0
    %3894 = vmatpush.msra.mxu0 0.0
    %3895 = vmatpush.msra.mxu0 0.0
    %3896 = vmatpush.msra.mxu0 0.0
    %3897 = vmatpush.msra.mxu0 0.0
    %3898 = vmatpush.msra.mxu0 0.0
    %3899 = vmatpush.msra.mxu0 %v484
    %3900 = vmatpush.msra.mxu0 %v480
    %3901 = vmatpush.msra.mxu0 %v476
    %3902 = vmatpush.msra.mxu0 %v472
    %3903 = vmatmul.f32.gmra.mxu0 %v3506
    %v3904 = vpop.f32.mrf.mxu0
    %v3905 = vadd.f32 0.0, %v3904
    %3906 = vdwg.mxu0
    %3907 = vmatpush.msra.mxu0 0.0
    %3908 = vmatpush.msra.mxu0 0.0
    %3909 = vmatpush.msra.mxu0 0.0
    %3910 = vmatpush.msra.mxu0 0.0
    %3911 = vmatpush.msra.mxu0 0.0
    %3912 = vmatpush.msra.mxu0 0.0
    %3913 = vmatpush.msra.mxu0 0.0
    %3914 = vmatpush.msra.mxu0 0.0
    %3915 = vmatpush.msra.mxu0 0.0
    %3916 = vmatpush.msra.mxu0 0.0
    %3917 = vmatpush.msra.mxu0 0.0
    %3918 = vmatpush.msra.mxu0 0.0
    %3919 = vmatpush.msra.mxu0 %v485
    %3920 = vmatpush.msra.mxu0 %v481
    %3921 = vmatpush.msra.mxu0 %v477
    %3922 = vmatpush.msra.mxu0 %v473
    %3923 = vmatmul.f32.gmra.mxu0 %v3506
    %v3924 = vpop.f32.mrf.mxu0
    %v3925 = vadd.f32 0.0, %v3924
    %3926 = vdwg.mxu0
    %3927 = vmatpush.msra.mxu0 0.0
    %3928 = vmatpush.msra.mxu0 0.0
    %3929 = vmatpush.msra.mxu0 0.0
    %3930 = vmatpush.msra.mxu0 0.0
    %3931 = vmatpush.msra.mxu0 0.0
    %3932 = vmatpush.msra.mxu0 0.0
    %3933 = vmatpush.msra.mxu0 0.0
    %3934 = vmatpush.msra.mxu0 0.0
    %3935 = vmatpush.msra.mxu0 0.0
    %3936 = vmatpush.msra.mxu0 0.0
    %3937 = vmatpush.msra.mxu0 0.0
    %3938 = vmatpush.msra.mxu0 0.0
    %3939 = vmatpush.msra.mxu0 %v486
    %3940 = vmatpush.msra.mxu0 %v482
    %3941 = vmatpush.msra.mxu0 %v478
    %3942 = vmatpush.msra.mxu0 %v474
    %3943 = vmatmul.f32.gmra.mxu0 %v3506
    %v3944 = vpop.f32.mrf.mxu0
    %v3945 = vadd.f32 0.0, %v3944
    %3946 = vdwg.mxu0
    %3947 = vmatpush.msra.mxu0 0.0
    %3948 = vmatpush.msra.mxu0 0.0
    %3949 = vmatpush.msra.mxu0 0.0
    %3950 = vmatpush.msra.mxu0 0.0
    %3951 = vmatpush.msra.mxu0 0.0
    %3952 = vmatpush.msra.mxu0 0.0
    %3953 = vmatpush.msra.mxu0 0.0
    %3954 = vmatpush.msra.mxu0 0.0
    %3955 = vmatpush.msra.mxu0 0.0
    %3956 = vmatpush.msra.mxu0 0.0
    %3957 = vmatpush.msra.mxu0 0.0
    %3958 = vmatpush.msra.mxu0 0.0
    %3959 = vmatpush.msra.mxu0 %v487
    %3960 = vmatpush.msra.mxu0 %v483
    %3961 = vmatpush.msra.mxu0 %v479
    %3962 = vmatpush.msra.mxu0 %v475
    %3963 = vmatmul.f32.gmra.mxu0 %v3506
    %v3964 = vpop.f32.mrf.mxu0
    %v3965 = vadd.f32 0.0, %v3964
    %3966 = vdwg.mxu0
    %v3968 = vsel %vm239, %v3886, 0
    %3970 = vmatpush.msra.mxu0 0.0
    %3971 = vmatpush.msra.mxu0 0.0
    %3972 = vmatpush.msra.mxu0 0.0
    %3973 = vmatpush.msra.mxu0 0.0
    %3974 = vmatpush.msra.mxu0 0.0
    %3975 = vmatpush.msra.mxu0 0.0
    %3976 = vmatpush.msra.mxu0 0.0
    %3977 = vmatpush.msra.mxu0 0.0
    %3978 = vmatpush.msra.mxu0 0.0
    %3979 = vmatpush.msra.mxu0 0.0
    %3980 = vmatpush.msra.mxu0 0.0
    %3981 = vmatpush.msra.mxu0 0.0
    %3982 = vmatpush.msra.mxu0 %v468
    %3983 = vmatpush.msra.mxu0 %v464
    %3984 = vmatpush.msra.mxu0 %v460
    %3985 = vmatpush.msra.mxu0 %v456
    %3986 = vmatmul.f32.gmra.mxu0 %v3968
    %v3987 = vpop.f32.mrf.mxu0
    %v3988 = vadd.f32 %v3905, %v3987
    %3989 = vdwg.mxu0
    %3990 = vmatpush.msra.mxu0 0.0
    %3991 = vmatpush.msra.mxu0 0.0
    %3992 = vmatpush.msra.mxu0 0.0
    %3993 = vmatpush.msra.mxu0 0.0
    %3994 = vmatpush.msra.mxu0 0.0
    %3995 = vmatpush.msra.mxu0 0.0
    %3996 = vmatpush.msra.mxu0 0.0
    %3997 = vmatpush.msra.mxu0 0.0
    %3998 = vmatpush.msra.mxu0 0.0
    %3999 = vmatpush.msra.mxu0 0.0
    %4000 = vmatpush.msra.mxu0 0.0
    %4001 = vmatpush.msra.mxu0 0.0
    %4002 = vmatpush.msra.mxu0 %v469
    %4003 = vmatpush.msra.mxu0 %v465
    %4004 = vmatpush.msra.mxu0 %v461
    %4005 = vmatpush.msra.mxu0 %v457
    %4006 = vmatmul.f32.gmra.mxu0 %v3968
    %v4007 = vpop.f32.mrf.mxu0
    %v4008 = vadd.f32 %v3925, %v4007
    %4009 = vdwg.mxu0
    %4010 = vmatpush.msra.mxu0 0.0
    %4011 = vmatpush.msra.mxu0 0.0
    %4012 = vmatpush.msra.mxu0 0.0
    %4013 = vmatpush.msra.mxu0 0.0
    %4014 = vmatpush.msra.mxu0 0.0
    %4015 = vmatpush.msra.mxu0 0.0
    %4016 = vmatpush.msra.mxu0 0.0
    %4017 = vmatpush.msra.mxu0 0.0
    %4018 = vmatpush.msra.mxu0 0.0
    %4019 = vmatpush.msra.mxu0 0.0
    %4020 = vmatpush.msra.mxu0 0.0
    %4021 = vmatpush.msra.mxu0 0.0
    %4022 = vmatpush.msra.mxu0 %v470
    %4023 = vmatpush.msra.mxu0 %v466
    %4024 = vmatpush.msra.mxu0 %v462
    %4025 = vmatpush.msra.mxu0 %v458
    %4026 = vmatmul.f32.gmra.mxu0 %v3968
    %v4027 = vpop.f32.mrf.mxu0
    %v4028 = vadd.f32 %v3945, %v4027
    %4029 = vdwg.mxu0
    %4030 = vmatpush.msra.mxu0 0.0
    %4031 = vmatpush.msra.mxu0 0.0
    %4032 = vmatpush.msra.mxu0 0.0
    %4033 = vmatpush.msra.mxu0 0.0
    %4034 = vmatpush.msra.mxu0 0.0
    %4035 = vmatpush.msra.mxu0 0.0
    %4036 = vmatpush.msra.mxu0 0.0
    %4037 = vmatpush.msra.mxu0 0.0
    %4038 = vmatpush.msra.mxu0 0.0
    %4039 = vmatpush.msra.mxu0 0.0
    %4040 = vmatpush.msra.mxu0 0.0
    %4041 = vmatpush.msra.mxu0 0.0
    %4042 = vmatpush.msra.mxu0 %v471
    %4043 = vmatpush.msra.mxu0 %v467
    %4044 = vmatpush.msra.mxu0 %v463
    %4045 = vmatpush.msra.mxu0 %v459
    %4046 = vmatmul.f32.gmra.mxu0 %v3968
    %v4047 = vpop.f32.mrf.mxu0
    %v4048 = vadd.f32 %v3965, %v4047
    %4049 = vdwg.mxu0
    %v4050 = vadd.f32 %v3988, %v192
    %v4051 = vadd.f32 %v4008, %v193
    %v4052 = vadd.f32 %v4028, %v194
    %v4053 = vadd.f32 %v4048, %v195
    %v4054 = vxor.u32 %v4050, 2147483648
    %v4055 = vmul.f32 %v4054, 1.442695
    %v4056 = vpow.pop %v4055
    %v4057 = vadd.f32 %v4056, 1.0
    %v4058 = vrcp.pop %v4057
    %v4059 = vmul.f32 %v4057, %v4058
    %v4060 = vsub.f32 1.0, %v4059
    %v4061 = vmul.f32 %v4058, %v4060
    %v4062 = vadd.f32 %v4058, %v4061
    %vm4063 = vweird.f32 %v4057
    %vm4064 = vweird.f32 %v4058
    %vm4065 = vmor %vm4063, %vm4064
    %v4066 = vsel %vm4065, %v4058, %v4062
    %v4067 = vand.u32 2147483647, %v4057
    %vm4068 = vcmp.eq.f32.partialorder %v4067, 8.507059e+37
    %v4069 = vand.u32 %v4057, 2147483648
    %v4070 = vor.u32 1.1754944e-38, %v4069
    %v4071 = vsel %vm4068, %v4070, %v4066
    %v4072 = vmul.f32 1.0, %v4071
    %v4073 = vxor.u32 %v4051, 2147483648
    %v4074 = vmul.f32 %v4073, 1.442695
    %v4075 = vpow.pop %v4074
    %v4076 = vadd.f32 %v4075, 1.0
    %v4077 = vrcp.pop %v4076
    %v4078 = vmul.f32 %v4076, %v4077
    %v4079 = vsub.f32 1.0, %v4078
    %v4080 = vmul.f32 %v4077, %v4079
    %v4081 = vadd.f32 %v4077, %v4080
    %vm4082 = vweird.f32 %v4076
    %vm4083 = vweird.f32 %v4077
    %vm4084 = vmor %vm4082, %vm4083
    %v4085 = vsel %vm4084, %v4077, %v4081
    %v4086 = vand.u32 2147483647, %v4076
    %vm4087 = vcmp.eq.f32.partialorder %v4086, 8.507059e+37
    %v4088 = vand.u32 %v4076, 2147483648
    %v4089 = vor.u32 1.1754944e-38, %v4088
    %v4090 = vsel %vm4087, %v4089, %v4085
    %v4091 = vmul.f32 1.0, %v4090
    %v4092 = vmul.f32 %v4072, %v4053
    %v4093 = vadd.f32 %v4052, %v4092
    %v4094 = vtanh.pop %v4093
    %v4095 = vsub.f32 1.0, %v4091
    %v4096 = vmul.f32 %v4095, %v4094
    %v4097 = vmul.f32 %v4091, %v3424
    %v4098 = vadd.f32 %v4096, %v4097
    %4099 = vmatpush.msra.mxu0 0.0
    %4100 = vmatpush.msra.mxu0 0.0
    %4101 = vmatpush.msra.mxu0 0.0
    %4102 = vmatpush.msra.mxu0 0.0
    %4103 = vmatpush.msra.mxu0 0.0
    %4104 = vmatpush.msra.mxu0 0.0
    %4105 = vmatpush.msra.mxu0 0.0
    %4106 = vmatpush.msra.mxu0 0.0
    %4107 = vmatpush.msra.mxu0 0.0
    %4108 = vmatpush.msra.mxu0 0.0
    %4109 = vmatpush.msra.mxu0 0.0
    %4110 = vmatpush.msra.mxu0 0.0
    %4111 = vmatpush.msra.mxu0 0.0
    %4112 = vmatpush.msra.mxu0 0.0
    %4113 = vmatpush.msra.mxu0 %v720
    %4114 = vmatpush.msra.mxu0 %v716
    %4115 = vmatmul.f32.gmra.mxu0 %v3638
    %v4116 = vpop.f32.mrf.mxu0
    %v4117 = vadd.f32 0.0, %v4116
    %4118 = vdwg.mxu0
    %4119 = vmatpush.msra.mxu0 0.0
    %4120 = vmatpush.msra.mxu0 0.0
    %4121 = vmatpush.msra.mxu0 0.0
    %4122 = vmatpush.msra.mxu0 0.0
    %4123 = vmatpush.msra.mxu0 0.0
    %4124 = vmatpush.msra.mxu0 0.0
    %4125 = vmatpush.msra.mxu0 0.0
    %4126 = vmatpush.msra.mxu0 0.0
    %4127 = vmatpush.msra.mxu0 0.0
    %4128 = vmatpush.msra.mxu0 0.0
    %4129 = vmatpush.msra.mxu0 0.0
    %4130 = vmatpush.msra.mxu0 0.0
    %4131 = vmatpush.msra.mxu0 0.0
    %4132 = vmatpush.msra.mxu0 0.0
    %4133 = vmatpush.msra.mxu0 %v721
    %4134 = vmatpush.msra.mxu0 %v717
    %4135 = vmatmul.f32.gmra.mxu0 %v3638
    %v4136 = vpop.f32.mrf.mxu0
    %v4137 = vadd.f32 0.0, %v4136
    %4138 = vdwg.mxu0
    %4139 = vmatpush.msra.mxu0 0.0
    %4140 = vmatpush.msra.mxu0 0.0
    %4141 = vmatpush.msra.mxu0 0.0
    %4142 = vmatpush.msra.mxu0 0.0
    %4143 = vmatpush.msra.mxu0 0.0
    %4144 = vmatpush.msra.mxu0 0.0
    %4145 = vmatpush.msra.mxu0 0.0
    %4146 = vmatpush.msra.mxu0 0.0
    %4147 = vmatpush.msra.mxu0 0.0
    %4148 = vmatpush.msra.mxu0 0.0
    %4149 = vmatpush.msra.mxu0 0.0
    %4150 = vmatpush.msra.mxu0 0.0
    %4151 = vmatpush.msra.mxu0 0.0
    %4152 = vmatpush.msra.mxu0 0.0
    %4153 = vmatpush.msra.mxu0 %v722
    %4154 = vmatpush.msra.mxu0 %v718
    %4155 = vmatmul.f32.gmra.mxu0 %v3638
    %v4156 = vpop.f32.mrf.mxu0
    %v4157 = vadd.f32 0.0, %v4156
    %4158 = vdwg.mxu0
    %4159 = vmatpush.msra.mxu0 0.0
    %4160 = vmatpush.msra.mxu0 0.0
    %4161 = vmatpush.msra.mxu0 0.0
    %4162 = vmatpush.msra.mxu0 0.0
    %4163 = vmatpush.msra.mxu0 0.0
    %4164 = vmatpush.msra.mxu0 0.0
    %4165 = vmatpush.msra.mxu0 0.0
    %4166 = vmatpush.msra.mxu0 0.0
    %4167 = vmatpush.msra.mxu0 0.0
    %4168 = vmatpush.msra.mxu0 0.0
    %4169 = vmatpush.msra.mxu0 0.0
    %4170 = vmatpush.msra.mxu0 0.0
    %4171 = vmatpush.msra.mxu0 0.0
    %4172 = vmatpush.msra.mxu0 0.0
    %4173 = vmatpush.msra.mxu0 %v723
    %4174 = vmatpush.msra.mxu0 %v719
    %4175 = vmatmul.f32.gmra.mxu0 %v3638
    %v4176 = vpop.f32.mrf.mxu0
    %v4177 = vadd.f32 0.0, %v4176
    %4178 = vdwg.mxu0
    %v4180 = vsel %vm239, %v4098, 0
    %4182 = vmatpush.msra.mxu0 0.0
    %4183 = vmatpush.msra.mxu0 0.0
    %4184 = vmatpush.msra.mxu0 0.0
    %4185 = vmatpush.msra.mxu0 0.0
    %4186 = vmatpush.msra.mxu0 0.0
    %4187 = vmatpush.msra.mxu0 0.0
    %4188 = vmatpush.msra.mxu0 0.0
    %4189 = vmatpush.msra.mxu0 0.0
    %4190 = vmatpush.msra.mxu0 0.0
    %4191 = vmatpush.msra.mxu0 0.0
    %4192 = vmatpush.msra.mxu0 0.0
    %4193 = vmatpush.msra.mxu0 0.0
    %4194 = vmatpush.msra.mxu0 %v712
    %4195 = vmatpush.msra.mxu0 %v708
    %4196 = vmatpush.msra.mxu0 %v704
    %4197 = vmatpush.msra.mxu0 %v700
    %4198 = vmatmul.f32.gmra.mxu0 %v4180
    %v4199 = vpop.f32.mrf.mxu0
    %v4200 = vadd.f32 %v4117, %v4199
    %4201 = vdwg.mxu0
    %4202 = vmatpush.msra.mxu0 0.0
    %4203 = vmatpush.msra.mxu0 0.0
    %4204 = vmatpush.msra.mxu0 0.0
    %4205 = vmatpush.msra.mxu0 0.0
    %4206 = vmatpush.msra.mxu0 0.0
    %4207 = vmatpush.msra.mxu0 0.0
    %4208 = vmatpush.msra.mxu0 0.0
    %4209 = vmatpush.msra.mxu0 0.0
    %4210 = vmatpush.msra.mxu0 0.0
    %4211 = vmatpush.msra.mxu0 0.0
    %4212 = vmatpush.msra.mxu0 0.0
    %4213 = vmatpush.msra.mxu0 0.0
    %4214 = vmatpush.msra.mxu0 %v713
    %4215 = vmatpush.msra.mxu0 %v709
    %4216 = vmatpush.msra.mxu0 %v705
    %4217 = vmatpush.msra.mxu0 %v701
    %4218 = vmatmul.f32.gmra.mxu0 %v4180
    %v4219 = vpop.f32.mrf.mxu0
    %v4220 = vadd.f32 %v4137, %v4219
    %4221 = vdwg.mxu0
    %4222 = vmatpush.msra.mxu0 0.0
    %4223 = vmatpush.msra.mxu0 0.0
    %4224 = vmatpush.msra.mxu0 0.0
    %4225 = vmatpush.msra.mxu0 0.0
    %4226 = vmatpush.msra.mxu0 0.0
    %4227 = vmatpush.msra.mxu0 0.0
    %4228 = vmatpush.msra.mxu0 0.0
    %4229 = vmatpush.msra.mxu0 0.0
    %4230 = vmatpush.msra.mxu0 0.0
    %4231 = vmatpush.msra.mxu0 0.0
    %4232 = vmatpush.msra.mxu0 0.0
    %4233 = vmatpush.msra.mxu0 0.0
    %4234 = vmatpush.msra.mxu0 %v714
    %4235 = vmatpush.msra.mxu0 %v710
    %4236 = vmatpush.msra.mxu0 %v706
    %4237 = vmatpush.msra.mxu0 %v702
    %4238 = vmatmul.f32.gmra.mxu0 %v4180
    %v4239 = vpop.f32.mrf.mxu0
    %v4240 = vadd.f32 %v4157, %v4239
    %4241 = vdwg.mxu0
    %4242 = vmatpush.msra.mxu0 0.0
    %4243 = vmatpush.msra.mxu0 0.0
    %4244 = vmatpush.msra.mxu0 0.0
    %4245 = vmatpush.msra.mxu0 0.0
    %4246 = vmatpush.msra.mxu0 0.0
    %4247 = vmatpush.msra.mxu0 0.0
    %4248 = vmatpush.msra.mxu0 0.0
    %4249 = vmatpush.msra.mxu0 0.0
    %4250 = vmatpush.msra.mxu0 0.0
    %4251 = vmatpush.msra.mxu0 0.0
    %4252 = vmatpush.msra.mxu0 0.0
    %4253 = vmatpush.msra.mxu0 0.0
    %4254 = vmatpush.msra.mxu0 %v715
    %4255 = vmatpush.msra.mxu0 %v711
    %4256 = vmatpush.msra.mxu0 %v707
    %4257 = vmatpush.msra.mxu0 %v703
    %4258 = vmatmul.f32.gmra.mxu0 %v4180
    %v4259 = vpop.f32.mrf.mxu0
    %v4260 = vadd.f32 %v4177, %v4259
    %4261 = vdwg.mxu0
    %v4262 = vadd.f32 %v4200, %v202
    %v4263 = vadd.f32 %v4220, %v203
    %v4264 = vadd.f32 %v4240, %v204
    %v4265 = vadd.f32 %v4260, %v205
    %v4266 = vxor.u32 %v4262, 2147483648
    %v4267 = vmul.f32 %v4266, 1.442695
    %v4268 = vpow.pop %v4267
    %v4269 = vadd.f32 %v4268, 1.0
    %v4270 = vrcp.pop %v4269
    %v4271 = vmul.f32 %v4269, %v4270
    %v4272 = vsub.f32 1.0, %v4271
    %v4273 = vmul.f32 %v4270, %v4272
    %v4274 = vadd.f32 %v4270, %v4273
    %vm4275 = vweird.f32 %v4269
    %vm4276 = vweird.f32 %v4270
    %vm4277 = vmor %vm4275, %vm4276
    %v4278 = vsel %vm4277, %v4270, %v4274
    %v4279 = vand.u32 2147483647, %v4269
    %vm4280 = vcmp.eq.f32.partialorder %v4279, 8.507059e+37
    %v4281 = vand.u32 %v4269, 2147483648
    %v4282 = vor.u32 1.1754944e-38, %v4281
    %v4283 = vsel %vm4280, %v4282, %v4278
    %v4284 = vmul.f32 1.0, %v4283
    %v4285 = vxor.u32 %v4263, 2147483648
    %v4286 = vmul.f32 %v4285, 1.442695
    %v4287 = vpow.pop %v4286
    %v4288 = vadd.f32 %v4287, 1.0
    %v4289 = vrcp.pop %v4288
    %v4290 = vmul.f32 %v4288, %v4289
    %v4291 = vsub.f32 1.0, %v4290
    %v4292 = vmul.f32 %v4289, %v4291
    %v4293 = vadd.f32 %v4289, %v4292
    %vm4294 = vweird.f32 %v4288
    %vm4295 = vweird.f32 %v4289
    %vm4296 = vmor %vm4294, %vm4295
    %v4297 = vsel %vm4296, %v4289, %v4293
    %v4298 = vand.u32 2147483647, %v4288
    %vm4299 = vcmp.eq.f32.partialorder %v4298, 8.507059e+37
    %v4300 = vand.u32 %v4288, 2147483648
    %v4301 = vor.u32 1.1754944e-38, %v4300
    %v4302 = vsel %vm4299, %v4301, %v4297
    %v4303 = vmul.f32 1.0, %v4302
    %v4304 = vmul.f32 %v4284, %v4265
    %v4305 = vadd.f32 %v4264, %v4304
    %v4306 = vtanh.pop %v4305
    %v4307 = vsub.f32 1.0, %v4303
    %v4308 = vmul.f32 %v4307, %v4306
    %v4309 = vmul.f32 %v4303, %v3636
    %v4310 = vadd.f32 %v4308, %v4309
    %v4312 = vsel %vm323, %v4310, 0
    %4314 = vmatpush.msra.mxu0 0.0
    %4315 = vmatpush.msra.mxu0 0.0
    %4316 = vmatpush.msra.mxu0 0.0
    %4317 = vmatpush.msra.mxu0 0.0
    %4318 = vmatpush.msra.mxu0 0.0
    %4319 = vmatpush.msra.mxu0 0.0
    %4320 = vmatpush.msra.mxu0 0.0
    %4321 = vmatpush.msra.mxu0 0.0
    %4322 = vmatpush.msra.mxu0 0.0
    %4323 = vmatpush.msra.mxu0 0.0
    %4324 = vmatpush.msra.mxu0 0.0
    %4325 = vmatpush.msra.mxu0 0.0
    %4326 = vmatpush.msra.mxu0 0.0
    %4327 = vmatpush.msra.mxu0 0.0
    %4328 = vmatpush.msra.mxu0 %v939
    %4329 = vmatpush.msra.mxu0 %v938
    %4330 = vmatmul.f32.gmra.mxu0 %v4312
    %v4331 = vpop.f32.mrf.mxu0
    %v4332 = vadd.f32 %v212, %v4331
    %4333 = vdwg.mxu0
    %v4334 = vsel %vm963, %v4332, -inf
    %4335 = vmax.xlane.f32.xlu0 %v4334
    %v4336 = vpop.xlane.xlu0 %4335
    %v4337 = vsub.f32 %v4332, %v4336
    %v4338 = vmul.f32 %v4337, 1.442695
    %v4339 = vpow.pop %v4338
    %v4340 = vsel %vm963, %v4339, 0.0
    %4341 = vadd.xlane.f32.xlu0 %v4340
    %v4342 = vpop.xlane.xlu0 %4341
    %v4343 = vlog2.pop %v4342
    %v4344 = vmul.f32 %v4343, 0.6931472
    %v4345 = vsub.f32 %v4337, %v4344
    %v4346 = vadd.f32 %v3672, %v4345
    %s4347 = scalar_lea.vmem [#allocation2], 12
    %v4348 = vld [vmem:[%s4347] sm:$0x3]
    %4349 = vmatpush.msra.mxu0 0.0
    %4350 = vmatpush.msra.mxu0 0.0
    %4351 = vmatpush.msra.mxu0 0.0
    %4352 = vmatpush.msra.mxu0 0.0
    %4353 = vmatpush.msra.mxu0 0.0
    %4354 = vmatpush.msra.mxu0 0.0
    %4355 = vmatpush.msra.mxu0 0.0
    %4356 = vmatpush.msra.mxu0 0.0
    %4357 = vmatpush.msra.mxu0 0.0
    %4358 = vmatpush.msra.mxu0 0.0
    %4359 = vmatpush.msra.mxu0 0.0
    %4360 = vmatpush.msra.mxu0 0.0
    %4361 = vmatpush.msra.mxu0 %v235
    %4362 = vmatpush.msra.mxu0 %v231
    %4363 = vmatpush.msra.mxu0 %v227
    %4364 = vmatpush.msra.mxu0 %v223
    %4365 = vmatmul.f32.gmra.mxu0 %v3968
    %v4366 = vpop.f32.mrf.mxu0
    %v4367 = vadd.f32 0.0, %v4366
    %4368 = vdwg.mxu0
    %4369 = vmatpush.msra.mxu0 0.0
    %4370 = vmatpush.msra.mxu0 0.0
    %4371 = vmatpush.msra.mxu0 0.0
    %4372 = vmatpush.msra.mxu0 0.0
    %4373 = vmatpush.msra.mxu0 0.0
    %4374 = vmatpush.msra.mxu0 0.0
    %4375 = vmatpush.msra.mxu0 0.0
    %4376 = vmatpush.msra.mxu0 0.0
    %4377 = vmatpush.msra.mxu0 0.0
    %4378 = vmatpush.msra.mxu0 0.0
    %4379 = vmatpush.msra.mxu0 0.0
    %4380 = vmatpush.msra.mxu0 0.0
    %4381 = vmatpush.msra.mxu0 %v236
    %4382 = vmatpush.msra.mxu0 %v232
    %4383 = vmatpush.msra.mxu0 %v228
    %4384 = vmatpush.msra.mxu0 %v224
    %4385 = vmatmul.f32.gmra.mxu0 %v3968
    %v4386 = vpop.f32.mrf.mxu0
    %v4387 = vadd.f32 0.0, %v4386
    %4388 = vdwg.mxu0
    %4389 = vmatpush.msra.mxu0 0.0
    %4390 = vmatpush.msra.mxu0 0.0
    %4391 = vmatpush.msra.mxu0 0.0
    %4392 = vmatpush.msra.mxu0 0.0
    %4393 = vmatpush.msra.mxu0 0.0
    %4394 = vmatpush.msra.mxu0 0.0
    %4395 = vmatpush.msra.mxu0 0.0
    %4396 = vmatpush.msra.mxu0 0.0
    %4397 = vmatpush.msra.mxu0 0.0
    %4398 = vmatpush.msra.mxu0 0.0
    %4399 = vmatpush.msra.mxu0 0.0
    %4400 = vmatpush.msra.mxu0 0.0
    %4401 = vmatpush.msra.mxu0 %v237
    %4402 = vmatpush.msra.mxu0 %v233
    %4403 = vmatpush.msra.mxu0 %v229
    %4404 = vmatpush.msra.mxu0 %v225
    %4405 = vmatmul.f32.gmra.mxu0 %v3968
    %v4406 = vpop.f32.mrf.mxu0
    %v4407 = vadd.f32 0.0, %v4406
    %4408 = vdwg.mxu0
    %4409 = vmatpush.msra.mxu0 0.0
    %4410 = vmatpush.msra.mxu0 0.0
    %4411 = vmatpush.msra.mxu0 0.0
    %4412 = vmatpush.msra.mxu0 0.0
    %4413 = vmatpush.msra.mxu0 0.0
    %4414 = vmatpush.msra.mxu0 0.0
    %4415 = vmatpush.msra.mxu0 0.0
    %4416 = vmatpush.msra.mxu0 0.0
    %4417 = vmatpush.msra.mxu0 0.0
    %4418 = vmatpush.msra.mxu0 0.0
    %4419 = vmatpush.msra.mxu0 0.0
    %4420 = vmatpush.msra.mxu0 0.0
    %4421 = vmatpush.msra.mxu0 %v238
    %4422 = vmatpush.msra.mxu0 %v234
    %4423 = vmatpush.msra.mxu0 %v230
    %4424 = vmatpush.msra.mxu0 %v226
    %4425 = vmatmul.f32.gmra.mxu0 %v3968
    %v4426 = vpop.f32.mrf.mxu0
    %v4427 = vadd.f32 0.0, %v4426
    %4428 = vdwg.mxu0
    %v4430 = vsel %vm323, %v4348, 0
    %4432 = vmatpush.msra.mxu0 0.0
    %4433 = vmatpush.msra.mxu0 0.0
    %4434 = vmatpush.msra.mxu0 0.0
    %4435 = vmatpush.msra.mxu0 0.0
    %4436 = vmatpush.msra.mxu0 0.0
    %4437 = vmatpush.msra.mxu0 0.0
    %4438 = vmatpush.msra.mxu0 0.0
    %4439 = vmatpush.msra.mxu0 0.0
    %4440 = vmatpush.msra.mxu0 0.0
    %4441 = vmatpush.msra.mxu0 0.0
    %4442 = vmatpush.msra.mxu0 0.0
    %4443 = vmatpush.msra.mxu0 0.0
    %4444 = vmatpush.msra.mxu0 0.0
    %4445 = vmatpush.msra.mxu0 0.0
    %4446 = vmatpush.msra.mxu0 %v219
    %4447 = vmatpush.msra.mxu0 %v215
    %4448 = vmatmul.f32.gmra.mxu0 %v4430
    %v4449 = vpop.f32.mrf.mxu0
    %v4450 = vadd.f32 %v4367, %v4449
    %4451 = vdwg.mxu0
    %4452 = vmatpush.msra.mxu0 0.0
    %4453 = vmatpush.msra.mxu0 0.0
    %4454 = vmatpush.msra.mxu0 0.0
    %4455 = vmatpush.msra.mxu0 0.0
    %4456 = vmatpush.msra.mxu0 0.0
    %4457 = vmatpush.msra.mxu0 0.0
    %4458 = vmatpush.msra.mxu0 0.0
    %4459 = vmatpush.msra.mxu0 0.0
    %4460 = vmatpush.msra.mxu0 0.0
    %4461 = vmatpush.msra.mxu0 0.0
    %4462 = vmatpush.msra.mxu0 0.0
    %4463 = vmatpush.msra.mxu0 0.0
    %4464 = vmatpush.msra.mxu0 0.0
    %4465 = vmatpush.msra.mxu0 0.0
    %4466 = vmatpush.msra.mxu0 %v220
    %4467 = vmatpush.msra.mxu0 %v216
    %4468 = vmatmul.f32.gmra.mxu0 %v4430
    %v4469 = vpop.f32.mrf.mxu0
    %v4470 = vadd.f32 %v4387, %v4469
    %4471 = vdwg.mxu0
    %4472 = vmatpush.msra.mxu0 0.0
    %4473 = vmatpush.msra.mxu0 0.0
    %4474 = vmatpush.msra.mxu0 0.0
    %4475 = vmatpush.msra.mxu0 0.0
    %4476 = vmatpush.msra.mxu0 0.0
    %4477 = vmatpush.msra.mxu0 0.0
    %4478 = vmatpush.msra.mxu0 0.0
    %4479 = vmatpush.msra.mxu0 0.0
    %4480 = vmatpush.msra.mxu0 0.0
    %4481 = vmatpush.msra.mxu0 0.0
    %4482 = vmatpush.msra.mxu0 0.0
    %4483 = vmatpush.msra.mxu0 0.0
    %4484 = vmatpush.msra.mxu0 0.0
    %4485 = vmatpush.msra.mxu0 0.0
    %4486 = vmatpush.msra.mxu0 %v221
    %4487 = vmatpush.msra.mxu0 %v217
    %4488 = vmatmul.f32.gmra.mxu0 %v4430
    %v4489 = vpop.f32.mrf.mxu0
    %v4490 = vadd.f32 %v4407, %v4489
    %4491 = vdwg.mxu0
    %4492 = vmatpush.msra.mxu0 0.0
    %4493 = vmatpush.msra.mxu0 0.0
    %4494 = vmatpush.msra.mxu0 0.0
    %4495 = vmatpush.msra.mxu0 0.0
    %4496 = vmatpush.msra.mxu0 0.0
    %4497 = vmatpush.msra.mxu0 0.0
    %4498 = vmatpush.msra.mxu0 0.0
    %4499 = vmatpush.msra.mxu0 0.0
    %4500 = vmatpush.msra.mxu0 0.0
    %4501 = vmatpush.msra.mxu0 0.0
    %4502 = vmatpush.msra.mxu0 0.0
    %4503 = vmatpush.msra.mxu0 0.0
    %4504 = vmatpush.msra.mxu0 0.0
    %4505 = vmatpush.msra.mxu0 0.0
    %4506 = vmatpush.msra.mxu0 %v222
    %4507 = vmatpush.msra.mxu0 %v218
    %4508 = vmatmul.f32.gmra.mxu0 %v4430
    %v4509 = vpop.f32.mrf.mxu0
    %v4510 = vadd.f32 %v4427, %v4509
    %4511 = vdwg.mxu0
    %v4512 = vadd.f32 %v4450, %v182
    %v4513 = vadd.f32 %v4470, %v183
    %v4514 = vadd.f32 %v4490, %v184
    %v4515 = vadd.f32 %v4510, %v185
    %v4516 = vxor.u32 %v4512, 2147483648
    %v4517 = vmul.f32 %v4516, 1.442695
    %v4518 = vpow.pop %v4517
    %v4519 = vadd.f32 %v4518, 1.0
    %v4520 = vrcp.pop %v4519
    %v4521 = vmul.f32 %v4519, %v4520
    %v4522 = vsub.f32 1.0, %v4521
    %v4523 = vmul.f32 %v4520, %v4522
    %v4524 = vadd.f32 %v4520, %v4523
    %vm4525 = vweird.f32 %v4519
    %vm4526 = vweird.f32 %v4520
    %vm4527 = vmor %vm4525, %vm4526
    %v4528 = vsel %vm4527, %v4520, %v4524
    %v4529 = vand.u32 2147483647, %v4519
    %vm4530 = vcmp.eq.f32.partialorder %v4529, 8.507059e+37
    %v4531 = vand.u32 %v4519, 2147483648
    %v4532 = vor.u32 1.1754944e-38, %v4531
    %v4533 = vsel %vm4530, %v4532, %v4528
    %v4534 = vmul.f32 1.0, %v4533
    %v4535 = vxor.u32 %v4513, 2147483648
    %v4536 = vmul.f32 %v4535, 1.442695
    %v4537 = vpow.pop %v4536
    %v4538 = vadd.f32 %v4537, 1.0
    %v4539 = vrcp.pop %v4538
    %v4540 = vmul.f32 %v4538, %v4539
    %v4541 = vsub.f32 1.0, %v4540
    %v4542 = vmul.f32 %v4539, %v4541
    %v4543 = vadd.f32 %v4539, %v4542
    %vm4544 = vweird.f32 %v4538
    %vm4545 = vweird.f32 %v4539
    %vm4546 = vmor %vm4544, %vm4545
    %v4547 = vsel %vm4546, %v4539, %v4543
    %v4548 = vand.u32 2147483647, %v4538
    %vm4549 = vcmp.eq.f32.partialorder %v4548, 8.507059e+37
    %v4550 = vand.u32 %v4538, 2147483648
    %v4551 = vor.u32 1.1754944e-38, %v4550
    %v4552 = vsel %vm4549, %v4551, %v4547
    %v4553 = vmul.f32 1.0, %v4552
    %v4554 = vmul.f32 %v4534, %v4515
    %v4555 = vadd.f32 %v4514, %v4554
    %v4556 = vtanh.pop %v4555
    %v4557 = vsub.f32 1.0, %v4553
    %v4558 = vmul.f32 %v4557, %v4556
    %v4559 = vmul.f32 %v4553, %v3886
    %v4560 = vadd.f32 %v4558, %v4559
    %4561 = vmatpush.msra.mxu0 0.0
    %4562 = vmatpush.msra.mxu0 0.0
    %4563 = vmatpush.msra.mxu0 0.0
    %4564 = vmatpush.msra.mxu0 0.0
    %4565 = vmatpush.msra.mxu0 0.0
    %4566 = vmatpush.msra.mxu0 0.0
    %4567 = vmatpush.msra.mxu0 0.0
    %4568 = vmatpush.msra.mxu0 0.0
    %4569 = vmatpush.msra.mxu0 0.0
    %4570 = vmatpush.msra.mxu0 0.0
    %4571 = vmatpush.msra.mxu0 0.0
    %4572 = vmatpush.msra.mxu0 0.0
    %4573 = vmatpush.msra.mxu0 %v484
    %4574 = vmatpush.msra.mxu0 %v480
    %4575 = vmatpush.msra.mxu0 %v476
    %4576 = vmatpush.msra.mxu0 %v472
    %4577 = vmatmul.f32.gmra.mxu0 %v4180
    %v4578 = vpop.f32.mrf.mxu0
    %v4579 = vadd.f32 0.0, %v4578
    %4580 = vdwg.mxu0
    %4581 = vmatpush.msra.mxu0 0.0
    %4582 = vmatpush.msra.mxu0 0.0
    %4583 = vmatpush.msra.mxu0 0.0
    %4584 = vmatpush.msra.mxu0 0.0
    %4585 = vmatpush.msra.mxu0 0.0
    %4586 = vmatpush.msra.mxu0 0.0
    %4587 = vmatpush.msra.mxu0 0.0
    %4588 = vmatpush.msra.mxu0 0.0
    %4589 = vmatpush.msra.mxu0 0.0
    %4590 = vmatpush.msra.mxu0 0.0
    %4591 = vmatpush.msra.mxu0 0.0
    %4592 = vmatpush.msra.mxu0 0.0
    %4593 = vmatpush.msra.mxu0 %v485
    %4594 = vmatpush.msra.mxu0 %v481
    %4595 = vmatpush.msra.mxu0 %v477
    %4596 = vmatpush.msra.mxu0 %v473
    %4597 = vmatmul.f32.gmra.mxu0 %v4180
    %v4598 = vpop.f32.mrf.mxu0
    %v4599 = vadd.f32 0.0, %v4598
    %4600 = vdwg.mxu0
    %4601 = vmatpush.msra.mxu0 0.0
    %4602 = vmatpush.msra.mxu0 0.0
    %4603 = vmatpush.msra.mxu0 0.0
    %4604 = vmatpush.msra.mxu0 0.0
    %4605 = vmatpush.msra.mxu0 0.0
    %4606 = vmatpush.msra.mxu0 0.0
    %4607 = vmatpush.msra.mxu0 0.0
    %4608 = vmatpush.msra.mxu0 0.0
    %4609 = vmatpush.msra.mxu0 0.0
    %4610 = vmatpush.msra.mxu0 0.0
    %4611 = vmatpush.msra.mxu0 0.0
    %4612 = vmatpush.msra.mxu0 0.0
    %4613 = vmatpush.msra.mxu0 %v486
    %4614 = vmatpush.msra.mxu0 %v482
    %4615 = vmatpush.msra.mxu0 %v478
    %4616 = vmatpush.msra.mxu0 %v474
    %4617 = vmatmul.f32.gmra.mxu0 %v4180
    %v4618 = vpop.f32.mrf.mxu0
    %v4619 = vadd.f32 0.0, %v4618
    %4620 = vdwg.mxu0
    %4621 = vmatpush.msra.mxu0 0.0
    %4622 = vmatpush.msra.mxu0 0.0
    %4623 = vmatpush.msra.mxu0 0.0
    %4624 = vmatpush.msra.mxu0 0.0
    %4625 = vmatpush.msra.mxu0 0.0
    %4626 = vmatpush.msra.mxu0 0.0
    %4627 = vmatpush.msra.mxu0 0.0
    %4628 = vmatpush.msra.mxu0 0.0
    %4629 = vmatpush.msra.mxu0 0.0
    %4630 = vmatpush.msra.mxu0 0.0
    %4631 = vmatpush.msra.mxu0 0.0
    %4632 = vmatpush.msra.mxu0 0.0
    %4633 = vmatpush.msra.mxu0 %v487
    %4634 = vmatpush.msra.mxu0 %v483
    %4635 = vmatpush.msra.mxu0 %v479
    %4636 = vmatpush.msra.mxu0 %v475
    %4637 = vmatmul.f32.gmra.mxu0 %v4180
    %v4638 = vpop.f32.mrf.mxu0
    %v4639 = vadd.f32 0.0, %v4638
    %4640 = vdwg.mxu0
    %v4642 = vsel %vm239, %v4560, 0
    %4644 = vmatpush.msra.mxu0 0.0
    %4645 = vmatpush.msra.mxu0 0.0
    %4646 = vmatpush.msra.mxu0 0.0
    %4647 = vmatpush.msra.mxu0 0.0
    %4648 = vmatpush.msra.mxu0 0.0
    %4649 = vmatpush.msra.mxu0 0.0
    %4650 = vmatpush.msra.mxu0 0.0
    %4651 = vmatpush.msra.mxu0 0.0
    %4652 = vmatpush.msra.mxu0 0.0
    %4653 = vmatpush.msra.mxu0 0.0
    %4654 = vmatpush.msra.mxu0 0.0
    %4655 = vmatpush.msra.mxu0 0.0
    %4656 = vmatpush.msra.mxu0 %v468
    %4657 = vmatpush.msra.mxu0 %v464
    %4658 = vmatpush.msra.mxu0 %v460
    %4659 = vmatpush.msra.mxu0 %v456
    %4660 = vmatmul.f32.gmra.mxu0 %v4642
    %v4661 = vpop.f32.mrf.mxu0
    %v4662 = vadd.f32 %v4579, %v4661
    %4663 = vdwg.mxu0
    %4664 = vmatpush.msra.mxu0 0.0
    %4665 = vmatpush.msra.mxu0 0.0
    %4666 = vmatpush.msra.mxu0 0.0
    %4667 = vmatpush.msra.mxu0 0.0
    %4668 = vmatpush.msra.mxu0 0.0
    %4669 = vmatpush.msra.mxu0 0.0
    %4670 = vmatpush.msra.mxu0 0.0
    %4671 = vmatpush.msra.mxu0 0.0
    %4672 = vmatpush.msra.mxu0 0.0
    %4673 = vmatpush.msra.mxu0 0.0
    %4674 = vmatpush.msra.mxu0 0.0
    %4675 = vmatpush.msra.mxu0 0.0
    %4676 = vmatpush.msra.mxu0 %v469
    %4677 = vmatpush.msra.mxu0 %v465
    %4678 = vmatpush.msra.mxu0 %v461
    %4679 = vmatpush.msra.mxu0 %v457
    %4680 = vmatmul.f32.gmra.mxu0 %v4642
    %v4681 = vpop.f32.mrf.mxu0
    %v4682 = vadd.f32 %v4599, %v4681
    %4683 = vdwg.mxu0
    %4684 = vmatpush.msra.mxu0 0.0
    %4685 = vmatpush.msra.mxu0 0.0
    %4686 = vmatpush.msra.mxu0 0.0
    %4687 = vmatpush.msra.mxu0 0.0
    %4688 = vmatpush.msra.mxu0 0.0
    %4689 = vmatpush.msra.mxu0 0.0
    %4690 = vmatpush.msra.mxu0 0.0
    %4691 = vmatpush.msra.mxu0 0.0
    %4692 = vmatpush.msra.mxu0 0.0
    %4693 = vmatpush.msra.mxu0 0.0
    %4694 = vmatpush.msra.mxu0 0.0
    %4695 = vmatpush.msra.mxu0 0.0
    %4696 = vmatpush.msra.mxu0 %v470
    %4697 = vmatpush.msra.mxu0 %v466
    %4698 = vmatpush.msra.mxu0 %v462
    %4699 = vmatpush.msra.mxu0 %v458
    %4700 = vmatmul.f32.gmra.mxu0 %v4642
    %v4701 = vpop.f32.mrf.mxu0
    %v4702 = vadd.f32 %v4619, %v4701
    %4703 = vdwg.mxu0
    %4704 = vmatpush.msra.mxu0 0.0
    %4705 = vmatpush.msra.mxu0 0.0
    %4706 = vmatpush.msra.mxu0 0.0
    %4707 = vmatpush.msra.mxu0 0.0
    %4708 = vmatpush.msra.mxu0 0.0
    %4709 = vmatpush.msra.mxu0 0.0
    %4710 = vmatpush.msra.mxu0 0.0
    %4711 = vmatpush.msra.mxu0 0.0
    %4712 = vmatpush.msra.mxu0 0.0
    %4713 = vmatpush.msra.mxu0 0.0
    %4714 = vmatpush.msra.mxu0 0.0
    %4715 = vmatpush.msra.mxu0 0.0
    %4716 = vmatpush.msra.mxu0 %v471
    %4717 = vmatpush.msra.mxu0 %v467
    %4718 = vmatpush.msra.mxu0 %v463
    %4719 = vmatpush.msra.mxu0 %v459
    %4720 = vmatmul.f32.gmra.mxu0 %v4642
    %v4721 = vpop.f32.mrf.mxu0
    %v4722 = vadd.f32 %v4639, %v4721
    %4723 = vdwg.mxu0
    %v4724 = vadd.f32 %v4662, %v192
    %v4725 = vadd.f32 %v4682, %v193
    %v4726 = vadd.f32 %v4702, %v194
    %v4727 = vadd.f32 %v4722, %v195
    %v4728 = vxor.u32 %v4724, 2147483648
    %v4729 = vmul.f32 %v4728, 1.442695
    %v4730 = vpow.pop %v4729
    %v4731 = vadd.f32 %v4730, 1.0
    %v4732 = vrcp.pop %v4731
    %v4733 = vmul.f32 %v4731, %v4732
    %v4734 = vsub.f32 1.0, %v4733
    %v4735 = vmul.f32 %v4732, %v4734
    %v4736 = vadd.f32 %v4732, %v4735
    %vm4737 = vweird.f32 %v4731
    %vm4738 = vweird.f32 %v4732
    %vm4739 = vmor %vm4737, %vm4738
    %v4740 = vsel %vm4739, %v4732, %v4736
    %v4741 = vand.u32 2147483647, %v4731
    %vm4742 = vcmp.eq.f32.partialorder %v4741, 8.507059e+37
    %v4743 = vand.u32 %v4731, 2147483648
    %v4744 = vor.u32 1.1754944e-38, %v4743
    %v4745 = vsel %vm4742, %v4744, %v4740
    %v4746 = vmul.f32 1.0, %v4745
    %v4747 = vxor.u32 %v4725, 2147483648
    %v4748 = vmul.f32 %v4747, 1.442695
    %v4749 = vpow.pop %v4748
    %v4750 = vadd.f32 %v4749, 1.0
    %v4751 = vrcp.pop %v4750
    %v4752 = vmul.f32 %v4750, %v4751
    %v4753 = vsub.f32 1.0, %v4752
    %v4754 = vmul.f32 %v4751, %v4753
    %v4755 = vadd.f32 %v4751, %v4754
    %vm4756 = vweird.f32 %v4750
    %vm4757 = vweird.f32 %v4751
    %vm4758 = vmor %vm4756, %vm4757
    %v4759 = vsel %vm4758, %v4751, %v4755
    %v4760 = vand.u32 2147483647, %v4750
    %vm4761 = vcmp.eq.f32.partialorder %v4760, 8.507059e+37
    %v4762 = vand.u32 %v4750, 2147483648
    %v4763 = vor.u32 1.1754944e-38, %v4762
    %v4764 = vsel %vm4761, %v4763, %v4759
    %v4765 = vmul.f32 1.0, %v4764
    %v4766 = vmul.f32 %v4746, %v4727
    %v4767 = vadd.f32 %v4726, %v4766
    %v4768 = vtanh.pop %v4767
    %v4769 = vsub.f32 1.0, %v4765
    %v4770 = vmul.f32 %v4769, %v4768
    %v4771 = vmul.f32 %v4765, %v4098
    %v4772 = vadd.f32 %v4770, %v4771
    %4773 = vmatpush.msra.mxu0 0.0
    %4774 = vmatpush.msra.mxu0 0.0
    %4775 = vmatpush.msra.mxu0 0.0
    %4776 = vmatpush.msra.mxu0 0.0
    %4777 = vmatpush.msra.mxu0 0.0
    %4778 = vmatpush.msra.mxu0 0.0
    %4779 = vmatpush.msra.mxu0 0.0
    %4780 = vmatpush.msra.mxu0 0.0
    %4781 = vmatpush.msra.mxu0 0.0
    %4782 = vmatpush.msra.mxu0 0.0
    %4783 = vmatpush.msra.mxu0 0.0
    %4784 = vmatpush.msra.mxu0 0.0
    %4785 = vmatpush.msra.mxu0 0.0
    %4786 = vmatpush.msra.mxu0 0.0
    %4787 = vmatpush.msra.mxu0 %v720
    %4788 = vmatpush.msra.mxu0 %v716
    %4789 = vmatmul.f32.gmra.mxu0 %v4312
    %v4790 = vpop.f32.mrf.mxu0
    %v4791 = vadd.f32 0.0, %v4790
    %4792 = vdwg.mxu0
    %4793 = vmatpush.msra.mxu0 0.0
    %4794 = vmatpush.msra.mxu0 0.0
    %4795 = vmatpush.msra.mxu0 0.0
    %4796 = vmatpush.msra.mxu0 0.0
    %4797 = vmatpush.msra.mxu0 0.0
    %4798 = vmatpush.msra.mxu0 0.0
    %4799 = vmatpush.msra.mxu0 0.0
    %4800 = vmatpush.msra.mxu0 0.0
    %4801 = vmatpush.msra.mxu0 0.0
    %4802 = vmatpush.msra.mxu0 0.0
    %4803 = vmatpush.msra.mxu0 0.0
    %4804 = vmatpush.msra.mxu0 0.0
    %4805 = vmatpush.msra.mxu0 0.0
    %4806 = vmatpush.msra.mxu0 0.0
    %4807 = vmatpush.msra.mxu0 %v721
    %4808 = vmatpush.msra.mxu0 %v717
    %4809 = vmatmul.f32.gmra.mxu0 %v4312
    %v4810 = vpop.f32.mrf.mxu0
    %v4811 = vadd.f32 0.0, %v4810
    %4812 = vdwg.mxu0
    %4813 = vmatpush.msra.mxu0 0.0
    %4814 = vmatpush.msra.mxu0 0.0
    %4815 = vmatpush.msra.mxu0 0.0
    %4816 = vmatpush.msra.mxu0 0.0
    %4817 = vmatpush.msra.mxu0 0.0
    %4818 = vmatpush.msra.mxu0 0.0
    %4819 = vmatpush.msra.mxu0 0.0
    %4820 = vmatpush.msra.mxu0 0.0
    %4821 = vmatpush.msra.mxu0 0.0
    %4822 = vmatpush.msra.mxu0 0.0
    %4823 = vmatpush.msra.mxu0 0.0
    %4824 = vmatpush.msra.mxu0 0.0
    %4825 = vmatpush.msra.mxu0 0.0
    %4826 = vmatpush.msra.mxu0 0.0
    %4827 = vmatpush.msra.mxu0 %v722
    %4828 = vmatpush.msra.mxu0 %v718
    %4829 = vmatmul.f32.gmra.mxu0 %v4312
    %v4830 = vpop.f32.mrf.mxu0
    %v4831 = vadd.f32 0.0, %v4830
    %4832 = vdwg.mxu0
    %4833 = vmatpush.msra.mxu0 0.0
    %4834 = vmatpush.msra.mxu0 0.0
    %4835 = vmatpush.msra.mxu0 0.0
    %4836 = vmatpush.msra.mxu0 0.0
    %4837 = vmatpush.msra.mxu0 0.0
    %4838 = vmatpush.msra.mxu0 0.0
    %4839 = vmatpush.msra.mxu0 0.0
    %4840 = vmatpush.msra.mxu0 0.0
    %4841 = vmatpush.msra.mxu0 0.0
    %4842 = vmatpush.msra.mxu0 0.0
    %4843 = vmatpush.msra.mxu0 0.0
    %4844 = vmatpush.msra.mxu0 0.0
    %4845 = vmatpush.msra.mxu0 0.0
    %4846 = vmatpush.msra.mxu0 0.0
    %4847 = vmatpush.msra.mxu0 %v723
    %4848 = vmatpush.msra.mxu0 %v719
    %4849 = vmatmul.f32.gmra.mxu0 %v4312
    %v4850 = vpop.f32.mrf.mxu0
    %v4851 = vadd.f32 0.0, %v4850
    %4852 = vdwg.mxu0
    %v4854 = vsel %vm239, %v4772, 0
    %4856 = vmatpush.msra.mxu0 0.0
    %4857 = vmatpush.msra.mxu0 0.0
    %4858 = vmatpush.msra.mxu0 0.0
    %4859 = vmatpush.msra.mxu0 0.0
    %4860 = vmatpush.msra.mxu0 0.0
    %4861 = vmatpush.msra.mxu0 0.0
    %4862 = vmatpush.msra.mxu0 0.0
    %4863 = vmatpush.msra.mxu0 0.0
    %4864 = vmatpush.msra.mxu0 0.0
    %4865 = vmatpush.msra.mxu0 0.0
    %4866 = vmatpush.msra.mxu0 0.0
    %4867 = vmatpush.msra.mxu0 0.0
    %4868 = vmatpush.msra.mxu0 %v712
    %4869 = vmatpush.msra.mxu0 %v708
    %4870 = vmatpush.msra.mxu0 %v704
    %4871 = vmatpush.msra.mxu0 %v700
    %4872 = vmatmul.f32.gmra.mxu0 %v4854
    %v4873 = vpop.f32.mrf.mxu0
    %v4874 = vadd.f32 %v4791, %v4873
    %4875 = vdwg.mxu0
    %4876 = vmatpush.msra.mxu0 0.0
    %4877 = vmatpush.msra.mxu0 0.0
    %4878 = vmatpush.msra.mxu0 0.0
    %4879 = vmatpush.msra.mxu0 0.0
    %4880 = vmatpush.msra.mxu0 0.0
    %4881 = vmatpush.msra.mxu0 0.0
    %4882 = vmatpush.msra.mxu0 0.0
    %4883 = vmatpush.msra.mxu0 0.0
    %4884 = vmatpush.msra.mxu0 0.0
    %4885 = vmatpush.msra.mxu0 0.0
    %4886 = vmatpush.msra.mxu0 0.0
    %4887 = vmatpush.msra.mxu0 0.0
    %4888 = vmatpush.msra.mxu0 %v713
    %4889 = vmatpush.msra.mxu0 %v709
    %4890 = vmatpush.msra.mxu0 %v705
    %4891 = vmatpush.msra.mxu0 %v701
    %4892 = vmatmul.f32.gmra.mxu0 %v4854
    %v4893 = vpop.f32.mrf.mxu0
    %v4894 = vadd.f32 %v4811, %v4893
    %4895 = vdwg.mxu0
    %4896 = vmatpush.msra.mxu0 0.0
    %4897 = vmatpush.msra.mxu0 0.0
    %4898 = vmatpush.msra.mxu0 0.0
    %4899 = vmatpush.msra.mxu0 0.0
    %4900 = vmatpush.msra.mxu0 0.0
    %4901 = vmatpush.msra.mxu0 0.0
    %4902 = vmatpush.msra.mxu0 0.0
    %4903 = vmatpush.msra.mxu0 0.0
    %4904 = vmatpush.msra.mxu0 0.0
    %4905 = vmatpush.msra.mxu0 0.0
    %4906 = vmatpush.msra.mxu0 0.0
    %4907 = vmatpush.msra.mxu0 0.0
    %4908 = vmatpush.msra.mxu0 %v714
    %4909 = vmatpush.msra.mxu0 %v710
    %4910 = vmatpush.msra.mxu0 %v706
    %4911 = vmatpush.msra.mxu0 %v702
    %4912 = vmatmul.f32.gmra.mxu0 %v4854
    %v4913 = vpop.f32.mrf.mxu0
    %v4914 = vadd.f32 %v4831, %v4913
    %4915 = vdwg.mxu0
    %4916 = vmatpush.msra.mxu0 0.0
    %4917 = vmatpush.msra.mxu0 0.0
    %4918 = vmatpush.msra.mxu0 0.0
    %4919 = vmatpush.msra.mxu0 0.0
    %4920 = vmatpush.msra.mxu0 0.0
    %4921 = vmatpush.msra.mxu0 0.0
    %4922 = vmatpush.msra.mxu0 0.0
    %4923 = vmatpush.msra.mxu0 0.0
    %4924 = vmatpush.msra.mxu0 0.0
    %4925 = vmatpush.msra.mxu0 0.0
    %4926 = vmatpush.msra.mxu0 0.0
    %4927 = vmatpush.msra.mxu0 0.0
    %4928 = vmatpush.msra.mxu0 %v715
    %4929 = vmatpush.msra.mxu0 %v711
    %4930 = vmatpush.msra.mxu0 %v707
    %4931 = vmatpush.msra.mxu0 %v703
    %4932 = vmatmul.f32.gmra.mxu0 %v4854
    %v4933 = vpop.f32.mrf.mxu0
    %v4934 = vadd.f32 %v4851, %v4933
    %4935 = vdwg.mxu0
    %v4936 = vadd.f32 %v4874, %v202
    %v4937 = vadd.f32 %v4894, %v203
    %v4938 = vadd.f32 %v4914, %v204
    %v4939 = vadd.f32 %v4934, %v205
    %v4940 = vxor.u32 %v4936, 2147483648
    %v4941 = vmul.f32 %v4940, 1.442695
    %v4942 = vpow.pop %v4941
    %v4943 = vadd.f32 %v4942, 1.0
    %v4944 = vrcp.pop %v4943
    %v4945 = vmul.f32 %v4943, %v4944
    %v4946 = vsub.f32 1.0, %v4945
    %v4947 = vmul.f32 %v4944, %v4946
    %v4948 = vadd.f32 %v4944, %v4947
    %vm4949 = vweird.f32 %v4943
    %vm4950 = vweird.f32 %v4944
    %vm4951 = vmor %vm4949, %vm4950
    %v4952 = vsel %vm4951, %v4944, %v4948
    %v4953 = vand.u32 2147483647, %v4943
    %vm4954 = vcmp.eq.f32.partialorder %v4953, 8.507059e+37
    %v4955 = vand.u32 %v4943, 2147483648
    %v4956 = vor.u32 1.1754944e-38, %v4955
    %v4957 = vsel %vm4954, %v4956, %v4952
    %v4958 = vmul.f32 1.0, %v4957
    %v4959 = vxor.u32 %v4937, 2147483648
    %v4960 = vmul.f32 %v4959, 1.442695
    %v4961 = vpow.pop %v4960
    %v4962 = vadd.f32 %v4961, 1.0
    %v4963 = vrcp.pop %v4962
    %v4964 = vmul.f32 %v4962, %v4963
    %v4965 = vsub.f32 1.0, %v4964
    %v4966 = vmul.f32 %v4963, %v4965
    %v4967 = vadd.f32 %v4963, %v4966
    %vm4968 = vweird.f32 %v4962
    %vm4969 = vweird.f32 %v4963
    %vm4970 = vmor %vm4968, %vm4969
    %v4971 = vsel %vm4970, %v4963, %v4967
    %v4972 = vand.u32 2147483647, %v4962
    %vm4973 = vcmp.eq.f32.partialorder %v4972, 8.507059e+37
    %v4974 = vand.u32 %v4962, 2147483648
    %v4975 = vor.u32 1.1754944e-38, %v4974
    %v4976 = vsel %vm4973, %v4975, %v4971
    %v4977 = vmul.f32 1.0, %v4976
    %v4978 = vmul.f32 %v4958, %v4939
    %v4979 = vadd.f32 %v4938, %v4978
    %v4980 = vtanh.pop %v4979
    %v4981 = vsub.f32 1.0, %v4977
    %v4982 = vmul.f32 %v4981, %v4980
    %v4983 = vmul.f32 %v4977, %v4310
    %v4984 = vadd.f32 %v4982, %v4983
    %v4986 = vsel %vm323, %v4984, 0
    %4988 = vmatpush.msra.mxu0 0.0
    %4989 = vmatpush.msra.mxu0 0.0
    %4990 = vmatpush.msra.mxu0 0.0
    %4991 = vmatpush.msra.mxu0 0.0
    %4992 = vmatpush.msra.mxu0 0.0
    %4993 = vmatpush.msra.mxu0 0.0
    %4994 = vmatpush.msra.mxu0 0.0
    %4995 = vmatpush.msra.mxu0 0.0
    %4996 = vmatpush.msra.mxu0 0.0
    %4997 = vmatpush.msra.mxu0 0.0
    %4998 = vmatpush.msra.mxu0 0.0
    %4999 = vmatpush.msra.mxu0 0.0
    %5000 = vmatpush.msra.mxu0 0.0
    %5001 = vmatpush.msra.mxu0 0.0
    %5002 = vmatpush.msra.mxu0 %v939
    %5003 = vmatpush.msra.mxu0 %v938
    %5004 = vmatmul.f32.gmra.mxu0 %v4986
    %v5005 = vpop.f32.mrf.mxu0
    %v5006 = vadd.f32 %v212, %v5005
    %5007 = vdwg.mxu0
    %v5008 = vsel %vm963, %v5006, -inf
    %5009 = vmax.xlane.f32.xlu0 %v5008
    %v5010 = vpop.xlane.xlu0 %5009
    %v5011 = vsub.f32 %v5006, %v5010
    %v5012 = vmul.f32 %v5011, 1.442695
    %v5013 = vpow.pop %v5012
    %v5014 = vsel %vm963, %v5013, 0.0
    %5015 = vadd.xlane.f32.xlu0 %v5014
    %v5016 = vpop.xlane.xlu0 %5015
    %v5017 = vlog2.pop %v5016
    %v5018 = vmul.f32 %v5017, 0.6931472
    %v5019 = vsub.f32 %v5011, %v5018
    %v5020 = vadd.f32 %v4346, %v5019
    %s5021 = scalar_lea.vmem [#allocation2], 14
    %v5022 = vld [vmem:[%s5021] sm:$0x3]
    %5023 = vmatpush.msra.mxu0 0.0
    %5024 = vmatpush.msra.mxu0 0.0
    %5025 = vmatpush.msra.mxu0 0.0
    %5026 = vmatpush.msra.mxu0 0.0
    %5027 = vmatpush.msra.mxu0 0.0
    %5028 = vmatpush.msra.mxu0 0.0
    %5029 = vmatpush.msra.mxu0 0.0
    %5030 = vmatpush.msra.mxu0 0.0
    %5031 = vmatpush.msra.mxu0 0.0
    %5032 = vmatpush.msra.mxu0 0.0
    %5033 = vmatpush.msra.mxu0 0.0
    %5034 = vmatpush.msra.mxu0 0.0
    %5035 = vmatpush.msra.mxu0 %v235
    %5036 = vmatpush.msra.mxu0 %v231
    %5037 = vmatpush.msra.mxu0 %v227
    %5038 = vmatpush.msra.mxu0 %v223
    %5039 = vmatmul.f32.gmra.mxu0 %v4642
    %v5040 = vpop.f32.mrf.mxu0
    %v5041 = vadd.f32 0.0, %v5040
    %5042 = vdwg.mxu0
    %5043 = vmatpush.msra.mxu0 0.0
    %5044 = vmatpush.msra.mxu0 0.0
    %5045 = vmatpush.msra.mxu0 0.0
    %5046 = vmatpush.msra.mxu0 0.0
    %5047 = vmatpush.msra.mxu0 0.0
    %5048 = vmatpush.msra.mxu0 0.0
    %5049 = vmatpush.msra.mxu0 0.0
    %5050 = vmatpush.msra.mxu0 0.0
    %5051 = vmatpush.msra.mxu0 0.0
    %5052 = vmatpush.msra.mxu0 0.0
    %5053 = vmatpush.msra.mxu0 0.0
    %5054 = vmatpush.msra.mxu0 0.0
    %5055 = vmatpush.msra.mxu0 %v236
    %5056 = vmatpush.msra.mxu0 %v232
    %5057 = vmatpush.msra.mxu0 %v228
    %5058 = vmatpush.msra.mxu0 %v224
    %5059 = vmatmul.f32.gmra.mxu0 %v4642
    %v5060 = vpop.f32.mrf.mxu0
    %v5061 = vadd.f32 0.0, %v5060
    %5062 = vdwg.mxu0
    %5063 = vmatpush.msra.mxu0 0.0
    %5064 = vmatpush.msra.mxu0 0.0
    %5065 = vmatpush.msra.mxu0 0.0
    %5066 = vmatpush.msra.mxu0 0.0
    %5067 = vmatpush.msra.mxu0 0.0
    %5068 = vmatpush.msra.mxu0 0.0
    %5069 = vmatpush.msra.mxu0 0.0
    %5070 = vmatpush.msra.mxu0 0.0
    %5071 = vmatpush.msra.mxu0 0.0
    %5072 = vmatpush.msra.mxu0 0.0
    %5073 = vmatpush.msra.mxu0 0.0
    %5074 = vmatpush.msra.mxu0 0.0
    %5075 = vmatpush.msra.mxu0 %v237
    %5076 = vmatpush.msra.mxu0 %v233
    %5077 = vmatpush.msra.mxu0 %v229
    %5078 = vmatpush.msra.mxu0 %v225
    %5079 = vmatmul.f32.gmra.mxu0 %v4642
    %v5080 = vpop.f32.mrf.mxu0
    %v5081 = vadd.f32 0.0, %v5080
    %5082 = vdwg.mxu0
    %5083 = vmatpush.msra.mxu0 0.0
    %5084 = vmatpush.msra.mxu0 0.0
    %5085 = vmatpush.msra.mxu0 0.0
    %5086 = vmatpush.msra.mxu0 0.0
    %5087 = vmatpush.msra.mxu0 0.0
    %5088 = vmatpush.msra.mxu0 0.0
    %5089 = vmatpush.msra.mxu0 0.0
    %5090 = vmatpush.msra.mxu0 0.0
    %5091 = vmatpush.msra.mxu0 0.0
    %5092 = vmatpush.msra.mxu0 0.0
    %5093 = vmatpush.msra.mxu0 0.0
    %5094 = vmatpush.msra.mxu0 0.0
    %5095 = vmatpush.msra.mxu0 %v238
    %5096 = vmatpush.msra.mxu0 %v234
    %5097 = vmatpush.msra.mxu0 %v230
    %5098 = vmatpush.msra.mxu0 %v226
    %5099 = vmatmul.f32.gmra.mxu0 %v4642
    %v5100 = vpop.f32.mrf.mxu0
    %v5101 = vadd.f32 0.0, %v5100
    %5102 = vdwg.mxu0
    %v5104 = vsel %vm323, %v5022, 0
    %5106 = vmatpush.msra.mxu0 0.0
    %5107 = vmatpush.msra.mxu0 0.0
    %5108 = vmatpush.msra.mxu0 0.0
    %5109 = vmatpush.msra.mxu0 0.0
    %5110 = vmatpush.msra.mxu0 0.0
    %5111 = vmatpush.msra.mxu0 0.0
    %5112 = vmatpush.msra.mxu0 0.0
    %5113 = vmatpush.msra.mxu0 0.0
    %5114 = vmatpush.msra.mxu0 0.0
    %5115 = vmatpush.msra.mxu0 0.0
    %5116 = vmatpush.msra.mxu0 0.0
    %5117 = vmatpush.msra.mxu0 0.0
    %5118 = vmatpush.msra.mxu0 0.0
    %5119 = vmatpush.msra.mxu0 0.0
    %5120 = vmatpush.msra.mxu0 %v219
    %5121 = vmatpush.msra.mxu0 %v215
    %5122 = vmatmul.f32.gmra.mxu0 %v5104
    %v5123 = vpop.f32.mrf.mxu0
    %v5124 = vadd.f32 %v5041, %v5123
    %5125 = vdwg.mxu0
    %5126 = vmatpush.msra.mxu0 0.0
    %5127 = vmatpush.msra.mxu0 0.0
    %5128 = vmatpush.msra.mxu0 0.0
    %5129 = vmatpush.msra.mxu0 0.0
    %5130 = vmatpush.msra.mxu0 0.0
    %5131 = vmatpush.msra.mxu0 0.0
    %5132 = vmatpush.msra.mxu0 0.0
    %5133 = vmatpush.msra.mxu0 0.0
    %5134 = vmatpush.msra.mxu0 0.0
    %5135 = vmatpush.msra.mxu0 0.0
    %5136 = vmatpush.msra.mxu0 0.0
    %5137 = vmatpush.msra.mxu0 0.0
    %5138 = vmatpush.msra.mxu0 0.0
    %5139 = vmatpush.msra.mxu0 0.0
    %5140 = vmatpush.msra.mxu0 %v220
    %5141 = vmatpush.msra.mxu0 %v216
    %5142 = vmatmul.f32.gmra.mxu0 %v5104
    %v5143 = vpop.f32.mrf.mxu0
    %v5144 = vadd.f32 %v5061, %v5143
    %5145 = vdwg.mxu0
    %5146 = vmatpush.msra.mxu0 0.0
    %5147 = vmatpush.msra.mxu0 0.0
    %5148 = vmatpush.msra.mxu0 0.0
    %5149 = vmatpush.msra.mxu0 0.0
    %5150 = vmatpush.msra.mxu0 0.0
    %5151 = vmatpush.msra.mxu0 0.0
    %5152 = vmatpush.msra.mxu0 0.0
    %5153 = vmatpush.msra.mxu0 0.0
    %5154 = vmatpush.msra.mxu0 0.0
    %5155 = vmatpush.msra.mxu0 0.0
    %5156 = vmatpush.msra.mxu0 0.0
    %5157 = vmatpush.msra.mxu0 0.0
    %5158 = vmatpush.msra.mxu0 0.0
    %5159 = vmatpush.msra.mxu0 0.0
    %5160 = vmatpush.msra.mxu0 %v221
    %5161 = vmatpush.msra.mxu0 %v217
    %5162 = vmatmul.f32.gmra.mxu0 %v5104
    %v5163 = vpop.f32.mrf.mxu0
    %v5164 = vadd.f32 %v5081, %v5163
    %5165 = vdwg.mxu0
    %5166 = vmatpush.msra.mxu0 0.0
    %5167 = vmatpush.msra.mxu0 0.0
    %5168 = vmatpush.msra.mxu0 0.0
    %5169 = vmatpush.msra.mxu0 0.0
    %5170 = vmatpush.msra.mxu0 0.0
    %5171 = vmatpush.msra.mxu0 0.0
    %5172 = vmatpush.msra.mxu0 0.0
    %5173 = vmatpush.msra.mxu0 0.0
    %5174 = vmatpush.msra.mxu0 0.0
    %5175 = vmatpush.msra.mxu0 0.0
    %5176 = vmatpush.msra.mxu0 0.0
    %5177 = vmatpush.msra.mxu0 0.0
    %5178 = vmatpush.msra.mxu0 0.0
    %5179 = vmatpush.msra.mxu0 0.0
    %5180 = vmatpush.msra.mxu0 %v222
    %5181 = vmatpush.msra.mxu0 %v218
    %5182 = vmatmul.f32.gmra.mxu0 %v5104
    %v5183 = vpop.f32.mrf.mxu0
    %v5184 = vadd.f32 %v5101, %v5183
    %5185 = vdwg.mxu0
    %v5186 = vadd.f32 %v5124, %v182
    %v5187 = vadd.f32 %v5144, %v183
    %v5188 = vadd.f32 %v5164, %v184
    %v5189 = vadd.f32 %v5184, %v185
    %v5190 = vxor.u32 %v5186, 2147483648
    %v5191 = vmul.f32 %v5190, 1.442695
    %v5192 = vpow.pop %v5191
    %v5193 = vadd.f32 %v5192, 1.0
    %v5194 = vrcp.pop %v5193
    %v5195 = vmul.f32 %v5193, %v5194
    %v5196 = vsub.f32 1.0, %v5195
    %v5197 = vmul.f32 %v5194, %v5196
    %v5198 = vadd.f32 %v5194, %v5197
    %vm5199 = vweird.f32 %v5193
    %vm5200 = vweird.f32 %v5194
    %vm5201 = vmor %vm5199, %vm5200
    %v5202 = vsel %vm5201, %v5194, %v5198
    %v5203 = vand.u32 2147483647, %v5193
    %vm5204 = vcmp.eq.f32.partialorder %v5203, 8.507059e+37
    %v5205 = vand.u32 %v5193, 2147483648
    %v5206 = vor.u32 1.1754944e-38, %v5205
    %v5207 = vsel %vm5204, %v5206, %v5202
    %v5208 = vmul.f32 1.0, %v5207
    %v5209 = vxor.u32 %v5187, 2147483648
    %v5210 = vmul.f32 %v5209, 1.442695
    %v5211 = vpow.pop %v5210
    %v5212 = vadd.f32 %v5211, 1.0
    %v5213 = vrcp.pop %v5212
    %v5214 = vmul.f32 %v5212, %v5213
    %v5215 = vsub.f32 1.0, %v5214
    %v5216 = vmul.f32 %v5213, %v5215
    %v5217 = vadd.f32 %v5213, %v5216
    %vm5218 = vweird.f32 %v5212
    %vm5219 = vweird.f32 %v5213
    %vm5220 = vmor %vm5218, %vm5219
    %v5221 = vsel %vm5220, %v5213, %v5217
    %v5222 = vand.u32 2147483647, %v5212
    %vm5223 = vcmp.eq.f32.partialorder %v5222, 8.507059e+37
    %v5224 = vand.u32 %v5212, 2147483648
    %v5225 = vor.u32 1.1754944e-38, %v5224
    %v5226 = vsel %vm5223, %v5225, %v5221
    %v5227 = vmul.f32 1.0, %v5226
    %v5228 = vmul.f32 %v5208, %v5189
    %v5229 = vadd.f32 %v5188, %v5228
    %v5230 = vtanh.pop %v5229
    %v5231 = vsub.f32 1.0, %v5227
    %v5232 = vmul.f32 %v5231, %v5230
    %v5233 = vmul.f32 %v5227, %v4560
    %v5234 = vadd.f32 %v5232, %v5233
    %5235 = vmatpush.msra.mxu0 0.0
    %5236 = vmatpush.msra.mxu0 0.0
    %5237 = vmatpush.msra.mxu0 0.0
    %5238 = vmatpush.msra.mxu0 0.0
    %5239 = vmatpush.msra.mxu0 0.0
    %5240 = vmatpush.msra.mxu0 0.0
    %5241 = vmatpush.msra.mxu0 0.0
    %5242 = vmatpush.msra.mxu0 0.0
    %5243 = vmatpush.msra.mxu0 0.0
    %5244 = vmatpush.msra.mxu0 0.0
    %5245 = vmatpush.msra.mxu0 0.0
    %5246 = vmatpush.msra.mxu0 0.0
    %5247 = vmatpush.msra.mxu0 %v484
    %5248 = vmatpush.msra.mxu0 %v480
    %5249 = vmatpush.msra.mxu0 %v476
    %5250 = vmatpush.msra.mxu0 %v472
    %5251 = vmatmul.f32.gmra.mxu0 %v4854
    %v5252 = vpop.f32.mrf.mxu0
    %v5253 = vadd.f32 0.0, %v5252
    %5254 = vdwg.mxu0
    %5255 = vmatpush.msra.mxu0 0.0
    %5256 = vmatpush.msra.mxu0 0.0
    %5257 = vmatpush.msra.mxu0 0.0
    %5258 = vmatpush.msra.mxu0 0.0
    %5259 = vmatpush.msra.mxu0 0.0
    %5260 = vmatpush.msra.mxu0 0.0
    %5261 = vmatpush.msra.mxu0 0.0
    %5262 = vmatpush.msra.mxu0 0.0
    %5263 = vmatpush.msra.mxu0 0.0
    %5264 = vmatpush.msra.mxu0 0.0
    %5265 = vmatpush.msra.mxu0 0.0
    %5266 = vmatpush.msra.mxu0 0.0
    %5267 = vmatpush.msra.mxu0 %v485
    %5268 = vmatpush.msra.mxu0 %v481
    %5269 = vmatpush.msra.mxu0 %v477
    %5270 = vmatpush.msra.mxu0 %v473
    %5271 = vmatmul.f32.gmra.mxu0 %v4854
    %v5272 = vpop.f32.mrf.mxu0
    %v5273 = vadd.f32 0.0, %v5272
    %5274 = vdwg.mxu0
    %5275 = vmatpush.msra.mxu0 0.0
    %5276 = vmatpush.msra.mxu0 0.0
    %5277 = vmatpush.msra.mxu0 0.0
    %5278 = vmatpush.msra.mxu0 0.0
    %5279 = vmatpush.msra.mxu0 0.0
    %5280 = vmatpush.msra.mxu0 0.0
    %5281 = vmatpush.msra.mxu0 0.0
    %5282 = vmatpush.msra.mxu0 0.0
    %5283 = vmatpush.msra.mxu0 0.0
    %5284 = vmatpush.msra.mxu0 0.0
    %5285 = vmatpush.msra.mxu0 0.0
    %5286 = vmatpush.msra.mxu0 0.0
    %5287 = vmatpush.msra.mxu0 %v486
    %5288 = vmatpush.msra.mxu0 %v482
    %5289 = vmatpush.msra.mxu0 %v478
    %5290 = vmatpush.msra.mxu0 %v474
    %5291 = vmatmul.f32.gmra.mxu0 %v4854
    %v5292 = vpop.f32.mrf.mxu0
    %v5293 = vadd.f32 0.0, %v5292
    %5294 = vdwg.mxu0
    %5295 = vmatpush.msra.mxu0 0.0
    %5296 = vmatpush.msra.mxu0 0.0
    %5297 = vmatpush.msra.mxu0 0.0
    %5298 = vmatpush.msra.mxu0 0.0
    %5299 = vmatpush.msra.mxu0 0.0
    %5300 = vmatpush.msra.mxu0 0.0
    %5301 = vmatpush.msra.mxu0 0.0
    %5302 = vmatpush.msra.mxu0 0.0
    %5303 = vmatpush.msra.mxu0 0.0
    %5304 = vmatpush.msra.mxu0 0.0
    %5305 = vmatpush.msra.mxu0 0.0
    %5306 = vmatpush.msra.mxu0 0.0
    %5307 = vmatpush.msra.mxu0 %v487
    %5308 = vmatpush.msra.mxu0 %v483
    %5309 = vmatpush.msra.mxu0 %v479
    %5310 = vmatpush.msra.mxu0 %v475
    %5311 = vmatmul.f32.gmra.mxu0 %v4854
    %v5312 = vpop.f32.mrf.mxu0
    %v5313 = vadd.f32 0.0, %v5312
    %5314 = vdwg.mxu0
    %v5316 = vsel %vm239, %v5234, 0
    %5318 = vmatpush.msra.mxu0 0.0
    %5319 = vmatpush.msra.mxu0 0.0
    %5320 = vmatpush.msra.mxu0 0.0
    %5321 = vmatpush.msra.mxu0 0.0
    %5322 = vmatpush.msra.mxu0 0.0
    %5323 = vmatpush.msra.mxu0 0.0
    %5324 = vmatpush.msra.mxu0 0.0
    %5325 = vmatpush.msra.mxu0 0.0
    %5326 = vmatpush.msra.mxu0 0.0
    %5327 = vmatpush.msra.mxu0 0.0
    %5328 = vmatpush.msra.mxu0 0.0
    %5329 = vmatpush.msra.mxu0 0.0
    %5330 = vmatpush.msra.mxu0 %v468
    %5331 = vmatpush.msra.mxu0 %v464
    %5332 = vmatpush.msra.mxu0 %v460
    %5333 = vmatpush.msra.mxu0 %v456
    %5334 = vmatmul.f32.gmra.mxu0 %v5316
    %v5335 = vpop.f32.mrf.mxu0
    %v5336 = vadd.f32 %v5253, %v5335
    %5337 = vdwg.mxu0
    %5338 = vmatpush.msra.mxu0 0.0
    %5339 = vmatpush.msra.mxu0 0.0
    %5340 = vmatpush.msra.mxu0 0.0
    %5341 = vmatpush.msra.mxu0 0.0
    %5342 = vmatpush.msra.mxu0 0.0
    %5343 = vmatpush.msra.mxu0 0.0
    %5344 = vmatpush.msra.mxu0 0.0
    %5345 = vmatpush.msra.mxu0 0.0
    %5346 = vmatpush.msra.mxu0 0.0
    %5347 = vmatpush.msra.mxu0 0.0
    %5348 = vmatpush.msra.mxu0 0.0
    %5349 = vmatpush.msra.mxu0 0.0
    %5350 = vmatpush.msra.mxu0 %v469
    %5351 = vmatpush.msra.mxu0 %v465
    %5352 = vmatpush.msra.mxu0 %v461
    %5353 = vmatpush.msra.mxu0 %v457
    %5354 = vmatmul.f32.gmra.mxu0 %v5316
    %v5355 = vpop.f32.mrf.mxu0
    %v5356 = vadd.f32 %v5273, %v5355
    %5357 = vdwg.mxu0
    %5358 = vmatpush.msra.mxu0 0.0
    %5359 = vmatpush.msra.mxu0 0.0
    %5360 = vmatpush.msra.mxu0 0.0
    %5361 = vmatpush.msra.mxu0 0.0
    %5362 = vmatpush.msra.mxu0 0.0
    %5363 = vmatpush.msra.mxu0 0.0
    %5364 = vmatpush.msra.mxu0 0.0
    %5365 = vmatpush.msra.mxu0 0.0
    %5366 = vmatpush.msra.mxu0 0.0
    %5367 = vmatpush.msra.mxu0 0.0
    %5368 = vmatpush.msra.mxu0 0.0
    %5369 = vmatpush.msra.mxu0 0.0
    %5370 = vmatpush.msra.mxu0 %v470
    %5371 = vmatpush.msra.mxu0 %v466
    %5372 = vmatpush.msra.mxu0 %v462
    %5373 = vmatpush.msra.mxu0 %v458
    %5374 = vmatmul.f32.gmra.mxu0 %v5316
    %v5375 = vpop.f32.mrf.mxu0
    %v5376 = vadd.f32 %v5293, %v5375
    %5377 = vdwg.mxu0
    %5378 = vmatpush.msra.mxu0 0.0
    %5379 = vmatpush.msra.mxu0 0.0
    %5380 = vmatpush.msra.mxu0 0.0
    %5381 = vmatpush.msra.mxu0 0.0
    %5382 = vmatpush.msra.mxu0 0.0
    %5383 = vmatpush.msra.mxu0 0.0
    %5384 = vmatpush.msra.mxu0 0.0
    %5385 = vmatpush.msra.mxu0 0.0
    %5386 = vmatpush.msra.mxu0 0.0
    %5387 = vmatpush.msra.mxu0 0.0
    %5388 = vmatpush.msra.mxu0 0.0
    %5389 = vmatpush.msra.mxu0 0.0
    %5390 = vmatpush.msra.mxu0 %v471
    %5391 = vmatpush.msra.mxu0 %v467
    %5392 = vmatpush.msra.mxu0 %v463
    %5393 = vmatpush.msra.mxu0 %v459
    %5394 = vmatmul.f32.gmra.mxu0 %v5316
    %v5395 = vpop.f32.mrf.mxu0
    %v5396 = vadd.f32 %v5313, %v5395
    %5397 = vdwg.mxu0
    %v5398 = vadd.f32 %v5336, %v192
    %v5399 = vadd.f32 %v5356, %v193
    %v5400 = vadd.f32 %v5376, %v194
    %v5401 = vadd.f32 %v5396, %v195
    %v5402 = vxor.u32 %v5398, 2147483648
    %v5403 = vmul.f32 %v5402, 1.442695
    %v5404 = vpow.pop %v5403
    %v5405 = vadd.f32 %v5404, 1.0
    %v5406 = vrcp.pop %v5405
    %v5407 = vmul.f32 %v5405, %v5406
    %v5408 = vsub.f32 1.0, %v5407
    %v5409 = vmul.f32 %v5406, %v5408
    %v5410 = vadd.f32 %v5406, %v5409
    %vm5411 = vweird.f32 %v5405
    %vm5412 = vweird.f32 %v5406
    %vm5413 = vmor %vm5411, %vm5412
    %v5414 = vsel %vm5413, %v5406, %v5410
    %v5415 = vand.u32 2147483647, %v5405
    %vm5416 = vcmp.eq.f32.partialorder %v5415, 8.507059e+37
    %v5417 = vand.u32 %v5405, 2147483648
    %v5418 = vor.u32 1.1754944e-38, %v5417
    %v5419 = vsel %vm5416, %v5418, %v5414
    %v5420 = vmul.f32 1.0, %v5419
    %v5421 = vxor.u32 %v5399, 2147483648
    %v5422 = vmul.f32 %v5421, 1.442695
    %v5423 = vpow.pop %v5422
    %v5424 = vadd.f32 %v5423, 1.0
    %v5425 = vrcp.pop %v5424
    %v5426 = vmul.f32 %v5424, %v5425
    %v5427 = vsub.f32 1.0, %v5426
    %v5428 = vmul.f32 %v5425, %v5427
    %v5429 = vadd.f32 %v5425, %v5428
    %vm5430 = vweird.f32 %v5424
    %vm5431 = vweird.f32 %v5425
    %vm5432 = vmor %vm5430, %vm5431
    %v5433 = vsel %vm5432, %v5425, %v5429
    %v5434 = vand.u32 2147483647, %v5424
    %vm5435 = vcmp.eq.f32.partialorder %v5434, 8.507059e+37
    %v5436 = vand.u32 %v5424, 2147483648
    %v5437 = vor.u32 1.1754944e-38, %v5436
    %v5438 = vsel %vm5435, %v5437, %v5433
    %v5439 = vmul.f32 1.0, %v5438
    %v5440 = vmul.f32 %v5420, %v5401
    %v5441 = vadd.f32 %v5400, %v5440
    %v5442 = vtanh.pop %v5441
    %v5443 = vsub.f32 1.0, %v5439
    %v5444 = vmul.f32 %v5443, %v5442
    %v5445 = vmul.f32 %v5439, %v4772
    %v5446 = vadd.f32 %v5444, %v5445
    %5447 = vmatpush.msra.mxu0 0.0
    %5448 = vmatpush.msra.mxu0 0.0
    %5449 = vmatpush.msra.mxu0 0.0
    %5450 = vmatpush.msra.mxu0 0.0
    %5451 = vmatpush.msra.mxu0 0.0
    %5452 = vmatpush.msra.mxu0 0.0
    %5453 = vmatpush.msra.mxu0 0.0
    %5454 = vmatpush.msra.mxu0 0.0
    %5455 = vmatpush.msra.mxu0 0.0
    %5456 = vmatpush.msra.mxu0 0.0
    %5457 = vmatpush.msra.mxu0 0.0
    %5458 = vmatpush.msra.mxu0 0.0
    %5459 = vmatpush.msra.mxu0 0.0
    %5460 = vmatpush.msra.mxu0 0.0
    %5461 = vmatpush.msra.mxu0 %v720
    %5462 = vmatpush.msra.mxu0 %v716
    %5463 = vmatmul.f32.gmra.mxu0 %v4986
    %v5464 = vpop.f32.mrf.mxu0
    %v5465 = vadd.f32 0.0, %v5464
    %5466 = vdwg.mxu0
    %5467 = vmatpush.msra.mxu0 0.0
    %5468 = vmatpush.msra.mxu0 0.0
    %5469 = vmatpush.msra.mxu0 0.0
    %5470 = vmatpush.msra.mxu0 0.0
    %5471 = vmatpush.msra.mxu0 0.0
    %5472 = vmatpush.msra.mxu0 0.0
    %5473 = vmatpush.msra.mxu0 0.0
    %5474 = vmatpush.msra.mxu0 0.0
    %5475 = vmatpush.msra.mxu0 0.0
    %5476 = vmatpush.msra.mxu0 0.0
    %5477 = vmatpush.msra.mxu0 0.0
    %5478 = vmatpush.msra.mxu0 0.0
    %5479 = vmatpush.msra.mxu0 0.0
    %5480 = vmatpush.msra.mxu0 0.0
    %5481 = vmatpush.msra.mxu0 %v721
    %5482 = vmatpush.msra.mxu0 %v717
    %5483 = vmatmul.f32.gmra.mxu0 %v4986
    %v5484 = vpop.f32.mrf.mxu0
    %v5485 = vadd.f32 0.0, %v5484
    %5486 = vdwg.mxu0
    %5487 = vmatpush.msra.mxu0 0.0
    %5488 = vmatpush.msra.mxu0 0.0
    %5489 = vmatpush.msra.mxu0 0.0
    %5490 = vmatpush.msra.mxu0 0.0
    %5491 = vmatpush.msra.mxu0 0.0
    %5492 = vmatpush.msra.mxu0 0.0
    %5493 = vmatpush.msra.mxu0 0.0
    %5494 = vmatpush.msra.mxu0 0.0
    %5495 = vmatpush.msra.mxu0 0.0
    %5496 = vmatpush.msra.mxu0 0.0
    %5497 = vmatpush.msra.mxu0 0.0
    %5498 = vmatpush.msra.mxu0 0.0
    %5499 = vmatpush.msra.mxu0 0.0
    %5500 = vmatpush.msra.mxu0 0.0
    %5501 = vmatpush.msra.mxu0 %v722
    %5502 = vmatpush.msra.mxu0 %v718
    %5503 = vmatmul.f32.gmra.mxu0 %v4986
    %v5504 = vpop.f32.mrf.mxu0
    %v5505 = vadd.f32 0.0, %v5504
    %5506 = vdwg.mxu0
    %5507 = vmatpush.msra.mxu0 0.0
    %5508 = vmatpush.msra.mxu0 0.0
    %5509 = vmatpush.msra.mxu0 0.0
    %5510 = vmatpush.msra.mxu0 0.0
    %5511 = vmatpush.msra.mxu0 0.0
    %5512 = vmatpush.msra.mxu0 0.0
    %5513 = vmatpush.msra.mxu0 0.0
    %5514 = vmatpush.msra.mxu0 0.0
    %5515 = vmatpush.msra.mxu0 0.0
    %5516 = vmatpush.msra.mxu0 0.0
    %5517 = vmatpush.msra.mxu0 0.0
    %5518 = vmatpush.msra.mxu0 0.0
    %5519 = vmatpush.msra.mxu0 0.0
    %5520 = vmatpush.msra.mxu0 0.0
    %5521 = vmatpush.msra.mxu0 %v723
    %5522 = vmatpush.msra.mxu0 %v719
    %5523 = vmatmul.f32.gmra.mxu0 %v4986
    %v5524 = vpop.f32.mrf.mxu0
    %v5525 = vadd.f32 0.0, %v5524
    %5526 = vdwg.mxu0
    %v5528 = vsel %vm239, %v5446, 0
    %5530 = vmatpush.msra.mxu0 0.0
    %5531 = vmatpush.msra.mxu0 0.0
    %5532 = vmatpush.msra.mxu0 0.0
    %5533 = vmatpush.msra.mxu0 0.0
    %5534 = vmatpush.msra.mxu0 0.0
    %5535 = vmatpush.msra.mxu0 0.0
    %5536 = vmatpush.msra.mxu0 0.0
    %5537 = vmatpush.msra.mxu0 0.0
    %5538 = vmatpush.msra.mxu0 0.0
    %5539 = vmatpush.msra.mxu0 0.0
    %5540 = vmatpush.msra.mxu0 0.0
    %5541 = vmatpush.msra.mxu0 0.0
    %5542 = vmatpush.msra.mxu0 %v712
    %5543 = vmatpush.msra.mxu0 %v708
    %5544 = vmatpush.msra.mxu0 %v704
    %5545 = vmatpush.msra.mxu0 %v700
    %5546 = vmatmul.f32.gmra.mxu0 %v5528
    %v5547 = vpop.f32.mrf.mxu0
    %v5548 = vadd.f32 %v5465, %v5547
    %5549 = vdwg.mxu0
    %5550 = vmatpush.msra.mxu0 0.0
    %5551 = vmatpush.msra.mxu0 0.0
    %5552 = vmatpush.msra.mxu0 0.0
    %5553 = vmatpush.msra.mxu0 0.0
    %5554 = vmatpush.msra.mxu0 0.0
    %5555 = vmatpush.msra.mxu0 0.0
    %5556 = vmatpush.msra.mxu0 0.0
    %5557 = vmatpush.msra.mxu0 0.0
    %5558 = vmatpush.msra.mxu0 0.0
    %5559 = vmatpush.msra.mxu0 0.0
    %5560 = vmatpush.msra.mxu0 0.0
    %5561 = vmatpush.msra.mxu0 0.0
    %5562 = vmatpush.msra.mxu0 %v713
    %5563 = vmatpush.msra.mxu0 %v709
    %5564 = vmatpush.msra.mxu0 %v705
    %5565 = vmatpush.msra.mxu0 %v701
    %5566 = vmatmul.f32.gmra.mxu0 %v5528
    %v5567 = vpop.f32.mrf.mxu0
    %v5568 = vadd.f32 %v5485, %v5567
    %5569 = vdwg.mxu0
    %5570 = vmatpush.msra.mxu0 0.0
    %5571 = vmatpush.msra.mxu0 0.0
    %5572 = vmatpush.msra.mxu0 0.0
    %5573 = vmatpush.msra.mxu0 0.0
    %5574 = vmatpush.msra.mxu0 0.0
    %5575 = vmatpush.msra.mxu0 0.0
    %5576 = vmatpush.msra.mxu0 0.0
    %5577 = vmatpush.msra.mxu0 0.0
    %5578 = vmatpush.msra.mxu0 0.0
    %5579 = vmatpush.msra.mxu0 0.0
    %5580 = vmatpush.msra.mxu0 0.0
    %5581 = vmatpush.msra.mxu0 0.0
    %5582 = vmatpush.msra.mxu0 %v714
    %5583 = vmatpush.msra.mxu0 %v710
    %5584 = vmatpush.msra.mxu0 %v706
    %5585 = vmatpush.msra.mxu0 %v702
    %5586 = vmatmul.f32.gmra.mxu0 %v5528
    %v5587 = vpop.f32.mrf.mxu0
    %v5588 = vadd.f32 %v5505, %v5587
    %5589 = vdwg.mxu0
    %5590 = vmatpush.msra.mxu0 0.0
    %5591 = vmatpush.msra.mxu0 0.0
    %5592 = vmatpush.msra.mxu0 0.0
    %5593 = vmatpush.msra.mxu0 0.0
    %5594 = vmatpush.msra.mxu0 0.0
    %5595 = vmatpush.msra.mxu0 0.0
    %5596 = vmatpush.msra.mxu0 0.0
    %5597 = vmatpush.msra.mxu0 0.0
    %5598 = vmatpush.msra.mxu0 0.0
    %5599 = vmatpush.msra.mxu0 0.0
    %5600 = vmatpush.msra.mxu0 0.0
    %5601 = vmatpush.msra.mxu0 0.0
    %5602 = vmatpush.msra.mxu0 %v715
    %5603 = vmatpush.msra.mxu0 %v711
    %5604 = vmatpush.msra.mxu0 %v707
    %5605 = vmatpush.msra.mxu0 %v703
    %5606 = vmatmul.f32.gmra.mxu0 %v5528
    %v5607 = vpop.f32.mrf.mxu0
    %v5608 = vadd.f32 %v5525, %v5607
    %5609 = vdwg.mxu0
    %v5610 = vadd.f32 %v5548, %v202
    %v5611 = vadd.f32 %v5568, %v203
    %v5612 = vadd.f32 %v5588, %v204
    %v5613 = vadd.f32 %v5608, %v205
    %v5614 = vxor.u32 %v5610, 2147483648
    %v5615 = vmul.f32 %v5614, 1.442695
    %v5616 = vpow.pop %v5615
    %v5617 = vadd.f32 %v5616, 1.0
    %v5618 = vrcp.pop %v5617
    %v5619 = vmul.f32 %v5617, %v5618
    %v5620 = vsub.f32 1.0, %v5619
    %v5621 = vmul.f32 %v5618, %v5620
    %v5622 = vadd.f32 %v5618, %v5621
    %vm5623 = vweird.f32 %v5617
    %vm5624 = vweird.f32 %v5618
    %vm5625 = vmor %vm5623, %vm5624
    %v5626 = vsel %vm5625, %v5618, %v5622
    %v5627 = vand.u32 2147483647, %v5617
    %vm5628 = vcmp.eq.f32.partialorder %v5627, 8.507059e+37
    %v5629 = vand.u32 %v5617, 2147483648
    %v5630 = vor.u32 1.1754944e-38, %v5629
    %v5631 = vsel %vm5628, %v5630, %v5626
    %v5632 = vmul.f32 1.0, %v5631
    %v5633 = vxor.u32 %v5611, 2147483648
    %v5634 = vmul.f32 %v5633, 1.442695
    %v5635 = vpow.pop %v5634
    %v5636 = vadd.f32 %v5635, 1.0
    %v5637 = vrcp.pop %v5636
    %v5638 = vmul.f32 %v5636, %v5637
    %v5639 = vsub.f32 1.0, %v5638
    %v5640 = vmul.f32 %v5637, %v5639
    %v5641 = vadd.f32 %v5637, %v5640
    %vm5642 = vweird.f32 %v5636
    %vm5643 = vweird.f32 %v5637
    %vm5644 = vmor %vm5642, %vm5643
    %v5645 = vsel %vm5644, %v5637, %v5641
    %v5646 = vand.u32 2147483647, %v5636
    %vm5647 = vcmp.eq.f32.partialorder %v5646, 8.507059e+37
    %v5648 = vand.u32 %v5636, 2147483648
    %v5649 = vor.u32 1.1754944e-38, %v5648
    %v5650 = vsel %vm5647, %v5649, %v5645
    %v5651 = vmul.f32 1.0, %v5650
    %v5652 = vmul.f32 %v5632, %v5613
    %v5653 = vadd.f32 %v5612, %v5652
    %v5654 = vtanh.pop %v5653
    %v5655 = vsub.f32 1.0, %v5651
    %v5656 = vmul.f32 %v5655, %v5654
    %v5657 = vmul.f32 %v5651, %v4984
    %v5658 = vadd.f32 %v5656, %v5657
    %v5660 = vsel %vm323, %v5658, 0
    %5662 = vmatpush.msra.mxu0 0.0
    %5663 = vmatpush.msra.mxu0 0.0
    %5664 = vmatpush.msra.mxu0 0.0
    %5665 = vmatpush.msra.mxu0 0.0
    %5666 = vmatpush.msra.mxu0 0.0
    %5667 = vmatpush.msra.mxu0 0.0
    %5668 = vmatpush.msra.mxu0 0.0
    %5669 = vmatpush.msra.mxu0 0.0
    %5670 = vmatpush.msra.mxu0 0.0
    %5671 = vmatpush.msra.mxu0 0.0
    %5672 = vmatpush.msra.mxu0 0.0
    %5673 = vmatpush.msra.mxu0 0.0
    %5674 = vmatpush.msra.mxu0 0.0
    %5675 = vmatpush.msra.mxu0 0.0
    %5676 = vmatpush.msra.mxu0 %v939
    %5677 = vmatpush.msra.mxu0 %v938
    %5678 = vmatmul.f32.gmra.mxu0 %v5660
    %v5679 = vpop.f32.mrf.mxu0
    %v5680 = vadd.f32 %v212, %v5679
    %5681 = vdwg.mxu0
    %v5682 = vsel %vm963, %v5680, -inf
    %5683 = vmax.xlane.f32.xlu0 %v5682
    %v5684 = vpop.xlane.xlu0 %5683
    %v5685 = vsub.f32 %v5680, %v5684
    %v5686 = vmul.f32 %v5685, 1.442695
    %v5687 = vpow.pop %v5686
    %v5688 = vsel %vm963, %v5687, 0.0
    %5689 = vadd.xlane.f32.xlu0 %v5688
    %v5690 = vpop.xlane.xlu0 %5689
    %v5691 = vlog2.pop %v5690
    %v5692 = vmul.f32 %v5691, 0.6931472
    %v5693 = vsub.f32 %v5685, %v5692
    %v5694 = vadd.f32 %v5020, %v5693
    %v5695 = vmul.f32 %v5694, 0.125
    %5696 = vst.msk [vmem:[#allocation17] sm:$0x3] %vm963, %v5695
    // Predicated region
    $region86: #{tpu_custom_call.1} parent=1 // pred_check
      _
    $region87: #{tpu_custom_call.1} parent=1 // pred_check_branch
      %5698 = sbr.rel (0) target = $region89
    $region88: #{tpu_custom_call.1} parent=1 // pred_region
      %5700 = vsyncadd [#allocation4], 0
      %s5702 = sshll.u32 [#allocation17], 4
      %s5703 = int_to_ptr.vmem [resolvable:$true] %s5702
      %s5704 = sshll.u32 %s12, 4
      %s5705 = int_to_ptr.hbm [resolvable:$true] %s5704
      %5707 = dma.vmem_to_hbm [thread:$0]  %s5703, 32, %s5705, [#allocation4]
    $region89: #{tpu_custom_call.1} parent=1 // pred_fallthru
      _
    // Predicated region
    $region90: #{tpu_custom_call.1} parent=1 // pred_check
      _
    $region91: #{tpu_custom_call.1} parent=1 // pred_check_branch
      %5709 = sbr.rel (0) target = $region93
    $region92: #{tpu_custom_call.1} parent=1 // pred_region
      %5711 = dma.done [#allocation4], 32
    $region93: #{tpu_custom_call.1} parent=1 // pred_fallthru
      _
    %5712 = vsyncpa [#allocation3], 1
    %5713 = vsyncpa [#allocation6], 1
    %5714 = vsyncpa [#allocation9], 1
    %5715 = vsyncpa [#allocation12], 1
    %5716 = vsyncpa [#allocation15], 1
    %5717 = vsyncpa [#allocation4], 1

</llo_original>
